<compile_context>
chip_gen: v6e
topology: v6e:2x2x1
jax: 0.10.0
libtpu: 0.0.40
codegen_flags: <defaults>
</compile_context>

<pallas_src>
import jax
import jax.numpy as jnp
from jax import lax
from jax.experimental import pallas as pl
from jax.experimental.pallas import tpu as pltpu


def _weight_norm(v, g):
    """torch.nn.utils.weight_norm (dim=0): W = g * V / ||V||, norm over dims 1,2,3."""
    norm = jnp.sqrt(jnp.sum(v * v, axis=(1, 2, 3), keepdims=True))
    return v * (g.reshape(-1, 1, 1, 1) / norm)


def _res_conv_block_kernel_factory(C, H, W, KS, P):
    """Fused conv1+relu -> conv2+relu -> +residual kernel for one NCHW image."""
    taps = [(kh, kw) for kh in range(KS) for kw in range(KS)]

    def widx(co, ci, kh, kw):
        # flat index into a row-major (C_out, C_in, KS, KS) weight tensor
        return ((co * C + ci) * KS + kh) * KS + kw

    def conv_relu_channel(src_loader, w_ref, b_ref, co):
        # src_loader(ci, kh, kw) -> (H, W) shifted window of the (padded) source
        acc = jnp.zeros((H, W), dtype=jnp.float32)
        for ci in range(C):
            for kh, kw in taps:
                acc = acc + w_ref[widx(co, ci, kh, kw)] * src_loader(ci, kh, kw)
        return jnp.maximum(acc + b_ref[co], 0.0)

    def kernel(w1_ref, b1_ref, w2_ref, b2_ref, xpad_ref, o_ref, h1pad_ref):
        # ---- stage 1: conv1 + bias + relu into a zero-haloed VMEM scratch ----
        # (border stays zero => zero padding for conv2, no HBM round trip)
        h1pad_ref[...] = jnp.zeros_like(h1pad_ref)

        def load_x(ci, kh, kw):
            return xpad_ref[0, ci, kh:kh + H, kw:kw + W]

        for co in range(C):
            h1pad_ref[co, P:P + H, P:P + W] = conv_relu_channel(
                load_x, w1_ref, b1_ref, co)

        # ---- stage 2: conv2 + bias + relu + residual add, store output ----
        def load_h1(ci, kh, kw):
            return h1pad_ref[ci, kh:kh + H, kw:kw + W]

        for co in range(C):
            y = conv_relu_channel(load_h1, w2_ref, b2_ref, co)
            # residual (identity skip) taken from the interior of the padded input
            o_ref[0, co, :, :] = y + xpad_ref[0, co, P:P + H, P:P + W]

    return kernel


def res_conv2d_block(x, v1, g1, b1, v2, g2, b2, *, kernel_size=3, padding=1):
    """x: (N, C, H, W) f32  ->  (N, C, H, W) f32, ResConv2DBlock forward."""
    N, C, H, W = x.shape
    assert v1.shape == (C, C, kernel_size, kernel_size)
    assert v2.shape == (C, C, kernel_size, kernel_size)
    assert 2 * padding == kernel_size - 1, "identity residual needs 'same' spatial dims"

    # fold weight norm into effective conv weights (tiny, done once in the wrapper)
    w1 = _weight_norm(v1, g1)
    w2 = _weight_norm(v2, g2)

    Hp, Wp = H + 2 * padding, W + 2 * padding
    x_pad = jnp.pad(x, ((0, 0), (0, 0), (padding, padding), (padding, padding)))

    kernel = _res_conv_block_kernel_factory(C, H, W, kernel_size, padding)
    smem = pl.BlockSpec(memory_space=pltpu.MemorySpace.SMEM)

    out = pl.pallas_call(
        kernel,
        out_shape=jax.ShapeDtypeStruct((N, C, H, W), x.dtype),
        grid_spec=pltpu.PrefetchScalarGridSpec(
            num_scalar_prefetch=0,
            grid=(N,),
            in_specs=[
                smem,                                                   # w1 (flat)
                smem,                                                   # b1
                smem,                                                   # w2 (flat)
                smem,                                                   # b2
                pl.BlockSpec((1, C, Hp, Wp), lambda n: (n, 0, 0, 0)),   # padded x
            ],
            out_specs=pl.BlockSpec((1, C, H, W), lambda n: (n, 0, 0, 0)),
            scratch_shapes=[pltpu.VMEM((C, Hp, Wp), jnp.float32)],      # h1 + halo
        ),
        compiler_params=pltpu.CompilerParams(
            dimension_semantics=("parallel",)),
    )(w1.reshape(-1), b1, w2.reshape(-1), b2, x_pad)

    return out


def res_conv2d_block_ref(x, v1, g1, b1, v2, g2, b2, *, kernel_size=3, padding=1):
    """Pure-JAX reference mirroring the PyTorch forward (default config)."""
    del kernel_size
    w1 = _weight_norm(v1, g1)
    w2 = _weight_norm(v2, g2)

    def conv_block(h, w, b):
        hp = jnp.pad(h, ((0, 0), (0, 0), (padding, padding), (padding, padding)))
        y = lax.conv_general_dilated(
            hp, w, window_strides=(1, 1), padding="VALID",
            dimension_numbers=("NCHW", "OIHW", "NCHW"))
        return jnp.maximum(y + b.reshape(1, -1, 1, 1), 0.0)

    out = conv_block(conv_block(x, w1, b1), w2, b2)
    return out + x  # skip == Identity since dim_in == dim_out


if __name__ == "__main__":
    key = jax.random.PRNGKey(0)
    k = jax.random.split(key, 7)

    N, C, H, W, KS, P = 2, 4, 16, 16, 3, 1  # dim_in == dim_out == 4
    x = jax.random.normal(k[0], (N, C, H, W), dtype=jnp.float32)
    v1 = 0.3 * jax.random.normal(k[1], (C, C, KS, KS), dtype=jnp.float32)
    g1 = jax.random.uniform(k[2], (C,), minval=0.5, maxval=1.5, dtype=jnp.float32)
    b1 = 0.1 * jax.random.normal(k[3], (C,), dtype=jnp.float32)
    v2 = 0.3 * jax.random.normal(k[4], (C, C, KS, KS), dtype=jnp.float32)
    g2 = jax.random.uniform(k[5], (C,), minval=0.5, maxval=1.5, dtype=jnp.float32)
    b2 = 0.1 * jax.random.normal(k[6], (C,), dtype=jnp.float32)

    out = res_conv2d_block(x, v1, g1, b1, v2, g2, b2, kernel_size=KS, padding=P)
    jax.block_until_ready(out)

    ref = res_conv2d_block_ref(x, v1, g1, b1, v2, g2, b2, kernel_size=KS, padding=P)
    assert out.shape == (N, C, H, W), out.shape
    assert jnp.allclose(out, ref, atol=1e-4, rtol=1e-4), float(jnp.max(jnp.abs(out - ref)))

    print("KERNEL_OK")
</pallas_src>

<mosaic_0001>
module attributes {stable_mosaic.version = 11 : i64} {
  func.func @kernel(%arg0: i32, %arg1: memref<144xf32, #tpu.memory_space<smem>>, %arg2: memref<4xf32, #tpu.memory_space<smem>>, %arg3: memref<144xf32, #tpu.memory_space<smem>>, %arg4: memref<4xf32, #tpu.memory_space<smem>>, %arg5: memref<1x4x18x18xf32, #tpu.memory_space<vmem>>, %arg6: memref<1x4x16x16xf32, #tpu.memory_space<vmem>>, %arg7: memref<4x18x18xf32, #tpu.memory_space<vmem>>) attributes {dimension_semantics = [#tpu.dimension_semantics<parallel>], iteration_bounds = array<i64: 2>, scalar_prefetch = 0 : i64, scratch_operands = 1 : i64, tpu.core_type = #tpu.core_type<tc>, window_params = [{transform_indices = @transform_0, window_bounds = array<i64: 144>}, {transform_indices = @transform_1, window_bounds = array<i64: 4>}, {transform_indices = @transform_2, window_bounds = array<i64: 144>}, {transform_indices = @transform_3, window_bounds = array<i64: 4>}, {transform_indices = @transform_4, window_bounds = array<i64: 1, 4, 18, 18>}, {transform_indices = @transform_5, window_bounds = array<i64: 1, 4, 16, 16>}]} {
    %cst = arith.constant 0.000000e+00 : f32
    %0 = vector.broadcast %cst : f32 to vector<4x18x18xf32>
    %c0 = arith.constant 0 : index
    %c0_0 = arith.constant 0 : index
    %c0_1 = arith.constant 0 : index
    %1 = vector.load %arg7[%c0, %c0_0, %c0_1] : memref<4x18x18xf32, #tpu.memory_space<vmem>>, vector<4x18x18xf32>
    tpu.vector_store %arg7[%c0, %c0_0, %c0_1], %0 {strides = array<i32>} : memref<4x18x18xf32, #tpu.memory_space<vmem>>, vector<4x18x18xf32>,
    %cst_2 = arith.constant 0.000000e+00 : f32
    %2 = vector.broadcast %cst_2 : f32 to vector<16x16xf32>
    %c0_3 = arith.constant 0 : index
    %3 = memref.load %arg1[%c0_3] : memref<144xf32, #tpu.memory_space<smem>>
    %c0_4 = arith.constant 0 : index
    %c0_5 = arith.constant 0 : index
    %c0_6 = arith.constant 0 : index
    %c0_7 = arith.constant 0 : index
    %4 = vector.load %arg5[%c0_4, %c0_5, %c0_6, %c0_7] : memref<1x4x18x18xf32, #tpu.memory_space<vmem>>, vector<1x1x16x16xf32>
    %5 = vector.shape_cast %4 : vector<1x1x16x16xf32> to vector<16x16xf32>
    %6 = vector.broadcast %3 : f32 to vector<16x16xf32>
    %7 = arith.mulf %6, %5 : vector<16x16xf32>
    %8 = arith.addf %2, %7 : vector<16x16xf32>
    %c1 = arith.constant 1 : index
    %9 = memref.load %arg1[%c1] : memref<144xf32, #tpu.memory_space<smem>>
    %c0_8 = arith.constant 0 : index
    %c0_9 = arith.constant 0 : index
    %c0_10 = arith.constant 0 : index
    %c1_11 = arith.constant 1 : index
    %10 = vector.load %arg5[%c0_8, %c0_9, %c0_10, %c1_11] : memref<1x4x18x18xf32, #tpu.memory_space<vmem>>, vector<1x1x16x16xf32>
    %11 = vector.shape_cast %10 : vector<1x1x16x16xf32> to vector<16x16xf32>
    %12 = vector.broadcast %9 : f32 to vector<16x16xf32>
    %13 = arith.mulf %12, %11 : vector<16x16xf32>
    %14 = arith.addf %8, %13 : vector<16x16xf32>
    %c2 = arith.constant 2 : index
    %15 = memref.load %arg1[%c2] : memref<144xf32, #tpu.memory_space<smem>>
    %c0_12 = arith.constant 0 : index
    %c0_13 = arith.constant 0 : index
    %c0_14 = arith.constant 0 : index
    %c2_15 = arith.constant 2 : index
    %16 = vector.load %arg5[%c0_12, %c0_13, %c0_14, %c2_15] : memref<1x4x18x18xf32, #tpu.memory_space<vmem>>, vector<1x1x16x16xf32>
    %17 = vector.shape_cast %16 : vector<1x1x16x16xf32> to vector<16x16xf32>
    %18 = vector.broadcast %15 : f32 to vector<16x16xf32>
    %19 = arith.mulf %18, %17 : vector<16x16xf32>
    %20 = arith.addf %14, %19 : vector<16x16xf32>
    %c3 = arith.constant 3 : index
    %21 = memref.load %arg1[%c3] : memref<144xf32, #tpu.memory_space<smem>>
    %c0_16 = arith.constant 0 : index
    %c0_17 = arith.constant 0 : index
    %c1_18 = arith.constant 1 : index
    %c0_19 = arith.constant 0 : index
    %22 = vector.load %arg5[%c0_16, %c0_17, %c1_18, %c0_19] : memref<1x4x18x18xf32, #tpu.memory_space<vmem>>, vector<1x1x16x16xf32>
    %23 = vector.shape_cast %22 : vector<1x1x16x16xf32> to vector<16x16xf32>
    %24 = vector.broadcast %21 : f32 to vector<16x16xf32>
    %25 = arith.mulf %24, %23 : vector<16x16xf32>
    %26 = arith.addf %20, %25 : vector<16x16xf32>
    %c4 = arith.constant 4 : index
    %27 = memref.load %arg1[%c4] : memref<144xf32, #tpu.memory_space<smem>>
    %c0_20 = arith.constant 0 : index
    %c0_21 = arith.constant 0 : index
    %c1_22 = arith.constant 1 : index
    %c1_23 = arith.constant 1 : index
    %28 = vector.load %arg5[%c0_20, %c0_21, %c1_22, %c1_23] : memref<1x4x18x18xf32, #tpu.memory_space<vmem>>, vector<1x1x16x16xf32>
    %29 = vector.shape_cast %28 : vector<1x1x16x16xf32> to vector<16x16xf32>
    %30 = vector.broadcast %27 : f32 to vector<16x16xf32>
    %31 = arith.mulf %30, %29 : vector<16x16xf32>
    %32 = arith.addf %26, %31 : vector<16x16xf32>
    %c5 = arith.constant 5 : index
    %33 = memref.load %arg1[%c5] : memref<144xf32, #tpu.memory_space<smem>>
    %c0_24 = arith.constant 0 : index
    %c0_25 = arith.constant 0 : index
    %c1_26 = arith.constant 1 : index
    %c2_27 = arith.constant 2 : index
    %34 = vector.load %arg5[%c0_24, %c0_25, %c1_26, %c2_27] : memref<1x4x18x18xf32, #tpu.memory_space<vmem>>, vector<1x1x16x16xf32>
    %35 = vector.shape_cast %34 : vector<1x1x16x16xf32> to vector<16x16xf32>
    %36 = vector.broadcast %33 : f32 to vector<16x16xf32>
    %37 = arith.mulf %36, %35 : vector<16x16xf32>
    %38 = arith.addf %32, %37 : vector<16x16xf32>
    %c6 = arith.constant 6 : index
    %39 = memref.load %arg1[%c6] : memref<144xf32, #tpu.memory_space<smem>>
    %c0_28 = arith.constant 0 : index
    %c0_29 = arith.constant 0 : index
    %c2_30 = arith.constant 2 : index
    %c0_31 = arith.constant 0 : index
    %40 = vector.load %arg5[%c0_28, %c0_29, %c2_30, %c0_31] : memref<1x4x18x18xf32, #tpu.memory_space<vmem>>, vector<1x1x16x16xf32>
    %41 = vector.shape_cast %40 : vector<1x1x16x16xf32> to vector<16x16xf32>
    %42 = vector.broadcast %39 : f32 to vector<16x16xf32>
    %43 = arith.mulf %42, %41 : vector<16x16xf32>
    %44 = arith.addf %38, %43 : vector<16x16xf32>
    %c7 = arith.constant 7 : index
    %45 = memref.load %arg1[%c7] : memref<144xf32, #tpu.memory_space<smem>>
    %c0_32 = arith.constant 0 : index
    %c0_33 = arith.constant 0 : index
    %c2_34 = arith.constant 2 : index
    %c1_35 = arith.constant 1 : index
    %46 = vector.load %arg5[%c0_32, %c0_33, %c2_34, %c1_35] : memref<1x4x18x18xf32, #tpu.memory_space<vmem>>, vector<1x1x16x16xf32>
    %47 = vector.shape_cast %46 : vector<1x1x16x16xf32> to vector<16x16xf32>
    %48 = vector.broadcast %45 : f32 to vector<16x16xf32>
    %49 = arith.mulf %48, %47 : vector<16x16xf32>
    %50 = arith.addf %44, %49 : vector<16x16xf32>
    %c8 = arith.constant 8 : index
    %51 = memref.load %arg1[%c8] : memref<144xf32, #tpu.memory_space<smem>>
    %c0_36 = arith.constant 0 : index
    %c0_37 = arith.constant 0 : index
    %c2_38 = arith.constant 2 : index
    %c2_39 = arith.constant 2 : index
    %52 = vector.load %arg5[%c0_36, %c0_37, %c2_38, %c2_39] : memref<1x4x18x18xf32, #tpu.memory_space<vmem>>, vector<1x1x16x16xf32>
    %53 = vector.shape_cast %52 : vector<1x1x16x16xf32> to vector<16x16xf32>
    %54 = vector.broadcast %51 : f32 to vector<16x16xf32>
    %55 = arith.mulf %54, %53 : vector<16x16xf32>
    %56 = arith.addf %50, %55 : vector<16x16xf32>
    %c9 = arith.constant 9 : index
    %57 = memref.load %arg1[%c9] : memref<144xf32, #tpu.memory_space<smem>>
    %c0_40 = arith.constant 0 : index
    %c1_41 = arith.constant 1 : index
    %c0_42 = arith.constant 0 : index
    %c0_43 = arith.constant 0 : index
    %58 = vector.load %arg5[%c0_40, %c1_41, %c0_42, %c0_43] : memref<1x4x18x18xf32, #tpu.memory_space<vmem>>, vector<1x1x16x16xf32>
    %59 = vector.shape_cast %58 : vector<1x1x16x16xf32> to vector<16x16xf32>
    %60 = vector.broadcast %57 : f32 to vector<16x16xf32>
    %61 = arith.mulf %60, %59 : vector<16x16xf32>
    %62 = arith.addf %56, %61 : vector<16x16xf32>
    %c10 = arith.constant 10 : index
    %63 = memref.load %arg1[%c10] : memref<144xf32, #tpu.memory_space<smem>>
    %c0_44 = arith.constant 0 : index
    %c1_45 = arith.constant 1 : index
    %c0_46 = arith.constant 0 : index
    %c1_47 = arith.constant 1 : index
    %64 = vector.load %arg5[%c0_44, %c1_45, %c0_46, %c1_47] : memref<1x4x18x18xf32, #tpu.memory_space<vmem>>, vector<1x1x16x16xf32>
    %65 = vector.shape_cast %64 : vector<1x1x16x16xf32> to vector<16x16xf32>
    %66 = vector.broadcast %63 : f32 to vector<16x16xf32>
    %67 = arith.mulf %66, %65 : vector<16x16xf32>
    %68 = arith.addf %62, %67 : vector<16x16xf32>
    %c11 = arith.constant 11 : index
    %69 = memref.load %arg1[%c11] : memref<144xf32, #tpu.memory_space<smem>>
    %c0_48 = arith.constant 0 : index
    %c1_49 = arith.constant 1 : index
    %c0_50 = arith.constant 0 : index
    %c2_51 = arith.constant 2 : index
    %70 = vector.load %arg5[%c0_48, %c1_49, %c0_50, %c2_51] : memref<1x4x18x18xf32, #tpu.memory_space<vmem>>, vector<1x1x16x16xf32>
    %71 = vector.shape_cast %70 : vector<1x1x16x16xf32> to vector<16x16xf32>
    %72 = vector.broadcast %69 : f32 to vector<16x16xf32>
    %73 = arith.mulf %72, %71 : vector<16x16xf32>
    %74 = arith.addf %68, %73 : vector<16x16xf32>
    %c12 = arith.constant 12 : index
    %75 = memref.load %arg1[%c12] : memref<144xf32, #tpu.memory_space<smem>>
    %c0_52 = arith.constant 0 : index
    %c1_53 = arith.constant 1 : index
    %c1_54 = arith.constant 1 : index
    %c0_55 = arith.constant 0 : index
    %76 = vector.load %arg5[%c0_52, %c1_53, %c1_54, %c0_55] : memref<1x4x18x18xf32, #tpu.memory_space<vmem>>, vector<1x1x16x16xf32>
    %77 = vector.shape_cast %76 : vector<1x1x16x16xf32> to vector<16x16xf32>
    %78 = vector.broadcast %75 : f32 to vector<16x16xf32>
    %79 = arith.mulf %78, %77 : vector<16x16xf32>
    %80 = arith.addf %74, %79 : vector<16x16xf32>
    %c13 = arith.constant 13 : index
    %81 = memref.load %arg1[%c13] : memref<144xf32, #tpu.memory_space<smem>>
    %c0_56 = arith.constant 0 : index
    %c1_57 = arith.constant 1 : index
    %c1_58 = arith.constant 1 : index
    %c1_59 = arith.constant 1 : index
    %82 = vector.load %arg5[%c0_56, %c1_57, %c1_58, %c1_59] : memref<1x4x18x18xf32, #tpu.memory_space<vmem>>, vector<1x1x16x16xf32>
    %83 = vector.shape_cast %82 : vector<1x1x16x16xf32> to vector<16x16xf32>
    %84 = vector.broadcast %81 : f32 to vector<16x16xf32>
    %85 = arith.mulf %84, %83 : vector<16x16xf32>
    %86 = arith.addf %80, %85 : vector<16x16xf32>
    %c14 = arith.constant 14 : index
    %87 = memref.load %arg1[%c14] : memref<144xf32, #tpu.memory_space<smem>>
    %c0_60 = arith.constant 0 : index
    %c1_61 = arith.constant 1 : index
    %c1_62 = arith.constant 1 : index
    %c2_63 = arith.constant 2 : index
    %88 = vector.load %arg5[%c0_60, %c1_61, %c1_62, %c2_63] : memref<1x4x18x18xf32, #tpu.memory_space<vmem>>, vector<1x1x16x16xf32>
    %89 = vector.shape_cast %88 : vector<1x1x16x16xf32> to vector<16x16xf32>
    %90 = vector.broadcast %87 : f32 to vector<16x16xf32>
    %91 = arith.mulf %90, %89 : vector<16x16xf32>
    %92 = arith.addf %86, %91 : vector<16x16xf32>
    %c15 = arith.constant 15 : index
    %93 = memref.load %arg1[%c15] : memref<144xf32, #tpu.memory_space<smem>>
    %c0_64 = arith.constant 0 : index
    %c1_65 = arith.constant 1 : index
    %c2_66 = arith.constant 2 : index
    %c0_67 = arith.constant 0 : index
    %94 = vector.load %arg5[%c0_64, %c1_65, %c2_66, %c0_67] : memref<1x4x18x18xf32, #tpu.memory_space<vmem>>, vector<1x1x16x16xf32>
    %95 = vector.shape_cast %94 : vector<1x1x16x16xf32> to vector<16x16xf32>
    %96 = vector.broadcast %93 : f32 to vector<16x16xf32>
    %97 = arith.mulf %96, %95 : vector<16x16xf32>
    %98 = arith.addf %92, %97 : vector<16x16xf32>
    %c16 = arith.constant 16 : index
    %99 = memref.load %arg1[%c16] : memref<144xf32, #tpu.memory_space<smem>>
    %c0_68 = arith.constant 0 : index
    %c1_69 = arith.constant 1 : index
    %c2_70 = arith.constant 2 : index
    %c1_71 = arith.constant 1 : index
    %100 = vector.load %arg5[%c0_68, %c1_69, %c2_70, %c1_71] : memref<1x4x18x18xf32, #tpu.memory_space<vmem>>, vector<1x1x16x16xf32>
    %101 = vector.shape_cast %100 : vector<1x1x16x16xf32> to vector<16x16xf32>
    %102 = vector.broadcast %99 : f32 to vector<16x16xf32>
    %103 = arith.mulf %102, %101 : vector<16x16xf32>
    %104 = arith.addf %98, %103 : vector<16x16xf32>
    %c17 = arith.constant 17 : index
    %105 = memref.load %arg1[%c17] : memref<144xf32, #tpu.memory_space<smem>>
    %c0_72 = arith.constant 0 : index
    %c1_73 = arith.constant 1 : index
    %c2_74 = arith.constant 2 : index
    %c2_75 = arith.constant 2 : index
    %106 = vector.load %arg5[%c0_72, %c1_73, %c2_74, %c2_75] : memref<1x4x18x18xf32, #tpu.memory_space<vmem>>, vector<1x1x16x16xf32>
    %107 = vector.shape_cast %106 : vector<1x1x16x16xf32> to vector<16x16xf32>
    %108 = vector.broadcast %105 : f32 to vector<16x16xf32>
    %109 = arith.mulf %108, %107 : vector<16x16xf32>
    %110 = arith.addf %104, %109 : vector<16x16xf32>
    %c18 = arith.constant 18 : index
    %111 = memref.load %arg1[%c18] : memref<144xf32, #tpu.memory_space<smem>>
    %c0_76 = arith.constant 0 : index
    %c2_77 = arith.constant 2 : index
    %c0_78 = arith.constant 0 : index
    %c0_79 = arith.constant 0 : index
    %112 = vector.load %arg5[%c0_76, %c2_77, %c0_78, %c0_79] : memref<1x4x18x18xf32, #tpu.memory_space<vmem>>, vector<1x1x16x16xf32>
    %113 = vector.shape_cast %112 : vector<1x1x16x16xf32> to vector<16x16xf32>
    %114 = vector.broadcast %111 : f32 to vector<16x16xf32>
    %115 = arith.mulf %114, %113 : vector<16x16xf32>
    %116 = arith.addf %110, %115 : vector<16x16xf32>
    %c19 = arith.constant 19 : index
    %117 = memref.load %arg1[%c19] : memref<144xf32, #tpu.memory_space<smem>>
    %c0_80 = arith.constant 0 : index
    %c2_81 = arith.constant 2 : index
    %c0_82 = arith.constant 0 : index
    %c1_83 = arith.constant 1 : index
    %118 = vector.load %arg5[%c0_80, %c2_81, %c0_82, %c1_83] : memref<1x4x18x18xf32, #tpu.memory_space<vmem>>, vector<1x1x16x16xf32>
    %119 = vector.shape_cast %118 : vector<1x1x16x16xf32> to vector<16x16xf32>
    %120 = vector.broadcast %117 : f32 to vector<16x16xf32>
    %121 = arith.mulf %120, %119 : vector<16x16xf32>
    %122 = arith.addf %116, %121 : vector<16x16xf32>
    %c20 = arith.constant 20 : index
    %123 = memref.load %arg1[%c20] : memref<144xf32, #tpu.memory_space<smem>>
    %c0_84 = arith.constant 0 : index
    %c2_85 = arith.constant 2 : index
    %c0_86 = arith.constant 0 : index
    %c2_87 = arith.constant 2 : index
    %124 = vector.load %arg5[%c0_84, %c2_85, %c0_86, %c2_87] : memref<1x4x18x18xf32, #tpu.memory_space<vmem>>, vector<1x1x16x16xf32>
    %125 = vector.shape_cast %124 : vector<1x1x16x16xf32> to vector<16x16xf32>
    %126 = vector.broadcast %123 : f32 to vector<16x16xf32>
    %127 = arith.mulf %126, %125 : vector<16x16xf32>
    %128 = arith.addf %122, %127 : vector<16x16xf32>
    %c21 = arith.constant 21 : index
    %129 = memref.load %arg1[%c21] : memref<144xf32, #tpu.memory_space<smem>>
    %c0_88 = arith.constant 0 : index
    %c2_89 = arith.constant 2 : index
    %c1_90 = arith.constant 1 : index
    %c0_91 = arith.constant 0 : index
    %130 = vector.load %arg5[%c0_88, %c2_89, %c1_90, %c0_91] : memref<1x4x18x18xf32, #tpu.memory_space<vmem>>, vector<1x1x16x16xf32>
    %131 = vector.shape_cast %130 : vector<1x1x16x16xf32> to vector<16x16xf32>
    %132 = vector.broadcast %129 : f32 to vector<16x16xf32>
    %133 = arith.mulf %132, %131 : vector<16x16xf32>
    %134 = arith.addf %128, %133 : vector<16x16xf32>
    %c22 = arith.constant 22 : index
    %135 = memref.load %arg1[%c22] : memref<144xf32, #tpu.memory_space<smem>>
    %c0_92 = arith.constant 0 : index
    %c2_93 = arith.constant 2 : index
    %c1_94 = arith.constant 1 : index
    %c1_95 = arith.constant 1 : index
    %136 = vector.load %arg5[%c0_92, %c2_93, %c1_94, %c1_95] : memref<1x4x18x18xf32, #tpu.memory_space<vmem>>, vector<1x1x16x16xf32>
    %137 = vector.shape_cast %136 : vector<1x1x16x16xf32> to vector<16x16xf32>
    %138 = vector.broadcast %135 : f32 to vector<16x16xf32>
    %139 = arith.mulf %138, %137 : vector<16x16xf32>
    %140 = arith.addf %134, %139 : vector<16x16xf32>
    %c23 = arith.constant 23 : index
    %141 = memref.load %arg1[%c23] : memref<144xf32, #tpu.memory_space<smem>>
    %c0_96 = arith.constant 0 : index
    %c2_97 = arith.constant 2 : index
    %c1_98 = arith.constant 1 : index
    %c2_99 = arith.constant 2 : index
    %142 = vector.load %arg5[%c0_96, %c2_97, %c1_98, %c2_99] : memref<1x4x18x18xf32, #tpu.memory_space<vmem>>, vector<1x1x16x16xf32>
    %143 = vector.shape_cast %142 : vector<1x1x16x16xf32> to vector<16x16xf32>
    %144 = vector.broadcast %141 : f32 to vector<16x16xf32>
    %145 = arith.mulf %144, %143 : vector<16x16xf32>
    %146 = arith.addf %140, %145 : vector<16x16xf32>
    %c24 = arith.constant 24 : index
    %147 = memref.load %arg1[%c24] : memref<144xf32, #tpu.memory_space<smem>>
    %c0_100 = arith.constant 0 : index
    %c2_101 = arith.constant 2 : index
    %c2_102 = arith.constant 2 : index
    %c0_103 = arith.constant 0 : index
    %148 = vector.load %arg5[%c0_100, %c2_101, %c2_102, %c0_103] : memref<1x4x18x18xf32, #tpu.memory_space<vmem>>, vector<1x1x16x16xf32>
    %149 = vector.shape_cast %148 : vector<1x1x16x16xf32> to vector<16x16xf32>
    %150 = vector.broadcast %147 : f32 to vector<16x16xf32>
    %151 = arith.mulf %150, %149 : vector<16x16xf32>
    %152 = arith.addf %146, %151 : vector<16x16xf32>
    %c25 = arith.constant 25 : index
    %153 = memref.load %arg1[%c25] : memref<144xf32, #tpu.memory_space<smem>>
    %c0_104 = arith.constant 0 : index
    %c2_105 = arith.constant 2 : index
    %c2_106 = arith.constant 2 : index
    %c1_107 = arith.constant 1 : index
    %154 = vector.load %arg5[%c0_104, %c2_105, %c2_106, %c1_107] : memref<1x4x18x18xf32, #tpu.memory_space<vmem>>, vector<1x1x16x16xf32>
    %155 = vector.shape_cast %154 : vector<1x1x16x16xf32> to vector<16x16xf32>
    %156 = vector.broadcast %153 : f32 to vector<16x16xf32>
    %157 = arith.mulf %156, %155 : vector<16x16xf32>
    %158 = arith.addf %152, %157 : vector<16x16xf32>
    %c26 = arith.constant 26 : index
    %159 = memref.load %arg1[%c26] : memref<144xf32, #tpu.memory_space<smem>>
    %c0_108 = arith.constant 0 : index
    %c2_109 = arith.constant 2 : index
    %c2_110 = arith.constant 2 : index
    %c2_111 = arith.constant 2 : index
    %160 = vector.load %arg5[%c0_108, %c2_109, %c2_110, %c2_111] : memref<1x4x18x18xf32, #tpu.memory_space<vmem>>, vector<1x1x16x16xf32>
    %161 = vector.shape_cast %160 : vector<1x1x16x16xf32> to vector<16x16xf32>
    %162 = vector.broadcast %159 : f32 to vector<16x16xf32>
    %163 = arith.mulf %162, %161 : vector<16x16xf32>
    %164 = arith.addf %158, %163 : vector<16x16xf32>
    %c27 = arith.constant 27 : index
    %165 = memref.load %arg1[%c27] : memref<144xf32, #tpu.memory_space<smem>>
    %c0_112 = arith.constant 0 : index
    %c3_113 = arith.constant 3 : index
    %c0_114 = arith.constant 0 : index
    %c0_115 = arith.constant 0 : index
    %166 = vector.load %arg5[%c0_112, %c3_113, %c0_114, %c0_115] : memref<1x4x18x18xf32, #tpu.memory_space<vmem>>, vector<1x1x16x16xf32>
    %167 = vector.shape_cast %166 : vector<1x1x16x16xf32> to vector<16x16xf32>
    %168 = vector.broadcast %165 : f32 to vector<16x16xf32>
    %169 = arith.mulf %168, %167 : vector<16x16xf32>
    %170 = arith.addf %164, %169 : vector<16x16xf32>
    %c28 = arith.constant 28 : index
    %171 = memref.load %arg1[%c28] : memref<144xf32, #tpu.memory_space<smem>>
    %c0_116 = arith.constant 0 : index
    %c3_117 = arith.constant 3 : index
    %c0_118 = arith.constant 0 : index
    %c1_119 = arith.constant 1 : index
    %172 = vector.load %arg5[%c0_116, %c3_117, %c0_118, %c1_119] : memref<1x4x18x18xf32, #tpu.memory_space<vmem>>, vector<1x1x16x16xf32>
    %173 = vector.shape_cast %172 : vector<1x1x16x16xf32> to vector<16x16xf32>
    %174 = vector.broadcast %171 : f32 to vector<16x16xf32>
    %175 = arith.mulf %174, %173 : vector<16x16xf32>
    %176 = arith.addf %170, %175 : vector<16x16xf32>
    %c29 = arith.constant 29 : index
    %177 = memref.load %arg1[%c29] : memref<144xf32, #tpu.memory_space<smem>>
    %c0_120 = arith.constant 0 : index
    %c3_121 = arith.constant 3 : index
    %c0_122 = arith.constant 0 : index
    %c2_123 = arith.constant 2 : index
    %178 = vector.load %arg5[%c0_120, %c3_121, %c0_122, %c2_123] : memref<1x4x18x18xf32, #tpu.memory_space<vmem>>, vector<1x1x16x16xf32>
    %179 = vector.shape_cast %178 : vector<1x1x16x16xf32> to vector<16x16xf32>
    %180 = vector.broadcast %177 : f32 to vector<16x16xf32>
    %181 = arith.mulf %180, %179 : vector<16x16xf32>
    %182 = arith.addf %176, %181 : vector<16x16xf32>
    %c30 = arith.constant 30 : index
    %183 = memref.load %arg1[%c30] : memref<144xf32, #tpu.memory_space<smem>>
    %c0_124 = arith.constant 0 : index
    %c3_125 = arith.constant 3 : index
    %c1_126 = arith.constant 1 : index
    %c0_127 = arith.constant 0 : index
    %184 = vector.load %arg5[%c0_124, %c3_125, %c1_126, %c0_127] : memref<1x4x18x18xf32, #tpu.memory_space<vmem>>, vector<1x1x16x16xf32>
    %185 = vector.shape_cast %184 : vector<1x1x16x16xf32> to vector<16x16xf32>
    %186 = vector.broadcast %183 : f32 to vector<16x16xf32>
    %187 = arith.mulf %186, %185 : vector<16x16xf32>
    %188 = arith.addf %182, %187 : vector<16x16xf32>
    %c31 = arith.constant 31 : index
    %189 = memref.load %arg1[%c31] : memref<144xf32, #tpu.memory_space<smem>>
    %c0_128 = arith.constant 0 : index
    %c3_129 = arith.constant 3 : index
    %c1_130 = arith.constant 1 : index
    %c1_131 = arith.constant 1 : index
    %190 = vector.load %arg5[%c0_128, %c3_129, %c1_130, %c1_131] : memref<1x4x18x18xf32, #tpu.memory_space<vmem>>, vector<1x1x16x16xf32>
    %191 = vector.shape_cast %190 : vector<1x1x16x16xf32> to vector<16x16xf32>
    %192 = vector.broadcast %189 : f32 to vector<16x16xf32>
    %193 = arith.mulf %192, %191 : vector<16x16xf32>
    %194 = arith.addf %188, %193 : vector<16x16xf32>
    %c32 = arith.constant 32 : index
    %195 = memref.load %arg1[%c32] : memref<144xf32, #tpu.memory_space<smem>>
    %c0_132 = arith.constant 0 : index
    %c3_133 = arith.constant 3 : index
    %c1_134 = arith.constant 1 : index
    %c2_135 = arith.constant 2 : index
    %196 = vector.load %arg5[%c0_132, %c3_133, %c1_134, %c2_135] : memref<1x4x18x18xf32, #tpu.memory_space<vmem>>, vector<1x1x16x16xf32>
    %197 = vector.shape_cast %196 : vector<1x1x16x16xf32> to vector<16x16xf32>
    %198 = vector.broadcast %195 : f32 to vector<16x16xf32>
    %199 = arith.mulf %198, %197 : vector<16x16xf32>
    %200 = arith.addf %194, %199 : vector<16x16xf32>
    %c33 = arith.constant 33 : index
    %201 = memref.load %arg1[%c33] : memref<144xf32, #tpu.memory_space<smem>>
    %c0_136 = arith.constant 0 : index
    %c3_137 = arith.constant 3 : index
    %c2_138 = arith.constant 2 : index
    %c0_139 = arith.constant 0 : index
    %202 = vector.load %arg5[%c0_136, %c3_137, %c2_138, %c0_139] : memref<1x4x18x18xf32, #tpu.memory_space<vmem>>, vector<1x1x16x16xf32>
    %203 = vector.shape_cast %202 : vector<1x1x16x16xf32> to vector<16x16xf32>
    %204 = vector.broadcast %201 : f32 to vector<16x16xf32>
    %205 = arith.mulf %204, %203 : vector<16x16xf32>
    %206 = arith.addf %200, %205 : vector<16x16xf32>
    %c34 = arith.constant 34 : index
    %207 = memref.load %arg1[%c34] : memref<144xf32, #tpu.memory_space<smem>>
    %c0_140 = arith.constant 0 : index
    %c3_141 = arith.constant 3 : index
    %c2_142 = arith.constant 2 : index
    %c1_143 = arith.constant 1 : index
    %208 = vector.load %arg5[%c0_140, %c3_141, %c2_142, %c1_143] : memref<1x4x18x18xf32, #tpu.memory_space<vmem>>, vector<1x1x16x16xf32>
    %209 = vector.shape_cast %208 : vector<1x1x16x16xf32> to vector<16x16xf32>
    %210 = vector.broadcast %207 : f32 to vector<16x16xf32>
    %211 = arith.mulf %210, %209 : vector<16x16xf32>
    %212 = arith.addf %206, %211 : vector<16x16xf32>
    %c35 = arith.constant 35 : index
    %213 = memref.load %arg1[%c35] : memref<144xf32, #tpu.memory_space<smem>>
    %c0_144 = arith.constant 0 : index
    %c3_145 = arith.constant 3 : index
    %c2_146 = arith.constant 2 : index
    %c2_147 = arith.constant 2 : index
    %214 = vector.load %arg5[%c0_144, %c3_145, %c2_146, %c2_147] : memref<1x4x18x18xf32, #tpu.memory_space<vmem>>, vector<1x1x16x16xf32>
    %215 = vector.shape_cast %214 : vector<1x1x16x16xf32> to vector<16x16xf32>
    %216 = vector.broadcast %213 : f32 to vector<16x16xf32>
    %217 = arith.mulf %216, %215 : vector<16x16xf32>
    %218 = arith.addf %212, %217 : vector<16x16xf32>
    %c0_148 = arith.constant 0 : index
    %219 = memref.load %arg2[%c0_148] : memref<4xf32, #tpu.memory_space<smem>>
    %220 = vector.broadcast %219 : f32 to vector<16x16xf32>
    %221 = arith.addf %218, %220 : vector<16x16xf32>
    %cst_149 = arith.constant 0.000000e+00 : f32
    %222 = vector.broadcast %cst_149 : f32 to vector<16x16xf32>
    %223 = arith.maximumf %221, %222 : vector<16x16xf32>
    %c0_150 = arith.constant 0 : index
    %c1_151 = arith.constant 1 : index
    %c1_152 = arith.constant 1 : index
    %224 = vector.load %arg7[%c0_150, %c1_151, %c1_152] : memref<4x18x18xf32, #tpu.memory_space<vmem>>, vector<1x16x16xf32>
    %225 = vector.shape_cast %224 : vector<1x16x16xf32> to vector<16x16xf32>
    %226 = vector.shape_cast %223 : vector<16x16xf32> to vector<1x16x16xf32>
    tpu.vector_store %arg7[%c0_150, %c1_151, %c1_152], %226 {strides = array<i32>} : memref<4x18x18xf32, #tpu.memory_space<vmem>>, vector<1x16x16xf32>,
    %cst_153 = arith.constant 0.000000e+00 : f32
    %227 = vector.broadcast %cst_153 : f32 to vector<16x16xf32>
    %c36 = arith.constant 36 : index
    %228 = memref.load %arg1[%c36] : memref<144xf32, #tpu.memory_space<smem>>
    %c0_154 = arith.constant 0 : index
    %c0_155 = arith.constant 0 : index
    %c0_156 = arith.constant 0 : index
    %c0_157 = arith.constant 0 : index
    %229 = vector.load %arg5[%c0_154, %c0_155, %c0_156, %c0_157] : memref<1x4x18x18xf32, #tpu.memory_space<vmem>>, vector<1x1x16x16xf32>
    %230 = vector.shape_cast %229 : vector<1x1x16x16xf32> to vector<16x16xf32>
    %231 = vector.broadcast %228 : f32 to vector<16x16xf32>
    %232 = arith.mulf %231, %230 : vector<16x16xf32>
    %233 = arith.addf %227, %232 : vector<16x16xf32>
    %c37 = arith.constant 37 : index
    %234 = memref.load %arg1[%c37] : memref<144xf32, #tpu.memory_space<smem>>
    %c0_158 = arith.constant 0 : index
    %c0_159 = arith.constant 0 : index
    %c0_160 = arith.constant 0 : index
    %c1_161 = arith.constant 1 : index
    %235 = vector.load %arg5[%c0_158, %c0_159, %c0_160, %c1_161] : memref<1x4x18x18xf32, #tpu.memory_space<vmem>>, vector<1x1x16x16xf32>
    %236 = vector.shape_cast %235 : vector<1x1x16x16xf32> to vector<16x16xf32>
    %237 = vector.broadcast %234 : f32 to vector<16x16xf32>
    %238 = arith.mulf %237, %236 : vector<16x16xf32>
    %239 = arith.addf %233, %238 : vector<16x16xf32>
    %c38 = arith.constant 38 : index
    %240 = memref.load %arg1[%c38] : memref<144xf32, #tpu.memory_space<smem>>
    %c0_162 = arith.constant 0 : index
    %c0_163 = arith.constant 0 : index
    %c0_164 = arith.constant 0 : index
    %c2_165 = arith.constant 2 : index
    %241 = vector.load %arg5[%c0_162, %c0_163, %c0_164, %c2_165] : memref<1x4x18x18xf32, #tpu.memory_space<vmem>>, vector<1x1x16x16xf32>
    %242 = vector.shape_cast %241 : vector<1x1x16x16xf32> to vector<16x16xf32>
    %243 = vector.broadcast %240 : f32 to vector<16x16xf32>
    %244 = arith.mulf %243, %242 : vector<16x16xf32>
    %245 = arith.addf %239, %244 : vector<16x16xf32>
    %c39 = arith.constant 39 : index
    %246 = memref.load %arg1[%c39] : memref<144xf32, #tpu.memory_space<smem>>
    %c0_166 = arith.constant 0 : index
    %c0_167 = arith.constant 0 : index
    %c1_168 = arith.constant 1 : index
    %c0_169 = arith.constant 0 : index
    %247 = vector.load %arg5[%c0_166, %c0_167, %c1_168, %c0_169] : memref<1x4x18x18xf32, #tpu.memory_space<vmem>>, vector<1x1x16x16xf32>
    %248 = vector.shape_cast %247 : vector<1x1x16x16xf32> to vector<16x16xf32>
    %249 = vector.broadcast %246 : f32 to vector<16x16xf32>
    %250 = arith.mulf %249, %248 : vector<16x16xf32>
    %251 = arith.addf %245, %250 : vector<16x16xf32>
    %c40 = arith.constant 40 : index
    %252 = memref.load %arg1[%c40] : memref<144xf32, #tpu.memory_space<smem>>
    %c0_170 = arith.constant 0 : index
    %c0_171 = arith.constant 0 : index
    %c1_172 = arith.constant 1 : index
    %c1_173 = arith.constant 1 : index
    %253 = vector.load %arg5[%c0_170, %c0_171, %c1_172, %c1_173] : memref<1x4x18x18xf32, #tpu.memory_space<vmem>>, vector<1x1x16x16xf32>
    %254 = vector.shape_cast %253 : vector<1x1x16x16xf32> to vector<16x16xf32>
    %255 = vector.broadcast %252 : f32 to vector<16x16xf32>
    %256 = arith.mulf %255, %254 : vector<16x16xf32>
    %257 = arith.addf %251, %256 : vector<16x16xf32>
    %c41 = arith.constant 41 : index
    %258 = memref.load %arg1[%c41] : memref<144xf32, #tpu.memory_space<smem>>
    %c0_174 = arith.constant 0 : index
    %c0_175 = arith.constant 0 : index
    %c1_176 = arith.constant 1 : index
    %c2_177 = arith.constant 2 : index
    %259 = vector.load %arg5[%c0_174, %c0_175, %c1_176, %c2_177] : memref<1x4x18x18xf32, #tpu.memory_space<vmem>>, vector<1x1x16x16xf32>
    %260 = vector.shape_cast %259 : vector<1x1x16x16xf32> to vector<16x16xf32>
    %261 = vector.broadcast %258 : f32 to vector<16x16xf32>
    %262 = arith.mulf %261, %260 : vector<16x16xf32>
    %263 = arith.addf %257, %262 : vector<16x16xf32>
    %c42 = arith.constant 42 : index
    %264 = memref.load %arg1[%c42] : memref<144xf32, #tpu.memory_space<smem>>
    %c0_178 = arith.constant 0 : index
    %c0_179 = arith.constant 0 : index
    %c2_180 = arith.constant 2 : index
    %c0_181 = arith.constant 0 : index
    %265 = vector.load %arg5[%c0_178, %c0_179, %c2_180, %c0_181] : memref<1x4x18x18xf32, #tpu.memory_space<vmem>>, vector<1x1x16x16xf32>
    %266 = vector.shape_cast %265 : vector<1x1x16x16xf32> to vector<16x16xf32>
    %267 = vector.broadcast %264 : f32 to vector<16x16xf32>
    %268 = arith.mulf %267, %266 : vector<16x16xf32>
    %269 = arith.addf %263, %268 : vector<16x16xf32>
    %c43 = arith.constant 43 : index
    %270 = memref.load %arg1[%c43] : memref<144xf32, #tpu.memory_space<smem>>
    %c0_182 = arith.constant 0 : index
    %c0_183 = arith.constant 0 : index
    %c2_184 = arith.constant 2 : index
    %c1_185 = arith.constant 1 : index
    %271 = vector.load %arg5[%c0_182, %c0_183, %c2_184, %c1_185] : memref<1x4x18x18xf32, #tpu.memory_space<vmem>>, vector<1x1x16x16xf32>
    %272 = vector.shape_cast %271 : vector<1x1x16x16xf32> to vector<16x16xf32>
    %273 = vector.broadcast %270 : f32 to vector<16x16xf32>
    %274 = arith.mulf %273, %272 : vector<16x16xf32>
    %275 = arith.addf %269, %274 : vector<16x16xf32>
    %c44 = arith.constant 44 : index
    %276 = memref.load %arg1[%c44] : memref<144xf32, #tpu.memory_space<smem>>
    %c0_186 = arith.constant 0 : index
    %c0_187 = arith.constant 0 : index
    %c2_188 = arith.constant 2 : index
    %c2_189 = arith.constant 2 : index
    %277 = vector.load %arg5[%c0_186, %c0_187, %c2_188, %c2_189] : memref<1x4x18x18xf32, #tpu.memory_space<vmem>>, vector<1x1x16x16xf32>
    %278 = vector.shape_cast %277 : vector<1x1x16x16xf32> to vector<16x16xf32>
    %279 = vector.broadcast %276 : f32 to vector<16x16xf32>
    %280 = arith.mulf %279, %278 : vector<16x16xf32>
    %281 = arith.addf %275, %280 : vector<16x16xf32>
    %c45 = arith.constant 45 : index
    %282 = memref.load %arg1[%c45] : memref<144xf32, #tpu.memory_space<smem>>
    %c0_190 = arith.constant 0 : index
    %c1_191 = arith.constant 1 : index
    %c0_192 = arith.constant 0 : index
    %c0_193 = arith.constant 0 : index
    %283 = vector.load %arg5[%c0_190, %c1_191, %c0_192, %c0_193] : memref<1x4x18x18xf32, #tpu.memory_space<vmem>>, vector<1x1x16x16xf32>
    %284 = vector.shape_cast %283 : vector<1x1x16x16xf32> to vector<16x16xf32>
    %285 = vector.broadcast %282 : f32 to vector<16x16xf32>
    %286 = arith.mulf %285, %284 : vector<16x16xf32>
    %287 = arith.addf %281, %286 : vector<16x16xf32>
    %c46 = arith.constant 46 : index
    %288 = memref.load %arg1[%c46] : memref<144xf32, #tpu.memory_space<smem>>
    %c0_194 = arith.constant 0 : index
    %c1_195 = arith.constant 1 : index
    %c0_196 = arith.constant 0 : index
    %c1_197 = arith.constant 1 : index
    %289 = vector.load %arg5[%c0_194, %c1_195, %c0_196, %c1_197] : memref<1x4x18x18xf32, #tpu.memory_space<vmem>>, vector<1x1x16x16xf32>
    %290 = vector.shape_cast %289 : vector<1x1x16x16xf32> to vector<16x16xf32>
    %291 = vector.broadcast %288 : f32 to vector<16x16xf32>
    %292 = arith.mulf %291, %290 : vector<16x16xf32>
    %293 = arith.addf %287, %292 : vector<16x16xf32>
    %c47 = arith.constant 47 : index
    %294 = memref.load %arg1[%c47] : memref<144xf32, #tpu.memory_space<smem>>
    %c0_198 = arith.constant 0 : index
    %c1_199 = arith.constant 1 : index
    %c0_200 = arith.constant 0 : index
    %c2_201 = arith.constant 2 : index
    %295 = vector.load %arg5[%c0_198, %c1_199, %c0_200, %c2_201] : memref<1x4x18x18xf32, #tpu.memory_space<vmem>>, vector<1x1x16x16xf32>
    %296 = vector.shape_cast %295 : vector<1x1x16x16xf32> to vector<16x16xf32>
    %297 = vector.broadcast %294 : f32 to vector<16x16xf32>
    %298 = arith.mulf %297, %296 : vector<16x16xf32>
    %299 = arith.addf %293, %298 : vector<16x16xf32>
    %c48 = arith.constant 48 : index
    %300 = memref.load %arg1[%c48] : memref<144xf32, #tpu.memory_space<smem>>
    %c0_202 = arith.constant 0 : index
    %c1_203 = arith.constant 1 : index
    %c1_204 = arith.constant 1 : index
    %c0_205 = arith.constant 0 : index
    %301 = vector.load %arg5[%c0_202, %c1_203, %c1_204, %c0_205] : memref<1x4x18x18xf32, #tpu.memory_space<vmem>>, vector<1x1x16x16xf32>
    %302 = vector.shape_cast %301 : vector<1x1x16x16xf32> to vector<16x16xf32>
    %303 = vector.broadcast %300 : f32 to vector<16x16xf32>
    %304 = arith.mulf %303, %302 : vector<16x16xf32>
    %305 = arith.addf %299, %304 : vector<16x16xf32>
    %c49 = arith.constant 49 : index
    %306 = memref.load %arg1[%c49] : memref<144xf32, #tpu.memory_space<smem>>
    %c0_206 = arith.constant 0 : index
    %c1_207 = arith.constant 1 : index
    %c1_208 = arith.constant 1 : index
    %c1_209 = arith.constant 1 : index
    %307 = vector.load %arg5[%c0_206, %c1_207, %c1_208, %c1_209] : memref<1x4x18x18xf32, #tpu.memory_space<vmem>>, vector<1x1x16x16xf32>
    %308 = vector.shape_cast %307 : vector<1x1x16x16xf32> to vector<16x16xf32>
    %309 = vector.broadcast %306 : f32 to vector<16x16xf32>
    %310 = arith.mulf %309, %308 : vector<16x16xf32>
    %311 = arith.addf %305, %310 : vector<16x16xf32>
    %c50 = arith.constant 50 : index
    %312 = memref.load %arg1[%c50] : memref<144xf32, #tpu.memory_space<smem>>
    %c0_210 = arith.constant 0 : index
    %c1_211 = arith.constant 1 : index
    %c1_212 = arith.constant 1 : index
    %c2_213 = arith.constant 2 : index
    %313 = vector.load %arg5[%c0_210, %c1_211, %c1_212, %c2_213] : memref<1x4x18x18xf32, #tpu.memory_space<vmem>>, vector<1x1x16x16xf32>
    %314 = vector.shape_cast %313 : vector<1x1x16x16xf32> to vector<16x16xf32>
    %315 = vector.broadcast %312 : f32 to vector<16x16xf32>
    %316 = arith.mulf %315, %314 : vector<16x16xf32>
    %317 = arith.addf %311, %316 : vector<16x16xf32>
    %c51 = arith.constant 51 : index
    %318 = memref.load %arg1[%c51] : memref<144xf32, #tpu.memory_space<smem>>
    %c0_214 = arith.constant 0 : index
    %c1_215 = arith.constant 1 : index
    %c2_216 = arith.constant 2 : index
    %c0_217 = arith.constant 0 : index
    %319 = vector.load %arg5[%c0_214, %c1_215, %c2_216, %c0_217] : memref<1x4x18x18xf32, #tpu.memory_space<vmem>>, vector<1x1x16x16xf32>
    %320 = vector.shape_cast %319 : vector<1x1x16x16xf32> to vector<16x16xf32>
    %321 = vector.broadcast %318 : f32 to vector<16x16xf32>
    %322 = arith.mulf %321, %320 : vector<16x16xf32>
    %323 = arith.addf %317, %322 : vector<16x16xf32>
    %c52 = arith.constant 52 : index
    %324 = memref.load %arg1[%c52] : memref<144xf32, #tpu.memory_space<smem>>
    %c0_218 = arith.constant 0 : index
    %c1_219 = arith.constant 1 : index
    %c2_220 = arith.constant 2 : index
    %c1_221 = arith.constant 1 : index
    %325 = vector.load %arg5[%c0_218, %c1_219, %c2_220, %c1_221] : memref<1x4x18x18xf32, #tpu.memory_space<vmem>>, vector<1x1x16x16xf32>
    %326 = vector.shape_cast %325 : vector<1x1x16x16xf32> to vector<16x16xf32>
    %327 = vector.broadcast %324 : f32 to vector<16x16xf32>
    %328 = arith.mulf %327, %326 : vector<16x16xf32>
    %329 = arith.addf %323, %328 : vector<16x16xf32>
    %c53 = arith.constant 53 : index
    %330 = memref.load %arg1[%c53] : memref<144xf32, #tpu.memory_space<smem>>
    %c0_222 = arith.constant 0 : index
    %c1_223 = arith.constant 1 : index
    %c2_224 = arith.constant 2 : index
    %c2_225 = arith.constant 2 : index
    %331 = vector.load %arg5[%c0_222, %c1_223, %c2_224, %c2_225] : memref<1x4x18x18xf32, #tpu.memory_space<vmem>>, vector<1x1x16x16xf32>
    %332 = vector.shape_cast %331 : vector<1x1x16x16xf32> to vector<16x16xf32>
    %333 = vector.broadcast %330 : f32 to vector<16x16xf32>
    %334 = arith.mulf %333, %332 : vector<16x16xf32>
    %335 = arith.addf %329, %334 : vector<16x16xf32>
    %c54 = arith.constant 54 : index
    %336 = memref.load %arg1[%c54] : memref<144xf32, #tpu.memory_space<smem>>
    %c0_226 = arith.constant 0 : index
    %c2_227 = arith.constant 2 : index
    %c0_228 = arith.constant 0 : index
    %c0_229 = arith.constant 0 : index
    %337 = vector.load %arg5[%c0_226, %c2_227, %c0_228, %c0_229] : memref<1x4x18x18xf32, #tpu.memory_space<vmem>>, vector<1x1x16x16xf32>
    %338 = vector.shape_cast %337 : vector<1x1x16x16xf32> to vector<16x16xf32>
    %339 = vector.broadcast %336 : f32 to vector<16x16xf32>
    %340 = arith.mulf %339, %338 : vector<16x16xf32>
    %341 = arith.addf %335, %340 : vector<16x16xf32>
    %c55 = arith.constant 55 : index
    %342 = memref.load %arg1[%c55] : memref<144xf32, #tpu.memory_space<smem>>
    %c0_230 = arith.constant 0 : index
    %c2_231 = arith.constant 2 : index
    %c0_232 = arith.constant 0 : index
    %c1_233 = arith.constant 1 : index
    %343 = vector.load %arg5[%c0_230, %c2_231, %c0_232, %c1_233] : memref<1x4x18x18xf32, #tpu.memory_space<vmem>>, vector<1x1x16x16xf32>
    %344 = vector.shape_cast %343 : vector<1x1x16x16xf32> to vector<16x16xf32>
    %345 = vector.broadcast %342 : f32 to vector<16x16xf32>
    %346 = arith.mulf %345, %344 : vector<16x16xf32>
    %347 = arith.addf %341, %346 : vector<16x16xf32>
    %c56 = arith.constant 56 : index
    %348 = memref.load %arg1[%c56] : memref<144xf32, #tpu.memory_space<smem>>
    %c0_234 = arith.constant 0 : index
    %c2_235 = arith.constant 2 : index
    %c0_236 = arith.constant 0 : index
    %c2_237 = arith.constant 2 : index
    %349 = vector.load %arg5[%c0_234, %c2_235, %c0_236, %c2_237] : memref<1x4x18x18xf32, #tpu.memory_space<vmem>>, vector<1x1x16x16xf32>
    %350 = vector.shape_cast %349 : vector<1x1x16x16xf32> to vector<16x16xf32>
    %351 = vector.broadcast %348 : f32 to vector<16x16xf32>
    %352 = arith.mulf %351, %350 : vector<16x16xf32>
    %353 = arith.addf %347, %352 : vector<16x16xf32>
    %c57 = arith.constant 57 : index
    %354 = memref.load %arg1[%c57] : memref<144xf32, #tpu.memory_space<smem>>
    %c0_238 = arith.constant 0 : index
    %c2_239 = arith.constant 2 : index
    %c1_240 = arith.constant 1 : index
    %c0_241 = arith.constant 0 : index
    %355 = vector.load %arg5[%c0_238, %c2_239, %c1_240, %c0_241] : memref<1x4x18x18xf32, #tpu.memory_space<vmem>>, vector<1x1x16x16xf32>
    %356 = vector.shape_cast %355 : vector<1x1x16x16xf32> to vector<16x16xf32>
    %357 = vector.broadcast %354 : f32 to vector<16x16xf32>
    %358 = arith.mulf %357, %356 : vector<16x16xf32>
    %359 = arith.addf %353, %358 : vector<16x16xf32>
    %c58 = arith.constant 58 : index
    %360 = memref.load %arg1[%c58] : memref<144xf32, #tpu.memory_space<smem>>
    %c0_242 = arith.constant 0 : index
    %c2_243 = arith.constant 2 : index
    %c1_244 = arith.constant 1 : index
    %c1_245 = arith.constant 1 : index
    %361 = vector.load %arg5[%c0_242, %c2_243, %c1_244, %c1_245] : memref<1x4x18x18xf32, #tpu.memory_space<vmem>>, vector<1x1x16x16xf32>
    %362 = vector.shape_cast %361 : vector<1x1x16x16xf32> to vector<16x16xf32>
    %363 = vector.broadcast %360 : f32 to vector<16x16xf32>
    %364 = arith.mulf %363, %362 : vector<16x16xf32>
    %365 = arith.addf %359, %364 : vector<16x16xf32>
    %c59 = arith.constant 59 : index
    %366 = memref.load %arg1[%c59] : memref<144xf32, #tpu.memory_space<smem>>
    %c0_246 = arith.constant 0 : index
    %c2_247 = arith.constant 2 : index
    %c1_248 = arith.constant 1 : index
    %c2_249 = arith.constant 2 : index
    %367 = vector.load %arg5[%c0_246, %c2_247, %c1_248, %c2_249] : memref<1x4x18x18xf32, #tpu.memory_space<vmem>>, vector<1x1x16x16xf32>
    %368 = vector.shape_cast %367 : vector<1x1x16x16xf32> to vector<16x16xf32>
    %369 = vector.broadcast %366 : f32 to vector<16x16xf32>
    %370 = arith.mulf %369, %368 : vector<16x16xf32>
    %371 = arith.addf %365, %370 : vector<16x16xf32>
    %c60 = arith.constant 60 : index
    %372 = memref.load %arg1[%c60] : memref<144xf32, #tpu.memory_space<smem>>
    %c0_250 = arith.constant 0 : index
    %c2_251 = arith.constant 2 : index
    %c2_252 = arith.constant 2 : index
    %c0_253 = arith.constant 0 : index
    %373 = vector.load %arg5[%c0_250, %c2_251, %c2_252, %c0_253] : memref<1x4x18x18xf32, #tpu.memory_space<vmem>>, vector<1x1x16x16xf32>
    %374 = vector.shape_cast %373 : vector<1x1x16x16xf32> to vector<16x16xf32>
    %375 = vector.broadcast %372 : f32 to vector<16x16xf32>
    %376 = arith.mulf %375, %374 : vector<16x16xf32>
    %377 = arith.addf %371, %376 : vector<16x16xf32>
    %c61 = arith.constant 61 : index
    %378 = memref.load %arg1[%c61] : memref<144xf32, #tpu.memory_space<smem>>
    %c0_254 = arith.constant 0 : index
    %c2_255 = arith.constant 2 : index
    %c2_256 = arith.constant 2 : index
    %c1_257 = arith.constant 1 : index
    %379 = vector.load %arg5[%c0_254, %c2_255, %c2_256, %c1_257] : memref<1x4x18x18xf32, #tpu.memory_space<vmem>>, vector<1x1x16x16xf32>
    %380 = vector.shape_cast %379 : vector<1x1x16x16xf32> to vector<16x16xf32>
    %381 = vector.broadcast %378 : f32 to vector<16x16xf32>
    %382 = arith.mulf %381, %380 : vector<16x16xf32>
    %383 = arith.addf %377, %382 : vector<16x16xf32>
    %c62 = arith.constant 62 : index
    %384 = memref.load %arg1[%c62] : memref<144xf32, #tpu.memory_space<smem>>
    %c0_258 = arith.constant 0 : index
    %c2_259 = arith.constant 2 : index
    %c2_260 = arith.constant 2 : index
    %c2_261 = arith.constant 2 : index
    %385 = vector.load %arg5[%c0_258, %c2_259, %c2_260, %c2_261] : memref<1x4x18x18xf32, #tpu.memory_space<vmem>>, vector<1x1x16x16xf32>
    %386 = vector.shape_cast %385 : vector<1x1x16x16xf32> to vector<16x16xf32>
    %387 = vector.broadcast %384 : f32 to vector<16x16xf32>
    %388 = arith.mulf %387, %386 : vector<16x16xf32>
    %389 = arith.addf %383, %388 : vector<16x16xf32>
    %c63 = arith.constant 63 : index
    %390 = memref.load %arg1[%c63] : memref<144xf32, #tpu.memory_space<smem>>
    %c0_262 = arith.constant 0 : index
    %c3_263 = arith.constant 3 : index
    %c0_264 = arith.constant 0 : index
    %c0_265 = arith.constant 0 : index
    %391 = vector.load %arg5[%c0_262, %c3_263, %c0_264, %c0_265] : memref<1x4x18x18xf32, #tpu.memory_space<vmem>>, vector<1x1x16x16xf32>
    %392 = vector.shape_cast %391 : vector<1x1x16x16xf32> to vector<16x16xf32>
    %393 = vector.broadcast %390 : f32 to vector<16x16xf32>
    %394 = arith.mulf %393, %392 : vector<16x16xf32>
    %395 = arith.addf %389, %394 : vector<16x16xf32>
    %c64 = arith.constant 64 : index
    %396 = memref.load %arg1[%c64] : memref<144xf32, #tpu.memory_space<smem>>
    %c0_266 = arith.constant 0 : index
    %c3_267 = arith.constant 3 : index
    %c0_268 = arith.constant 0 : index
    %c1_269 = arith.constant 1 : index
    %397 = vector.load %arg5[%c0_266, %c3_267, %c0_268, %c1_269] : memref<1x4x18x18xf32, #tpu.memory_space<vmem>>, vector<1x1x16x16xf32>
    %398 = vector.shape_cast %397 : vector<1x1x16x16xf32> to vector<16x16xf32>
    %399 = vector.broadcast %396 : f32 to vector<16x16xf32>
    %400 = arith.mulf %399, %398 : vector<16x16xf32>
    %401 = arith.addf %395, %400 : vector<16x16xf32>
    %c65 = arith.constant 65 : index
    %402 = memref.load %arg1[%c65] : memref<144xf32, #tpu.memory_space<smem>>
    %c0_270 = arith.constant 0 : index
    %c3_271 = arith.constant 3 : index
    %c0_272 = arith.constant 0 : index
    %c2_273 = arith.constant 2 : index
    %403 = vector.load %arg5[%c0_270, %c3_271, %c0_272, %c2_273] : memref<1x4x18x18xf32, #tpu.memory_space<vmem>>, vector<1x1x16x16xf32>
    %404 = vector.shape_cast %403 : vector<1x1x16x16xf32> to vector<16x16xf32>
    %405 = vector.broadcast %402 : f32 to vector<16x16xf32>
    %406 = arith.mulf %405, %404 : vector<16x16xf32>
    %407 = arith.addf %401, %406 : vector<16x16xf32>
    %c66 = arith.constant 66 : index
    %408 = memref.load %arg1[%c66] : memref<144xf32, #tpu.memory_space<smem>>
    %c0_274 = arith.constant 0 : index
    %c3_275 = arith.constant 3 : index
    %c1_276 = arith.constant 1 : index
    %c0_277 = arith.constant 0 : index
    %409 = vector.load %arg5[%c0_274, %c3_275, %c1_276, %c0_277] : memref<1x4x18x18xf32, #tpu.memory_space<vmem>>, vector<1x1x16x16xf32>
    %410 = vector.shape_cast %409 : vector<1x1x16x16xf32> to vector<16x16xf32>
    %411 = vector.broadcast %408 : f32 to vector<16x16xf32>
    %412 = arith.mulf %411, %410 : vector<16x16xf32>
    %413 = arith.addf %407, %412 : vector<16x16xf32>
    %c67 = arith.constant 67 : index
    %414 = memref.load %arg1[%c67] : memref<144xf32, #tpu.memory_space<smem>>
    %c0_278 = arith.constant 0 : index
    %c3_279 = arith.constant 3 : index
    %c1_280 = arith.constant 1 : index
    %c1_281 = arith.constant 1 : index
    %415 = vector.load %arg5[%c0_278, %c3_279, %c1_280, %c1_281] : memref<1x4x18x18xf32, #tpu.memory_space<vmem>>, vector<1x1x16x16xf32>
    %416 = vector.shape_cast %415 : vector<1x1x16x16xf32> to vector<16x16xf32>
    %417 = vector.broadcast %414 : f32 to vector<16x16xf32>
    %418 = arith.mulf %417, %416 : vector<16x16xf32>
    %419 = arith.addf %413, %418 : vector<16x16xf32>
    %c68 = arith.constant 68 : index
    %420 = memref.load %arg1[%c68] : memref<144xf32, #tpu.memory_space<smem>>
    %c0_282 = arith.constant 0 : index
    %c3_283 = arith.constant 3 : index
    %c1_284 = arith.constant 1 : index
    %c2_285 = arith.constant 2 : index
    %421 = vector.load %arg5[%c0_282, %c3_283, %c1_284, %c2_285] : memref<1x4x18x18xf32, #tpu.memory_space<vmem>>, vector<1x1x16x16xf32>
    %422 = vector.shape_cast %421 : vector<1x1x16x16xf32> to vector<16x16xf32>
    %423 = vector.broadcast %420 : f32 to vector<16x16xf32>
    %424 = arith.mulf %423, %422 : vector<16x16xf32>
    %425 = arith.addf %419, %424 : vector<16x16xf32>
    %c69 = arith.constant 69 : index
    %426 = memref.load %arg1[%c69] : memref<144xf32, #tpu.memory_space<smem>>
    %c0_286 = arith.constant 0 : index
    %c3_287 = arith.constant 3 : index
    %c2_288 = arith.constant 2 : index
    %c0_289 = arith.constant 0 : index
    %427 = vector.load %arg5[%c0_286, %c3_287, %c2_288, %c0_289] : memref<1x4x18x18xf32, #tpu.memory_space<vmem>>, vector<1x1x16x16xf32>
    %428 = vector.shape_cast %427 : vector<1x1x16x16xf32> to vector<16x16xf32>
    %429 = vector.broadcast %426 : f32 to vector<16x16xf32>
    %430 = arith.mulf %429, %428 : vector<16x16xf32>
    %431 = arith.addf %425, %430 : vector<16x16xf32>
    %c70 = arith.constant 70 : index
    %432 = memref.load %arg1[%c70] : memref<144xf32, #tpu.memory_space<smem>>
    %c0_290 = arith.constant 0 : index
    %c3_291 = arith.constant 3 : index
    %c2_292 = arith.constant 2 : index
    %c1_293 = arith.constant 1 : index
    %433 = vector.load %arg5[%c0_290, %c3_291, %c2_292, %c1_293] : memref<1x4x18x18xf32, #tpu.memory_space<vmem>>, vector<1x1x16x16xf32>
    %434 = vector.shape_cast %433 : vector<1x1x16x16xf32> to vector<16x16xf32>
    %435 = vector.broadcast %432 : f32 to vector<16x16xf32>
    %436 = arith.mulf %435, %434 : vector<16x16xf32>
    %437 = arith.addf %431, %436 : vector<16x16xf32>
    %c71 = arith.constant 71 : index
    %438 = memref.load %arg1[%c71] : memref<144xf32, #tpu.memory_space<smem>>
    %c0_294 = arith.constant 0 : index
    %c3_295 = arith.constant 3 : index
    %c2_296 = arith.constant 2 : index
    %c2_297 = arith.constant 2 : index
    %439 = vector.load %arg5[%c0_294, %c3_295, %c2_296, %c2_297] : memref<1x4x18x18xf32, #tpu.memory_space<vmem>>, vector<1x1x16x16xf32>
    %440 = vector.shape_cast %439 : vector<1x1x16x16xf32> to vector<16x16xf32>
    %441 = vector.broadcast %438 : f32 to vector<16x16xf32>
    %442 = arith.mulf %441, %440 : vector<16x16xf32>
    %443 = arith.addf %437, %442 : vector<16x16xf32>
    %c1_298 = arith.constant 1 : index
    %444 = memref.load %arg2[%c1_298] : memref<4xf32, #tpu.memory_space<smem>>
    %445 = vector.broadcast %444 : f32 to vector<16x16xf32>
    %446 = arith.addf %443, %445 : vector<16x16xf32>
    %cst_299 = arith.constant 0.000000e+00 : f32
    %447 = vector.broadcast %cst_299 : f32 to vector<16x16xf32>
    %448 = arith.maximumf %446, %447 : vector<16x16xf32>
    %c1_300 = arith.constant 1 : index
    %c1_301 = arith.constant 1 : index
    %c1_302 = arith.constant 1 : index
    %449 = vector.load %arg7[%c1_300, %c1_301, %c1_302] : memref<4x18x18xf32, #tpu.memory_space<vmem>>, vector<1x16x16xf32>
    %450 = vector.shape_cast %449 : vector<1x16x16xf32> to vector<16x16xf32>
    %451 = vector.shape_cast %448 : vector<16x16xf32> to vector<1x16x16xf32>
    tpu.vector_store %arg7[%c1_300, %c1_301, %c1_302], %451 {strides = array<i32>} : memref<4x18x18xf32, #tpu.memory_space<vmem>>, vector<1x16x16xf32>,
    %cst_303 = arith.constant 0.000000e+00 : f32
    %452 = vector.broadcast %cst_303 : f32 to vector<16x16xf32>
    %c72 = arith.constant 72 : index
    %453 = memref.load %arg1[%c72] : memref<144xf32, #tpu.memory_space<smem>>
    %c0_304 = arith.constant 0 : index
    %c0_305 = arith.constant 0 : index
    %c0_306 = arith.constant 0 : index
    %c0_307 = arith.constant 0 : index
    %454 = vector.load %arg5[%c0_304, %c0_305, %c0_306, %c0_307] : memref<1x4x18x18xf32, #tpu.memory_space<vmem>>, vector<1x1x16x16xf32>
    %455 = vector.shape_cast %454 : vector<1x1x16x16xf32> to vector<16x16xf32>
    %456 = vector.broadcast %453 : f32 to vector<16x16xf32>
    %457 = arith.mulf %456, %455 : vector<16x16xf32>
    %458 = arith.addf %452, %457 : vector<16x16xf32>
    %c73 = arith.constant 73 : index
    %459 = memref.load %arg1[%c73] : memref<144xf32, #tpu.memory_space<smem>>
    %c0_308 = arith.constant 0 : index
    %c0_309 = arith.constant 0 : index
    %c0_310 = arith.constant 0 : index
    %c1_311 = arith.constant 1 : index
    %460 = vector.load %arg5[%c0_308, %c0_309, %c0_310, %c1_311] : memref<1x4x18x18xf32, #tpu.memory_space<vmem>>, vector<1x1x16x16xf32>
    %461 = vector.shape_cast %460 : vector<1x1x16x16xf32> to vector<16x16xf32>
    %462 = vector.broadcast %459 : f32 to vector<16x16xf32>
    %463 = arith.mulf %462, %461 : vector<16x16xf32>
    %464 = arith.addf %458, %463 : vector<16x16xf32>
    %c74 = arith.constant 74 : index
    %465 = memref.load %arg1[%c74] : memref<144xf32, #tpu.memory_space<smem>>
    %c0_312 = arith.constant 0 : index
    %c0_313 = arith.constant 0 : index
    %c0_314 = arith.constant 0 : index
    %c2_315 = arith.constant 2 : index
    %466 = vector.load %arg5[%c0_312, %c0_313, %c0_314, %c2_315] : memref<1x4x18x18xf32, #tpu.memory_space<vmem>>, vector<1x1x16x16xf32>
    %467 = vector.shape_cast %466 : vector<1x1x16x16xf32> to vector<16x16xf32>
    %468 = vector.broadcast %465 : f32 to vector<16x16xf32>
    %469 = arith.mulf %468, %467 : vector<16x16xf32>
    %470 = arith.addf %464, %469 : vector<16x16xf32>
    %c75 = arith.constant 75 : index
    %471 = memref.load %arg1[%c75] : memref<144xf32, #tpu.memory_space<smem>>
    %c0_316 = arith.constant 0 : index
    %c0_317 = arith.constant 0 : index
    %c1_318 = arith.constant 1 : index
    %c0_319 = arith.constant 0 : index
    %472 = vector.load %arg5[%c0_316, %c0_317, %c1_318, %c0_319] : memref<1x4x18x18xf32, #tpu.memory_space<vmem>>, vector<1x1x16x16xf32>
    %473 = vector.shape_cast %472 : vector<1x1x16x16xf32> to vector<16x16xf32>
    %474 = vector.broadcast %471 : f32 to vector<16x16xf32>
    %475 = arith.mulf %474, %473 : vector<16x16xf32>
    %476 = arith.addf %470, %475 : vector<16x16xf32>
    %c76 = arith.constant 76 : index
    %477 = memref.load %arg1[%c76] : memref<144xf32, #tpu.memory_space<smem>>
    %c0_320 = arith.constant 0 : index
    %c0_321 = arith.constant 0 : index
    %c1_322 = arith.constant 1 : index
    %c1_323 = arith.constant 1 : index
    %478 = vector.load %arg5[%c0_320, %c0_321, %c1_322, %c1_323] : memref<1x4x18x18xf32, #tpu.memory_space<vmem>>, vector<1x1x16x16xf32>
    %479 = vector.shape_cast %478 : vector<1x1x16x16xf32> to vector<16x16xf32>
    %480 = vector.broadcast %477 : f32 to vector<16x16xf32>
    %481 = arith.mulf %480, %479 : vector<16x16xf32>
    %482 = arith.addf %476, %481 : vector<16x16xf32>
    %c77 = arith.constant 77 : index
    %483 = memref.load %arg1[%c77] : memref<144xf32, #tpu.memory_space<smem>>
    %c0_324 = arith.constant 0 : index
    %c0_325 = arith.constant 0 : index
    %c1_326 = arith.constant 1 : index
    %c2_327 = arith.constant 2 : index
    %484 = vector.load %arg5[%c0_324, %c0_325, %c1_326, %c2_327] : memref<1x4x18x18xf32, #tpu.memory_space<vmem>>, vector<1x1x16x16xf32>
    %485 = vector.shape_cast %484 : vector<1x1x16x16xf32> to vector<16x16xf32>
    %486 = vector.broadcast %483 : f32 to vector<16x16xf32>
    %487 = arith.mulf %486, %485 : vector<16x16xf32>
    %488 = arith.addf %482, %487 : vector<16x16xf32>
    %c78 = arith.constant 78 : index
    %489 = memref.load %arg1[%c78] : memref<144xf32, #tpu.memory_space<smem>>
    %c0_328 = arith.constant 0 : index
    %c0_329 = arith.constant 0 : index
    %c2_330 = arith.constant 2 : index
    %c0_331 = arith.constant 0 : index
    %490 = vector.load %arg5[%c0_328, %c0_329, %c2_330, %c0_331] : memref<1x4x18x18xf32, #tpu.memory_space<vmem>>, vector<1x1x16x16xf32>
    %491 = vector.shape_cast %490 : vector<1x1x16x16xf32> to vector<16x16xf32>
    %492 = vector.broadcast %489 : f32 to vector<16x16xf32>
    %493 = arith.mulf %492, %491 : vector<16x16xf32>
    %494 = arith.addf %488, %493 : vector<16x16xf32>
    %c79 = arith.constant 79 : index
    %495 = memref.load %arg1[%c79] : memref<144xf32, #tpu.memory_space<smem>>
    %c0_332 = arith.constant 0 : index
    %c0_333 = arith.constant 0 : index
    %c2_334 = arith.constant 2 : index
    %c1_335 = arith.constant 1 : index
    %496 = vector.load %arg5[%c0_332, %c0_333, %c2_334, %c1_335] : memref<1x4x18x18xf32, #tpu.memory_space<vmem>>, vector<1x1x16x16xf32>
    %497 = vector.shape_cast %496 : vector<1x1x16x16xf32> to vector<16x16xf32>
    %498 = vector.broadcast %495 : f32 to vector<16x16xf32>
    %499 = arith.mulf %498, %497 : vector<16x16xf32>
    %500 = arith.addf %494, %499 : vector<16x16xf32>
    %c80 = arith.constant 80 : index
    %501 = memref.load %arg1[%c80] : memref<144xf32, #tpu.memory_space<smem>>
    %c0_336 = arith.constant 0 : index
    %c0_337 = arith.constant 0 : index
    %c2_338 = arith.constant 2 : index
    %c2_339 = arith.constant 2 : index
    %502 = vector.load %arg5[%c0_336, %c0_337, %c2_338, %c2_339] : memref<1x4x18x18xf32, #tpu.memory_space<vmem>>, vector<1x1x16x16xf32>
    %503 = vector.shape_cast %502 : vector<1x1x16x16xf32> to vector<16x16xf32>
    %504 = vector.broadcast %501 : f32 to vector<16x16xf32>
    %505 = arith.mulf %504, %503 : vector<16x16xf32>
    %506 = arith.addf %500, %505 : vector<16x16xf32>
    %c81 = arith.constant 81 : index
    %507 = memref.load %arg1[%c81] : memref<144xf32, #tpu.memory_space<smem>>
    %c0_340 = arith.constant 0 : index
    %c1_341 = arith.constant 1 : index
    %c0_342 = arith.constant 0 : index
    %c0_343 = arith.constant 0 : index
    %508 = vector.load %arg5[%c0_340, %c1_341, %c0_342, %c0_343] : memref<1x4x18x18xf32, #tpu.memory_space<vmem>>, vector<1x1x16x16xf32>
    %509 = vector.shape_cast %508 : vector<1x1x16x16xf32> to vector<16x16xf32>
    %510 = vector.broadcast %507 : f32 to vector<16x16xf32>
    %511 = arith.mulf %510, %509 : vector<16x16xf32>
    %512 = arith.addf %506, %511 : vector<16x16xf32>
    %c82 = arith.constant 82 : index
    %513 = memref.load %arg1[%c82] : memref<144xf32, #tpu.memory_space<smem>>
    %c0_344 = arith.constant 0 : index
    %c1_345 = arith.constant 1 : index
    %c0_346 = arith.constant 0 : index
    %c1_347 = arith.constant 1 : index
    %514 = vector.load %arg5[%c0_344, %c1_345, %c0_346, %c1_347] : memref<1x4x18x18xf32, #tpu.memory_space<vmem>>, vector<1x1x16x16xf32>
    %515 = vector.shape_cast %514 : vector<1x1x16x16xf32> to vector<16x16xf32>
    %516 = vector.broadcast %513 : f32 to vector<16x16xf32>
    %517 = arith.mulf %516, %515 : vector<16x16xf32>
    %518 = arith.addf %512, %517 : vector<16x16xf32>
    %c83 = arith.constant 83 : index
    %519 = memref.load %arg1[%c83] : memref<144xf32, #tpu.memory_space<smem>>
    %c0_348 = arith.constant 0 : index
    %c1_349 = arith.constant 1 : index
    %c0_350 = arith.constant 0 : index
    %c2_351 = arith.constant 2 : index
    %520 = vector.load %arg5[%c0_348, %c1_349, %c0_350, %c2_351] : memref<1x4x18x18xf32, #tpu.memory_space<vmem>>, vector<1x1x16x16xf32>
    %521 = vector.shape_cast %520 : vector<1x1x16x16xf32> to vector<16x16xf32>
    %522 = vector.broadcast %519 : f32 to vector<16x16xf32>
    %523 = arith.mulf %522, %521 : vector<16x16xf32>
    %524 = arith.addf %518, %523 : vector<16x16xf32>
    %c84 = arith.constant 84 : index
    %525 = memref.load %arg1[%c84] : memref<144xf32, #tpu.memory_space<smem>>
    %c0_352 = arith.constant 0 : index
    %c1_353 = arith.constant 1 : index
    %c1_354 = arith.constant 1 : index
    %c0_355 = arith.constant 0 : index
    %526 = vector.load %arg5[%c0_352, %c1_353, %c1_354, %c0_355] : memref<1x4x18x18xf32, #tpu.memory_space<vmem>>, vector<1x1x16x16xf32>
    %527 = vector.shape_cast %526 : vector<1x1x16x16xf32> to vector<16x16xf32>
    %528 = vector.broadcast %525 : f32 to vector<16x16xf32>
    %529 = arith.mulf %528, %527 : vector<16x16xf32>
    %530 = arith.addf %524, %529 : vector<16x16xf32>
    %c85 = arith.constant 85 : index
    %531 = memref.load %arg1[%c85] : memref<144xf32, #tpu.memory_space<smem>>
    %c0_356 = arith.constant 0 : index
    %c1_357 = arith.constant 1 : index
    %c1_358 = arith.constant 1 : index
    %c1_359 = arith.constant 1 : index
    %532 = vector.load %arg5[%c0_356, %c1_357, %c1_358, %c1_359] : memref<1x4x18x18xf32, #tpu.memory_space<vmem>>, vector<1x1x16x16xf32>
    %533 = vector.shape_cast %532 : vector<1x1x16x16xf32> to vector<16x16xf32>
    %534 = vector.broadcast %531 : f32 to vector<16x16xf32>
    %535 = arith.mulf %534, %533 : vector<16x16xf32>
    %536 = arith.addf %530, %535 : vector<16x16xf32>
    %c86 = arith.constant 86 : index
    %537 = memref.load %arg1[%c86] : memref<144xf32, #tpu.memory_space<smem>>
    %c0_360 = arith.constant 0 : index
    %c1_361 = arith.constant 1 : index
    %c1_362 = arith.constant 1 : index
    %c2_363 = arith.constant 2 : index
    %538 = vector.load %arg5[%c0_360, %c1_361, %c1_362, %c2_363] : memref<1x4x18x18xf32, #tpu.memory_space<vmem>>, vector<1x1x16x16xf32>
    %539 = vector.shape_cast %538 : vector<1x1x16x16xf32> to vector<16x16xf32>
    %540 = vector.broadcast %537 : f32 to vector<16x16xf32>
    %541 = arith.mulf %540, %539 : vector<16x16xf32>
    %542 = arith.addf %536, %541 : vector<16x16xf32>
    %c87 = arith.constant 87 : index
    %543 = memref.load %arg1[%c87] : memref<144xf32, #tpu.memory_space<smem>>
    %c0_364 = arith.constant 0 : index
    %c1_365 = arith.constant 1 : index
    %c2_366 = arith.constant 2 : index
    %c0_367 = arith.constant 0 : index
    %544 = vector.load %arg5[%c0_364, %c1_365, %c2_366, %c0_367] : memref<1x4x18x18xf32, #tpu.memory_space<vmem>>, vector<1x1x16x16xf32>
    %545 = vector.shape_cast %544 : vector<1x1x16x16xf32> to vector<16x16xf32>
    %546 = vector.broadcast %543 : f32 to vector<16x16xf32>
    %547 = arith.mulf %546, %545 : vector<16x16xf32>
    %548 = arith.addf %542, %547 : vector<16x16xf32>
    %c88 = arith.constant 88 : index
    %549 = memref.load %arg1[%c88] : memref<144xf32, #tpu.memory_space<smem>>
    %c0_368 = arith.constant 0 : index
    %c1_369 = arith.constant 1 : index
    %c2_370 = arith.constant 2 : index
    %c1_371 = arith.constant 1 : index
    %550 = vector.load %arg5[%c0_368, %c1_369, %c2_370, %c1_371] : memref<1x4x18x18xf32, #tpu.memory_space<vmem>>, vector<1x1x16x16xf32>
    %551 = vector.shape_cast %550 : vector<1x1x16x16xf32> to vector<16x16xf32>
    %552 = vector.broadcast %549 : f32 to vector<16x16xf32>
    %553 = arith.mulf %552, %551 : vector<16x16xf32>
    %554 = arith.addf %548, %553 : vector<16x16xf32>
    %c89 = arith.constant 89 : index
    %555 = memref.load %arg1[%c89] : memref<144xf32, #tpu.memory_space<smem>>
    %c0_372 = arith.constant 0 : index
    %c1_373 = arith.constant 1 : index
    %c2_374 = arith.constant 2 : index
    %c2_375 = arith.constant 2 : index
    %556 = vector.load %arg5[%c0_372, %c1_373, %c2_374, %c2_375] : memref<1x4x18x18xf32, #tpu.memory_space<vmem>>, vector<1x1x16x16xf32>
    %557 = vector.shape_cast %556 : vector<1x1x16x16xf32> to vector<16x16xf32>
    %558 = vector.broadcast %555 : f32 to vector<16x16xf32>
    %559 = arith.mulf %558, %557 : vector<16x16xf32>
    %560 = arith.addf %554, %559 : vector<16x16xf32>
    %c90 = arith.constant 90 : index
    %561 = memref.load %arg1[%c90] : memref<144xf32, #tpu.memory_space<smem>>
    %c0_376 = arith.constant 0 : index
    %c2_377 = arith.constant 2 : index
    %c0_378 = arith.constant 0 : index
    %c0_379 = arith.constant 0 : index
    %562 = vector.load %arg5[%c0_376, %c2_377, %c0_378, %c0_379] : memref<1x4x18x18xf32, #tpu.memory_space<vmem>>, vector<1x1x16x16xf32>
    %563 = vector.shape_cast %562 : vector<1x1x16x16xf32> to vector<16x16xf32>
    %564 = vector.broadcast %561 : f32 to vector<16x16xf32>
    %565 = arith.mulf %564, %563 : vector<16x16xf32>
    %566 = arith.addf %560, %565 : vector<16x16xf32>
    %c91 = arith.constant 91 : index
    %567 = memref.load %arg1[%c91] : memref<144xf32, #tpu.memory_space<smem>>
    %c0_380 = arith.constant 0 : index
    %c2_381 = arith.constant 2 : index
    %c0_382 = arith.constant 0 : index
    %c1_383 = arith.constant 1 : index
    %568 = vector.load %arg5[%c0_380, %c2_381, %c0_382, %c1_383] : memref<1x4x18x18xf32, #tpu.memory_space<vmem>>, vector<1x1x16x16xf32>
    %569 = vector.shape_cast %568 : vector<1x1x16x16xf32> to vector<16x16xf32>
    %570 = vector.broadcast %567 : f32 to vector<16x16xf32>
    %571 = arith.mulf %570, %569 : vector<16x16xf32>
    %572 = arith.addf %566, %571 : vector<16x16xf32>
    %c92 = arith.constant 92 : index
    %573 = memref.load %arg1[%c92] : memref<144xf32, #tpu.memory_space<smem>>
    %c0_384 = arith.constant 0 : index
    %c2_385 = arith.constant 2 : index
    %c0_386 = arith.constant 0 : index
    %c2_387 = arith.constant 2 : index
    %574 = vector.load %arg5[%c0_384, %c2_385, %c0_386, %c2_387] : memref<1x4x18x18xf32, #tpu.memory_space<vmem>>, vector<1x1x16x16xf32>
    %575 = vector.shape_cast %574 : vector<1x1x16x16xf32> to vector<16x16xf32>
    %576 = vector.broadcast %573 : f32 to vector<16x16xf32>
    %577 = arith.mulf %576, %575 : vector<16x16xf32>
    %578 = arith.addf %572, %577 : vector<16x16xf32>
    %c93 = arith.constant 93 : index
    %579 = memref.load %arg1[%c93] : memref<144xf32, #tpu.memory_space<smem>>
    %c0_388 = arith.constant 0 : index
    %c2_389 = arith.constant 2 : index
    %c1_390 = arith.constant 1 : index
    %c0_391 = arith.constant 0 : index
    %580 = vector.load %arg5[%c0_388, %c2_389, %c1_390, %c0_391] : memref<1x4x18x18xf32, #tpu.memory_space<vmem>>, vector<1x1x16x16xf32>
    %581 = vector.shape_cast %580 : vector<1x1x16x16xf32> to vector<16x16xf32>
    %582 = vector.broadcast %579 : f32 to vector<16x16xf32>
    %583 = arith.mulf %582, %581 : vector<16x16xf32>
    %584 = arith.addf %578, %583 : vector<16x16xf32>
    %c94 = arith.constant 94 : index
    %585 = memref.load %arg1[%c94] : memref<144xf32, #tpu.memory_space<smem>>
    %c0_392 = arith.constant 0 : index
    %c2_393 = arith.constant 2 : index
    %c1_394 = arith.constant 1 : index
    %c1_395 = arith.constant 1 : index
    %586 = vector.load %arg5[%c0_392, %c2_393, %c1_394, %c1_395] : memref<1x4x18x18xf32, #tpu.memory_space<vmem>>, vector<1x1x16x16xf32>
    %587 = vector.shape_cast %586 : vector<1x1x16x16xf32> to vector<16x16xf32>
    %588 = vector.broadcast %585 : f32 to vector<16x16xf32>
    %589 = arith.mulf %588, %587 : vector<16x16xf32>
    %590 = arith.addf %584, %589 : vector<16x16xf32>
    %c95 = arith.constant 95 : index
    %591 = memref.load %arg1[%c95] : memref<144xf32, #tpu.memory_space<smem>>
    %c0_396 = arith.constant 0 : index
    %c2_397 = arith.constant 2 : index
    %c1_398 = arith.constant 1 : index
    %c2_399 = arith.constant 2 : index
    %592 = vector.load %arg5[%c0_396, %c2_397, %c1_398, %c2_399] : memref<1x4x18x18xf32, #tpu.memory_space<vmem>>, vector<1x1x16x16xf32>
    %593 = vector.shape_cast %592 : vector<1x1x16x16xf32> to vector<16x16xf32>
    %594 = vector.broadcast %591 : f32 to vector<16x16xf32>
    %595 = arith.mulf %594, %593 : vector<16x16xf32>
    %596 = arith.addf %590, %595 : vector<16x16xf32>
    %c96 = arith.constant 96 : index
    %597 = memref.load %arg1[%c96] : memref<144xf32, #tpu.memory_space<smem>>
    %c0_400 = arith.constant 0 : index
    %c2_401 = arith.constant 2 : index
    %c2_402 = arith.constant 2 : index
    %c0_403 = arith.constant 0 : index
    %598 = vector.load %arg5[%c0_400, %c2_401, %c2_402, %c0_403] : memref<1x4x18x18xf32, #tpu.memory_space<vmem>>, vector<1x1x16x16xf32>
    %599 = vector.shape_cast %598 : vector<1x1x16x16xf32> to vector<16x16xf32>
    %600 = vector.broadcast %597 : f32 to vector<16x16xf32>
    %601 = arith.mulf %600, %599 : vector<16x16xf32>
    %602 = arith.addf %596, %601 : vector<16x16xf32>
    %c97 = arith.constant 97 : index
    %603 = memref.load %arg1[%c97] : memref<144xf32, #tpu.memory_space<smem>>
    %c0_404 = arith.constant 0 : index
    %c2_405 = arith.constant 2 : index
    %c2_406 = arith.constant 2 : index
    %c1_407 = arith.constant 1 : index
    %604 = vector.load %arg5[%c0_404, %c2_405, %c2_406, %c1_407] : memref<1x4x18x18xf32, #tpu.memory_space<vmem>>, vector<1x1x16x16xf32>
    %605 = vector.shape_cast %604 : vector<1x1x16x16xf32> to vector<16x16xf32>
    %606 = vector.broadcast %603 : f32 to vector<16x16xf32>
    %607 = arith.mulf %606, %605 : vector<16x16xf32>
    %608 = arith.addf %602, %607 : vector<16x16xf32>
    %c98 = arith.constant 98 : index
    %609 = memref.load %arg1[%c98] : memref<144xf32, #tpu.memory_space<smem>>
    %c0_408 = arith.constant 0 : index
    %c2_409 = arith.constant 2 : index
    %c2_410 = arith.constant 2 : index
    %c2_411 = arith.constant 2 : index
    %610 = vector.load %arg5[%c0_408, %c2_409, %c2_410, %c2_411] : memref<1x4x18x18xf32, #tpu.memory_space<vmem>>, vector<1x1x16x16xf32>
    %611 = vector.shape_cast %610 : vector<1x1x16x16xf32> to vector<16x16xf32>
    %612 = vector.broadcast %609 : f32 to vector<16x16xf32>
    %613 = arith.mulf %612, %611 : vector<16x16xf32>
    %614 = arith.addf %608, %613 : vector<16x16xf32>
    %c99 = arith.constant 99 : index
    %615 = memref.load %arg1[%c99] : memref<144xf32, #tpu.memory_space<smem>>
    %c0_412 = arith.constant 0 : index
    %c3_413 = arith.constant 3 : index
    %c0_414 = arith.constant 0 : index
    %c0_415 = arith.constant 0 : index
    %616 = vector.load %arg5[%c0_412, %c3_413, %c0_414, %c0_415] : memref<1x4x18x18xf32, #tpu.memory_space<vmem>>, vector<1x1x16x16xf32>
    %617 = vector.shape_cast %616 : vector<1x1x16x16xf32> to vector<16x16xf32>
    %618 = vector.broadcast %615 : f32 to vector<16x16xf32>
    %619 = arith.mulf %618, %617 : vector<16x16xf32>
    %620 = arith.addf %614, %619 : vector<16x16xf32>
    %c100 = arith.constant 100 : index
    %621 = memref.load %arg1[%c100] : memref<144xf32, #tpu.memory_space<smem>>
    %c0_416 = arith.constant 0 : index
    %c3_417 = arith.constant 3 : index
    %c0_418 = arith.constant 0 : index
    %c1_419 = arith.constant 1 : index
    %622 = vector.load %arg5[%c0_416, %c3_417, %c0_418, %c1_419] : memref<1x4x18x18xf32, #tpu.memory_space<vmem>>, vector<1x1x16x16xf32>
    %623 = vector.shape_cast %622 : vector<1x1x16x16xf32> to vector<16x16xf32>
    %624 = vector.broadcast %621 : f32 to vector<16x16xf32>
    %625 = arith.mulf %624, %623 : vector<16x16xf32>
    %626 = arith.addf %620, %625 : vector<16x16xf32>
    %c101 = arith.constant 101 : index
    %627 = memref.load %arg1[%c101] : memref<144xf32, #tpu.memory_space<smem>>
    %c0_420 = arith.constant 0 : index
    %c3_421 = arith.constant 3 : index
    %c0_422 = arith.constant 0 : index
    %c2_423 = arith.constant 2 : index
    %628 = vector.load %arg5[%c0_420, %c3_421, %c0_422, %c2_423] : memref<1x4x18x18xf32, #tpu.memory_space<vmem>>, vector<1x1x16x16xf32>
    %629 = vector.shape_cast %628 : vector<1x1x16x16xf32> to vector<16x16xf32>
    %630 = vector.broadcast %627 : f32 to vector<16x16xf32>
    %631 = arith.mulf %630, %629 : vector<16x16xf32>
    %632 = arith.addf %626, %631 : vector<16x16xf32>
    %c102 = arith.constant 102 : index
    %633 = memref.load %arg1[%c102] : memref<144xf32, #tpu.memory_space<smem>>
    %c0_424 = arith.constant 0 : index
    %c3_425 = arith.constant 3 : index
    %c1_426 = arith.constant 1 : index
    %c0_427 = arith.constant 0 : index
    %634 = vector.load %arg5[%c0_424, %c3_425, %c1_426, %c0_427] : memref<1x4x18x18xf32, #tpu.memory_space<vmem>>, vector<1x1x16x16xf32>
    %635 = vector.shape_cast %634 : vector<1x1x16x16xf32> to vector<16x16xf32>
    %636 = vector.broadcast %633 : f32 to vector<16x16xf32>
    %637 = arith.mulf %636, %635 : vector<16x16xf32>
    %638 = arith.addf %632, %637 : vector<16x16xf32>
    %c103 = arith.constant 103 : index
    %639 = memref.load %arg1[%c103] : memref<144xf32, #tpu.memory_space<smem>>
    %c0_428 = arith.constant 0 : index
    %c3_429 = arith.constant 3 : index
    %c1_430 = arith.constant 1 : index
    %c1_431 = arith.constant 1 : index
    %640 = vector.load %arg5[%c0_428, %c3_429, %c1_430, %c1_431] : memref<1x4x18x18xf32, #tpu.memory_space<vmem>>, vector<1x1x16x16xf32>
    %641 = vector.shape_cast %640 : vector<1x1x16x16xf32> to vector<16x16xf32>
    %642 = vector.broadcast %639 : f32 to vector<16x16xf32>
    %643 = arith.mulf %642, %641 : vector<16x16xf32>
    %644 = arith.addf %638, %643 : vector<16x16xf32>
    %c104 = arith.constant 104 : index
    %645 = memref.load %arg1[%c104] : memref<144xf32, #tpu.memory_space<smem>>
    %c0_432 = arith.constant 0 : index
    %c3_433 = arith.constant 3 : index
    %c1_434 = arith.constant 1 : index
    %c2_435 = arith.constant 2 : index
    %646 = vector.load %arg5[%c0_432, %c3_433, %c1_434, %c2_435] : memref<1x4x18x18xf32, #tpu.memory_space<vmem>>, vector<1x1x16x16xf32>
    %647 = vector.shape_cast %646 : vector<1x1x16x16xf32> to vector<16x16xf32>
    %648 = vector.broadcast %645 : f32 to vector<16x16xf32>
    %649 = arith.mulf %648, %647 : vector<16x16xf32>
    %650 = arith.addf %644, %649 : vector<16x16xf32>
    %c105 = arith.constant 105 : index
    %651 = memref.load %arg1[%c105] : memref<144xf32, #tpu.memory_space<smem>>
    %c0_436 = arith.constant 0 : index
    %c3_437 = arith.constant 3 : index
    %c2_438 = arith.constant 2 : index
    %c0_439 = arith.constant 0 : index
    %652 = vector.load %arg5[%c0_436, %c3_437, %c2_438, %c0_439] : memref<1x4x18x18xf32, #tpu.memory_space<vmem>>, vector<1x1x16x16xf32>
    %653 = vector.shape_cast %652 : vector<1x1x16x16xf32> to vector<16x16xf32>
    %654 = vector.broadcast %651 : f32 to vector<16x16xf32>
    %655 = arith.mulf %654, %653 : vector<16x16xf32>
    %656 = arith.addf %650, %655 : vector<16x16xf32>
    %c106 = arith.constant 106 : index
    %657 = memref.load %arg1[%c106] : memref<144xf32, #tpu.memory_space<smem>>
    %c0_440 = arith.constant 0 : index
    %c3_441 = arith.constant 3 : index
    %c2_442 = arith.constant 2 : index
    %c1_443 = arith.constant 1 : index
    %658 = vector.load %arg5[%c0_440, %c3_441, %c2_442, %c1_443] : memref<1x4x18x18xf32, #tpu.memory_space<vmem>>, vector<1x1x16x16xf32>
    %659 = vector.shape_cast %658 : vector<1x1x16x16xf32> to vector<16x16xf32>
    %660 = vector.broadcast %657 : f32 to vector<16x16xf32>
    %661 = arith.mulf %660, %659 : vector<16x16xf32>
    %662 = arith.addf %656, %661 : vector<16x16xf32>
    %c107 = arith.constant 107 : index
    %663 = memref.load %arg1[%c107] : memref<144xf32, #tpu.memory_space<smem>>
    %c0_444 = arith.constant 0 : index
    %c3_445 = arith.constant 3 : index
    %c2_446 = arith.constant 2 : index
    %c2_447 = arith.constant 2 : index
    %664 = vector.load %arg5[%c0_444, %c3_445, %c2_446, %c2_447] : memref<1x4x18x18xf32, #tpu.memory_space<vmem>>, vector<1x1x16x16xf32>
    %665 = vector.shape_cast %664 : vector<1x1x16x16xf32> to vector<16x16xf32>
    %666 = vector.broadcast %663 : f32 to vector<16x16xf32>
    %667 = arith.mulf %666, %665 : vector<16x16xf32>
    %668 = arith.addf %662, %667 : vector<16x16xf32>
    %c2_448 = arith.constant 2 : index
    %669 = memref.load %arg2[%c2_448] : memref<4xf32, #tpu.memory_space<smem>>
    %670 = vector.broadcast %669 : f32 to vector<16x16xf32>
    %671 = arith.addf %668, %670 : vector<16x16xf32>
    %cst_449 = arith.constant 0.000000e+00 : f32
    %672 = vector.broadcast %cst_449 : f32 to vector<16x16xf32>
    %673 = arith.maximumf %671, %672 : vector<16x16xf32>
    %c2_450 = arith.constant 2 : index
    %c1_451 = arith.constant 1 : index
    %c1_452 = arith.constant 1 : index
    %674 = vector.load %arg7[%c2_450, %c1_451, %c1_452] : memref<4x18x18xf32, #tpu.memory_space<vmem>>, vector<1x16x16xf32>
    %675 = vector.shape_cast %674 : vector<1x16x16xf32> to vector<16x16xf32>
    %676 = vector.shape_cast %673 : vector<16x16xf32> to vector<1x16x16xf32>
    tpu.vector_store %arg7[%c2_450, %c1_451, %c1_452], %676 {strides = array<i32>} : memref<4x18x18xf32, #tpu.memory_space<vmem>>, vector<1x16x16xf32>,
    %cst_453 = arith.constant 0.000000e+00 : f32
    %677 = vector.broadcast %cst_453 : f32 to vector<16x16xf32>
    %c108 = arith.constant 108 : index
    %678 = memref.load %arg1[%c108] : memref<144xf32, #tpu.memory_space<smem>>
    %c0_454 = arith.constant 0 : index
    %c0_455 = arith.constant 0 : index
    %c0_456 = arith.constant 0 : index
    %c0_457 = arith.constant 0 : index
    %679 = vector.load %arg5[%c0_454, %c0_455, %c0_456, %c0_457] : memref<1x4x18x18xf32, #tpu.memory_space<vmem>>, vector<1x1x16x16xf32>
    %680 = vector.shape_cast %679 : vector<1x1x16x16xf32> to vector<16x16xf32>
    %681 = vector.broadcast %678 : f32 to vector<16x16xf32>
    %682 = arith.mulf %681, %680 : vector<16x16xf32>
    %683 = arith.addf %677, %682 : vector<16x16xf32>
    %c109 = arith.constant 109 : index
    %684 = memref.load %arg1[%c109] : memref<144xf32, #tpu.memory_space<smem>>
    %c0_458 = arith.constant 0 : index
    %c0_459 = arith.constant 0 : index
    %c0_460 = arith.constant 0 : index
    %c1_461 = arith.constant 1 : index
    %685 = vector.load %arg5[%c0_458, %c0_459, %c0_460, %c1_461] : memref<1x4x18x18xf32, #tpu.memory_space<vmem>>, vector<1x1x16x16xf32>
    %686 = vector.shape_cast %685 : vector<1x1x16x16xf32> to vector<16x16xf32>
    %687 = vector.broadcast %684 : f32 to vector<16x16xf32>
    %688 = arith.mulf %687, %686 : vector<16x16xf32>
    %689 = arith.addf %683, %688 : vector<16x16xf32>
    %c110 = arith.constant 110 : index
    %690 = memref.load %arg1[%c110] : memref<144xf32, #tpu.memory_space<smem>>
    %c0_462 = arith.constant 0 : index
    %c0_463 = arith.constant 0 : index
    %c0_464 = arith.constant 0 : index
    %c2_465 = arith.constant 2 : index
    %691 = vector.load %arg5[%c0_462, %c0_463, %c0_464, %c2_465] : memref<1x4x18x18xf32, #tpu.memory_space<vmem>>, vector<1x1x16x16xf32>
    %692 = vector.shape_cast %691 : vector<1x1x16x16xf32> to vector<16x16xf32>
    %693 = vector.broadcast %690 : f32 to vector<16x16xf32>
    %694 = arith.mulf %693, %692 : vector<16x16xf32>
    %695 = arith.addf %689, %694 : vector<16x16xf32>
    %c111 = arith.constant 111 : index
    %696 = memref.load %arg1[%c111] : memref<144xf32, #tpu.memory_space<smem>>
    %c0_466 = arith.constant 0 : index
    %c0_467 = arith.constant 0 : index
    %c1_468 = arith.constant 1 : index
    %c0_469 = arith.constant 0 : index
    %697 = vector.load %arg5[%c0_466, %c0_467, %c1_468, %c0_469] : memref<1x4x18x18xf32, #tpu.memory_space<vmem>>, vector<1x1x16x16xf32>
    %698 = vector.shape_cast %697 : vector<1x1x16x16xf32> to vector<16x16xf32>
    %699 = vector.broadcast %696 : f32 to vector<16x16xf32>
    %700 = arith.mulf %699, %698 : vector<16x16xf32>
    %701 = arith.addf %695, %700 : vector<16x16xf32>
    %c112 = arith.constant 112 : index
    %702 = memref.load %arg1[%c112] : memref<144xf32, #tpu.memory_space<smem>>
    %c0_470 = arith.constant 0 : index
    %c0_471 = arith.constant 0 : index
    %c1_472 = arith.constant 1 : index
    %c1_473 = arith.constant 1 : index
    %703 = vector.load %arg5[%c0_470, %c0_471, %c1_472, %c1_473] : memref<1x4x18x18xf32, #tpu.memory_space<vmem>>, vector<1x1x16x16xf32>
    %704 = vector.shape_cast %703 : vector<1x1x16x16xf32> to vector<16x16xf32>
    %705 = vector.broadcast %702 : f32 to vector<16x16xf32>
    %706 = arith.mulf %705, %704 : vector<16x16xf32>
    %707 = arith.addf %701, %706 : vector<16x16xf32>
    %c113 = arith.constant 113 : index
    %708 = memref.load %arg1[%c113] : memref<144xf32, #tpu.memory_space<smem>>
    %c0_474 = arith.constant 0 : index
    %c0_475 = arith.constant 0 : index
    %c1_476 = arith.constant 1 : index
    %c2_477 = arith.constant 2 : index
    %709 = vector.load %arg5[%c0_474, %c0_475, %c1_476, %c2_477] : memref<1x4x18x18xf32, #tpu.memory_space<vmem>>, vector<1x1x16x16xf32>
    %710 = vector.shape_cast %709 : vector<1x1x16x16xf32> to vector<16x16xf32>
    %711 = vector.broadcast %708 : f32 to vector<16x16xf32>
    %712 = arith.mulf %711, %710 : vector<16x16xf32>
    %713 = arith.addf %707, %712 : vector<16x16xf32>
    %c114 = arith.constant 114 : index
    %714 = memref.load %arg1[%c114] : memref<144xf32, #tpu.memory_space<smem>>
    %c0_478 = arith.constant 0 : index
    %c0_479 = arith.constant 0 : index
    %c2_480 = arith.constant 2 : index
    %c0_481 = arith.constant 0 : index
    %715 = vector.load %arg5[%c0_478, %c0_479, %c2_480, %c0_481] : memref<1x4x18x18xf32, #tpu.memory_space<vmem>>, vector<1x1x16x16xf32>
    %716 = vector.shape_cast %715 : vector<1x1x16x16xf32> to vector<16x16xf32>
    %717 = vector.broadcast %714 : f32 to vector<16x16xf32>
    %718 = arith.mulf %717, %716 : vector<16x16xf32>
    %719 = arith.addf %713, %718 : vector<16x16xf32>
    %c115 = arith.constant 115 : index
    %720 = memref.load %arg1[%c115] : memref<144xf32, #tpu.memory_space<smem>>
    %c0_482 = arith.constant 0 : index
    %c0_483 = arith.constant 0 : index
    %c2_484 = arith.constant 2 : index
    %c1_485 = arith.constant 1 : index
    %721 = vector.load %arg5[%c0_482, %c0_483, %c2_484, %c1_485] : memref<1x4x18x18xf32, #tpu.memory_space<vmem>>, vector<1x1x16x16xf32>
    %722 = vector.shape_cast %721 : vector<1x1x16x16xf32> to vector<16x16xf32>
    %723 = vector.broadcast %720 : f32 to vector<16x16xf32>
    %724 = arith.mulf %723, %722 : vector<16x16xf32>
    %725 = arith.addf %719, %724 : vector<16x16xf32>
    %c116 = arith.constant 116 : index
    %726 = memref.load %arg1[%c116] : memref<144xf32, #tpu.memory_space<smem>>
    %c0_486 = arith.constant 0 : index
    %c0_487 = arith.constant 0 : index
    %c2_488 = arith.constant 2 : index
    %c2_489 = arith.constant 2 : index
    %727 = vector.load %arg5[%c0_486, %c0_487, %c2_488, %c2_489] : memref<1x4x18x18xf32, #tpu.memory_space<vmem>>, vector<1x1x16x16xf32>
    %728 = vector.shape_cast %727 : vector<1x1x16x16xf32> to vector<16x16xf32>
    %729 = vector.broadcast %726 : f32 to vector<16x16xf32>
    %730 = arith.mulf %729, %728 : vector<16x16xf32>
    %731 = arith.addf %725, %730 : vector<16x16xf32>
    %c117 = arith.constant 117 : index
    %732 = memref.load %arg1[%c117] : memref<144xf32, #tpu.memory_space<smem>>
    %c0_490 = arith.constant 0 : index
    %c1_491 = arith.constant 1 : index
    %c0_492 = arith.constant 0 : index
    %c0_493 = arith.constant 0 : index
    %733 = vector.load %arg5[%c0_490, %c1_491, %c0_492, %c0_493] : memref<1x4x18x18xf32, #tpu.memory_space<vmem>>, vector<1x1x16x16xf32>
    %734 = vector.shape_cast %733 : vector<1x1x16x16xf32> to vector<16x16xf32>
    %735 = vector.broadcast %732 : f32 to vector<16x16xf32>
    %736 = arith.mulf %735, %734 : vector<16x16xf32>
    %737 = arith.addf %731, %736 : vector<16x16xf32>
    %c118 = arith.constant 118 : index
    %738 = memref.load %arg1[%c118] : memref<144xf32, #tpu.memory_space<smem>>
    %c0_494 = arith.constant 0 : index
    %c1_495 = arith.constant 1 : index
    %c0_496 = arith.constant 0 : index
    %c1_497 = arith.constant 1 : index
    %739 = vector.load %arg5[%c0_494, %c1_495, %c0_496, %c1_497] : memref<1x4x18x18xf32, #tpu.memory_space<vmem>>, vector<1x1x16x16xf32>
    %740 = vector.shape_cast %739 : vector<1x1x16x16xf32> to vector<16x16xf32>
    %741 = vector.broadcast %738 : f32 to vector<16x16xf32>
    %742 = arith.mulf %741, %740 : vector<16x16xf32>
    %743 = arith.addf %737, %742 : vector<16x16xf32>
    %c119 = arith.constant 119 : index
    %744 = memref.load %arg1[%c119] : memref<144xf32, #tpu.memory_space<smem>>
    %c0_498 = arith.constant 0 : index
    %c1_499 = arith.constant 1 : index
    %c0_500 = arith.constant 0 : index
    %c2_501 = arith.constant 2 : index
    %745 = vector.load %arg5[%c0_498, %c1_499, %c0_500, %c2_501] : memref<1x4x18x18xf32, #tpu.memory_space<vmem>>, vector<1x1x16x16xf32>
    %746 = vector.shape_cast %745 : vector<1x1x16x16xf32> to vector<16x16xf32>
    %747 = vector.broadcast %744 : f32 to vector<16x16xf32>
    %748 = arith.mulf %747, %746 : vector<16x16xf32>
    %749 = arith.addf %743, %748 : vector<16x16xf32>
    %c120 = arith.constant 120 : index
    %750 = memref.load %arg1[%c120] : memref<144xf32, #tpu.memory_space<smem>>
    %c0_502 = arith.constant 0 : index
    %c1_503 = arith.constant 1 : index
    %c1_504 = arith.constant 1 : index
    %c0_505 = arith.constant 0 : index
    %751 = vector.load %arg5[%c0_502, %c1_503, %c1_504, %c0_505] : memref<1x4x18x18xf32, #tpu.memory_space<vmem>>, vector<1x1x16x16xf32>
    %752 = vector.shape_cast %751 : vector<1x1x16x16xf32> to vector<16x16xf32>
    %753 = vector.broadcast %750 : f32 to vector<16x16xf32>
    %754 = arith.mulf %753, %752 : vector<16x16xf32>
    %755 = arith.addf %749, %754 : vector<16x16xf32>
    %c121 = arith.constant 121 : index
    %756 = memref.load %arg1[%c121] : memref<144xf32, #tpu.memory_space<smem>>
    %c0_506 = arith.constant 0 : index
    %c1_507 = arith.constant 1 : index
    %c1_508 = arith.constant 1 : index
    %c1_509 = arith.constant 1 : index
    %757 = vector.load %arg5[%c0_506, %c1_507, %c1_508, %c1_509] : memref<1x4x18x18xf32, #tpu.memory_space<vmem>>, vector<1x1x16x16xf32>
    %758 = vector.shape_cast %757 : vector<1x1x16x16xf32> to vector<16x16xf32>
    %759 = vector.broadcast %756 : f32 to vector<16x16xf32>
    %760 = arith.mulf %759, %758 : vector<16x16xf32>
    %761 = arith.addf %755, %760 : vector<16x16xf32>
    %c122 = arith.constant 122 : index
    %762 = memref.load %arg1[%c122] : memref<144xf32, #tpu.memory_space<smem>>
    %c0_510 = arith.constant 0 : index
    %c1_511 = arith.constant 1 : index
    %c1_512 = arith.constant 1 : index
    %c2_513 = arith.constant 2 : index
    %763 = vector.load %arg5[%c0_510, %c1_511, %c1_512, %c2_513] : memref<1x4x18x18xf32, #tpu.memory_space<vmem>>, vector<1x1x16x16xf32>
    %764 = vector.shape_cast %763 : vector<1x1x16x16xf32> to vector<16x16xf32>
    %765 = vector.broadcast %762 : f32 to vector<16x16xf32>
    %766 = arith.mulf %765, %764 : vector<16x16xf32>
    %767 = arith.addf %761, %766 : vector<16x16xf32>
    %c123 = arith.constant 123 : index
    %768 = memref.load %arg1[%c123] : memref<144xf32, #tpu.memory_space<smem>>
    %c0_514 = arith.constant 0 : index
    %c1_515 = arith.constant 1 : index
    %c2_516 = arith.constant 2 : index
    %c0_517 = arith.constant 0 : index
    %769 = vector.load %arg5[%c0_514, %c1_515, %c2_516, %c0_517] : memref<1x4x18x18xf32, #tpu.memory_space<vmem>>, vector<1x1x16x16xf32>
    %770 = vector.shape_cast %769 : vector<1x1x16x16xf32> to vector<16x16xf32>
    %771 = vector.broadcast %768 : f32 to vector<16x16xf32>
    %772 = arith.mulf %771, %770 : vector<16x16xf32>
    %773 = arith.addf %767, %772 : vector<16x16xf32>
    %c124 = arith.constant 124 : index
    %774 = memref.load %arg1[%c124] : memref<144xf32, #tpu.memory_space<smem>>
    %c0_518 = arith.constant 0 : index
    %c1_519 = arith.constant 1 : index
    %c2_520 = arith.constant 2 : index
    %c1_521 = arith.constant 1 : index
    %775 = vector.load %arg5[%c0_518, %c1_519, %c2_520, %c1_521] : memref<1x4x18x18xf32, #tpu.memory_space<vmem>>, vector<1x1x16x16xf32>
    %776 = vector.shape_cast %775 : vector<1x1x16x16xf32> to vector<16x16xf32>
    %777 = vector.broadcast %774 : f32 to vector<16x16xf32>
    %778 = arith.mulf %777, %776 : vector<16x16xf32>
    %779 = arith.addf %773, %778 : vector<16x16xf32>
    %c125 = arith.constant 125 : index
    %780 = memref.load %arg1[%c125] : memref<144xf32, #tpu.memory_space<smem>>
    %c0_522 = arith.constant 0 : index
    %c1_523 = arith.constant 1 : index
    %c2_524 = arith.constant 2 : index
    %c2_525 = arith.constant 2 : index
    %781 = vector.load %arg5[%c0_522, %c1_523, %c2_524, %c2_525] : memref<1x4x18x18xf32, #tpu.memory_space<vmem>>, vector<1x1x16x16xf32>
    %782 = vector.shape_cast %781 : vector<1x1x16x16xf32> to vector<16x16xf32>
    %783 = vector.broadcast %780 : f32 to vector<16x16xf32>
    %784 = arith.mulf %783, %782 : vector<16x16xf32>
    %785 = arith.addf %779, %784 : vector<16x16xf32>
    %c126 = arith.constant 126 : index
    %786 = memref.load %arg1[%c126] : memref<144xf32, #tpu.memory_space<smem>>
    %c0_526 = arith.constant 0 : index
    %c2_527 = arith.constant 2 : index
    %c0_528 = arith.constant 0 : index
    %c0_529 = arith.constant 0 : index
    %787 = vector.load %arg5[%c0_526, %c2_527, %c0_528, %c0_529] : memref<1x4x18x18xf32, #tpu.memory_space<vmem>>, vector<1x1x16x16xf32>
    %788 = vector.shape_cast %787 : vector<1x1x16x16xf32> to vector<16x16xf32>
    %789 = vector.broadcast %786 : f32 to vector<16x16xf32>
    %790 = arith.mulf %789, %788 : vector<16x16xf32>
    %791 = arith.addf %785, %790 : vector<16x16xf32>
    %c127 = arith.constant 127 : index
    %792 = memref.load %arg1[%c127] : memref<144xf32, #tpu.memory_space<smem>>
    %c0_530 = arith.constant 0 : index
    %c2_531 = arith.constant 2 : index
    %c0_532 = arith.constant 0 : index
    %c1_533 = arith.constant 1 : index
    %793 = vector.load %arg5[%c0_530, %c2_531, %c0_532, %c1_533] : memref<1x4x18x18xf32, #tpu.memory_space<vmem>>, vector<1x1x16x16xf32>
    %794 = vector.shape_cast %793 : vector<1x1x16x16xf32> to vector<16x16xf32>
    %795 = vector.broadcast %792 : f32 to vector<16x16xf32>
    %796 = arith.mulf %795, %794 : vector<16x16xf32>
    %797 = arith.addf %791, %796 : vector<16x16xf32>
    %c128 = arith.constant 128 : index
    %798 = memref.load %arg1[%c128] : memref<144xf32, #tpu.memory_space<smem>>
    %c0_534 = arith.constant 0 : index
    %c2_535 = arith.constant 2 : index
    %c0_536 = arith.constant 0 : index
    %c2_537 = arith.constant 2 : index
    %799 = vector.load %arg5[%c0_534, %c2_535, %c0_536, %c2_537] : memref<1x4x18x18xf32, #tpu.memory_space<vmem>>, vector<1x1x16x16xf32>
    %800 = vector.shape_cast %799 : vector<1x1x16x16xf32> to vector<16x16xf32>
    %801 = vector.broadcast %798 : f32 to vector<16x16xf32>
    %802 = arith.mulf %801, %800 : vector<16x16xf32>
    %803 = arith.addf %797, %802 : vector<16x16xf32>
    %c129 = arith.constant 129 : index
    %804 = memref.load %arg1[%c129] : memref<144xf32, #tpu.memory_space<smem>>
    %c0_538 = arith.constant 0 : index
    %c2_539 = arith.constant 2 : index
    %c1_540 = arith.constant 1 : index
    %c0_541 = arith.constant 0 : index
    %805 = vector.load %arg5[%c0_538, %c2_539, %c1_540, %c0_541] : memref<1x4x18x18xf32, #tpu.memory_space<vmem>>, vector<1x1x16x16xf32>
    %806 = vector.shape_cast %805 : vector<1x1x16x16xf32> to vector<16x16xf32>
    %807 = vector.broadcast %804 : f32 to vector<16x16xf32>
    %808 = arith.mulf %807, %806 : vector<16x16xf32>
    %809 = arith.addf %803, %808 : vector<16x16xf32>
    %c130 = arith.constant 130 : index
    %810 = memref.load %arg1[%c130] : memref<144xf32, #tpu.memory_space<smem>>
    %c0_542 = arith.constant 0 : index
    %c2_543 = arith.constant 2 : index
    %c1_544 = arith.constant 1 : index
    %c1_545 = arith.constant 1 : index
    %811 = vector.load %arg5[%c0_542, %c2_543, %c1_544, %c1_545] : memref<1x4x18x18xf32, #tpu.memory_space<vmem>>, vector<1x1x16x16xf32>
    %812 = vector.shape_cast %811 : vector<1x1x16x16xf32> to vector<16x16xf32>
    %813 = vector.broadcast %810 : f32 to vector<16x16xf32>
    %814 = arith.mulf %813, %812 : vector<16x16xf32>
    %815 = arith.addf %809, %814 : vector<16x16xf32>
    %c131 = arith.constant 131 : index
    %816 = memref.load %arg1[%c131] : memref<144xf32, #tpu.memory_space<smem>>
    %c0_546 = arith.constant 0 : index
    %c2_547 = arith.constant 2 : index
    %c1_548 = arith.constant 1 : index
    %c2_549 = arith.constant 2 : index
    %817 = vector.load %arg5[%c0_546, %c2_547, %c1_548, %c2_549] : memref<1x4x18x18xf32, #tpu.memory_space<vmem>>, vector<1x1x16x16xf32>
    %818 = vector.shape_cast %817 : vector<1x1x16x16xf32> to vector<16x16xf32>
    %819 = vector.broadcast %816 : f32 to vector<16x16xf32>
    %820 = arith.mulf %819, %818 : vector<16x16xf32>
    %821 = arith.addf %815, %820 : vector<16x16xf32>
    %c132 = arith.constant 132 : index
    %822 = memref.load %arg1[%c132] : memref<144xf32, #tpu.memory_space<smem>>
    %c0_550 = arith.constant 0 : index
    %c2_551 = arith.constant 2 : index
    %c2_552 = arith.constant 2 : index
    %c0_553 = arith.constant 0 : index
    %823 = vector.load %arg5[%c0_550, %c2_551, %c2_552, %c0_553] : memref<1x4x18x18xf32, #tpu.memory_space<vmem>>, vector<1x1x16x16xf32>
    %824 = vector.shape_cast %823 : vector<1x1x16x16xf32> to vector<16x16xf32>
    %825 = vector.broadcast %822 : f32 to vector<16x16xf32>
    %826 = arith.mulf %825, %824 : vector<16x16xf32>
    %827 = arith.addf %821, %826 : vector<16x16xf32>
    %c133 = arith.constant 133 : index
    %828 = memref.load %arg1[%c133] : memref<144xf32, #tpu.memory_space<smem>>
    %c0_554 = arith.constant 0 : index
    %c2_555 = arith.constant 2 : index
    %c2_556 = arith.constant 2 : index
    %c1_557 = arith.constant 1 : index
    %829 = vector.load %arg5[%c0_554, %c2_555, %c2_556, %c1_557] : memref<1x4x18x18xf32, #tpu.memory_space<vmem>>, vector<1x1x16x16xf32>
    %830 = vector.shape_cast %829 : vector<1x1x16x16xf32> to vector<16x16xf32>
    %831 = vector.broadcast %828 : f32 to vector<16x16xf32>
    %832 = arith.mulf %831, %830 : vector<16x16xf32>
    %833 = arith.addf %827, %832 : vector<16x16xf32>
    %c134 = arith.constant 134 : index
    %834 = memref.load %arg1[%c134] : memref<144xf32, #tpu.memory_space<smem>>
    %c0_558 = arith.constant 0 : index
    %c2_559 = arith.constant 2 : index
    %c2_560 = arith.constant 2 : index
    %c2_561 = arith.constant 2 : index
    %835 = vector.load %arg5[%c0_558, %c2_559, %c2_560, %c2_561] : memref<1x4x18x18xf32, #tpu.memory_space<vmem>>, vector<1x1x16x16xf32>
    %836 = vector.shape_cast %835 : vector<1x1x16x16xf32> to vector<16x16xf32>
    %837 = vector.broadcast %834 : f32 to vector<16x16xf32>
    %838 = arith.mulf %837, %836 : vector<16x16xf32>
    %839 = arith.addf %833, %838 : vector<16x16xf32>
    %c135 = arith.constant 135 : index
    %840 = memref.load %arg1[%c135] : memref<144xf32, #tpu.memory_space<smem>>
    %c0_562 = arith.constant 0 : index
    %c3_563 = arith.constant 3 : index
    %c0_564 = arith.constant 0 : index
    %c0_565 = arith.constant 0 : index
    %841 = vector.load %arg5[%c0_562, %c3_563, %c0_564, %c0_565] : memref<1x4x18x18xf32, #tpu.memory_space<vmem>>, vector<1x1x16x16xf32>
    %842 = vector.shape_cast %841 : vector<1x1x16x16xf32> to vector<16x16xf32>
    %843 = vector.broadcast %840 : f32 to vector<16x16xf32>
    %844 = arith.mulf %843, %842 : vector<16x16xf32>
    %845 = arith.addf %839, %844 : vector<16x16xf32>
    %c136 = arith.constant 136 : index
    %846 = memref.load %arg1[%c136] : memref<144xf32, #tpu.memory_space<smem>>
    %c0_566 = arith.constant 0 : index
    %c3_567 = arith.constant 3 : index
    %c0_568 = arith.constant 0 : index
    %c1_569 = arith.constant 1 : index
    %847 = vector.load %arg5[%c0_566, %c3_567, %c0_568, %c1_569] : memref<1x4x18x18xf32, #tpu.memory_space<vmem>>, vector<1x1x16x16xf32>
    %848 = vector.shape_cast %847 : vector<1x1x16x16xf32> to vector<16x16xf32>
    %849 = vector.broadcast %846 : f32 to vector<16x16xf32>
    %850 = arith.mulf %849, %848 : vector<16x16xf32>
    %851 = arith.addf %845, %850 : vector<16x16xf32>
    %c137 = arith.constant 137 : index
    %852 = memref.load %arg1[%c137] : memref<144xf32, #tpu.memory_space<smem>>
    %c0_570 = arith.constant 0 : index
    %c3_571 = arith.constant 3 : index
    %c0_572 = arith.constant 0 : index
    %c2_573 = arith.constant 2 : index
    %853 = vector.load %arg5[%c0_570, %c3_571, %c0_572, %c2_573] : memref<1x4x18x18xf32, #tpu.memory_space<vmem>>, vector<1x1x16x16xf32>
    %854 = vector.shape_cast %853 : vector<1x1x16x16xf32> to vector<16x16xf32>
    %855 = vector.broadcast %852 : f32 to vector<16x16xf32>
    %856 = arith.mulf %855, %854 : vector<16x16xf32>
    %857 = arith.addf %851, %856 : vector<16x16xf32>
    %c138 = arith.constant 138 : index
    %858 = memref.load %arg1[%c138] : memref<144xf32, #tpu.memory_space<smem>>
    %c0_574 = arith.constant 0 : index
    %c3_575 = arith.constant 3 : index
    %c1_576 = arith.constant 1 : index
    %c0_577 = arith.constant 0 : index
    %859 = vector.load %arg5[%c0_574, %c3_575, %c1_576, %c0_577] : memref<1x4x18x18xf32, #tpu.memory_space<vmem>>, vector<1x1x16x16xf32>
    %860 = vector.shape_cast %859 : vector<1x1x16x16xf32> to vector<16x16xf32>
    %861 = vector.broadcast %858 : f32 to vector<16x16xf32>
    %862 = arith.mulf %861, %860 : vector<16x16xf32>
    %863 = arith.addf %857, %862 : vector<16x16xf32>
    %c139 = arith.constant 139 : index
    %864 = memref.load %arg1[%c139] : memref<144xf32, #tpu.memory_space<smem>>
    %c0_578 = arith.constant 0 : index
    %c3_579 = arith.constant 3 : index
    %c1_580 = arith.constant 1 : index
    %c1_581 = arith.constant 1 : index
    %865 = vector.load %arg5[%c0_578, %c3_579, %c1_580, %c1_581] : memref<1x4x18x18xf32, #tpu.memory_space<vmem>>, vector<1x1x16x16xf32>
    %866 = vector.shape_cast %865 : vector<1x1x16x16xf32> to vector<16x16xf32>
    %867 = vector.broadcast %864 : f32 to vector<16x16xf32>
    %868 = arith.mulf %867, %866 : vector<16x16xf32>
    %869 = arith.addf %863, %868 : vector<16x16xf32>
    %c140 = arith.constant 140 : index
    %870 = memref.load %arg1[%c140] : memref<144xf32, #tpu.memory_space<smem>>
    %c0_582 = arith.constant 0 : index
    %c3_583 = arith.constant 3 : index
    %c1_584 = arith.constant 1 : index
    %c2_585 = arith.constant 2 : index
    %871 = vector.load %arg5[%c0_582, %c3_583, %c1_584, %c2_585] : memref<1x4x18x18xf32, #tpu.memory_space<vmem>>, vector<1x1x16x16xf32>
    %872 = vector.shape_cast %871 : vector<1x1x16x16xf32> to vector<16x16xf32>
    %873 = vector.broadcast %870 : f32 to vector<16x16xf32>
    %874 = arith.mulf %873, %872 : vector<16x16xf32>
    %875 = arith.addf %869, %874 : vector<16x16xf32>
    %c141 = arith.constant 141 : index
    %876 = memref.load %arg1[%c141] : memref<144xf32, #tpu.memory_space<smem>>
    %c0_586 = arith.constant 0 : index
    %c3_587 = arith.constant 3 : index
    %c2_588 = arith.constant 2 : index
    %c0_589 = arith.constant 0 : index
    %877 = vector.load %arg5[%c0_586, %c3_587, %c2_588, %c0_589] : memref<1x4x18x18xf32, #tpu.memory_space<vmem>>, vector<1x1x16x16xf32>
    %878 = vector.shape_cast %877 : vector<1x1x16x16xf32> to vector<16x16xf32>
    %879 = vector.broadcast %876 : f32 to vector<16x16xf32>
    %880 = arith.mulf %879, %878 : vector<16x16xf32>
    %881 = arith.addf %875, %880 : vector<16x16xf32>
    %c142 = arith.constant 142 : index
    %882 = memref.load %arg1[%c142] : memref<144xf32, #tpu.memory_space<smem>>
    %c0_590 = arith.constant 0 : index
    %c3_591 = arith.constant 3 : index
    %c2_592 = arith.constant 2 : index
    %c1_593 = arith.constant 1 : index
    %883 = vector.load %arg5[%c0_590, %c3_591, %c2_592, %c1_593] : memref<1x4x18x18xf32, #tpu.memory_space<vmem>>, vector<1x1x16x16xf32>
    %884 = vector.shape_cast %883 : vector<1x1x16x16xf32> to vector<16x16xf32>
    %885 = vector.broadcast %882 : f32 to vector<16x16xf32>
    %886 = arith.mulf %885, %884 : vector<16x16xf32>
    %887 = arith.addf %881, %886 : vector<16x16xf32>
    %c143 = arith.constant 143 : index
    %888 = memref.load %arg1[%c143] : memref<144xf32, #tpu.memory_space<smem>>
    %c0_594 = arith.constant 0 : index
    %c3_595 = arith.constant 3 : index
    %c2_596 = arith.constant 2 : index
    %c2_597 = arith.constant 2 : index
    %889 = vector.load %arg5[%c0_594, %c3_595, %c2_596, %c2_597] : memref<1x4x18x18xf32, #tpu.memory_space<vmem>>, vector<1x1x16x16xf32>
    %890 = vector.shape_cast %889 : vector<1x1x16x16xf32> to vector<16x16xf32>
    %891 = vector.broadcast %888 : f32 to vector<16x16xf32>
    %892 = arith.mulf %891, %890 : vector<16x16xf32>
    %893 = arith.addf %887, %892 : vector<16x16xf32>
    %c3_598 = arith.constant 3 : index
    %894 = memref.load %arg2[%c3_598] : memref<4xf32, #tpu.memory_space<smem>>
    %895 = vector.broadcast %894 : f32 to vector<16x16xf32>
    %896 = arith.addf %893, %895 : vector<16x16xf32>
    %cst_599 = arith.constant 0.000000e+00 : f32
    %897 = vector.broadcast %cst_599 : f32 to vector<16x16xf32>
    %898 = arith.maximumf %896, %897 : vector<16x16xf32>
    %c3_600 = arith.constant 3 : index
    %c1_601 = arith.constant 1 : index
    %c1_602 = arith.constant 1 : index
    %899 = vector.load %arg7[%c3_600, %c1_601, %c1_602] : memref<4x18x18xf32, #tpu.memory_space<vmem>>, vector<1x16x16xf32>
    %900 = vector.shape_cast %899 : vector<1x16x16xf32> to vector<16x16xf32>
    %901 = vector.shape_cast %898 : vector<16x16xf32> to vector<1x16x16xf32>
    tpu.vector_store %arg7[%c3_600, %c1_601, %c1_602], %901 {strides = array<i32>} : memref<4x18x18xf32, #tpu.memory_space<vmem>>, vector<1x16x16xf32>,
    %cst_603 = arith.constant 0.000000e+00 : f32
    %902 = vector.broadcast %cst_603 : f32 to vector<16x16xf32>
    %c0_604 = arith.constant 0 : index
    %903 = memref.load %arg3[%c0_604] : memref<144xf32, #tpu.memory_space<smem>>
    %c0_605 = arith.constant 0 : index
    %c0_606 = arith.constant 0 : index
    %c0_607 = arith.constant 0 : index
    %904 = vector.load %arg7[%c0_605, %c0_606, %c0_607] : memref<4x18x18xf32, #tpu.memory_space<vmem>>, vector<1x16x16xf32>
    %905 = vector.shape_cast %904 : vector<1x16x16xf32> to vector<16x16xf32>
    %906 = vector.broadcast %903 : f32 to vector<16x16xf32>
    %907 = arith.mulf %906, %905 : vector<16x16xf32>
    %908 = arith.addf %902, %907 : vector<16x16xf32>
    %c1_608 = arith.constant 1 : index
    %909 = memref.load %arg3[%c1_608] : memref<144xf32, #tpu.memory_space<smem>>
    %c0_609 = arith.constant 0 : index
    %c0_610 = arith.constant 0 : index
    %c1_611 = arith.constant 1 : index
    %910 = vector.load %arg7[%c0_609, %c0_610, %c1_611] : memref<4x18x18xf32, #tpu.memory_space<vmem>>, vector<1x16x16xf32>
    %911 = vector.shape_cast %910 : vector<1x16x16xf32> to vector<16x16xf32>
    %912 = vector.broadcast %909 : f32 to vector<16x16xf32>
    %913 = arith.mulf %912, %911 : vector<16x16xf32>
    %914 = arith.addf %908, %913 : vector<16x16xf32>
    %c2_612 = arith.constant 2 : index
    %915 = memref.load %arg3[%c2_612] : memref<144xf32, #tpu.memory_space<smem>>
    %c0_613 = arith.constant 0 : index
    %c0_614 = arith.constant 0 : index
    %c2_615 = arith.constant 2 : index
    %916 = vector.load %arg7[%c0_613, %c0_614, %c2_615] : memref<4x18x18xf32, #tpu.memory_space<vmem>>, vector<1x16x16xf32>
    %917 = vector.shape_cast %916 : vector<1x16x16xf32> to vector<16x16xf32>
    %918 = vector.broadcast %915 : f32 to vector<16x16xf32>
    %919 = arith.mulf %918, %917 : vector<16x16xf32>
    %920 = arith.addf %914, %919 : vector<16x16xf32>
    %c3_616 = arith.constant 3 : index
    %921 = memref.load %arg3[%c3_616] : memref<144xf32, #tpu.memory_space<smem>>
    %c0_617 = arith.constant 0 : index
    %c1_618 = arith.constant 1 : index
    %c0_619 = arith.constant 0 : index
    %922 = vector.load %arg7[%c0_617, %c1_618, %c0_619] : memref<4x18x18xf32, #tpu.memory_space<vmem>>, vector<1x16x16xf32>
    %923 = vector.shape_cast %922 : vector<1x16x16xf32> to vector<16x16xf32>
    %924 = vector.broadcast %921 : f32 to vector<16x16xf32>
    %925 = arith.mulf %924, %923 : vector<16x16xf32>
    %926 = arith.addf %920, %925 : vector<16x16xf32>
    %c4_620 = arith.constant 4 : index
    %927 = memref.load %arg3[%c4_620] : memref<144xf32, #tpu.memory_space<smem>>
    %c0_621 = arith.constant 0 : index
    %c1_622 = arith.constant 1 : index
    %c1_623 = arith.constant 1 : index
    %928 = vector.load %arg7[%c0_621, %c1_622, %c1_623] : memref<4x18x18xf32, #tpu.memory_space<vmem>>, vector<1x16x16xf32>
    %929 = vector.shape_cast %928 : vector<1x16x16xf32> to vector<16x16xf32>
    %930 = vector.broadcast %927 : f32 to vector<16x16xf32>
    %931 = arith.mulf %930, %929 : vector<16x16xf32>
    %932 = arith.addf %926, %931 : vector<16x16xf32>
    %c5_624 = arith.constant 5 : index
    %933 = memref.load %arg3[%c5_624] : memref<144xf32, #tpu.memory_space<smem>>
    %c0_625 = arith.constant 0 : index
    %c1_626 = arith.constant 1 : index
    %c2_627 = arith.constant 2 : index
    %934 = vector.load %arg7[%c0_625, %c1_626, %c2_627] : memref<4x18x18xf32, #tpu.memory_space<vmem>>, vector<1x16x16xf32>
    %935 = vector.shape_cast %934 : vector<1x16x16xf32> to vector<16x16xf32>
    %936 = vector.broadcast %933 : f32 to vector<16x16xf32>
    %937 = arith.mulf %936, %935 : vector<16x16xf32>
    %938 = arith.addf %932, %937 : vector<16x16xf32>
    %c6_628 = arith.constant 6 : index
    %939 = memref.load %arg3[%c6_628] : memref<144xf32, #tpu.memory_space<smem>>
    %c0_629 = arith.constant 0 : index
    %c2_630 = arith.constant 2 : index
    %c0_631 = arith.constant 0 : index
    %940 = vector.load %arg7[%c0_629, %c2_630, %c0_631] : memref<4x18x18xf32, #tpu.memory_space<vmem>>, vector<1x16x16xf32>
    %941 = vector.shape_cast %940 : vector<1x16x16xf32> to vector<16x16xf32>
    %942 = vector.broadcast %939 : f32 to vector<16x16xf32>
    %943 = arith.mulf %942, %941 : vector<16x16xf32>
    %944 = arith.addf %938, %943 : vector<16x16xf32>
    %c7_632 = arith.constant 7 : index
    %945 = memref.load %arg3[%c7_632] : memref<144xf32, #tpu.memory_space<smem>>
    %c0_633 = arith.constant 0 : index
    %c2_634 = arith.constant 2 : index
    %c1_635 = arith.constant 1 : index
    %946 = vector.load %arg7[%c0_633, %c2_634, %c1_635] : memref<4x18x18xf32, #tpu.memory_space<vmem>>, vector<1x16x16xf32>
    %947 = vector.shape_cast %946 : vector<1x16x16xf32> to vector<16x16xf32>
    %948 = vector.broadcast %945 : f32 to vector<16x16xf32>
    %949 = arith.mulf %948, %947 : vector<16x16xf32>
    %950 = arith.addf %944, %949 : vector<16x16xf32>
    %c8_636 = arith.constant 8 : index
    %951 = memref.load %arg3[%c8_636] : memref<144xf32, #tpu.memory_space<smem>>
    %c0_637 = arith.constant 0 : index
    %c2_638 = arith.constant 2 : index
    %c2_639 = arith.constant 2 : index
    %952 = vector.load %arg7[%c0_637, %c2_638, %c2_639] : memref<4x18x18xf32, #tpu.memory_space<vmem>>, vector<1x16x16xf32>
    %953 = vector.shape_cast %952 : vector<1x16x16xf32> to vector<16x16xf32>
    %954 = vector.broadcast %951 : f32 to vector<16x16xf32>
    %955 = arith.mulf %954, %953 : vector<16x16xf32>
    %956 = arith.addf %950, %955 : vector<16x16xf32>
    %c9_640 = arith.constant 9 : index
    %957 = memref.load %arg3[%c9_640] : memref<144xf32, #tpu.memory_space<smem>>
    %c1_641 = arith.constant 1 : index
    %c0_642 = arith.constant 0 : index
    %c0_643 = arith.constant 0 : index
    %958 = vector.load %arg7[%c1_641, %c0_642, %c0_643] : memref<4x18x18xf32, #tpu.memory_space<vmem>>, vector<1x16x16xf32>
    %959 = vector.shape_cast %958 : vector<1x16x16xf32> to vector<16x16xf32>
    %960 = vector.broadcast %957 : f32 to vector<16x16xf32>
    %961 = arith.mulf %960, %959 : vector<16x16xf32>
    %962 = arith.addf %956, %961 : vector<16x16xf32>
    %c10_644 = arith.constant 10 : index
    %963 = memref.load %arg3[%c10_644] : memref<144xf32, #tpu.memory_space<smem>>
    %c1_645 = arith.constant 1 : index
    %c0_646 = arith.constant 0 : index
    %c1_647 = arith.constant 1 : index
    %964 = vector.load %arg7[%c1_645, %c0_646, %c1_647] : memref<4x18x18xf32, #tpu.memory_space<vmem>>, vector<1x16x16xf32>
    %965 = vector.shape_cast %964 : vector<1x16x16xf32> to vector<16x16xf32>
    %966 = vector.broadcast %963 : f32 to vector<16x16xf32>
    %967 = arith.mulf %966, %965 : vector<16x16xf32>
    %968 = arith.addf %962, %967 : vector<16x16xf32>
    %c11_648 = arith.constant 11 : index
    %969 = memref.load %arg3[%c11_648] : memref<144xf32, #tpu.memory_space<smem>>
    %c1_649 = arith.constant 1 : index
    %c0_650 = arith.constant 0 : index
    %c2_651 = arith.constant 2 : index
    %970 = vector.load %arg7[%c1_649, %c0_650, %c2_651] : memref<4x18x18xf32, #tpu.memory_space<vmem>>, vector<1x16x16xf32>
    %971 = vector.shape_cast %970 : vector<1x16x16xf32> to vector<16x16xf32>
    %972 = vector.broadcast %969 : f32 to vector<16x16xf32>
    %973 = arith.mulf %972, %971 : vector<16x16xf32>
    %974 = arith.addf %968, %973 : vector<16x16xf32>
    %c12_652 = arith.constant 12 : index
    %975 = memref.load %arg3[%c12_652] : memref<144xf32, #tpu.memory_space<smem>>
    %c1_653 = arith.constant 1 : index
    %c1_654 = arith.constant 1 : index
    %c0_655 = arith.constant 0 : index
    %976 = vector.load %arg7[%c1_653, %c1_654, %c0_655] : memref<4x18x18xf32, #tpu.memory_space<vmem>>, vector<1x16x16xf32>
    %977 = vector.shape_cast %976 : vector<1x16x16xf32> to vector<16x16xf32>
    %978 = vector.broadcast %975 : f32 to vector<16x16xf32>
    %979 = arith.mulf %978, %977 : vector<16x16xf32>
    %980 = arith.addf %974, %979 : vector<16x16xf32>
    %c13_656 = arith.constant 13 : index
    %981 = memref.load %arg3[%c13_656] : memref<144xf32, #tpu.memory_space<smem>>
    %c1_657 = arith.constant 1 : index
    %c1_658 = arith.constant 1 : index
    %c1_659 = arith.constant 1 : index
    %982 = vector.load %arg7[%c1_657, %c1_658, %c1_659] : memref<4x18x18xf32, #tpu.memory_space<vmem>>, vector<1x16x16xf32>
    %983 = vector.shape_cast %982 : vector<1x16x16xf32> to vector<16x16xf32>
    %984 = vector.broadcast %981 : f32 to vector<16x16xf32>
    %985 = arith.mulf %984, %983 : vector<16x16xf32>
    %986 = arith.addf %980, %985 : vector<16x16xf32>
    %c14_660 = arith.constant 14 : index
    %987 = memref.load %arg3[%c14_660] : memref<144xf32, #tpu.memory_space<smem>>
    %c1_661 = arith.constant 1 : index
    %c1_662 = arith.constant 1 : index
    %c2_663 = arith.constant 2 : index
    %988 = vector.load %arg7[%c1_661, %c1_662, %c2_663] : memref<4x18x18xf32, #tpu.memory_space<vmem>>, vector<1x16x16xf32>
    %989 = vector.shape_cast %988 : vector<1x16x16xf32> to vector<16x16xf32>
    %990 = vector.broadcast %987 : f32 to vector<16x16xf32>
    %991 = arith.mulf %990, %989 : vector<16x16xf32>
    %992 = arith.addf %986, %991 : vector<16x16xf32>
    %c15_664 = arith.constant 15 : index
    %993 = memref.load %arg3[%c15_664] : memref<144xf32, #tpu.memory_space<smem>>
    %c1_665 = arith.constant 1 : index
    %c2_666 = arith.constant 2 : index
    %c0_667 = arith.constant 0 : index
    %994 = vector.load %arg7[%c1_665, %c2_666, %c0_667] : memref<4x18x18xf32, #tpu.memory_space<vmem>>, vector<1x16x16xf32>
    %995 = vector.shape_cast %994 : vector<1x16x16xf32> to vector<16x16xf32>
    %996 = vector.broadcast %993 : f32 to vector<16x16xf32>
    %997 = arith.mulf %996, %995 : vector<16x16xf32>
    %998 = arith.addf %992, %997 : vector<16x16xf32>
    %c16_668 = arith.constant 16 : index
    %999 = memref.load %arg3[%c16_668] : memref<144xf32, #tpu.memory_space<smem>>
    %c1_669 = arith.constant 1 : index
    %c2_670 = arith.constant 2 : index
    %c1_671 = arith.constant 1 : index
    %1000 = vector.load %arg7[%c1_669, %c2_670, %c1_671] : memref<4x18x18xf32, #tpu.memory_space<vmem>>, vector<1x16x16xf32>
    %1001 = vector.shape_cast %1000 : vector<1x16x16xf32> to vector<16x16xf32>
    %1002 = vector.broadcast %999 : f32 to vector<16x16xf32>
    %1003 = arith.mulf %1002, %1001 : vector<16x16xf32>
    %1004 = arith.addf %998, %1003 : vector<16x16xf32>
    %c17_672 = arith.constant 17 : index
    %1005 = memref.load %arg3[%c17_672] : memref<144xf32, #tpu.memory_space<smem>>
    %c1_673 = arith.constant 1 : index
    %c2_674 = arith.constant 2 : index
    %c2_675 = arith.constant 2 : index
    %1006 = vector.load %arg7[%c1_673, %c2_674, %c2_675] : memref<4x18x18xf32, #tpu.memory_space<vmem>>, vector<1x16x16xf32>
    %1007 = vector.shape_cast %1006 : vector<1x16x16xf32> to vector<16x16xf32>
    %1008 = vector.broadcast %1005 : f32 to vector<16x16xf32>
    %1009 = arith.mulf %1008, %1007 : vector<16x16xf32>
    %1010 = arith.addf %1004, %1009 : vector<16x16xf32>
    %c18_676 = arith.constant 18 : index
    %1011 = memref.load %arg3[%c18_676] : memref<144xf32, #tpu.memory_space<smem>>
    %c2_677 = arith.constant 2 : index
    %c0_678 = arith.constant 0 : index
    %c0_679 = arith.constant 0 : index
    %1012 = vector.load %arg7[%c2_677, %c0_678, %c0_679] : memref<4x18x18xf32, #tpu.memory_space<vmem>>, vector<1x16x16xf32>
    %1013 = vector.shape_cast %1012 : vector<1x16x16xf32> to vector<16x16xf32>
    %1014 = vector.broadcast %1011 : f32 to vector<16x16xf32>
    %1015 = arith.mulf %1014, %1013 : vector<16x16xf32>
    %1016 = arith.addf %1010, %1015 : vector<16x16xf32>
    %c19_680 = arith.constant 19 : index
    %1017 = memref.load %arg3[%c19_680] : memref<144xf32, #tpu.memory_space<smem>>
    %c2_681 = arith.constant 2 : index
    %c0_682 = arith.constant 0 : index
    %c1_683 = arith.constant 1 : index
    %1018 = vector.load %arg7[%c2_681, %c0_682, %c1_683] : memref<4x18x18xf32, #tpu.memory_space<vmem>>, vector<1x16x16xf32>
    %1019 = vector.shape_cast %1018 : vector<1x16x16xf32> to vector<16x16xf32>
    %1020 = vector.broadcast %1017 : f32 to vector<16x16xf32>
    %1021 = arith.mulf %1020, %1019 : vector<16x16xf32>
    %1022 = arith.addf %1016, %1021 : vector<16x16xf32>
    %c20_684 = arith.constant 20 : index
    %1023 = memref.load %arg3[%c20_684] : memref<144xf32, #tpu.memory_space<smem>>
    %c2_685 = arith.constant 2 : index
    %c0_686 = arith.constant 0 : index
    %c2_687 = arith.constant 2 : index
    %1024 = vector.load %arg7[%c2_685, %c0_686, %c2_687] : memref<4x18x18xf32, #tpu.memory_space<vmem>>, vector<1x16x16xf32>
    %1025 = vector.shape_cast %1024 : vector<1x16x16xf32> to vector<16x16xf32>
    %1026 = vector.broadcast %1023 : f32 to vector<16x16xf32>
    %1027 = arith.mulf %1026, %1025 : vector<16x16xf32>
    %1028 = arith.addf %1022, %1027 : vector<16x16xf32>
    %c21_688 = arith.constant 21 : index
    %1029 = memref.load %arg3[%c21_688] : memref<144xf32, #tpu.memory_space<smem>>
    %c2_689 = arith.constant 2 : index
    %c1_690 = arith.constant 1 : index
    %c0_691 = arith.constant 0 : index
    %1030 = vector.load %arg7[%c2_689, %c1_690, %c0_691] : memref<4x18x18xf32, #tpu.memory_space<vmem>>, vector<1x16x16xf32>
    %1031 = vector.shape_cast %1030 : vector<1x16x16xf32> to vector<16x16xf32>
    %1032 = vector.broadcast %1029 : f32 to vector<16x16xf32>
    %1033 = arith.mulf %1032, %1031 : vector<16x16xf32>
    %1034 = arith.addf %1028, %1033 : vector<16x16xf32>
    %c22_692 = arith.constant 22 : index
    %1035 = memref.load %arg3[%c22_692] : memref<144xf32, #tpu.memory_space<smem>>
    %c2_693 = arith.constant 2 : index
    %c1_694 = arith.constant 1 : index
    %c1_695 = arith.constant 1 : index
    %1036 = vector.load %arg7[%c2_693, %c1_694, %c1_695] : memref<4x18x18xf32, #tpu.memory_space<vmem>>, vector<1x16x16xf32>
    %1037 = vector.shape_cast %1036 : vector<1x16x16xf32> to vector<16x16xf32>
    %1038 = vector.broadcast %1035 : f32 to vector<16x16xf32>
    %1039 = arith.mulf %1038, %1037 : vector<16x16xf32>
    %1040 = arith.addf %1034, %1039 : vector<16x16xf32>
    %c23_696 = arith.constant 23 : index
    %1041 = memref.load %arg3[%c23_696] : memref<144xf32, #tpu.memory_space<smem>>
    %c2_697 = arith.constant 2 : index
    %c1_698 = arith.constant 1 : index
    %c2_699 = arith.constant 2 : index
    %1042 = vector.load %arg7[%c2_697, %c1_698, %c2_699] : memref<4x18x18xf32, #tpu.memory_space<vmem>>, vector<1x16x16xf32>
    %1043 = vector.shape_cast %1042 : vector<1x16x16xf32> to vector<16x16xf32>
    %1044 = vector.broadcast %1041 : f32 to vector<16x16xf32>
    %1045 = arith.mulf %1044, %1043 : vector<16x16xf32>
    %1046 = arith.addf %1040, %1045 : vector<16x16xf32>
    %c24_700 = arith.constant 24 : index
    %1047 = memref.load %arg3[%c24_700] : memref<144xf32, #tpu.memory_space<smem>>
    %c2_701 = arith.constant 2 : index
    %c2_702 = arith.constant 2 : index
    %c0_703 = arith.constant 0 : index
    %1048 = vector.load %arg7[%c2_701, %c2_702, %c0_703] : memref<4x18x18xf32, #tpu.memory_space<vmem>>, vector<1x16x16xf32>
    %1049 = vector.shape_cast %1048 : vector<1x16x16xf32> to vector<16x16xf32>
    %1050 = vector.broadcast %1047 : f32 to vector<16x16xf32>
    %1051 = arith.mulf %1050, %1049 : vector<16x16xf32>
    %1052 = arith.addf %1046, %1051 : vector<16x16xf32>
    %c25_704 = arith.constant 25 : index
    %1053 = memref.load %arg3[%c25_704] : memref<144xf32, #tpu.memory_space<smem>>
    %c2_705 = arith.constant 2 : index
    %c2_706 = arith.constant 2 : index
    %c1_707 = arith.constant 1 : index
    %1054 = vector.load %arg7[%c2_705, %c2_706, %c1_707] : memref<4x18x18xf32, #tpu.memory_space<vmem>>, vector<1x16x16xf32>
    %1055 = vector.shape_cast %1054 : vector<1x16x16xf32> to vector<16x16xf32>
    %1056 = vector.broadcast %1053 : f32 to vector<16x16xf32>
    %1057 = arith.mulf %1056, %1055 : vector<16x16xf32>
    %1058 = arith.addf %1052, %1057 : vector<16x16xf32>
    %c26_708 = arith.constant 26 : index
    %1059 = memref.load %arg3[%c26_708] : memref<144xf32, #tpu.memory_space<smem>>
    %c2_709 = arith.constant 2 : index
    %c2_710 = arith.constant 2 : index
    %c2_711 = arith.constant 2 : index
    %1060 = vector.load %arg7[%c2_709, %c2_710, %c2_711] : memref<4x18x18xf32, #tpu.memory_space<vmem>>, vector<1x16x16xf32>
    %1061 = vector.shape_cast %1060 : vector<1x16x16xf32> to vector<16x16xf32>
    %1062 = vector.broadcast %1059 : f32 to vector<16x16xf32>
    %1063 = arith.mulf %1062, %1061 : vector<16x16xf32>
    %1064 = arith.addf %1058, %1063 : vector<16x16xf32>
    %c27_712 = arith.constant 27 : index
    %1065 = memref.load %arg3[%c27_712] : memref<144xf32, #tpu.memory_space<smem>>
    %c3_713 = arith.constant 3 : index
    %c0_714 = arith.constant 0 : index
    %c0_715 = arith.constant 0 : index
    %1066 = vector.load %arg7[%c3_713, %c0_714, %c0_715] : memref<4x18x18xf32, #tpu.memory_space<vmem>>, vector<1x16x16xf32>
    %1067 = vector.shape_cast %1066 : vector<1x16x16xf32> to vector<16x16xf32>
    %1068 = vector.broadcast %1065 : f32 to vector<16x16xf32>
    %1069 = arith.mulf %1068, %1067 : vector<16x16xf32>
    %1070 = arith.addf %1064, %1069 : vector<16x16xf32>
    %c28_716 = arith.constant 28 : index
    %1071 = memref.load %arg3[%c28_716] : memref<144xf32, #tpu.memory_space<smem>>
    %c3_717 = arith.constant 3 : index
    %c0_718 = arith.constant 0 : index
    %c1_719 = arith.constant 1 : index
    %1072 = vector.load %arg7[%c3_717, %c0_718, %c1_719] : memref<4x18x18xf32, #tpu.memory_space<vmem>>, vector<1x16x16xf32>
    %1073 = vector.shape_cast %1072 : vector<1x16x16xf32> to vector<16x16xf32>
    %1074 = vector.broadcast %1071 : f32 to vector<16x16xf32>
    %1075 = arith.mulf %1074, %1073 : vector<16x16xf32>
    %1076 = arith.addf %1070, %1075 : vector<16x16xf32>
    %c29_720 = arith.constant 29 : index
    %1077 = memref.load %arg3[%c29_720] : memref<144xf32, #tpu.memory_space<smem>>
    %c3_721 = arith.constant 3 : index
    %c0_722 = arith.constant 0 : index
    %c2_723 = arith.constant 2 : index
    %1078 = vector.load %arg7[%c3_721, %c0_722, %c2_723] : memref<4x18x18xf32, #tpu.memory_space<vmem>>, vector<1x16x16xf32>
    %1079 = vector.shape_cast %1078 : vector<1x16x16xf32> to vector<16x16xf32>
    %1080 = vector.broadcast %1077 : f32 to vector<16x16xf32>
    %1081 = arith.mulf %1080, %1079 : vector<16x16xf32>
    %1082 = arith.addf %1076, %1081 : vector<16x16xf32>
    %c30_724 = arith.constant 30 : index
    %1083 = memref.load %arg3[%c30_724] : memref<144xf32, #tpu.memory_space<smem>>
    %c3_725 = arith.constant 3 : index
    %c1_726 = arith.constant 1 : index
    %c0_727 = arith.constant 0 : index
    %1084 = vector.load %arg7[%c3_725, %c1_726, %c0_727] : memref<4x18x18xf32, #tpu.memory_space<vmem>>, vector<1x16x16xf32>
    %1085 = vector.shape_cast %1084 : vector<1x16x16xf32> to vector<16x16xf32>
    %1086 = vector.broadcast %1083 : f32 to vector<16x16xf32>
    %1087 = arith.mulf %1086, %1085 : vector<16x16xf32>
    %1088 = arith.addf %1082, %1087 : vector<16x16xf32>
    %c31_728 = arith.constant 31 : index
    %1089 = memref.load %arg3[%c31_728] : memref<144xf32, #tpu.memory_space<smem>>
    %c3_729 = arith.constant 3 : index
    %c1_730 = arith.constant 1 : index
    %c1_731 = arith.constant 1 : index
    %1090 = vector.load %arg7[%c3_729, %c1_730, %c1_731] : memref<4x18x18xf32, #tpu.memory_space<vmem>>, vector<1x16x16xf32>
    %1091 = vector.shape_cast %1090 : vector<1x16x16xf32> to vector<16x16xf32>
    %1092 = vector.broadcast %1089 : f32 to vector<16x16xf32>
    %1093 = arith.mulf %1092, %1091 : vector<16x16xf32>
    %1094 = arith.addf %1088, %1093 : vector<16x16xf32>
    %c32_732 = arith.constant 32 : index
    %1095 = memref.load %arg3[%c32_732] : memref<144xf32, #tpu.memory_space<smem>>
    %c3_733 = arith.constant 3 : index
    %c1_734 = arith.constant 1 : index
    %c2_735 = arith.constant 2 : index
    %1096 = vector.load %arg7[%c3_733, %c1_734, %c2_735] : memref<4x18x18xf32, #tpu.memory_space<vmem>>, vector<1x16x16xf32>
    %1097 = vector.shape_cast %1096 : vector<1x16x16xf32> to vector<16x16xf32>
    %1098 = vector.broadcast %1095 : f32 to vector<16x16xf32>
    %1099 = arith.mulf %1098, %1097 : vector<16x16xf32>
    %1100 = arith.addf %1094, %1099 : vector<16x16xf32>
    %c33_736 = arith.constant 33 : index
    %1101 = memref.load %arg3[%c33_736] : memref<144xf32, #tpu.memory_space<smem>>
    %c3_737 = arith.constant 3 : index
    %c2_738 = arith.constant 2 : index
    %c0_739 = arith.constant 0 : index
    %1102 = vector.load %arg7[%c3_737, %c2_738, %c0_739] : memref<4x18x18xf32, #tpu.memory_space<vmem>>, vector<1x16x16xf32>
    %1103 = vector.shape_cast %1102 : vector<1x16x16xf32> to vector<16x16xf32>
    %1104 = vector.broadcast %1101 : f32 to vector<16x16xf32>
    %1105 = arith.mulf %1104, %1103 : vector<16x16xf32>
    %1106 = arith.addf %1100, %1105 : vector<16x16xf32>
    %c34_740 = arith.constant 34 : index
    %1107 = memref.load %arg3[%c34_740] : memref<144xf32, #tpu.memory_space<smem>>
    %c3_741 = arith.constant 3 : index
    %c2_742 = arith.constant 2 : index
    %c1_743 = arith.constant 1 : index
    %1108 = vector.load %arg7[%c3_741, %c2_742, %c1_743] : memref<4x18x18xf32, #tpu.memory_space<vmem>>, vector<1x16x16xf32>
    %1109 = vector.shape_cast %1108 : vector<1x16x16xf32> to vector<16x16xf32>
    %1110 = vector.broadcast %1107 : f32 to vector<16x16xf32>
    %1111 = arith.mulf %1110, %1109 : vector<16x16xf32>
    %1112 = arith.addf %1106, %1111 : vector<16x16xf32>
    %c35_744 = arith.constant 35 : index
    %1113 = memref.load %arg3[%c35_744] : memref<144xf32, #tpu.memory_space<smem>>
    %c3_745 = arith.constant 3 : index
    %c2_746 = arith.constant 2 : index
    %c2_747 = arith.constant 2 : index
    %1114 = vector.load %arg7[%c3_745, %c2_746, %c2_747] : memref<4x18x18xf32, #tpu.memory_space<vmem>>, vector<1x16x16xf32>
    %1115 = vector.shape_cast %1114 : vector<1x16x16xf32> to vector<16x16xf32>
    %1116 = vector.broadcast %1113 : f32 to vector<16x16xf32>
    %1117 = arith.mulf %1116, %1115 : vector<16x16xf32>
    %1118 = arith.addf %1112, %1117 : vector<16x16xf32>
    %c0_748 = arith.constant 0 : index
    %1119 = memref.load %arg4[%c0_748] : memref<4xf32, #tpu.memory_space<smem>>
    %1120 = vector.broadcast %1119 : f32 to vector<16x16xf32>
    %1121 = arith.addf %1118, %1120 : vector<16x16xf32>
    %cst_749 = arith.constant 0.000000e+00 : f32
    %1122 = vector.broadcast %cst_749 : f32 to vector<16x16xf32>
    %1123 = arith.maximumf %1121, %1122 : vector<16x16xf32>
    %c0_750 = arith.constant 0 : index
    %c0_751 = arith.constant 0 : index
    %c1_752 = arith.constant 1 : index
    %c1_753 = arith.constant 1 : index
    %1124 = vector.load %arg5[%c0_750, %c0_751, %c1_752, %c1_753] : memref<1x4x18x18xf32, #tpu.memory_space<vmem>>, vector<1x1x16x16xf32>
    %1125 = vector.shape_cast %1124 : vector<1x1x16x16xf32> to vector<16x16xf32>
    %1126 = arith.addf %1123, %1125 : vector<16x16xf32>
    %c0_754 = arith.constant 0 : index
    %c0_755 = arith.constant 0 : index
    %c0_756 = arith.constant 0 : index
    %c0_757 = arith.constant 0 : index
    %1127 = vector.load %arg6[%c0_754, %c0_755, %c0_756, %c0_757] : memref<1x4x16x16xf32, #tpu.memory_space<vmem>>, vector<1x1x16x16xf32>
    %1128 = vector.shape_cast %1127 : vector<1x1x16x16xf32> to vector<16x16xf32>
    %1129 = vector.shape_cast %1126 : vector<16x16xf32> to vector<1x1x16x16xf32>
    tpu.vector_store %arg6[%c0_754, %c0_755, %c0_756, %c0_757], %1129 {strides = array<i32>} : memref<1x4x16x16xf32, #tpu.memory_space<vmem>>, vector<1x1x16x16xf32>,
    %cst_758 = arith.constant 0.000000e+00 : f32
    %1130 = vector.broadcast %cst_758 : f32 to vector<16x16xf32>
    %c36_759 = arith.constant 36 : index
    %1131 = memref.load %arg3[%c36_759] : memref<144xf32, #tpu.memory_space<smem>>
    %c0_760 = arith.constant 0 : index
    %c0_761 = arith.constant 0 : index
    %c0_762 = arith.constant 0 : index
    %1132 = vector.load %arg7[%c0_760, %c0_761, %c0_762] : memref<4x18x18xf32, #tpu.memory_space<vmem>>, vector<1x16x16xf32>
    %1133 = vector.shape_cast %1132 : vector<1x16x16xf32> to vector<16x16xf32>
    %1134 = vector.broadcast %1131 : f32 to vector<16x16xf32>
    %1135 = arith.mulf %1134, %1133 : vector<16x16xf32>
    %1136 = arith.addf %1130, %1135 : vector<16x16xf32>
    %c37_763 = arith.constant 37 : index
    %1137 = memref.load %arg3[%c37_763] : memref<144xf32, #tpu.memory_space<smem>>
    %c0_764 = arith.constant 0 : index
    %c0_765 = arith.constant 0 : index
    %c1_766 = arith.constant 1 : index
    %1138 = vector.load %arg7[%c0_764, %c0_765, %c1_766] : memref<4x18x18xf32, #tpu.memory_space<vmem>>, vector<1x16x16xf32>
    %1139 = vector.shape_cast %1138 : vector<1x16x16xf32> to vector<16x16xf32>
    %1140 = vector.broadcast %1137 : f32 to vector<16x16xf32>
    %1141 = arith.mulf %1140, %1139 : vector<16x16xf32>
    %1142 = arith.addf %1136, %1141 : vector<16x16xf32>
    %c38_767 = arith.constant 38 : index
    %1143 = memref.load %arg3[%c38_767] : memref<144xf32, #tpu.memory_space<smem>>
    %c0_768 = arith.constant 0 : index
    %c0_769 = arith.constant 0 : index
    %c2_770 = arith.constant 2 : index
    %1144 = vector.load %arg7[%c0_768, %c0_769, %c2_770] : memref<4x18x18xf32, #tpu.memory_space<vmem>>, vector<1x16x16xf32>
    %1145 = vector.shape_cast %1144 : vector<1x16x16xf32> to vector<16x16xf32>
    %1146 = vector.broadcast %1143 : f32 to vector<16x16xf32>
    %1147 = arith.mulf %1146, %1145 : vector<16x16xf32>
    %1148 = arith.addf %1142, %1147 : vector<16x16xf32>
    %c39_771 = arith.constant 39 : index
    %1149 = memref.load %arg3[%c39_771] : memref<144xf32, #tpu.memory_space<smem>>
    %c0_772 = arith.constant 0 : index
    %c1_773 = arith.constant 1 : index
    %c0_774 = arith.constant 0 : index
    %1150 = vector.load %arg7[%c0_772, %c1_773, %c0_774] : memref<4x18x18xf32, #tpu.memory_space<vmem>>, vector<1x16x16xf32>
    %1151 = vector.shape_cast %1150 : vector<1x16x16xf32> to vector<16x16xf32>
    %1152 = vector.broadcast %1149 : f32 to vector<16x16xf32>
    %1153 = arith.mulf %1152, %1151 : vector<16x16xf32>
    %1154 = arith.addf %1148, %1153 : vector<16x16xf32>
    %c40_775 = arith.constant 40 : index
    %1155 = memref.load %arg3[%c40_775] : memref<144xf32, #tpu.memory_space<smem>>
    %c0_776 = arith.constant 0 : index
    %c1_777 = arith.constant 1 : index
    %c1_778 = arith.constant 1 : index
    %1156 = vector.load %arg7[%c0_776, %c1_777, %c1_778] : memref<4x18x18xf32, #tpu.memory_space<vmem>>, vector<1x16x16xf32>
    %1157 = vector.shape_cast %1156 : vector<1x16x16xf32> to vector<16x16xf32>
    %1158 = vector.broadcast %1155 : f32 to vector<16x16xf32>
    %1159 = arith.mulf %1158, %1157 : vector<16x16xf32>
    %1160 = arith.addf %1154, %1159 : vector<16x16xf32>
    %c41_779 = arith.constant 41 : index
    %1161 = memref.load %arg3[%c41_779] : memref<144xf32, #tpu.memory_space<smem>>
    %c0_780 = arith.constant 0 : index
    %c1_781 = arith.constant 1 : index
    %c2_782 = arith.constant 2 : index
    %1162 = vector.load %arg7[%c0_780, %c1_781, %c2_782] : memref<4x18x18xf32, #tpu.memory_space<vmem>>, vector<1x16x16xf32>
    %1163 = vector.shape_cast %1162 : vector<1x16x16xf32> to vector<16x16xf32>
    %1164 = vector.broadcast %1161 : f32 to vector<16x16xf32>
    %1165 = arith.mulf %1164, %1163 : vector<16x16xf32>
    %1166 = arith.addf %1160, %1165 : vector<16x16xf32>
    %c42_783 = arith.constant 42 : index
    %1167 = memref.load %arg3[%c42_783] : memref<144xf32, #tpu.memory_space<smem>>
    %c0_784 = arith.constant 0 : index
    %c2_785 = arith.constant 2 : index
    %c0_786 = arith.constant 0 : index
    %1168 = vector.load %arg7[%c0_784, %c2_785, %c0_786] : memref<4x18x18xf32, #tpu.memory_space<vmem>>, vector<1x16x16xf32>
    %1169 = vector.shape_cast %1168 : vector<1x16x16xf32> to vector<16x16xf32>
    %1170 = vector.broadcast %1167 : f32 to vector<16x16xf32>
    %1171 = arith.mulf %1170, %1169 : vector<16x16xf32>
    %1172 = arith.addf %1166, %1171 : vector<16x16xf32>
    %c43_787 = arith.constant 43 : index
    %1173 = memref.load %arg3[%c43_787] : memref<144xf32, #tpu.memory_space<smem>>
    %c0_788 = arith.constant 0 : index
    %c2_789 = arith.constant 2 : index
    %c1_790 = arith.constant 1 : index
    %1174 = vector.load %arg7[%c0_788, %c2_789, %c1_790] : memref<4x18x18xf32, #tpu.memory_space<vmem>>, vector<1x16x16xf32>
    %1175 = vector.shape_cast %1174 : vector<1x16x16xf32> to vector<16x16xf32>
    %1176 = vector.broadcast %1173 : f32 to vector<16x16xf32>
    %1177 = arith.mulf %1176, %1175 : vector<16x16xf32>
    %1178 = arith.addf %1172, %1177 : vector<16x16xf32>
    %c44_791 = arith.constant 44 : index
    %1179 = memref.load %arg3[%c44_791] : memref<144xf32, #tpu.memory_space<smem>>
    %c0_792 = arith.constant 0 : index
    %c2_793 = arith.constant 2 : index
    %c2_794 = arith.constant 2 : index
    %1180 = vector.load %arg7[%c0_792, %c2_793, %c2_794] : memref<4x18x18xf32, #tpu.memory_space<vmem>>, vector<1x16x16xf32>
    %1181 = vector.shape_cast %1180 : vector<1x16x16xf32> to vector<16x16xf32>
    %1182 = vector.broadcast %1179 : f32 to vector<16x16xf32>
    %1183 = arith.mulf %1182, %1181 : vector<16x16xf32>
    %1184 = arith.addf %1178, %1183 : vector<16x16xf32>
    %c45_795 = arith.constant 45 : index
    %1185 = memref.load %arg3[%c45_795] : memref<144xf32, #tpu.memory_space<smem>>
    %c1_796 = arith.constant 1 : index
    %c0_797 = arith.constant 0 : index
    %c0_798 = arith.constant 0 : index
    %1186 = vector.load %arg7[%c1_796, %c0_797, %c0_798] : memref<4x18x18xf32, #tpu.memory_space<vmem>>, vector<1x16x16xf32>
    %1187 = vector.shape_cast %1186 : vector<1x16x16xf32> to vector<16x16xf32>
    %1188 = vector.broadcast %1185 : f32 to vector<16x16xf32>
    %1189 = arith.mulf %1188, %1187 : vector<16x16xf32>
    %1190 = arith.addf %1184, %1189 : vector<16x16xf32>
    %c46_799 = arith.constant 46 : index
    %1191 = memref.load %arg3[%c46_799] : memref<144xf32, #tpu.memory_space<smem>>
    %c1_800 = arith.constant 1 : index
    %c0_801 = arith.constant 0 : index
    %c1_802 = arith.constant 1 : index
    %1192 = vector.load %arg7[%c1_800, %c0_801, %c1_802] : memref<4x18x18xf32, #tpu.memory_space<vmem>>, vector<1x16x16xf32>
    %1193 = vector.shape_cast %1192 : vector<1x16x16xf32> to vector<16x16xf32>
    %1194 = vector.broadcast %1191 : f32 to vector<16x16xf32>
    %1195 = arith.mulf %1194, %1193 : vector<16x16xf32>
    %1196 = arith.addf %1190, %1195 : vector<16x16xf32>
    %c47_803 = arith.constant 47 : index
    %1197 = memref.load %arg3[%c47_803] : memref<144xf32, #tpu.memory_space<smem>>
    %c1_804 = arith.constant 1 : index
    %c0_805 = arith.constant 0 : index
    %c2_806 = arith.constant 2 : index
    %1198 = vector.load %arg7[%c1_804, %c0_805, %c2_806] : memref<4x18x18xf32, #tpu.memory_space<vmem>>, vector<1x16x16xf32>
    %1199 = vector.shape_cast %1198 : vector<1x16x16xf32> to vector<16x16xf32>
    %1200 = vector.broadcast %1197 : f32 to vector<16x16xf32>
    %1201 = arith.mulf %1200, %1199 : vector<16x16xf32>
    %1202 = arith.addf %1196, %1201 : vector<16x16xf32>
    %c48_807 = arith.constant 48 : index
    %1203 = memref.load %arg3[%c48_807] : memref<144xf32, #tpu.memory_space<smem>>
    %c1_808 = arith.constant 1 : index
    %c1_809 = arith.constant 1 : index
    %c0_810 = arith.constant 0 : index
    %1204 = vector.load %arg7[%c1_808, %c1_809, %c0_810] : memref<4x18x18xf32, #tpu.memory_space<vmem>>, vector<1x16x16xf32>
    %1205 = vector.shape_cast %1204 : vector<1x16x16xf32> to vector<16x16xf32>
    %1206 = vector.broadcast %1203 : f32 to vector<16x16xf32>
    %1207 = arith.mulf %1206, %1205 : vector<16x16xf32>
    %1208 = arith.addf %1202, %1207 : vector<16x16xf32>
    %c49_811 = arith.constant 49 : index
    %1209 = memref.load %arg3[%c49_811] : memref<144xf32, #tpu.memory_space<smem>>
    %c1_812 = arith.constant 1 : index
    %c1_813 = arith.constant 1 : index
    %c1_814 = arith.constant 1 : index
    %1210 = vector.load %arg7[%c1_812, %c1_813, %c1_814] : memref<4x18x18xf32, #tpu.memory_space<vmem>>, vector<1x16x16xf32>
    %1211 = vector.shape_cast %1210 : vector<1x16x16xf32> to vector<16x16xf32>
    %1212 = vector.broadcast %1209 : f32 to vector<16x16xf32>
    %1213 = arith.mulf %1212, %1211 : vector<16x16xf32>
    %1214 = arith.addf %1208, %1213 : vector<16x16xf32>
    %c50_815 = arith.constant 50 : index
    %1215 = memref.load %arg3[%c50_815] : memref<144xf32, #tpu.memory_space<smem>>
    %c1_816 = arith.constant 1 : index
    %c1_817 = arith.constant 1 : index
    %c2_818 = arith.constant 2 : index
    %1216 = vector.load %arg7[%c1_816, %c1_817, %c2_818] : memref<4x18x18xf32, #tpu.memory_space<vmem>>, vector<1x16x16xf32>
    %1217 = vector.shape_cast %1216 : vector<1x16x16xf32> to vector<16x16xf32>
    %1218 = vector.broadcast %1215 : f32 to vector<16x16xf32>
    %1219 = arith.mulf %1218, %1217 : vector<16x16xf32>
    %1220 = arith.addf %1214, %1219 : vector<16x16xf32>
    %c51_819 = arith.constant 51 : index
    %1221 = memref.load %arg3[%c51_819] : memref<144xf32, #tpu.memory_space<smem>>
    %c1_820 = arith.constant 1 : index
    %c2_821 = arith.constant 2 : index
    %c0_822 = arith.constant 0 : index
    %1222 = vector.load %arg7[%c1_820, %c2_821, %c0_822] : memref<4x18x18xf32, #tpu.memory_space<vmem>>, vector<1x16x16xf32>
    %1223 = vector.shape_cast %1222 : vector<1x16x16xf32> to vector<16x16xf32>
    %1224 = vector.broadcast %1221 : f32 to vector<16x16xf32>
    %1225 = arith.mulf %1224, %1223 : vector<16x16xf32>
    %1226 = arith.addf %1220, %1225 : vector<16x16xf32>
    %c52_823 = arith.constant 52 : index
    %1227 = memref.load %arg3[%c52_823] : memref<144xf32, #tpu.memory_space<smem>>
    %c1_824 = arith.constant 1 : index
    %c2_825 = arith.constant 2 : index
    %c1_826 = arith.constant 1 : index
    %1228 = vector.load %arg7[%c1_824, %c2_825, %c1_826] : memref<4x18x18xf32, #tpu.memory_space<vmem>>, vector<1x16x16xf32>
    %1229 = vector.shape_cast %1228 : vector<1x16x16xf32> to vector<16x16xf32>
    %1230 = vector.broadcast %1227 : f32 to vector<16x16xf32>
    %1231 = arith.mulf %1230, %1229 : vector<16x16xf32>
    %1232 = arith.addf %1226, %1231 : vector<16x16xf32>
    %c53_827 = arith.constant 53 : index
    %1233 = memref.load %arg3[%c53_827] : memref<144xf32, #tpu.memory_space<smem>>
    %c1_828 = arith.constant 1 : index
    %c2_829 = arith.constant 2 : index
    %c2_830 = arith.constant 2 : index
    %1234 = vector.load %arg7[%c1_828, %c2_829, %c2_830] : memref<4x18x18xf32, #tpu.memory_space<vmem>>, vector<1x16x16xf32>
    %1235 = vector.shape_cast %1234 : vector<1x16x16xf32> to vector<16x16xf32>
    %1236 = vector.broadcast %1233 : f32 to vector<16x16xf32>
    %1237 = arith.mulf %1236, %1235 : vector<16x16xf32>
    %1238 = arith.addf %1232, %1237 : vector<16x16xf32>
    %c54_831 = arith.constant 54 : index
    %1239 = memref.load %arg3[%c54_831] : memref<144xf32, #tpu.memory_space<smem>>
    %c2_832 = arith.constant 2 : index
    %c0_833 = arith.constant 0 : index
    %c0_834 = arith.constant 0 : index
    %1240 = vector.load %arg7[%c2_832, %c0_833, %c0_834] : memref<4x18x18xf32, #tpu.memory_space<vmem>>, vector<1x16x16xf32>
    %1241 = vector.shape_cast %1240 : vector<1x16x16xf32> to vector<16x16xf32>
    %1242 = vector.broadcast %1239 : f32 to vector<16x16xf32>
    %1243 = arith.mulf %1242, %1241 : vector<16x16xf32>
    %1244 = arith.addf %1238, %1243 : vector<16x16xf32>
    %c55_835 = arith.constant 55 : index
    %1245 = memref.load %arg3[%c55_835] : memref<144xf32, #tpu.memory_space<smem>>
    %c2_836 = arith.constant 2 : index
    %c0_837 = arith.constant 0 : index
    %c1_838 = arith.constant 1 : index
    %1246 = vector.load %arg7[%c2_836, %c0_837, %c1_838] : memref<4x18x18xf32, #tpu.memory_space<vmem>>, vector<1x16x16xf32>
    %1247 = vector.shape_cast %1246 : vector<1x16x16xf32> to vector<16x16xf32>
    %1248 = vector.broadcast %1245 : f32 to vector<16x16xf32>
    %1249 = arith.mulf %1248, %1247 : vector<16x16xf32>
    %1250 = arith.addf %1244, %1249 : vector<16x16xf32>
    %c56_839 = arith.constant 56 : index
    %1251 = memref.load %arg3[%c56_839] : memref<144xf32, #tpu.memory_space<smem>>
    %c2_840 = arith.constant 2 : index
    %c0_841 = arith.constant 0 : index
    %c2_842 = arith.constant 2 : index
    %1252 = vector.load %arg7[%c2_840, %c0_841, %c2_842] : memref<4x18x18xf32, #tpu.memory_space<vmem>>, vector<1x16x16xf32>
    %1253 = vector.shape_cast %1252 : vector<1x16x16xf32> to vector<16x16xf32>
    %1254 = vector.broadcast %1251 : f32 to vector<16x16xf32>
    %1255 = arith.mulf %1254, %1253 : vector<16x16xf32>
    %1256 = arith.addf %1250, %1255 : vector<16x16xf32>
    %c57_843 = arith.constant 57 : index
    %1257 = memref.load %arg3[%c57_843] : memref<144xf32, #tpu.memory_space<smem>>
    %c2_844 = arith.constant 2 : index
    %c1_845 = arith.constant 1 : index
    %c0_846 = arith.constant 0 : index
    %1258 = vector.load %arg7[%c2_844, %c1_845, %c0_846] : memref<4x18x18xf32, #tpu.memory_space<vmem>>, vector<1x16x16xf32>
    %1259 = vector.shape_cast %1258 : vector<1x16x16xf32> to vector<16x16xf32>
    %1260 = vector.broadcast %1257 : f32 to vector<16x16xf32>
    %1261 = arith.mulf %1260, %1259 : vector<16x16xf32>
    %1262 = arith.addf %1256, %1261 : vector<16x16xf32>
    %c58_847 = arith.constant 58 : index
    %1263 = memref.load %arg3[%c58_847] : memref<144xf32, #tpu.memory_space<smem>>
    %c2_848 = arith.constant 2 : index
    %c1_849 = arith.constant 1 : index
    %c1_850 = arith.constant 1 : index
    %1264 = vector.load %arg7[%c2_848, %c1_849, %c1_850] : memref<4x18x18xf32, #tpu.memory_space<vmem>>, vector<1x16x16xf32>
    %1265 = vector.shape_cast %1264 : vector<1x16x16xf32> to vector<16x16xf32>
    %1266 = vector.broadcast %1263 : f32 to vector<16x16xf32>
    %1267 = arith.mulf %1266, %1265 : vector<16x16xf32>
    %1268 = arith.addf %1262, %1267 : vector<16x16xf32>
    %c59_851 = arith.constant 59 : index
    %1269 = memref.load %arg3[%c59_851] : memref<144xf32, #tpu.memory_space<smem>>
    %c2_852 = arith.constant 2 : index
    %c1_853 = arith.constant 1 : index
    %c2_854 = arith.constant 2 : index
    %1270 = vector.load %arg7[%c2_852, %c1_853, %c2_854] : memref<4x18x18xf32, #tpu.memory_space<vmem>>, vector<1x16x16xf32>
    %1271 = vector.shape_cast %1270 : vector<1x16x16xf32> to vector<16x16xf32>
    %1272 = vector.broadcast %1269 : f32 to vector<16x16xf32>
    %1273 = arith.mulf %1272, %1271 : vector<16x16xf32>
    %1274 = arith.addf %1268, %1273 : vector<16x16xf32>
    %c60_855 = arith.constant 60 : index
    %1275 = memref.load %arg3[%c60_855] : memref<144xf32, #tpu.memory_space<smem>>
    %c2_856 = arith.constant 2 : index
    %c2_857 = arith.constant 2 : index
    %c0_858 = arith.constant 0 : index
    %1276 = vector.load %arg7[%c2_856, %c2_857, %c0_858] : memref<4x18x18xf32, #tpu.memory_space<vmem>>, vector<1x16x16xf32>
    %1277 = vector.shape_cast %1276 : vector<1x16x16xf32> to vector<16x16xf32>
    %1278 = vector.broadcast %1275 : f32 to vector<16x16xf32>
    %1279 = arith.mulf %1278, %1277 : vector<16x16xf32>
    %1280 = arith.addf %1274, %1279 : vector<16x16xf32>
    %c61_859 = arith.constant 61 : index
    %1281 = memref.load %arg3[%c61_859] : memref<144xf32, #tpu.memory_space<smem>>
    %c2_860 = arith.constant 2 : index
    %c2_861 = arith.constant 2 : index
    %c1_862 = arith.constant 1 : index
    %1282 = vector.load %arg7[%c2_860, %c2_861, %c1_862] : memref<4x18x18xf32, #tpu.memory_space<vmem>>, vector<1x16x16xf32>
    %1283 = vector.shape_cast %1282 : vector<1x16x16xf32> to vector<16x16xf32>
    %1284 = vector.broadcast %1281 : f32 to vector<16x16xf32>
    %1285 = arith.mulf %1284, %1283 : vector<16x16xf32>
    %1286 = arith.addf %1280, %1285 : vector<16x16xf32>
    %c62_863 = arith.constant 62 : index
    %1287 = memref.load %arg3[%c62_863] : memref<144xf32, #tpu.memory_space<smem>>
    %c2_864 = arith.constant 2 : index
    %c2_865 = arith.constant 2 : index
    %c2_866 = arith.constant 2 : index
    %1288 = vector.load %arg7[%c2_864, %c2_865, %c2_866] : memref<4x18x18xf32, #tpu.memory_space<vmem>>, vector<1x16x16xf32>
    %1289 = vector.shape_cast %1288 : vector<1x16x16xf32> to vector<16x16xf32>
    %1290 = vector.broadcast %1287 : f32 to vector<16x16xf32>
    %1291 = arith.mulf %1290, %1289 : vector<16x16xf32>
    %1292 = arith.addf %1286, %1291 : vector<16x16xf32>
    %c63_867 = arith.constant 63 : index
    %1293 = memref.load %arg3[%c63_867] : memref<144xf32, #tpu.memory_space<smem>>
    %c3_868 = arith.constant 3 : index
    %c0_869 = arith.constant 0 : index
    %c0_870 = arith.constant 0 : index
    %1294 = vector.load %arg7[%c3_868, %c0_869, %c0_870] : memref<4x18x18xf32, #tpu.memory_space<vmem>>, vector<1x16x16xf32>
    %1295 = vector.shape_cast %1294 : vector<1x16x16xf32> to vector<16x16xf32>
    %1296 = vector.broadcast %1293 : f32 to vector<16x16xf32>
    %1297 = arith.mulf %1296, %1295 : vector<16x16xf32>
    %1298 = arith.addf %1292, %1297 : vector<16x16xf32>
    %c64_871 = arith.constant 64 : index
    %1299 = memref.load %arg3[%c64_871] : memref<144xf32, #tpu.memory_space<smem>>
    %c3_872 = arith.constant 3 : index
    %c0_873 = arith.constant 0 : index
    %c1_874 = arith.constant 1 : index
    %1300 = vector.load %arg7[%c3_872, %c0_873, %c1_874] : memref<4x18x18xf32, #tpu.memory_space<vmem>>, vector<1x16x16xf32>
    %1301 = vector.shape_cast %1300 : vector<1x16x16xf32> to vector<16x16xf32>
    %1302 = vector.broadcast %1299 : f32 to vector<16x16xf32>
    %1303 = arith.mulf %1302, %1301 : vector<16x16xf32>
    %1304 = arith.addf %1298, %1303 : vector<16x16xf32>
    %c65_875 = arith.constant 65 : index
    %1305 = memref.load %arg3[%c65_875] : memref<144xf32, #tpu.memory_space<smem>>
    %c3_876 = arith.constant 3 : index
    %c0_877 = arith.constant 0 : index
    %c2_878 = arith.constant 2 : index
    %1306 = vector.load %arg7[%c3_876, %c0_877, %c2_878] : memref<4x18x18xf32, #tpu.memory_space<vmem>>, vector<1x16x16xf32>
    %1307 = vector.shape_cast %1306 : vector<1x16x16xf32> to vector<16x16xf32>
    %1308 = vector.broadcast %1305 : f32 to vector<16x16xf32>
    %1309 = arith.mulf %1308, %1307 : vector<16x16xf32>
    %1310 = arith.addf %1304, %1309 : vector<16x16xf32>
    %c66_879 = arith.constant 66 : index
    %1311 = memref.load %arg3[%c66_879] : memref<144xf32, #tpu.memory_space<smem>>
    %c3_880 = arith.constant 3 : index
    %c1_881 = arith.constant 1 : index
    %c0_882 = arith.constant 0 : index
    %1312 = vector.load %arg7[%c3_880, %c1_881, %c0_882] : memref<4x18x18xf32, #tpu.memory_space<vmem>>, vector<1x16x16xf32>
    %1313 = vector.shape_cast %1312 : vector<1x16x16xf32> to vector<16x16xf32>
    %1314 = vector.broadcast %1311 : f32 to vector<16x16xf32>
    %1315 = arith.mulf %1314, %1313 : vector<16x16xf32>
    %1316 = arith.addf %1310, %1315 : vector<16x16xf32>
    %c67_883 = arith.constant 67 : index
    %1317 = memref.load %arg3[%c67_883] : memref<144xf32, #tpu.memory_space<smem>>
    %c3_884 = arith.constant 3 : index
    %c1_885 = arith.constant 1 : index
    %c1_886 = arith.constant 1 : index
    %1318 = vector.load %arg7[%c3_884, %c1_885, %c1_886] : memref<4x18x18xf32, #tpu.memory_space<vmem>>, vector<1x16x16xf32>
    %1319 = vector.shape_cast %1318 : vector<1x16x16xf32> to vector<16x16xf32>
    %1320 = vector.broadcast %1317 : f32 to vector<16x16xf32>
    %1321 = arith.mulf %1320, %1319 : vector<16x16xf32>
    %1322 = arith.addf %1316, %1321 : vector<16x16xf32>
    %c68_887 = arith.constant 68 : index
    %1323 = memref.load %arg3[%c68_887] : memref<144xf32, #tpu.memory_space<smem>>
    %c3_888 = arith.constant 3 : index
    %c1_889 = arith.constant 1 : index
    %c2_890 = arith.constant 2 : index
    %1324 = vector.load %arg7[%c3_888, %c1_889, %c2_890] : memref<4x18x18xf32, #tpu.memory_space<vmem>>, vector<1x16x16xf32>
    %1325 = vector.shape_cast %1324 : vector<1x16x16xf32> to vector<16x16xf32>
    %1326 = vector.broadcast %1323 : f32 to vector<16x16xf32>
    %1327 = arith.mulf %1326, %1325 : vector<16x16xf32>
    %1328 = arith.addf %1322, %1327 : vector<16x16xf32>
    %c69_891 = arith.constant 69 : index
    %1329 = memref.load %arg3[%c69_891] : memref<144xf32, #tpu.memory_space<smem>>
    %c3_892 = arith.constant 3 : index
    %c2_893 = arith.constant 2 : index
    %c0_894 = arith.constant 0 : index
    %1330 = vector.load %arg7[%c3_892, %c2_893, %c0_894] : memref<4x18x18xf32, #tpu.memory_space<vmem>>, vector<1x16x16xf32>
    %1331 = vector.shape_cast %1330 : vector<1x16x16xf32> to vector<16x16xf32>
    %1332 = vector.broadcast %1329 : f32 to vector<16x16xf32>
    %1333 = arith.mulf %1332, %1331 : vector<16x16xf32>
    %1334 = arith.addf %1328, %1333 : vector<16x16xf32>
    %c70_895 = arith.constant 70 : index
    %1335 = memref.load %arg3[%c70_895] : memref<144xf32, #tpu.memory_space<smem>>
    %c3_896 = arith.constant 3 : index
    %c2_897 = arith.constant 2 : index
    %c1_898 = arith.constant 1 : index
    %1336 = vector.load %arg7[%c3_896, %c2_897, %c1_898] : memref<4x18x18xf32, #tpu.memory_space<vmem>>, vector<1x16x16xf32>
    %1337 = vector.shape_cast %1336 : vector<1x16x16xf32> to vector<16x16xf32>
    %1338 = vector.broadcast %1335 : f32 to vector<16x16xf32>
    %1339 = arith.mulf %1338, %1337 : vector<16x16xf32>
    %1340 = arith.addf %1334, %1339 : vector<16x16xf32>
    %c71_899 = arith.constant 71 : index
    %1341 = memref.load %arg3[%c71_899] : memref<144xf32, #tpu.memory_space<smem>>
    %c3_900 = arith.constant 3 : index
    %c2_901 = arith.constant 2 : index
    %c2_902 = arith.constant 2 : index
    %1342 = vector.load %arg7[%c3_900, %c2_901, %c2_902] : memref<4x18x18xf32, #tpu.memory_space<vmem>>, vector<1x16x16xf32>
    %1343 = vector.shape_cast %1342 : vector<1x16x16xf32> to vector<16x16xf32>
    %1344 = vector.broadcast %1341 : f32 to vector<16x16xf32>
    %1345 = arith.mulf %1344, %1343 : vector<16x16xf32>
    %1346 = arith.addf %1340, %1345 : vector<16x16xf32>
    %c1_903 = arith.constant 1 : index
    %1347 = memref.load %arg4[%c1_903] : memref<4xf32, #tpu.memory_space<smem>>
    %1348 = vector.broadcast %1347 : f32 to vector<16x16xf32>
    %1349 = arith.addf %1346, %1348 : vector<16x16xf32>
    %cst_904 = arith.constant 0.000000e+00 : f32
    %1350 = vector.broadcast %cst_904 : f32 to vector<16x16xf32>
    %1351 = arith.maximumf %1349, %1350 : vector<16x16xf32>
    %c0_905 = arith.constant 0 : index
    %c1_906 = arith.constant 1 : index
    %c1_907 = arith.constant 1 : index
    %c1_908 = arith.constant 1 : index
    %1352 = vector.load %arg5[%c0_905, %c1_906, %c1_907, %c1_908] : memref<1x4x18x18xf32, #tpu.memory_space<vmem>>, vector<1x1x16x16xf32>
    %1353 = vector.shape_cast %1352 : vector<1x1x16x16xf32> to vector<16x16xf32>
    %1354 = arith.addf %1351, %1353 : vector<16x16xf32>
    %c0_909 = arith.constant 0 : index
    %c1_910 = arith.constant 1 : index
    %c0_911 = arith.constant 0 : index
    %c0_912 = arith.constant 0 : index
    %1355 = vector.load %arg6[%c0_909, %c1_910, %c0_911, %c0_912] : memref<1x4x16x16xf32, #tpu.memory_space<vmem>>, vector<1x1x16x16xf32>
    %1356 = vector.shape_cast %1355 : vector<1x1x16x16xf32> to vector<16x16xf32>
    %1357 = vector.shape_cast %1354 : vector<16x16xf32> to vector<1x1x16x16xf32>
    tpu.vector_store %arg6[%c0_909, %c1_910, %c0_911, %c0_912], %1357 {strides = array<i32>} : memref<1x4x16x16xf32, #tpu.memory_space<vmem>>, vector<1x1x16x16xf32>,
    %cst_913 = arith.constant 0.000000e+00 : f32
    %1358 = vector.broadcast %cst_913 : f32 to vector<16x16xf32>
    %c72_914 = arith.constant 72 : index
    %1359 = memref.load %arg3[%c72_914] : memref<144xf32, #tpu.memory_space<smem>>
    %c0_915 = arith.constant 0 : index
    %c0_916 = arith.constant 0 : index
    %c0_917 = arith.constant 0 : index
    %1360 = vector.load %arg7[%c0_915, %c0_916, %c0_917] : memref<4x18x18xf32, #tpu.memory_space<vmem>>, vector<1x16x16xf32>
    %1361 = vector.shape_cast %1360 : vector<1x16x16xf32> to vector<16x16xf32>
    %1362 = vector.broadcast %1359 : f32 to vector<16x16xf32>
    %1363 = arith.mulf %1362, %1361 : vector<16x16xf32>
    %1364 = arith.addf %1358, %1363 : vector<16x16xf32>
    %c73_918 = arith.constant 73 : index
    %1365 = memref.load %arg3[%c73_918] : memref<144xf32, #tpu.memory_space<smem>>
    %c0_919 = arith.constant 0 : index
    %c0_920 = arith.constant 0 : index
    %c1_921 = arith.constant 1 : index
    %1366 = vector.load %arg7[%c0_919, %c0_920, %c1_921] : memref<4x18x18xf32, #tpu.memory_space<vmem>>, vector<1x16x16xf32>
    %1367 = vector.shape_cast %1366 : vector<1x16x16xf32> to vector<16x16xf32>
    %1368 = vector.broadcast %1365 : f32 to vector<16x16xf32>
    %1369 = arith.mulf %1368, %1367 : vector<16x16xf32>
    %1370 = arith.addf %1364, %1369 : vector<16x16xf32>
    %c74_922 = arith.constant 74 : index
    %1371 = memref.load %arg3[%c74_922] : memref<144xf32, #tpu.memory_space<smem>>
    %c0_923 = arith.constant 0 : index
    %c0_924 = arith.constant 0 : index
    %c2_925 = arith.constant 2 : index
    %1372 = vector.load %arg7[%c0_923, %c0_924, %c2_925] : memref<4x18x18xf32, #tpu.memory_space<vmem>>, vector<1x16x16xf32>
    %1373 = vector.shape_cast %1372 : vector<1x16x16xf32> to vector<16x16xf32>
    %1374 = vector.broadcast %1371 : f32 to vector<16x16xf32>
    %1375 = arith.mulf %1374, %1373 : vector<16x16xf32>
    %1376 = arith.addf %1370, %1375 : vector<16x16xf32>
    %c75_926 = arith.constant 75 : index
    %1377 = memref.load %arg3[%c75_926] : memref<144xf32, #tpu.memory_space<smem>>
    %c0_927 = arith.constant 0 : index
    %c1_928 = arith.constant 1 : index
    %c0_929 = arith.constant 0 : index
    %1378 = vector.load %arg7[%c0_927, %c1_928, %c0_929] : memref<4x18x18xf32, #tpu.memory_space<vmem>>, vector<1x16x16xf32>
    %1379 = vector.shape_cast %1378 : vector<1x16x16xf32> to vector<16x16xf32>
    %1380 = vector.broadcast %1377 : f32 to vector<16x16xf32>
    %1381 = arith.mulf %1380, %1379 : vector<16x16xf32>
    %1382 = arith.addf %1376, %1381 : vector<16x16xf32>
    %c76_930 = arith.constant 76 : index
    %1383 = memref.load %arg3[%c76_930] : memref<144xf32, #tpu.memory_space<smem>>
    %c0_931 = arith.constant 0 : index
    %c1_932 = arith.constant 1 : index
    %c1_933 = arith.constant 1 : index
    %1384 = vector.load %arg7[%c0_931, %c1_932, %c1_933] : memref<4x18x18xf32, #tpu.memory_space<vmem>>, vector<1x16x16xf32>
    %1385 = vector.shape_cast %1384 : vector<1x16x16xf32> to vector<16x16xf32>
    %1386 = vector.broadcast %1383 : f32 to vector<16x16xf32>
    %1387 = arith.mulf %1386, %1385 : vector<16x16xf32>
    %1388 = arith.addf %1382, %1387 : vector<16x16xf32>
    %c77_934 = arith.constant 77 : index
    %1389 = memref.load %arg3[%c77_934] : memref<144xf32, #tpu.memory_space<smem>>
    %c0_935 = arith.constant 0 : index
    %c1_936 = arith.constant 1 : index
    %c2_937 = arith.constant 2 : index
    %1390 = vector.load %arg7[%c0_935, %c1_936, %c2_937] : memref<4x18x18xf32, #tpu.memory_space<vmem>>, vector<1x16x16xf32>
    %1391 = vector.shape_cast %1390 : vector<1x16x16xf32> to vector<16x16xf32>
    %1392 = vector.broadcast %1389 : f32 to vector<16x16xf32>
    %1393 = arith.mulf %1392, %1391 : vector<16x16xf32>
    %1394 = arith.addf %1388, %1393 : vector<16x16xf32>
    %c78_938 = arith.constant 78 : index
    %1395 = memref.load %arg3[%c78_938] : memref<144xf32, #tpu.memory_space<smem>>
    %c0_939 = arith.constant 0 : index
    %c2_940 = arith.constant 2 : index
    %c0_941 = arith.constant 0 : index
    %1396 = vector.load %arg7[%c0_939, %c2_940, %c0_941] : memref<4x18x18xf32, #tpu.memory_space<vmem>>, vector<1x16x16xf32>
    %1397 = vector.shape_cast %1396 : vector<1x16x16xf32> to vector<16x16xf32>
    %1398 = vector.broadcast %1395 : f32 to vector<16x16xf32>
    %1399 = arith.mulf %1398, %1397 : vector<16x16xf32>
    %1400 = arith.addf %1394, %1399 : vector<16x16xf32>
    %c79_942 = arith.constant 79 : index
    %1401 = memref.load %arg3[%c79_942] : memref<144xf32, #tpu.memory_space<smem>>
    %c0_943 = arith.constant 0 : index
    %c2_944 = arith.constant 2 : index
    %c1_945 = arith.constant 1 : index
    %1402 = vector.load %arg7[%c0_943, %c2_944, %c1_945] : memref<4x18x18xf32, #tpu.memory_space<vmem>>, vector<1x16x16xf32>
    %1403 = vector.shape_cast %1402 : vector<1x16x16xf32> to vector<16x16xf32>
    %1404 = vector.broadcast %1401 : f32 to vector<16x16xf32>
    %1405 = arith.mulf %1404, %1403 : vector<16x16xf32>
    %1406 = arith.addf %1400, %1405 : vector<16x16xf32>
    %c80_946 = arith.constant 80 : index
    %1407 = memref.load %arg3[%c80_946] : memref<144xf32, #tpu.memory_space<smem>>
    %c0_947 = arith.constant 0 : index
    %c2_948 = arith.constant 2 : index
    %c2_949 = arith.constant 2 : index
    %1408 = vector.load %arg7[%c0_947, %c2_948, %c2_949] : memref<4x18x18xf32, #tpu.memory_space<vmem>>, vector<1x16x16xf32>
    %1409 = vector.shape_cast %1408 : vector<1x16x16xf32> to vector<16x16xf32>
    %1410 = vector.broadcast %1407 : f32 to vector<16x16xf32>
    %1411 = arith.mulf %1410, %1409 : vector<16x16xf32>
    %1412 = arith.addf %1406, %1411 : vector<16x16xf32>
    %c81_950 = arith.constant 81 : index
    %1413 = memref.load %arg3[%c81_950] : memref<144xf32, #tpu.memory_space<smem>>
    %c1_951 = arith.constant 1 : index
    %c0_952 = arith.constant 0 : index
    %c0_953 = arith.constant 0 : index
    %1414 = vector.load %arg7[%c1_951, %c0_952, %c0_953] : memref<4x18x18xf32, #tpu.memory_space<vmem>>, vector<1x16x16xf32>
    %1415 = vector.shape_cast %1414 : vector<1x16x16xf32> to vector<16x16xf32>
    %1416 = vector.broadcast %1413 : f32 to vector<16x16xf32>
    %1417 = arith.mulf %1416, %1415 : vector<16x16xf32>
    %1418 = arith.addf %1412, %1417 : vector<16x16xf32>
    %c82_954 = arith.constant 82 : index
    %1419 = memref.load %arg3[%c82_954] : memref<144xf32, #tpu.memory_space<smem>>
    %c1_955 = arith.constant 1 : index
    %c0_956 = arith.constant 0 : index
    %c1_957 = arith.constant 1 : index
    %1420 = vector.load %arg7[%c1_955, %c0_956, %c1_957] : memref<4x18x18xf32, #tpu.memory_space<vmem>>, vector<1x16x16xf32>
    %1421 = vector.shape_cast %1420 : vector<1x16x16xf32> to vector<16x16xf32>
    %1422 = vector.broadcast %1419 : f32 to vector<16x16xf32>
    %1423 = arith.mulf %1422, %1421 : vector<16x16xf32>
    %1424 = arith.addf %1418, %1423 : vector<16x16xf32>
    %c83_958 = arith.constant 83 : index
    %1425 = memref.load %arg3[%c83_958] : memref<144xf32, #tpu.memory_space<smem>>
    %c1_959 = arith.constant 1 : index
    %c0_960 = arith.constant 0 : index
    %c2_961 = arith.constant 2 : index
    %1426 = vector.load %arg7[%c1_959, %c0_960, %c2_961] : memref<4x18x18xf32, #tpu.memory_space<vmem>>, vector<1x16x16xf32>
    %1427 = vector.shape_cast %1426 : vector<1x16x16xf32> to vector<16x16xf32>
    %1428 = vector.broadcast %1425 : f32 to vector<16x16xf32>
    %1429 = arith.mulf %1428, %1427 : vector<16x16xf32>
    %1430 = arith.addf %1424, %1429 : vector<16x16xf32>
    %c84_962 = arith.constant 84 : index
    %1431 = memref.load %arg3[%c84_962] : memref<144xf32, #tpu.memory_space<smem>>
    %c1_963 = arith.constant 1 : index
    %c1_964 = arith.constant 1 : index
    %c0_965 = arith.constant 0 : index
    %1432 = vector.load %arg7[%c1_963, %c1_964, %c0_965] : memref<4x18x18xf32, #tpu.memory_space<vmem>>, vector<1x16x16xf32>
    %1433 = vector.shape_cast %1432 : vector<1x16x16xf32> to vector<16x16xf32>
    %1434 = vector.broadcast %1431 : f32 to vector<16x16xf32>
    %1435 = arith.mulf %1434, %1433 : vector<16x16xf32>
    %1436 = arith.addf %1430, %1435 : vector<16x16xf32>
    %c85_966 = arith.constant 85 : index
    %1437 = memref.load %arg3[%c85_966] : memref<144xf32, #tpu.memory_space<smem>>
    %c1_967 = arith.constant 1 : index
    %c1_968 = arith.constant 1 : index
    %c1_969 = arith.constant 1 : index
    %1438 = vector.load %arg7[%c1_967, %c1_968, %c1_969] : memref<4x18x18xf32, #tpu.memory_space<vmem>>, vector<1x16x16xf32>
    %1439 = vector.shape_cast %1438 : vector<1x16x16xf32> to vector<16x16xf32>
    %1440 = vector.broadcast %1437 : f32 to vector<16x16xf32>
    %1441 = arith.mulf %1440, %1439 : vector<16x16xf32>
    %1442 = arith.addf %1436, %1441 : vector<16x16xf32>
    %c86_970 = arith.constant 86 : index
    %1443 = memref.load %arg3[%c86_970] : memref<144xf32, #tpu.memory_space<smem>>
    %c1_971 = arith.constant 1 : index
    %c1_972 = arith.constant 1 : index
    %c2_973 = arith.constant 2 : index
    %1444 = vector.load %arg7[%c1_971, %c1_972, %c2_973] : memref<4x18x18xf32, #tpu.memory_space<vmem>>, vector<1x16x16xf32>
    %1445 = vector.shape_cast %1444 : vector<1x16x16xf32> to vector<16x16xf32>
    %1446 = vector.broadcast %1443 : f32 to vector<16x16xf32>
    %1447 = arith.mulf %1446, %1445 : vector<16x16xf32>
    %1448 = arith.addf %1442, %1447 : vector<16x16xf32>
    %c87_974 = arith.constant 87 : index
    %1449 = memref.load %arg3[%c87_974] : memref<144xf32, #tpu.memory_space<smem>>
    %c1_975 = arith.constant 1 : index
    %c2_976 = arith.constant 2 : index
    %c0_977 = arith.constant 0 : index
    %1450 = vector.load %arg7[%c1_975, %c2_976, %c0_977] : memref<4x18x18xf32, #tpu.memory_space<vmem>>, vector<1x16x16xf32>
    %1451 = vector.shape_cast %1450 : vector<1x16x16xf32> to vector<16x16xf32>
    %1452 = vector.broadcast %1449 : f32 to vector<16x16xf32>
    %1453 = arith.mulf %1452, %1451 : vector<16x16xf32>
    %1454 = arith.addf %1448, %1453 : vector<16x16xf32>
    %c88_978 = arith.constant 88 : index
    %1455 = memref.load %arg3[%c88_978] : memref<144xf32, #tpu.memory_space<smem>>
    %c1_979 = arith.constant 1 : index
    %c2_980 = arith.constant 2 : index
    %c1_981 = arith.constant 1 : index
    %1456 = vector.load %arg7[%c1_979, %c2_980, %c1_981] : memref<4x18x18xf32, #tpu.memory_space<vmem>>, vector<1x16x16xf32>
    %1457 = vector.shape_cast %1456 : vector<1x16x16xf32> to vector<16x16xf32>
    %1458 = vector.broadcast %1455 : f32 to vector<16x16xf32>
    %1459 = arith.mulf %1458, %1457 : vector<16x16xf32>
    %1460 = arith.addf %1454, %1459 : vector<16x16xf32>
    %c89_982 = arith.constant 89 : index
    %1461 = memref.load %arg3[%c89_982] : memref<144xf32, #tpu.memory_space<smem>>
    %c1_983 = arith.constant 1 : index
    %c2_984 = arith.constant 2 : index
    %c2_985 = arith.constant 2 : index
    %1462 = vector.load %arg7[%c1_983, %c2_984, %c2_985] : memref<4x18x18xf32, #tpu.memory_space<vmem>>, vector<1x16x16xf32>
    %1463 = vector.shape_cast %1462 : vector<1x16x16xf32> to vector<16x16xf32>
    %1464 = vector.broadcast %1461 : f32 to vector<16x16xf32>
    %1465 = arith.mulf %1464, %1463 : vector<16x16xf32>
    %1466 = arith.addf %1460, %1465 : vector<16x16xf32>
    %c90_986 = arith.constant 90 : index
    %1467 = memref.load %arg3[%c90_986] : memref<144xf32, #tpu.memory_space<smem>>
    %c2_987 = arith.constant 2 : index
    %c0_988 = arith.constant 0 : index
    %c0_989 = arith.constant 0 : index
    %1468 = vector.load %arg7[%c2_987, %c0_988, %c0_989] : memref<4x18x18xf32, #tpu.memory_space<vmem>>, vector<1x16x16xf32>
    %1469 = vector.shape_cast %1468 : vector<1x16x16xf32> to vector<16x16xf32>
    %1470 = vector.broadcast %1467 : f32 to vector<16x16xf32>
    %1471 = arith.mulf %1470, %1469 : vector<16x16xf32>
    %1472 = arith.addf %1466, %1471 : vector<16x16xf32>
    %c91_990 = arith.constant 91 : index
    %1473 = memref.load %arg3[%c91_990] : memref<144xf32, #tpu.memory_space<smem>>
    %c2_991 = arith.constant 2 : index
    %c0_992 = arith.constant 0 : index
    %c1_993 = arith.constant 1 : index
    %1474 = vector.load %arg7[%c2_991, %c0_992, %c1_993] : memref<4x18x18xf32, #tpu.memory_space<vmem>>, vector<1x16x16xf32>
    %1475 = vector.shape_cast %1474 : vector<1x16x16xf32> to vector<16x16xf32>
    %1476 = vector.broadcast %1473 : f32 to vector<16x16xf32>
    %1477 = arith.mulf %1476, %1475 : vector<16x16xf32>
    %1478 = arith.addf %1472, %1477 : vector<16x16xf32>
    %c92_994 = arith.constant 92 : index
    %1479 = memref.load %arg3[%c92_994] : memref<144xf32, #tpu.memory_space<smem>>
    %c2_995 = arith.constant 2 : index
    %c0_996 = arith.constant 0 : index
    %c2_997 = arith.constant 2 : index
    %1480 = vector.load %arg7[%c2_995, %c0_996, %c2_997] : memref<4x18x18xf32, #tpu.memory_space<vmem>>, vector<1x16x16xf32>
    %1481 = vector.shape_cast %1480 : vector<1x16x16xf32> to vector<16x16xf32>
    %1482 = vector.broadcast %1479 : f32 to vector<16x16xf32>
    %1483 = arith.mulf %1482, %1481 : vector<16x16xf32>
    %1484 = arith.addf %1478, %1483 : vector<16x16xf32>
    %c93_998 = arith.constant 93 : index
    %1485 = memref.load %arg3[%c93_998] : memref<144xf32, #tpu.memory_space<smem>>
    %c2_999 = arith.constant 2 : index
    %c1_1000 = arith.constant 1 : index
    %c0_1001 = arith.constant 0 : index
    %1486 = vector.load %arg7[%c2_999, %c1_1000, %c0_1001] : memref<4x18x18xf32, #tpu.memory_space<vmem>>, vector<1x16x16xf32>
    %1487 = vector.shape_cast %1486 : vector<1x16x16xf32> to vector<16x16xf32>
    %1488 = vector.broadcast %1485 : f32 to vector<16x16xf32>
    %1489 = arith.mulf %1488, %1487 : vector<16x16xf32>
    %1490 = arith.addf %1484, %1489 : vector<16x16xf32>
    %c94_1002 = arith.constant 94 : index
    %1491 = memref.load %arg3[%c94_1002] : memref<144xf32, #tpu.memory_space<smem>>
    %c2_1003 = arith.constant 2 : index
    %c1_1004 = arith.constant 1 : index
    %c1_1005 = arith.constant 1 : index
    %1492 = vector.load %arg7[%c2_1003, %c1_1004, %c1_1005] : memref<4x18x18xf32, #tpu.memory_space<vmem>>, vector<1x16x16xf32>
    %1493 = vector.shape_cast %1492 : vector<1x16x16xf32> to vector<16x16xf32>
    %1494 = vector.broadcast %1491 : f32 to vector<16x16xf32>
    %1495 = arith.mulf %1494, %1493 : vector<16x16xf32>
    %1496 = arith.addf %1490, %1495 : vector<16x16xf32>
    %c95_1006 = arith.constant 95 : index
    %1497 = memref.load %arg3[%c95_1006] : memref<144xf32, #tpu.memory_space<smem>>
    %c2_1007 = arith.constant 2 : index
    %c1_1008 = arith.constant 1 : index
    %c2_1009 = arith.constant 2 : index
    %1498 = vector.load %arg7[%c2_1007, %c1_1008, %c2_1009] : memref<4x18x18xf32, #tpu.memory_space<vmem>>, vector<1x16x16xf32>
    %1499 = vector.shape_cast %1498 : vector<1x16x16xf32> to vector<16x16xf32>
    %1500 = vector.broadcast %1497 : f32 to vector<16x16xf32>
    %1501 = arith.mulf %1500, %1499 : vector<16x16xf32>
    %1502 = arith.addf %1496, %1501 : vector<16x16xf32>
    %c96_1010 = arith.constant 96 : index
    %1503 = memref.load %arg3[%c96_1010] : memref<144xf32, #tpu.memory_space<smem>>
    %c2_1011 = arith.constant 2 : index
    %c2_1012 = arith.constant 2 : index
    %c0_1013 = arith.constant 0 : index
    %1504 = vector.load %arg7[%c2_1011, %c2_1012, %c0_1013] : memref<4x18x18xf32, #tpu.memory_space<vmem>>, vector<1x16x16xf32>
    %1505 = vector.shape_cast %1504 : vector<1x16x16xf32> to vector<16x16xf32>
    %1506 = vector.broadcast %1503 : f32 to vector<16x16xf32>
    %1507 = arith.mulf %1506, %1505 : vector<16x16xf32>
    %1508 = arith.addf %1502, %1507 : vector<16x16xf32>
    %c97_1014 = arith.constant 97 : index
    %1509 = memref.load %arg3[%c97_1014] : memref<144xf32, #tpu.memory_space<smem>>
    %c2_1015 = arith.constant 2 : index
    %c2_1016 = arith.constant 2 : index
    %c1_1017 = arith.constant 1 : index
    %1510 = vector.load %arg7[%c2_1015, %c2_1016, %c1_1017] : memref<4x18x18xf32, #tpu.memory_space<vmem>>, vector<1x16x16xf32>
    %1511 = vector.shape_cast %1510 : vector<1x16x16xf32> to vector<16x16xf32>
    %1512 = vector.broadcast %1509 : f32 to vector<16x16xf32>
    %1513 = arith.mulf %1512, %1511 : vector<16x16xf32>
    %1514 = arith.addf %1508, %1513 : vector<16x16xf32>
    %c98_1018 = arith.constant 98 : index
    %1515 = memref.load %arg3[%c98_1018] : memref<144xf32, #tpu.memory_space<smem>>
    %c2_1019 = arith.constant 2 : index
    %c2_1020 = arith.constant 2 : index
    %c2_1021 = arith.constant 2 : index
    %1516 = vector.load %arg7[%c2_1019, %c2_1020, %c2_1021] : memref<4x18x18xf32, #tpu.memory_space<vmem>>, vector<1x16x16xf32>
    %1517 = vector.shape_cast %1516 : vector<1x16x16xf32> to vector<16x16xf32>
    %1518 = vector.broadcast %1515 : f32 to vector<16x16xf32>
    %1519 = arith.mulf %1518, %1517 : vector<16x16xf32>
    %1520 = arith.addf %1514, %1519 : vector<16x16xf32>
    %c99_1022 = arith.constant 99 : index
    %1521 = memref.load %arg3[%c99_1022] : memref<144xf32, #tpu.memory_space<smem>>
    %c3_1023 = arith.constant 3 : index
    %c0_1024 = arith.constant 0 : index
    %c0_1025 = arith.constant 0 : index
    %1522 = vector.load %arg7[%c3_1023, %c0_1024, %c0_1025] : memref<4x18x18xf32, #tpu.memory_space<vmem>>, vector<1x16x16xf32>
    %1523 = vector.shape_cast %1522 : vector<1x16x16xf32> to vector<16x16xf32>
    %1524 = vector.broadcast %1521 : f32 to vector<16x16xf32>
    %1525 = arith.mulf %1524, %1523 : vector<16x16xf32>
    %1526 = arith.addf %1520, %1525 : vector<16x16xf32>
    %c100_1026 = arith.constant 100 : index
    %1527 = memref.load %arg3[%c100_1026] : memref<144xf32, #tpu.memory_space<smem>>
    %c3_1027 = arith.constant 3 : index
    %c0_1028 = arith.constant 0 : index
    %c1_1029 = arith.constant 1 : index
    %1528 = vector.load %arg7[%c3_1027, %c0_1028, %c1_1029] : memref<4x18x18xf32, #tpu.memory_space<vmem>>, vector<1x16x16xf32>
    %1529 = vector.shape_cast %1528 : vector<1x16x16xf32> to vector<16x16xf32>
    %1530 = vector.broadcast %1527 : f32 to vector<16x16xf32>
    %1531 = arith.mulf %1530, %1529 : vector<16x16xf32>
    %1532 = arith.addf %1526, %1531 : vector<16x16xf32>
    %c101_1030 = arith.constant 101 : index
    %1533 = memref.load %arg3[%c101_1030] : memref<144xf32, #tpu.memory_space<smem>>
    %c3_1031 = arith.constant 3 : index
    %c0_1032 = arith.constant 0 : index
    %c2_1033 = arith.constant 2 : index
    %1534 = vector.load %arg7[%c3_1031, %c0_1032, %c2_1033] : memref<4x18x18xf32, #tpu.memory_space<vmem>>, vector<1x16x16xf32>
    %1535 = vector.shape_cast %1534 : vector<1x16x16xf32> to vector<16x16xf32>
    %1536 = vector.broadcast %1533 : f32 to vector<16x16xf32>
    %1537 = arith.mulf %1536, %1535 : vector<16x16xf32>
    %1538 = arith.addf %1532, %1537 : vector<16x16xf32>
    %c102_1034 = arith.constant 102 : index
    %1539 = memref.load %arg3[%c102_1034] : memref<144xf32, #tpu.memory_space<smem>>
    %c3_1035 = arith.constant 3 : index
    %c1_1036 = arith.constant 1 : index
    %c0_1037 = arith.constant 0 : index
    %1540 = vector.load %arg7[%c3_1035, %c1_1036, %c0_1037] : memref<4x18x18xf32, #tpu.memory_space<vmem>>, vector<1x16x16xf32>
    %1541 = vector.shape_cast %1540 : vector<1x16x16xf32> to vector<16x16xf32>
    %1542 = vector.broadcast %1539 : f32 to vector<16x16xf32>
    %1543 = arith.mulf %1542, %1541 : vector<16x16xf32>
    %1544 = arith.addf %1538, %1543 : vector<16x16xf32>
    %c103_1038 = arith.constant 103 : index
    %1545 = memref.load %arg3[%c103_1038] : memref<144xf32, #tpu.memory_space<smem>>
    %c3_1039 = arith.constant 3 : index
    %c1_1040 = arith.constant 1 : index
    %c1_1041 = arith.constant 1 : index
    %1546 = vector.load %arg7[%c3_1039, %c1_1040, %c1_1041] : memref<4x18x18xf32, #tpu.memory_space<vmem>>, vector<1x16x16xf32>
    %1547 = vector.shape_cast %1546 : vector<1x16x16xf32> to vector<16x16xf32>
    %1548 = vector.broadcast %1545 : f32 to vector<16x16xf32>
    %1549 = arith.mulf %1548, %1547 : vector<16x16xf32>
    %1550 = arith.addf %1544, %1549 : vector<16x16xf32>
    %c104_1042 = arith.constant 104 : index
    %1551 = memref.load %arg3[%c104_1042] : memref<144xf32, #tpu.memory_space<smem>>
    %c3_1043 = arith.constant 3 : index
    %c1_1044 = arith.constant 1 : index
    %c2_1045 = arith.constant 2 : index
    %1552 = vector.load %arg7[%c3_1043, %c1_1044, %c2_1045] : memref<4x18x18xf32, #tpu.memory_space<vmem>>, vector<1x16x16xf32>
    %1553 = vector.shape_cast %1552 : vector<1x16x16xf32> to vector<16x16xf32>
    %1554 = vector.broadcast %1551 : f32 to vector<16x16xf32>
    %1555 = arith.mulf %1554, %1553 : vector<16x16xf32>
    %1556 = arith.addf %1550, %1555 : vector<16x16xf32>
    %c105_1046 = arith.constant 105 : index
    %1557 = memref.load %arg3[%c105_1046] : memref<144xf32, #tpu.memory_space<smem>>
    %c3_1047 = arith.constant 3 : index
    %c2_1048 = arith.constant 2 : index
    %c0_1049 = arith.constant 0 : index
    %1558 = vector.load %arg7[%c3_1047, %c2_1048, %c0_1049] : memref<4x18x18xf32, #tpu.memory_space<vmem>>, vector<1x16x16xf32>
    %1559 = vector.shape_cast %1558 : vector<1x16x16xf32> to vector<16x16xf32>
    %1560 = vector.broadcast %1557 : f32 to vector<16x16xf32>
    %1561 = arith.mulf %1560, %1559 : vector<16x16xf32>
    %1562 = arith.addf %1556, %1561 : vector<16x16xf32>
    %c106_1050 = arith.constant 106 : index
    %1563 = memref.load %arg3[%c106_1050] : memref<144xf32, #tpu.memory_space<smem>>
    %c3_1051 = arith.constant 3 : index
    %c2_1052 = arith.constant 2 : index
    %c1_1053 = arith.constant 1 : index
    %1564 = vector.load %arg7[%c3_1051, %c2_1052, %c1_1053] : memref<4x18x18xf32, #tpu.memory_space<vmem>>, vector<1x16x16xf32>
    %1565 = vector.shape_cast %1564 : vector<1x16x16xf32> to vector<16x16xf32>
    %1566 = vector.broadcast %1563 : f32 to vector<16x16xf32>
    %1567 = arith.mulf %1566, %1565 : vector<16x16xf32>
    %1568 = arith.addf %1562, %1567 : vector<16x16xf32>
    %c107_1054 = arith.constant 107 : index
    %1569 = memref.load %arg3[%c107_1054] : memref<144xf32, #tpu.memory_space<smem>>
    %c3_1055 = arith.constant 3 : index
    %c2_1056 = arith.constant 2 : index
    %c2_1057 = arith.constant 2 : index
    %1570 = vector.load %arg7[%c3_1055, %c2_1056, %c2_1057] : memref<4x18x18xf32, #tpu.memory_space<vmem>>, vector<1x16x16xf32>
    %1571 = vector.shape_cast %1570 : vector<1x16x16xf32> to vector<16x16xf32>
    %1572 = vector.broadcast %1569 : f32 to vector<16x16xf32>
    %1573 = arith.mulf %1572, %1571 : vector<16x16xf32>
    %1574 = arith.addf %1568, %1573 : vector<16x16xf32>
    %c2_1058 = arith.constant 2 : index
    %1575 = memref.load %arg4[%c2_1058] : memref<4xf32, #tpu.memory_space<smem>>
    %1576 = vector.broadcast %1575 : f32 to vector<16x16xf32>
    %1577 = arith.addf %1574, %1576 : vector<16x16xf32>
    %cst_1059 = arith.constant 0.000000e+00 : f32
    %1578 = vector.broadcast %cst_1059 : f32 to vector<16x16xf32>
    %1579 = arith.maximumf %1577, %1578 : vector<16x16xf32>
    %c0_1060 = arith.constant 0 : index
    %c2_1061 = arith.constant 2 : index
    %c1_1062 = arith.constant 1 : index
    %c1_1063 = arith.constant 1 : index
    %1580 = vector.load %arg5[%c0_1060, %c2_1061, %c1_1062, %c1_1063] : memref<1x4x18x18xf32, #tpu.memory_space<vmem>>, vector<1x1x16x16xf32>
    %1581 = vector.shape_cast %1580 : vector<1x1x16x16xf32> to vector<16x16xf32>
    %1582 = arith.addf %1579, %1581 : vector<16x16xf32>
    %c0_1064 = arith.constant 0 : index
    %c2_1065 = arith.constant 2 : index
    %c0_1066 = arith.constant 0 : index
    %c0_1067 = arith.constant 0 : index
    %1583 = vector.load %arg6[%c0_1064, %c2_1065, %c0_1066, %c0_1067] : memref<1x4x16x16xf32, #tpu.memory_space<vmem>>, vector<1x1x16x16xf32>
    %1584 = vector.shape_cast %1583 : vector<1x1x16x16xf32> to vector<16x16xf32>
    %1585 = vector.shape_cast %1582 : vector<16x16xf32> to vector<1x1x16x16xf32>
    tpu.vector_store %arg6[%c0_1064, %c2_1065, %c0_1066, %c0_1067], %1585 {strides = array<i32>} : memref<1x4x16x16xf32, #tpu.memory_space<vmem>>, vector<1x1x16x16xf32>,
    %cst_1068 = arith.constant 0.000000e+00 : f32
    %1586 = vector.broadcast %cst_1068 : f32 to vector<16x16xf32>
    %c108_1069 = arith.constant 108 : index
    %1587 = memref.load %arg3[%c108_1069] : memref<144xf32, #tpu.memory_space<smem>>
    %c0_1070 = arith.constant 0 : index
    %c0_1071 = arith.constant 0 : index
    %c0_1072 = arith.constant 0 : index
    %1588 = vector.load %arg7[%c0_1070, %c0_1071, %c0_1072] : memref<4x18x18xf32, #tpu.memory_space<vmem>>, vector<1x16x16xf32>
    %1589 = vector.shape_cast %1588 : vector<1x16x16xf32> to vector<16x16xf32>
    %1590 = vector.broadcast %1587 : f32 to vector<16x16xf32>
    %1591 = arith.mulf %1590, %1589 : vector<16x16xf32>
    %1592 = arith.addf %1586, %1591 : vector<16x16xf32>
    %c109_1073 = arith.constant 109 : index
    %1593 = memref.load %arg3[%c109_1073] : memref<144xf32, #tpu.memory_space<smem>>
    %c0_1074 = arith.constant 0 : index
    %c0_1075 = arith.constant 0 : index
    %c1_1076 = arith.constant 1 : index
    %1594 = vector.load %arg7[%c0_1074, %c0_1075, %c1_1076] : memref<4x18x18xf32, #tpu.memory_space<vmem>>, vector<1x16x16xf32>
    %1595 = vector.shape_cast %1594 : vector<1x16x16xf32> to vector<16x16xf32>
    %1596 = vector.broadcast %1593 : f32 to vector<16x16xf32>
    %1597 = arith.mulf %1596, %1595 : vector<16x16xf32>
    %1598 = arith.addf %1592, %1597 : vector<16x16xf32>
    %c110_1077 = arith.constant 110 : index
    %1599 = memref.load %arg3[%c110_1077] : memref<144xf32, #tpu.memory_space<smem>>
    %c0_1078 = arith.constant 0 : index
    %c0_1079 = arith.constant 0 : index
    %c2_1080 = arith.constant 2 : index
    %1600 = vector.load %arg7[%c0_1078, %c0_1079, %c2_1080] : memref<4x18x18xf32, #tpu.memory_space<vmem>>, vector<1x16x16xf32>
    %1601 = vector.shape_cast %1600 : vector<1x16x16xf32> to vector<16x16xf32>
    %1602 = vector.broadcast %1599 : f32 to vector<16x16xf32>
    %1603 = arith.mulf %1602, %1601 : vector<16x16xf32>
    %1604 = arith.addf %1598, %1603 : vector<16x16xf32>
    %c111_1081 = arith.constant 111 : index
    %1605 = memref.load %arg3[%c111_1081] : memref<144xf32, #tpu.memory_space<smem>>
    %c0_1082 = arith.constant 0 : index
    %c1_1083 = arith.constant 1 : index
    %c0_1084 = arith.constant 0 : index
    %1606 = vector.load %arg7[%c0_1082, %c1_1083, %c0_1084] : memref<4x18x18xf32, #tpu.memory_space<vmem>>, vector<1x16x16xf32>
    %1607 = vector.shape_cast %1606 : vector<1x16x16xf32> to vector<16x16xf32>
    %1608 = vector.broadcast %1605 : f32 to vector<16x16xf32>
    %1609 = arith.mulf %1608, %1607 : vector<16x16xf32>
    %1610 = arith.addf %1604, %1609 : vector<16x16xf32>
    %c112_1085 = arith.constant 112 : index
    %1611 = memref.load %arg3[%c112_1085] : memref<144xf32, #tpu.memory_space<smem>>
    %c0_1086 = arith.constant 0 : index
    %c1_1087 = arith.constant 1 : index
    %c1_1088 = arith.constant 1 : index
    %1612 = vector.load %arg7[%c0_1086, %c1_1087, %c1_1088] : memref<4x18x18xf32, #tpu.memory_space<vmem>>, vector<1x16x16xf32>
    %1613 = vector.shape_cast %1612 : vector<1x16x16xf32> to vector<16x16xf32>
    %1614 = vector.broadcast %1611 : f32 to vector<16x16xf32>
    %1615 = arith.mulf %1614, %1613 : vector<16x16xf32>
    %1616 = arith.addf %1610, %1615 : vector<16x16xf32>
    %c113_1089 = arith.constant 113 : index
    %1617 = memref.load %arg3[%c113_1089] : memref<144xf32, #tpu.memory_space<smem>>
    %c0_1090 = arith.constant 0 : index
    %c1_1091 = arith.constant 1 : index
    %c2_1092 = arith.constant 2 : index
    %1618 = vector.load %arg7[%c0_1090, %c1_1091, %c2_1092] : memref<4x18x18xf32, #tpu.memory_space<vmem>>, vector<1x16x16xf32>
    %1619 = vector.shape_cast %1618 : vector<1x16x16xf32> to vector<16x16xf32>
    %1620 = vector.broadcast %1617 : f32 to vector<16x16xf32>
    %1621 = arith.mulf %1620, %1619 : vector<16x16xf32>
    %1622 = arith.addf %1616, %1621 : vector<16x16xf32>
    %c114_1093 = arith.constant 114 : index
    %1623 = memref.load %arg3[%c114_1093] : memref<144xf32, #tpu.memory_space<smem>>
    %c0_1094 = arith.constant 0 : index
    %c2_1095 = arith.constant 2 : index
    %c0_1096 = arith.constant 0 : index
    %1624 = vector.load %arg7[%c0_1094, %c2_1095, %c0_1096] : memref<4x18x18xf32, #tpu.memory_space<vmem>>, vector<1x16x16xf32>
    %1625 = vector.shape_cast %1624 : vector<1x16x16xf32> to vector<16x16xf32>
    %1626 = vector.broadcast %1623 : f32 to vector<16x16xf32>
    %1627 = arith.mulf %1626, %1625 : vector<16x16xf32>
    %1628 = arith.addf %1622, %1627 : vector<16x16xf32>
    %c115_1097 = arith.constant 115 : index
    %1629 = memref.load %arg3[%c115_1097] : memref<144xf32, #tpu.memory_space<smem>>
    %c0_1098 = arith.constant 0 : index
    %c2_1099 = arith.constant 2 : index
    %c1_1100 = arith.constant 1 : index
    %1630 = vector.load %arg7[%c0_1098, %c2_1099, %c1_1100] : memref<4x18x18xf32, #tpu.memory_space<vmem>>, vector<1x16x16xf32>
    %1631 = vector.shape_cast %1630 : vector<1x16x16xf32> to vector<16x16xf32>
    %1632 = vector.broadcast %1629 : f32 to vector<16x16xf32>
    %1633 = arith.mulf %1632, %1631 : vector<16x16xf32>
    %1634 = arith.addf %1628, %1633 : vector<16x16xf32>
    %c116_1101 = arith.constant 116 : index
    %1635 = memref.load %arg3[%c116_1101] : memref<144xf32, #tpu.memory_space<smem>>
    %c0_1102 = arith.constant 0 : index
    %c2_1103 = arith.constant 2 : index
    %c2_1104 = arith.constant 2 : index
    %1636 = vector.load %arg7[%c0_1102, %c2_1103, %c2_1104] : memref<4x18x18xf32, #tpu.memory_space<vmem>>, vector<1x16x16xf32>
    %1637 = vector.shape_cast %1636 : vector<1x16x16xf32> to vector<16x16xf32>
    %1638 = vector.broadcast %1635 : f32 to vector<16x16xf32>
    %1639 = arith.mulf %1638, %1637 : vector<16x16xf32>
    %1640 = arith.addf %1634, %1639 : vector<16x16xf32>
    %c117_1105 = arith.constant 117 : index
    %1641 = memref.load %arg3[%c117_1105] : memref<144xf32, #tpu.memory_space<smem>>
    %c1_1106 = arith.constant 1 : index
    %c0_1107 = arith.constant 0 : index
    %c0_1108 = arith.constant 0 : index
    %1642 = vector.load %arg7[%c1_1106, %c0_1107, %c0_1108] : memref<4x18x18xf32, #tpu.memory_space<vmem>>, vector<1x16x16xf32>
    %1643 = vector.shape_cast %1642 : vector<1x16x16xf32> to vector<16x16xf32>
    %1644 = vector.broadcast %1641 : f32 to vector<16x16xf32>
    %1645 = arith.mulf %1644, %1643 : vector<16x16xf32>
    %1646 = arith.addf %1640, %1645 : vector<16x16xf32>
    %c118_1109 = arith.constant 118 : index
    %1647 = memref.load %arg3[%c118_1109] : memref<144xf32, #tpu.memory_space<smem>>
    %c1_1110 = arith.constant 1 : index
    %c0_1111 = arith.constant 0 : index
    %c1_1112 = arith.constant 1 : index
    %1648 = vector.load %arg7[%c1_1110, %c0_1111, %c1_1112] : memref<4x18x18xf32, #tpu.memory_space<vmem>>, vector<1x16x16xf32>
    %1649 = vector.shape_cast %1648 : vector<1x16x16xf32> to vector<16x16xf32>
    %1650 = vector.broadcast %1647 : f32 to vector<16x16xf32>
    %1651 = arith.mulf %1650, %1649 : vector<16x16xf32>
    %1652 = arith.addf %1646, %1651 : vector<16x16xf32>
    %c119_1113 = arith.constant 119 : index
    %1653 = memref.load %arg3[%c119_1113] : memref<144xf32, #tpu.memory_space<smem>>
    %c1_1114 = arith.constant 1 : index
    %c0_1115 = arith.constant 0 : index
    %c2_1116 = arith.constant 2 : index
    %1654 = vector.load %arg7[%c1_1114, %c0_1115, %c2_1116] : memref<4x18x18xf32, #tpu.memory_space<vmem>>, vector<1x16x16xf32>
    %1655 = vector.shape_cast %1654 : vector<1x16x16xf32> to vector<16x16xf32>
    %1656 = vector.broadcast %1653 : f32 to vector<16x16xf32>
    %1657 = arith.mulf %1656, %1655 : vector<16x16xf32>
    %1658 = arith.addf %1652, %1657 : vector<16x16xf32>
    %c120_1117 = arith.constant 120 : index
    %1659 = memref.load %arg3[%c120_1117] : memref<144xf32, #tpu.memory_space<smem>>
    %c1_1118 = arith.constant 1 : index
    %c1_1119 = arith.constant 1 : index
    %c0_1120 = arith.constant 0 : index
    %1660 = vector.load %arg7[%c1_1118, %c1_1119, %c0_1120] : memref<4x18x18xf32, #tpu.memory_space<vmem>>, vector<1x16x16xf32>
    %1661 = vector.shape_cast %1660 : vector<1x16x16xf32> to vector<16x16xf32>
    %1662 = vector.broadcast %1659 : f32 to vector<16x16xf32>
    %1663 = arith.mulf %1662, %1661 : vector<16x16xf32>
    %1664 = arith.addf %1658, %1663 : vector<16x16xf32>
    %c121_1121 = arith.constant 121 : index
    %1665 = memref.load %arg3[%c121_1121] : memref<144xf32, #tpu.memory_space<smem>>
    %c1_1122 = arith.constant 1 : index
    %c1_1123 = arith.constant 1 : index
    %c1_1124 = arith.constant 1 : index
    %1666 = vector.load %arg7[%c1_1122, %c1_1123, %c1_1124] : memref<4x18x18xf32, #tpu.memory_space<vmem>>, vector<1x16x16xf32>
    %1667 = vector.shape_cast %1666 : vector<1x16x16xf32> to vector<16x16xf32>
    %1668 = vector.broadcast %1665 : f32 to vector<16x16xf32>
    %1669 = arith.mulf %1668, %1667 : vector<16x16xf32>
    %1670 = arith.addf %1664, %1669 : vector<16x16xf32>
    %c122_1125 = arith.constant 122 : index
    %1671 = memref.load %arg3[%c122_1125] : memref<144xf32, #tpu.memory_space<smem>>
    %c1_1126 = arith.constant 1 : index
    %c1_1127 = arith.constant 1 : index
    %c2_1128 = arith.constant 2 : index
    %1672 = vector.load %arg7[%c1_1126, %c1_1127, %c2_1128] : memref<4x18x18xf32, #tpu.memory_space<vmem>>, vector<1x16x16xf32>
    %1673 = vector.shape_cast %1672 : vector<1x16x16xf32> to vector<16x16xf32>
    %1674 = vector.broadcast %1671 : f32 to vector<16x16xf32>
    %1675 = arith.mulf %1674, %1673 : vector<16x16xf32>
    %1676 = arith.addf %1670, %1675 : vector<16x16xf32>
    %c123_1129 = arith.constant 123 : index
    %1677 = memref.load %arg3[%c123_1129] : memref<144xf32, #tpu.memory_space<smem>>
    %c1_1130 = arith.constant 1 : index
    %c2_1131 = arith.constant 2 : index
    %c0_1132 = arith.constant 0 : index
    %1678 = vector.load %arg7[%c1_1130, %c2_1131, %c0_1132] : memref<4x18x18xf32, #tpu.memory_space<vmem>>, vector<1x16x16xf32>
    %1679 = vector.shape_cast %1678 : vector<1x16x16xf32> to vector<16x16xf32>
    %1680 = vector.broadcast %1677 : f32 to vector<16x16xf32>
    %1681 = arith.mulf %1680, %1679 : vector<16x16xf32>
    %1682 = arith.addf %1676, %1681 : vector<16x16xf32>
    %c124_1133 = arith.constant 124 : index
    %1683 = memref.load %arg3[%c124_1133] : memref<144xf32, #tpu.memory_space<smem>>
    %c1_1134 = arith.constant 1 : index
    %c2_1135 = arith.constant 2 : index
    %c1_1136 = arith.constant 1 : index
    %1684 = vector.load %arg7[%c1_1134, %c2_1135, %c1_1136] : memref<4x18x18xf32, #tpu.memory_space<vmem>>, vector<1x16x16xf32>
    %1685 = vector.shape_cast %1684 : vector<1x16x16xf32> to vector<16x16xf32>
    %1686 = vector.broadcast %1683 : f32 to vector<16x16xf32>
    %1687 = arith.mulf %1686, %1685 : vector<16x16xf32>
    %1688 = arith.addf %1682, %1687 : vector<16x16xf32>
    %c125_1137 = arith.constant 125 : index
    %1689 = memref.load %arg3[%c125_1137] : memref<144xf32, #tpu.memory_space<smem>>
    %c1_1138 = arith.constant 1 : index
    %c2_1139 = arith.constant 2 : index
    %c2_1140 = arith.constant 2 : index
    %1690 = vector.load %arg7[%c1_1138, %c2_1139, %c2_1140] : memref<4x18x18xf32, #tpu.memory_space<vmem>>, vector<1x16x16xf32>
    %1691 = vector.shape_cast %1690 : vector<1x16x16xf32> to vector<16x16xf32>
    %1692 = vector.broadcast %1689 : f32 to vector<16x16xf32>
    %1693 = arith.mulf %1692, %1691 : vector<16x16xf32>
    %1694 = arith.addf %1688, %1693 : vector<16x16xf32>
    %c126_1141 = arith.constant 126 : index
    %1695 = memref.load %arg3[%c126_1141] : memref<144xf32, #tpu.memory_space<smem>>
    %c2_1142 = arith.constant 2 : index
    %c0_1143 = arith.constant 0 : index
    %c0_1144 = arith.constant 0 : index
    %1696 = vector.load %arg7[%c2_1142, %c0_1143, %c0_1144] : memref<4x18x18xf32, #tpu.memory_space<vmem>>, vector<1x16x16xf32>
    %1697 = vector.shape_cast %1696 : vector<1x16x16xf32> to vector<16x16xf32>
    %1698 = vector.broadcast %1695 : f32 to vector<16x16xf32>
    %1699 = arith.mulf %1698, %1697 : vector<16x16xf32>
    %1700 = arith.addf %1694, %1699 : vector<16x16xf32>
    %c127_1145 = arith.constant 127 : index
    %1701 = memref.load %arg3[%c127_1145] : memref<144xf32, #tpu.memory_space<smem>>
    %c2_1146 = arith.constant 2 : index
    %c0_1147 = arith.constant 0 : index
    %c1_1148 = arith.constant 1 : index
    %1702 = vector.load %arg7[%c2_1146, %c0_1147, %c1_1148] : memref<4x18x18xf32, #tpu.memory_space<vmem>>, vector<1x16x16xf32>
    %1703 = vector.shape_cast %1702 : vector<1x16x16xf32> to vector<16x16xf32>
    %1704 = vector.broadcast %1701 : f32 to vector<16x16xf32>
    %1705 = arith.mulf %1704, %1703 : vector<16x16xf32>
    %1706 = arith.addf %1700, %1705 : vector<16x16xf32>
    %c128_1149 = arith.constant 128 : index
    %1707 = memref.load %arg3[%c128_1149] : memref<144xf32, #tpu.memory_space<smem>>
    %c2_1150 = arith.constant 2 : index
    %c0_1151 = arith.constant 0 : index
    %c2_1152 = arith.constant 2 : index
    %1708 = vector.load %arg7[%c2_1150, %c0_1151, %c2_1152] : memref<4x18x18xf32, #tpu.memory_space<vmem>>, vector<1x16x16xf32>
    %1709 = vector.shape_cast %1708 : vector<1x16x16xf32> to vector<16x16xf32>
    %1710 = vector.broadcast %1707 : f32 to vector<16x16xf32>
    %1711 = arith.mulf %1710, %1709 : vector<16x16xf32>
    %1712 = arith.addf %1706, %1711 : vector<16x16xf32>
    %c129_1153 = arith.constant 129 : index
    %1713 = memref.load %arg3[%c129_1153] : memref<144xf32, #tpu.memory_space<smem>>
    %c2_1154 = arith.constant 2 : index
    %c1_1155 = arith.constant 1 : index
    %c0_1156 = arith.constant 0 : index
    %1714 = vector.load %arg7[%c2_1154, %c1_1155, %c0_1156] : memref<4x18x18xf32, #tpu.memory_space<vmem>>, vector<1x16x16xf32>
    %1715 = vector.shape_cast %1714 : vector<1x16x16xf32> to vector<16x16xf32>
    %1716 = vector.broadcast %1713 : f32 to vector<16x16xf32>
    %1717 = arith.mulf %1716, %1715 : vector<16x16xf32>
    %1718 = arith.addf %1712, %1717 : vector<16x16xf32>
    %c130_1157 = arith.constant 130 : index
    %1719 = memref.load %arg3[%c130_1157] : memref<144xf32, #tpu.memory_space<smem>>
    %c2_1158 = arith.constant 2 : index
    %c1_1159 = arith.constant 1 : index
    %c1_1160 = arith.constant 1 : index
    %1720 = vector.load %arg7[%c2_1158, %c1_1159, %c1_1160] : memref<4x18x18xf32, #tpu.memory_space<vmem>>, vector<1x16x16xf32>
    %1721 = vector.shape_cast %1720 : vector<1x16x16xf32> to vector<16x16xf32>
    %1722 = vector.broadcast %1719 : f32 to vector<16x16xf32>
    %1723 = arith.mulf %1722, %1721 : vector<16x16xf32>
    %1724 = arith.addf %1718, %1723 : vector<16x16xf32>
    %c131_1161 = arith.constant 131 : index
    %1725 = memref.load %arg3[%c131_1161] : memref<144xf32, #tpu.memory_space<smem>>
    %c2_1162 = arith.constant 2 : index
    %c1_1163 = arith.constant 1 : index
    %c2_1164 = arith.constant 2 : index
    %1726 = vector.load %arg7[%c2_1162, %c1_1163, %c2_1164] : memref<4x18x18xf32, #tpu.memory_space<vmem>>, vector<1x16x16xf32>
    %1727 = vector.shape_cast %1726 : vector<1x16x16xf32> to vector<16x16xf32>
    %1728 = vector.broadcast %1725 : f32 to vector<16x16xf32>
    %1729 = arith.mulf %1728, %1727 : vector<16x16xf32>
    %1730 = arith.addf %1724, %1729 : vector<16x16xf32>
    %c132_1165 = arith.constant 132 : index
    %1731 = memref.load %arg3[%c132_1165] : memref<144xf32, #tpu.memory_space<smem>>
    %c2_1166 = arith.constant 2 : index
    %c2_1167 = arith.constant 2 : index
    %c0_1168 = arith.constant 0 : index
    %1732 = vector.load %arg7[%c2_1166, %c2_1167, %c0_1168] : memref<4x18x18xf32, #tpu.memory_space<vmem>>, vector<1x16x16xf32>
    %1733 = vector.shape_cast %1732 : vector<1x16x16xf32> to vector<16x16xf32>
    %1734 = vector.broadcast %1731 : f32 to vector<16x16xf32>
    %1735 = arith.mulf %1734, %1733 : vector<16x16xf32>
    %1736 = arith.addf %1730, %1735 : vector<16x16xf32>
    %c133_1169 = arith.constant 133 : index
    %1737 = memref.load %arg3[%c133_1169] : memref<144xf32, #tpu.memory_space<smem>>
    %c2_1170 = arith.constant 2 : index
    %c2_1171 = arith.constant 2 : index
    %c1_1172 = arith.constant 1 : index
    %1738 = vector.load %arg7[%c2_1170, %c2_1171, %c1_1172] : memref<4x18x18xf32, #tpu.memory_space<vmem>>, vector<1x16x16xf32>
    %1739 = vector.shape_cast %1738 : vector<1x16x16xf32> to vector<16x16xf32>
    %1740 = vector.broadcast %1737 : f32 to vector<16x16xf32>
    %1741 = arith.mulf %1740, %1739 : vector<16x16xf32>
    %1742 = arith.addf %1736, %1741 : vector<16x16xf32>
    %c134_1173 = arith.constant 134 : index
    %1743 = memref.load %arg3[%c134_1173] : memref<144xf32, #tpu.memory_space<smem>>
    %c2_1174 = arith.constant 2 : index
    %c2_1175 = arith.constant 2 : index
    %c2_1176 = arith.constant 2 : index
    %1744 = vector.load %arg7[%c2_1174, %c2_1175, %c2_1176] : memref<4x18x18xf32, #tpu.memory_space<vmem>>, vector<1x16x16xf32>
    %1745 = vector.shape_cast %1744 : vector<1x16x16xf32> to vector<16x16xf32>
    %1746 = vector.broadcast %1743 : f32 to vector<16x16xf32>
    %1747 = arith.mulf %1746, %1745 : vector<16x16xf32>
    %1748 = arith.addf %1742, %1747 : vector<16x16xf32>
    %c135_1177 = arith.constant 135 : index
    %1749 = memref.load %arg3[%c135_1177] : memref<144xf32, #tpu.memory_space<smem>>
    %c3_1178 = arith.constant 3 : index
    %c0_1179 = arith.constant 0 : index
    %c0_1180 = arith.constant 0 : index
    %1750 = vector.load %arg7[%c3_1178, %c0_1179, %c0_1180] : memref<4x18x18xf32, #tpu.memory_space<vmem>>, vector<1x16x16xf32>
    %1751 = vector.shape_cast %1750 : vector<1x16x16xf32> to vector<16x16xf32>
    %1752 = vector.broadcast %1749 : f32 to vector<16x16xf32>
    %1753 = arith.mulf %1752, %1751 : vector<16x16xf32>
    %1754 = arith.addf %1748, %1753 : vector<16x16xf32>
    %c136_1181 = arith.constant 136 : index
    %1755 = memref.load %arg3[%c136_1181] : memref<144xf32, #tpu.memory_space<smem>>
    %c3_1182 = arith.constant 3 : index
    %c0_1183 = arith.constant 0 : index
    %c1_1184 = arith.constant 1 : index
    %1756 = vector.load %arg7[%c3_1182, %c0_1183, %c1_1184] : memref<4x18x18xf32, #tpu.memory_space<vmem>>, vector<1x16x16xf32>
    %1757 = vector.shape_cast %1756 : vector<1x16x16xf32> to vector<16x16xf32>
    %1758 = vector.broadcast %1755 : f32 to vector<16x16xf32>
    %1759 = arith.mulf %1758, %1757 : vector<16x16xf32>
    %1760 = arith.addf %1754, %1759 : vector<16x16xf32>
    %c137_1185 = arith.constant 137 : index
    %1761 = memref.load %arg3[%c137_1185] : memref<144xf32, #tpu.memory_space<smem>>
    %c3_1186 = arith.constant 3 : index
    %c0_1187 = arith.constant 0 : index
    %c2_1188 = arith.constant 2 : index
    %1762 = vector.load %arg7[%c3_1186, %c0_1187, %c2_1188] : memref<4x18x18xf32, #tpu.memory_space<vmem>>, vector<1x16x16xf32>
    %1763 = vector.shape_cast %1762 : vector<1x16x16xf32> to vector<16x16xf32>
    %1764 = vector.broadcast %1761 : f32 to vector<16x16xf32>
    %1765 = arith.mulf %1764, %1763 : vector<16x16xf32>
    %1766 = arith.addf %1760, %1765 : vector<16x16xf32>
    %c138_1189 = arith.constant 138 : index
    %1767 = memref.load %arg3[%c138_1189] : memref<144xf32, #tpu.memory_space<smem>>
    %c3_1190 = arith.constant 3 : index
    %c1_1191 = arith.constant 1 : index
    %c0_1192 = arith.constant 0 : index
    %1768 = vector.load %arg7[%c3_1190, %c1_1191, %c0_1192] : memref<4x18x18xf32, #tpu.memory_space<vmem>>, vector<1x16x16xf32>
    %1769 = vector.shape_cast %1768 : vector<1x16x16xf32> to vector<16x16xf32>
    %1770 = vector.broadcast %1767 : f32 to vector<16x16xf32>
    %1771 = arith.mulf %1770, %1769 : vector<16x16xf32>
    %1772 = arith.addf %1766, %1771 : vector<16x16xf32>
    %c139_1193 = arith.constant 139 : index
    %1773 = memref.load %arg3[%c139_1193] : memref<144xf32, #tpu.memory_space<smem>>
    %c3_1194 = arith.constant 3 : index
    %c1_1195 = arith.constant 1 : index
    %c1_1196 = arith.constant 1 : index
    %1774 = vector.load %arg7[%c3_1194, %c1_1195, %c1_1196] : memref<4x18x18xf32, #tpu.memory_space<vmem>>, vector<1x16x16xf32>
    %1775 = vector.shape_cast %1774 : vector<1x16x16xf32> to vector<16x16xf32>
    %1776 = vector.broadcast %1773 : f32 to vector<16x16xf32>
    %1777 = arith.mulf %1776, %1775 : vector<16x16xf32>
    %1778 = arith.addf %1772, %1777 : vector<16x16xf32>
    %c140_1197 = arith.constant 140 : index
    %1779 = memref.load %arg3[%c140_1197] : memref<144xf32, #tpu.memory_space<smem>>
    %c3_1198 = arith.constant 3 : index
    %c1_1199 = arith.constant 1 : index
    %c2_1200 = arith.constant 2 : index
    %1780 = vector.load %arg7[%c3_1198, %c1_1199, %c2_1200] : memref<4x18x18xf32, #tpu.memory_space<vmem>>, vector<1x16x16xf32>
    %1781 = vector.shape_cast %1780 : vector<1x16x16xf32> to vector<16x16xf32>
    %1782 = vector.broadcast %1779 : f32 to vector<16x16xf32>
    %1783 = arith.mulf %1782, %1781 : vector<16x16xf32>
    %1784 = arith.addf %1778, %1783 : vector<16x16xf32>
    %c141_1201 = arith.constant 141 : index
    %1785 = memref.load %arg3[%c141_1201] : memref<144xf32, #tpu.memory_space<smem>>
    %c3_1202 = arith.constant 3 : index
    %c2_1203 = arith.constant 2 : index
    %c0_1204 = arith.constant 0 : index
    %1786 = vector.load %arg7[%c3_1202, %c2_1203, %c0_1204] : memref<4x18x18xf32, #tpu.memory_space<vmem>>, vector<1x16x16xf32>
    %1787 = vector.shape_cast %1786 : vector<1x16x16xf32> to vector<16x16xf32>
    %1788 = vector.broadcast %1785 : f32 to vector<16x16xf32>
    %1789 = arith.mulf %1788, %1787 : vector<16x16xf32>
    %1790 = arith.addf %1784, %1789 : vector<16x16xf32>
    %c142_1205 = arith.constant 142 : index
    %1791 = memref.load %arg3[%c142_1205] : memref<144xf32, #tpu.memory_space<smem>>
    %c3_1206 = arith.constant 3 : index
    %c2_1207 = arith.constant 2 : index
    %c1_1208 = arith.constant 1 : index
    %1792 = vector.load %arg7[%c3_1206, %c2_1207, %c1_1208] : memref<4x18x18xf32, #tpu.memory_space<vmem>>, vector<1x16x16xf32>
    %1793 = vector.shape_cast %1792 : vector<1x16x16xf32> to vector<16x16xf32>
    %1794 = vector.broadcast %1791 : f32 to vector<16x16xf32>
    %1795 = arith.mulf %1794, %1793 : vector<16x16xf32>
    %1796 = arith.addf %1790, %1795 : vector<16x16xf32>
    %c143_1209 = arith.constant 143 : index
    %1797 = memref.load %arg3[%c143_1209] : memref<144xf32, #tpu.memory_space<smem>>
    %c3_1210 = arith.constant 3 : index
    %c2_1211 = arith.constant 2 : index
    %c2_1212 = arith.constant 2 : index
    %1798 = vector.load %arg7[%c3_1210, %c2_1211, %c2_1212] : memref<4x18x18xf32, #tpu.memory_space<vmem>>, vector<1x16x16xf32>
    %1799 = vector.shape_cast %1798 : vector<1x16x16xf32> to vector<16x16xf32>
    %1800 = vector.broadcast %1797 : f32 to vector<16x16xf32>
    %1801 = arith.mulf %1800, %1799 : vector<16x16xf32>
    %1802 = arith.addf %1796, %1801 : vector<16x16xf32>
    %c3_1213 = arith.constant 3 : index
    %1803 = memref.load %arg4[%c3_1213] : memref<4xf32, #tpu.memory_space<smem>>
    %1804 = vector.broadcast %1803 : f32 to vector<16x16xf32>
    %1805 = arith.addf %1802, %1804 : vector<16x16xf32>
    %cst_1214 = arith.constant 0.000000e+00 : f32
    %1806 = vector.broadcast %cst_1214 : f32 to vector<16x16xf32>
    %1807 = arith.maximumf %1805, %1806 : vector<16x16xf32>
    %c0_1215 = arith.constant 0 : index
    %c3_1216 = arith.constant 3 : index
    %c1_1217 = arith.constant 1 : index
    %c1_1218 = arith.constant 1 : index
    %1808 = vector.load %arg5[%c0_1215, %c3_1216, %c1_1217, %c1_1218] : memref<1x4x18x18xf32, #tpu.memory_space<vmem>>, vector<1x1x16x16xf32>
    %1809 = vector.shape_cast %1808 : vector<1x1x16x16xf32> to vector<16x16xf32>
    %1810 = arith.addf %1807, %1809 : vector<16x16xf32>
    %c0_1219 = arith.constant 0 : index
    %c3_1220 = arith.constant 3 : index
    %c0_1221 = arith.constant 0 : index
    %c0_1222 = arith.constant 0 : index
    %1811 = vector.load %arg6[%c0_1219, %c3_1220, %c0_1221, %c0_1222] : memref<1x4x16x16xf32, #tpu.memory_space<vmem>>, vector<1x1x16x16xf32>
    %1812 = vector.shape_cast %1811 : vector<1x1x16x16xf32> to vector<16x16xf32>
    %1813 = vector.shape_cast %1810 : vector<16x16xf32> to vector<1x1x16x16xf32>
    tpu.vector_store %arg6[%c0_1219, %c3_1220, %c0_1221, %c0_1222], %1813 {strides = array<i32>} : memref<1x4x16x16xf32, #tpu.memory_space<vmem>>, vector<1x1x16x16xf32>,
    return
  }
  func.func @transform_0(%arg0: i32) -> i32 {
    %c0_i32 = arith.constant 0 : i32
    %c0_i32_0 = arith.constant 0 : i32
    return %c0_i32 : i32
  }
  func.func @transform_1(%arg0: i32) -> i32 {
    %c0_i32 = arith.constant 0 : i32
    %c0_i32_0 = arith.constant 0 : i32
    return %c0_i32 : i32
  }
  func.func @transform_2(%arg0: i32) -> i32 {
    %c0_i32 = arith.constant 0 : i32
    %c0_i32_0 = arith.constant 0 : i32
    return %c0_i32 : i32
  }
  func.func @transform_3(%arg0: i32) -> i32 {
    %c0_i32 = arith.constant 0 : i32
    %c0_i32_0 = arith.constant 0 : i32
    return %c0_i32 : i32
  }
  func.func @transform_4(%arg0: i32) -> (i32, i32, i32, i32) {
    %c0_i32 = arith.constant 0 : i32
    %c0_i32_0 = arith.constant 0 : i32
    %c0_i32_1 = arith.constant 0 : i32
    %c0_i32_2 = arith.constant 0 : i32
    return %arg0, %c0_i32, %c0_i32_0, %c0_i32_1 : i32, i32, i32, i32
  }
  func.func @transform_5(%arg0: i32) -> (i32, i32, i32, i32) {
    %c0_i32 = arith.constant 0 : i32
    %c0_i32_0 = arith.constant 0 : i32
    %c0_i32_1 = arith.constant 0 : i32
    %c0_i32_2 = arith.constant 0 : i32
    return %arg0, %c0_i32, %c0_i32_0, %c0_i32_1 : i32, i32, i32, i32
  }
}

</mosaic_0001>

<llo_original>
// kernel: tpu_custom_call.1
$region0: #{tpu_custom_call.1}
  #allocation0 [shape = 'u32[]', space=smem, size = 0x4, offset = 0x4, fixed_abs, tag = 'smem constant byte address 0x4 - core index']
  #allocation1 [shape = 'u32[144,128]{1,0:T(1,128)}', space=vmem, size = 0x12000, scoped, tag = 'internal scratch']
  #allocation2 [shape = 'f32[4,18,18]{2,1,0:T(8,128)}', space=vmem, size = 0xc000, scoped, tag = 'scratch operand']
  %s0 = inlined_call_operand.vmem [shape: f32[144], index: 0, kind: input, shape index: {}]
  %s1 = inlined_call_operand.vmem [shape: f32[4], index: 1, kind: input, shape index: {}]
  %s2 = inlined_call_operand.vmem [shape: f32[144], index: 2, kind: input, shape index: {}]
  %s3 = inlined_call_operand.vmem [shape: f32[4], index: 3, kind: input, shape index: {}]
  %s4 = inlined_call_operand.vmem [shape: f32[2,4,18,18], index: 4, kind: input, shape index: {}]
  %s5 = inlined_call_operand.hbm [shape: f32[2,4,16,16], index: 5, kind: output, shape index: {}]
  %s6 = sld [smem:[#allocation0]]
  $region69: #{tpu_custom_call.1} parent=0
    _
  %s8 = ssub.s32 1, %s6
  %s9 = scalar_select 0, %s8, %s6
  $region1: #{tpu_custom_call.1} parent=0
    #allocation3 [shape = 'u8[1024]{0}', space=smem, size = 0x400, scoped, tag = 'input window, operand 0, single buffered']
    #allocation4 [shape = 's32[2]{0}', space=sflag, size = 0x8, scoped, tag = 'scoped memory for tpu_custom_call.1']
    #allocation5 [shape = 's32[2]{0}', space=sflag, size = 0x8, scoped, tag = 'scoped memory for tpu_custom_call.1']
    #allocation6 [shape = 'u8[512]{0}', space=smem, size = 0x200, scoped, tag = 'input window, operand 1, single buffered']
    #allocation7 [shape = 's32[1]{0}', space=sflag, size = 0x4, scoped, tag = 'scoped memory for tpu_custom_call.1']
    #allocation8 [shape = 'u8[1024]{0}', space=smem, size = 0x400, scoped, tag = 'input window, operand 2, single buffered']
    #allocation9 [shape = 'u8[512]{0}', space=smem, size = 0x200, scoped, tag = 'input window, operand 3, single buffered']
    #allocation10 [shape = 's32[1]{0}', space=sflag, size = 0x4, scoped, tag = 'scoped memory for tpu_custom_call.1']
    #allocation11 [shape = 'u8[65536]{0}', space=vmem, size = 0x10000, scoped, tag = 'output window, operand 0']
    %10 = vsyncpa [#allocation5], 0
    %11 = vsyncpa [#allocation7], 0
    %12 = vsyncpa [#allocation10], 0
    %13 = vsyncpa [#allocation4], 0
    %s14 = scalar_lea.sflag [#allocation4], 1
    %15 = vsyncpa %s14, 0
    loop: start=0, step=1, limit=4
    $region2: #{tpu_custom_call.1} parent=1 // loop_pre_header
      _
    $region3: #{tpu_custom_call.1} parent=1 // loop_header
      %s17 = sphi 0, %s21
      %p18 = scmp.ge.s32.totalorder %s17, 4
      %s25 = sphi 0, %s25
      %s27 = sphi 0, %s25
      %s28 = sphi 0, %s27
      %s42 = sphi 0, %s28
      %s46 = sphi 0, %s46
      %s48 = sphi 0, %s46
      %s49 = sphi 0, %s48
      %s63 = sphi 0, %s49
      %s67 = sphi 0, %s67
      %s69 = sphi 0, %s67
      %s70 = sphi 0, %s69
      %s84 = sphi 0, %s70
      %s88 = sphi 0, %s88
      %s90 = sphi 0, %s88
      %s91 = sphi 0, %s90
      %s105 = sphi 0, %s91
      %s111 = sphi 0, %s113
      %s114 = sphi 0, %s111
      %s115 = sphi 0, %s114
      %s131 = sphi 0, %s115
      %s137 = sphi 0, %s139
      %s140 = sphi 0, %s137
      %s141 = sphi 0, %s140
      %s157 = sphi 0, %s141
    $region4: #{tpu_custom_call.1} parent=1 // loop_header_branch
      %20 = sbr.rel (%p18) target = $region8
    $region5: #{tpu_custom_call.1} parent=1 // loop_body
      %s22 = ssub.s32 %s17, 1
      %s23 = ssub.s32 %s17, 2
      %s24 = sadd.s32 %s17, 1
      %s26 = sadd.s32 %s25, 1
      %p29 = scmp.eq.s32.totalorder %s17, 1
      %p30 = scmp.ne.s32.totalorder %s25, %s27
      %p31 = scmp.eq.s32.totalorder %s17, 0
      %p32 = por %p30, %p31
      %p33 = scmp.ne.s32.totalorder %s25, %s27
      %p34 = scmp.eq.s32.totalorder %s22, 1
      %p35 = por %p33, %p34
      %p36 = scmp.ne.s32.totalorder %s27, %s28
      %p37 = scmp.eq.s32.totalorder %s22, 0
      %p38 = por %p36, %p37
      %p39 = scmp.ne.s32.totalorder %s27, %s28
      %p40 = scmp.eq.s32.totalorder %s23, 1
      %p41 = por %p39, %p40
      %p43 = scmp.ne.s32.totalorder %s28, %s42
      %p44 = scmp.eq.s32.totalorder %s23, 0
      %p45 = por %p43, %p44
      %s47 = sadd.s32 %s46, 1
      %p50 = scmp.eq.s32.totalorder %s17, 1
      %p51 = scmp.ne.s32.totalorder %s46, %s48
      %p52 = scmp.eq.s32.totalorder %s17, 0
      %p53 = por %p51, %p52
      %p54 = scmp.ne.s32.totalorder %s46, %s48
      %p55 = scmp.eq.s32.totalorder %s22, 1
      %p56 = por %p54, %p55
      %p57 = scmp.ne.s32.totalorder %s48, %s49
      %p58 = scmp.eq.s32.totalorder %s22, 0
      %p59 = por %p57, %p58
      %p60 = scmp.ne.s32.totalorder %s48, %s49
      %p61 = scmp.eq.s32.totalorder %s23, 1
      %p62 = por %p60, %p61
      %p64 = scmp.ne.s32.totalorder %s49, %s63
      %p65 = scmp.eq.s32.totalorder %s23, 0
      %p66 = por %p64, %p65
      %s68 = sadd.s32 %s67, 1
      %p71 = scmp.eq.s32.totalorder %s17, 1
      %p72 = scmp.ne.s32.totalorder %s67, %s69
      %p73 = scmp.eq.s32.totalorder %s17, 0
      %p74 = por %p72, %p73
      %p75 = scmp.ne.s32.totalorder %s67, %s69
      %p76 = scmp.eq.s32.totalorder %s22, 1
      %p77 = por %p75, %p76
      %p78 = scmp.ne.s32.totalorder %s69, %s70
      %p79 = scmp.eq.s32.totalorder %s22, 0
      %p80 = por %p78, %p79
      %p81 = scmp.ne.s32.totalorder %s69, %s70
      %p82 = scmp.eq.s32.totalorder %s23, 1
      %p83 = por %p81, %p82
      %p85 = scmp.ne.s32.totalorder %s70, %s84
      %p86 = scmp.eq.s32.totalorder %s23, 0
      %p87 = por %p85, %p86
      %s89 = sadd.s32 %s88, 1
      %p92 = scmp.eq.s32.totalorder %s17, 1
      %p93 = scmp.ne.s32.totalorder %s88, %s90
      %p94 = scmp.eq.s32.totalorder %s17, 0
      %p95 = por %p93, %p94
      %p96 = scmp.ne.s32.totalorder %s88, %s90
      %p97 = scmp.eq.s32.totalorder %s22, 1
      %p98 = por %p96, %p97
      %p99 = scmp.ne.s32.totalorder %s90, %s91
      %p100 = scmp.eq.s32.totalorder %s22, 0
      %p101 = por %p99, %p100
      %p102 = scmp.ne.s32.totalorder %s90, %s91
      %p103 = scmp.eq.s32.totalorder %s23, 1
      %p104 = por %p102, %p103
      %p106 = scmp.ne.s32.totalorder %s91, %s105
      %p107 = scmp.eq.s32.totalorder %s23, 0
      %p108 = por %p106, %p107
      %s109 = ssub.s32 %s17, %s24
      %p110 = scmp.eq.s32.totalorder %s109, 0
      %s112 = sadd.s32 %s111, 1
      %s113 = scalar_select %p110, %s111, %s112
      %p116 = pneg %p110
      %p117 = scmp.eq.s32.totalorder %s17, 1
      %p118 = por %p116, %p117
      %p119 = scmp.ne.s32.totalorder %s111, %s114
      %p120 = scmp.eq.s32.totalorder %s17, 0
      %p121 = por %p119, %p120
      %p122 = scmp.ne.s32.totalorder %s111, %s114
      %p123 = scmp.eq.s32.totalorder %s22, 1
      %p124 = por %p122, %p123
      %p125 = scmp.ne.s32.totalorder %s114, %s115
      %p126 = scmp.eq.s32.totalorder %s22, 0
      %p127 = por %p125, %p126
      %p128 = scmp.ne.s32.totalorder %s114, %s115
      %p129 = scmp.eq.s32.totalorder %s23, 1
      %p130 = por %p128, %p129
      %p132 = scmp.ne.s32.totalorder %s115, %s131
      %p133 = scmp.eq.s32.totalorder %s23, 0
      %p134 = por %p132, %p133
      %s135 = ssub.s32 %s17, %s24
      %p136 = scmp.eq.s32.totalorder %s135, 0
      %s138 = sadd.s32 %s137, 1
      %s139 = scalar_select %p136, %s137, %s138
      %p142 = pneg %p136
      %p143 = scmp.eq.s32.totalorder %s17, 1
      %p144 = por %p142, %p143
      %p145 = scmp.ne.s32.totalorder %s137, %s140
      %p146 = scmp.eq.s32.totalorder %s17, 0
      %p147 = por %p145, %p146
      %p148 = scmp.ne.s32.totalorder %s137, %s140
      %p149 = scmp.eq.s32.totalorder %s22, 1
      %p150 = por %p148, %p149
      %p151 = scmp.ne.s32.totalorder %s140, %s141
      %p152 = scmp.eq.s32.totalorder %s22, 0
      %p153 = por %p151, %p152
      %p154 = scmp.ne.s32.totalorder %s140, %s141
      %p155 = scmp.eq.s32.totalorder %s23, 1
      %p156 = por %p154, %p155
      %p158 = scmp.ne.s32.totalorder %s141, %s157
      %p159 = scmp.eq.s32.totalorder %s23, 0
      %p160 = por %p158, %p159
      %p161 = scmp.le.s32.totalorder 1, %s17
      %p162 = scmp.lt.s32.totalorder %s17, 3
      %p163 = pnand %p161, %p162
      %p164 = pneg %p163
      // Predicated region
      $region9: #{tpu_custom_call.1} parent=5 // pred_check
        _
      $region10: #{tpu_custom_call.1} parent=5 // pred_check_branch
        %166 = sbr.rel (%p163) target = $region12
      $region11: #{tpu_custom_call.1} parent=5 // pred_region
        %s167 = ssub.s32 %s17, 1
        // Predicated region
        $region13: #{tpu_custom_call.1} parent=11 // pred_check
          %p168 = pneg %p38
        $region14: #{tpu_custom_call.1} parent=11 // pred_check_branch
          %170 = sbr.rel (%p168) target = $region16
        $region15: #{tpu_custom_call.1} parent=11 // pred_region
          %s172 = ssub.s32 32, 32
          %173 = vsyncadd [#allocation5], %s172
          %s175 = sshll.u32 %s0, 4
          %s176 = int_to_ptr.vmem [resolvable:$true] %s175
          %178 = dma.vmem_to_smem %s176, 32, [#allocation3], [#allocation5]
        $region16: #{tpu_custom_call.1} parent=11 // pred_fallthru
          _
        // Predicated region
        $region17: #{tpu_custom_call.1} parent=11 // pred_check
          %p179 = pneg %p59
        $region18: #{tpu_custom_call.1} parent=11 // pred_check_branch
          %181 = sbr.rel (%p179) target = $region20
        $region19: #{tpu_custom_call.1} parent=11 // pred_region
          %s183 = ssub.s32 16, 16
          %184 = vsyncadd [#allocation7], %s183
          %s186 = sshll.u32 %s1, 4
          %s187 = int_to_ptr.vmem [resolvable:$true] %s186
          %189 = dma.vmem_to_smem %s187, 16, [#allocation6], [#allocation7]
        $region20: #{tpu_custom_call.1} parent=11 // pred_fallthru
          _
        // Predicated region
        $region21: #{tpu_custom_call.1} parent=11 // pred_check
          %p190 = pneg %p80
        $region22: #{tpu_custom_call.1} parent=11 // pred_check_branch
          %192 = sbr.rel (%p190) target = $region24
        $region23: #{tpu_custom_call.1} parent=11 // pred_region
          %s194 = ssub.s32 32, 32
          %195 = vsyncadd [#allocation7], %s194
          %s197 = sshll.u32 %s2, 4
          %s198 = int_to_ptr.vmem [resolvable:$true] %s197
          %200 = dma.vmem_to_smem %s198, 32, [#allocation8], [#allocation7]
        $region24: #{tpu_custom_call.1} parent=11 // pred_fallthru
          _
        // Predicated region
        $region25: #{tpu_custom_call.1} parent=11 // pred_check
          %p201 = pneg %p101
        $region26: #{tpu_custom_call.1} parent=11 // pred_check_branch
          %203 = sbr.rel (%p201) target = $region28
        $region27: #{tpu_custom_call.1} parent=11 // pred_region
          %s205 = ssub.s32 16, 16
          %206 = vsyncadd [#allocation10], %s205
          %s208 = sshll.u32 %s3, 4
          %s209 = int_to_ptr.vmem [resolvable:$true] %s208
          %211 = dma.vmem_to_smem %s209, 16, [#allocation9], [#allocation10]
        $region28: #{tpu_custom_call.1} parent=11 // pred_fallthru
          _
      $region12: #{tpu_custom_call.1} parent=5 // pred_fallthru
        _
      %p212 = scmp.lt.s32.totalorder %s17, 2
      // Predicated region
      $region29: #{tpu_custom_call.1} parent=5 // pred_check
        %p213 = pneg %p212
      $region30: #{tpu_custom_call.1} parent=5 // pred_check_branch
        %215 = sbr.rel (%p213) target = $region32
      $region31: #{tpu_custom_call.1} parent=5 // pred_region
        // Predicated region
        $region33: #{tpu_custom_call.1} parent=31 // pred_check
          %p216 = pneg %p121
        $region34: #{tpu_custom_call.1} parent=31 // pred_check_branch
          %218 = sbr.rel (%p216) target = $region36
        $region35: #{tpu_custom_call.1} parent=31 // pred_region
          %p219 = scmp.lt.s32.totalorder %s17, 1
          %s220 = scalar_select %p219, %s17, 1
          %s221 = smul.addr %s220, 12
          %s222 = smul.addr %s221, 8
          %s223 = scalar_lea.vmem %s4, %s222
        $region36: #{tpu_custom_call.1} parent=31 // pred_fallthru
          _
      $region32: #{tpu_custom_call.1} parent=5 // pred_fallthru
        _
      %p224 = scmp.le.s32.totalorder 1, %s17
      %p225 = scmp.lt.s32.totalorder %s17, 3
      %p226 = pnand %p224, %p225
      %p227 = pneg %p226
      // Predicated region
      $region37: #{tpu_custom_call.1} parent=5 // pred_check
        _
      $region38: #{tpu_custom_call.1} parent=5 // pred_check_branch
        %229 = sbr.rel (%p226) target = $region40
      $region39: #{tpu_custom_call.1} parent=5 // pred_region
        %s230 = ssub.s32 %s17, 1
        // Predicated region
        $region41: #{tpu_custom_call.1} parent=39 // pred_check
          %p231 = pneg %p38
        $region42: #{tpu_custom_call.1} parent=39 // pred_check_branch
          %233 = sbr.rel (%p231) target = $region44
        $region43: #{tpu_custom_call.1} parent=39 // pred_region
          %234 = dma.done [#allocation5], 32
        $region44: #{tpu_custom_call.1} parent=39 // pred_fallthru
          _
        // Predicated region
        $region45: #{tpu_custom_call.1} parent=39 // pred_check
          %p235 = pneg %p59
        $region46: #{tpu_custom_call.1} parent=39 // pred_check_branch
          %237 = sbr.rel (%p235) target = $region48
        $region47: #{tpu_custom_call.1} parent=39 // pred_region
          %238 = dma.done [#allocation7], 16
        $region48: #{tpu_custom_call.1} parent=39 // pred_fallthru
          _
        // Predicated region
        $region49: #{tpu_custom_call.1} parent=39 // pred_check
          %p239 = pneg %p80
        $region50: #{tpu_custom_call.1} parent=39 // pred_check_branch
          %241 = sbr.rel (%p239) target = $region52
        $region51: #{tpu_custom_call.1} parent=39 // pred_region
          %242 = dma.done [#allocation7], 32
        $region52: #{tpu_custom_call.1} parent=39 // pred_fallthru
          _
        // Predicated region
        $region53: #{tpu_custom_call.1} parent=39 // pred_check
          %p243 = pneg %p101
        $region54: #{tpu_custom_call.1} parent=39 // pred_check_branch
          %245 = sbr.rel (%p243) target = $region56
        $region55: #{tpu_custom_call.1} parent=39 // pred_region
          %246 = dma.done [#allocation10], 16
        $region56: #{tpu_custom_call.1} parent=39 // pred_fallthru
          _
        %247 = sfence
        %p248 = pneg %p38
        %p249 = pneg %p35
        %p250 = pneg %p59
        %p251 = pneg %p56
        %p252 = pneg %p80
        %p253 = pneg %p77
        %p254 = pneg %p101
        %p255 = pneg %p98
        %p256 = scmp.lt.s32.totalorder %s22, 1
        %s257 = scalar_select %p256, %s22, 1
        %s258 = smul.addr %s257, 12
        %s259 = smul.addr %s258, 8
        %s260 = scalar_lea.vmem %s4, %s259
        %p261 = pneg %p127
        %p262 = pneg %p124
        %p263 = pneg %p153
        %p264 = pneg %p150
        %s265 = sand.u32 %s140, 1
        %s266 = scalar_lea.sflag [#allocation4], %s265
        %s267 = sand.u32 %s140, 1
        %s268 = smul.addr %s267, 64
        %s269 = scalar_lea.vmem [#allocation11], %s268
        %p270 = scmp.lt.s32.totalorder %s22, 1
        %s271 = scalar_select %p270, %s22, 1
        %s272 = smul.addr %s271, 12
        %s273 = smul.addr %s272, 8
        %s274 = scalar_lea.vmem %s4, %s273
        %vm275 = vcmask 146432
        %276 = vst.msk [vmem:[#allocation2] sm:$0xff] %vm275, 0.0
        %277 = vst.msk [vmem:[#allocation2 + $0x8] sm:$0xff] %vm275, 0.0
        %vm278 = vcmask 140288
        %279 = vst.msk [vmem:[#allocation2 + $0x10] sm:$0x3] %vm278, 0.0
        %280 = vst.msk [vmem:[#allocation2 + $0x18] sm:$0xff] %vm275, 0.0
        %281 = vst.msk [vmem:[#allocation2 + $0x20] sm:$0xff] %vm275, 0.0
        %282 = vst.msk [vmem:[#allocation2 + $0x28] sm:$0x3] %vm278, 0.0
        %283 = vst.msk [vmem:[#allocation2 + $0x30] sm:$0xff] %vm275, 0.0
        %284 = vst.msk [vmem:[#allocation2 + $0x38] sm:$0xff] %vm275, 0.0
        %285 = vst.msk [vmem:[#allocation2 + $0x40] sm:$0x3] %vm278, 0.0
        %286 = vst.msk [vmem:[#allocation2 + $0x48] sm:$0xff] %vm275, 0.0
        %287 = vst.msk [vmem:[#allocation2 + $0x50] sm:$0xff] %vm275, 0.0
        %288 = vst.msk [vmem:[#allocation2 + $0x58] sm:$0x3] %vm278, 0.0
        %s289 = sld [smem:[#allocation3]]
        %v290 = vld [vmem:[%s274] sm:$0xff]
        %v291 = vld [vmem:[%s274 + $0x8] sm:$0xff]
        %v292 = vstv %s289
        %v293 = vmul.f32 %v292, %v290
        %v294 = vmul.f32 %v292, %v291
        %v295 = vadd.f32 %v293, 0.0
        %v296 = vadd.f32 %v294, 0.0
        %s297 = sld [smem:[#allocation3 + $0x1]]
        %v298 = vstv %s297
        %v299 = vmul.f32 %v298, %v290
        %v300 = vmul.f32 %v298, %v291
        %303 = vrot.lane.b32.xlu0 %v299, 127
        %v304 = vpop.permute.xlu0 %303
        %305 = vrot.lane.b32.xlu0 %v300, 127
        %v306 = vpop.permute.xlu0 %305
        %v309 = vadd.f32 %v295, %v304
        %v310 = vadd.f32 %v296, %v306
        %s311 = sld [smem:[#allocation3 + $0x2]]
        %v312 = vstv %s311
        %v313 = vmul.f32 %v312, %v290
        %v314 = vmul.f32 %v312, %v291
        %317 = vrot.lane.b32.xlu0 %v313, 126
        %v318 = vpop.permute.xlu0 %317
        %319 = vrot.lane.b32.xlu0 %v314, 126
        %v320 = vpop.permute.xlu0 %319
        %v323 = vadd.f32 %v309, %v318
        %v324 = vadd.f32 %v310, %v320
        %s325 = sld [smem:[#allocation3 + $0x3]]
        %v326 = vld [vmem:[%s274 + $0x1] sm:$0xff]
        %v327 = vld [vmem:[%s274 + $0x9] sm:$0xff]
        %v328 = vstv %s325
        %v329 = vmul.f32 %v328, %v326
        %v330 = vmul.f32 %v328, %v327
        %v331 = vadd.f32 %v323, %v329
        %v332 = vadd.f32 %v324, %v330
        %s333 = sld [smem:[#allocation3 + $0x4]]
        %v334 = vstv %s333
        %v335 = vmul.f32 %v334, %v326
        %v336 = vmul.f32 %v334, %v327
        %339 = vrot.lane.b32.xlu0 %v335, 127
        %v340 = vpop.permute.xlu0 %339
        %341 = vrot.lane.b32.xlu0 %v336, 127
        %v342 = vpop.permute.xlu0 %341
        %v345 = vadd.f32 %v331, %v340
        %v346 = vadd.f32 %v332, %v342
        %s347 = sld [smem:[#allocation3 + $0x5]]
        %v348 = vstv %s347
        %v349 = vmul.f32 %v348, %v326
        %v350 = vmul.f32 %v348, %v327
        %353 = vrot.lane.b32.xlu0 %v349, 126
        %v354 = vpop.permute.xlu0 %353
        %355 = vrot.lane.b32.xlu0 %v350, 126
        %v356 = vpop.permute.xlu0 %355
        %v359 = vadd.f32 %v345, %v354
        %v360 = vadd.f32 %v346, %v356
        %s361 = sld [smem:[#allocation3 + $0x6]]
        %v362 = vld [vmem:[%s274 + $0x2] sm:$0xff]
        %v363 = vld [vmem:[%s274 + $0xa] sm:$0xff]
        %v364 = vstv %s361
        %v365 = vmul.f32 %v364, %v362
        %v366 = vmul.f32 %v364, %v363
        %v367 = vadd.f32 %v359, %v365
        %v368 = vadd.f32 %v360, %v366
        %s369 = sld [smem:[#allocation3 + $0x7]]
        %v370 = vstv %s369
        %v371 = vmul.f32 %v370, %v362
        %v372 = vmul.f32 %v370, %v363
        %375 = vrot.lane.b32.xlu0 %v371, 127
        %v376 = vpop.permute.xlu0 %375
        %377 = vrot.lane.b32.xlu0 %v372, 127
        %v378 = vpop.permute.xlu0 %377
        %v381 = vadd.f32 %v367, %v376
        %v382 = vadd.f32 %v368, %v378
        %s383 = sld [smem:[#allocation3 + $0x8]]
        %v384 = vstv %s383
        %v385 = vmul.f32 %v384, %v362
        %v386 = vmul.f32 %v384, %v363
        %389 = vrot.lane.b32.xlu0 %v385, 126
        %v390 = vpop.permute.xlu0 %389
        %391 = vrot.lane.b32.xlu0 %v386, 126
        %v392 = vpop.permute.xlu0 %391
        %v395 = vadd.f32 %v381, %v390
        %v396 = vadd.f32 %v382, %v392
        %s397 = sld [smem:[#allocation3 + $0x9]]
        %s398 = scalar_lea.vmem %s274, 24
        %v399 = vld [vmem:[%s398] sm:$0xff]
        %v400 = vld [vmem:[%s398 + $0x8] sm:$0xff]
        %v401 = vstv %s397
        %v402 = vmul.f32 %v401, %v399
        %v403 = vmul.f32 %v401, %v400
        %v404 = vadd.f32 %v395, %v402
        %v405 = vadd.f32 %v396, %v403
        %s406 = sld [smem:[#allocation3 + $0xa]]
        %v407 = vstv %s406
        %v408 = vmul.f32 %v407, %v399
        %v409 = vmul.f32 %v407, %v400
        %412 = vrot.lane.b32.xlu0 %v408, 127
        %v413 = vpop.permute.xlu0 %412
        %414 = vrot.lane.b32.xlu0 %v409, 127
        %v415 = vpop.permute.xlu0 %414
        %v418 = vadd.f32 %v404, %v413
        %v419 = vadd.f32 %v405, %v415
        %s420 = sld [smem:[#allocation3 + $0xb]]
        %v421 = vstv %s420
        %v422 = vmul.f32 %v421, %v399
        %v423 = vmul.f32 %v421, %v400
        %426 = vrot.lane.b32.xlu0 %v422, 126
        %v427 = vpop.permute.xlu0 %426
        %428 = vrot.lane.b32.xlu0 %v423, 126
        %v429 = vpop.permute.xlu0 %428
        %v432 = vadd.f32 %v418, %v427
        %v433 = vadd.f32 %v419, %v429
        %s434 = sld [smem:[#allocation3 + $0xc]]
        %v435 = vld [vmem:[%s398 + $0x1] sm:$0xff]
        %v436 = vld [vmem:[%s398 + $0x9] sm:$0xff]
        %v437 = vstv %s434
        %v438 = vmul.f32 %v437, %v435
        %v439 = vmul.f32 %v437, %v436
        %v440 = vadd.f32 %v432, %v438
        %v441 = vadd.f32 %v433, %v439
        %s442 = sld [smem:[#allocation3 + $0xd]]
        %v443 = vstv %s442
        %v444 = vmul.f32 %v443, %v435
        %v445 = vmul.f32 %v443, %v436
        %448 = vrot.lane.b32.xlu0 %v444, 127
        %v449 = vpop.permute.xlu0 %448
        %450 = vrot.lane.b32.xlu0 %v445, 127
        %v451 = vpop.permute.xlu0 %450
        %v454 = vadd.f32 %v440, %v449
        %v455 = vadd.f32 %v441, %v451
        %s456 = sld [smem:[#allocation3 + $0xe]]
        %v457 = vstv %s456
        %v458 = vmul.f32 %v457, %v435
        %v459 = vmul.f32 %v457, %v436
        %462 = vrot.lane.b32.xlu0 %v458, 126
        %v463 = vpop.permute.xlu0 %462
        %464 = vrot.lane.b32.xlu0 %v459, 126
        %v465 = vpop.permute.xlu0 %464
        %v468 = vadd.f32 %v454, %v463
        %v469 = vadd.f32 %v455, %v465
        %s470 = sld [smem:[#allocation3 + $0xf]]
        %v471 = vld [vmem:[%s398 + $0x2] sm:$0xff]
        %v472 = vld [vmem:[%s398 + $0xa] sm:$0xff]
        %v473 = vstv %s470
        %v474 = vmul.f32 %v473, %v471
        %v475 = vmul.f32 %v473, %v472
        %v476 = vadd.f32 %v468, %v474
        %v477 = vadd.f32 %v469, %v475
        %s478 = sld [smem:[#allocation3 + $0x10]]
        %v479 = vstv %s478
        %v480 = vmul.f32 %v479, %v471
        %v481 = vmul.f32 %v479, %v472
        %484 = vrot.lane.b32.xlu0 %v480, 127
        %v485 = vpop.permute.xlu0 %484
        %486 = vrot.lane.b32.xlu0 %v481, 127
        %v487 = vpop.permute.xlu0 %486
        %v490 = vadd.f32 %v476, %v485
        %v491 = vadd.f32 %v477, %v487
        %s492 = sld [smem:[#allocation3 + $0x11]]
        %v493 = vstv %s492
        %v494 = vmul.f32 %v493, %v471
        %v495 = vmul.f32 %v493, %v472
        %498 = vrot.lane.b32.xlu0 %v494, 126
        %v499 = vpop.permute.xlu0 %498
        %500 = vrot.lane.b32.xlu0 %v495, 126
        %v501 = vpop.permute.xlu0 %500
        %v504 = vadd.f32 %v490, %v499
        %v505 = vadd.f32 %v491, %v501
        %s506 = sld [smem:[#allocation3 + $0x12]]
        %s507 = scalar_lea.vmem %s274, 48
        %v508 = vld [vmem:[%s507] sm:$0xff]
        %v509 = vld [vmem:[%s507 + $0x8] sm:$0xff]
        %v510 = vstv %s506
        %v511 = vmul.f32 %v510, %v508
        %v512 = vmul.f32 %v510, %v509
        %v513 = vadd.f32 %v504, %v511
        %v514 = vadd.f32 %v505, %v512
        %s515 = sld [smem:[#allocation3 + $0x13]]
        %v516 = vstv %s515
        %v517 = vmul.f32 %v516, %v508
        %v518 = vmul.f32 %v516, %v509
        %521 = vrot.lane.b32.xlu0 %v517, 127
        %v522 = vpop.permute.xlu0 %521
        %523 = vrot.lane.b32.xlu0 %v518, 127
        %v524 = vpop.permute.xlu0 %523
        %v527 = vadd.f32 %v513, %v522
        %v528 = vadd.f32 %v514, %v524
        %s529 = sld [smem:[#allocation3 + $0x14]]
        %v530 = vstv %s529
        %v531 = vmul.f32 %v530, %v508
        %v532 = vmul.f32 %v530, %v509
        %535 = vrot.lane.b32.xlu0 %v531, 126
        %v536 = vpop.permute.xlu0 %535
        %537 = vrot.lane.b32.xlu0 %v532, 126
        %v538 = vpop.permute.xlu0 %537
        %v541 = vadd.f32 %v527, %v536
        %v542 = vadd.f32 %v528, %v538
        %s543 = sld [smem:[#allocation3 + $0x15]]
        %v544 = vld [vmem:[%s507 + $0x1] sm:$0xff]
        %v545 = vld [vmem:[%s507 + $0x9] sm:$0xff]
        %v546 = vstv %s543
        %v547 = vmul.f32 %v546, %v544
        %v548 = vmul.f32 %v546, %v545
        %v549 = vadd.f32 %v541, %v547
        %v550 = vadd.f32 %v542, %v548
        %s551 = sld [smem:[#allocation3 + $0x16]]
        %v552 = vstv %s551
        %v553 = vmul.f32 %v552, %v544
        %v554 = vmul.f32 %v552, %v545
        %557 = vrot.lane.b32.xlu0 %v553, 127
        %v558 = vpop.permute.xlu0 %557
        %559 = vrot.lane.b32.xlu0 %v554, 127
        %v560 = vpop.permute.xlu0 %559
        %v563 = vadd.f32 %v549, %v558
        %v564 = vadd.f32 %v550, %v560
        %s565 = sld [smem:[#allocation3 + $0x17]]
        %v566 = vstv %s565
        %v567 = vmul.f32 %v566, %v544
        %v568 = vmul.f32 %v566, %v545
        %571 = vrot.lane.b32.xlu0 %v567, 126
        %v572 = vpop.permute.xlu0 %571
        %573 = vrot.lane.b32.xlu0 %v568, 126
        %v574 = vpop.permute.xlu0 %573
        %v577 = vadd.f32 %v563, %v572
        %v578 = vadd.f32 %v564, %v574
        %s579 = sld [smem:[#allocation3 + $0x18]]
        %v580 = vld [vmem:[%s507 + $0x2] sm:$0xff]
        %v581 = vld [vmem:[%s507 + $0xa] sm:$0xff]
        %v582 = vstv %s579
        %v583 = vmul.f32 %v582, %v580
        %v584 = vmul.f32 %v582, %v581
        %v585 = vadd.f32 %v577, %v583
        %v586 = vadd.f32 %v578, %v584
        %s587 = sld [smem:[#allocation3 + $0x19]]
        %v588 = vstv %s587
        %v589 = vmul.f32 %v588, %v580
        %v590 = vmul.f32 %v588, %v581
        %593 = vrot.lane.b32.xlu0 %v589, 127
        %v594 = vpop.permute.xlu0 %593
        %595 = vrot.lane.b32.xlu0 %v590, 127
        %v596 = vpop.permute.xlu0 %595
        %v599 = vadd.f32 %v585, %v594
        %v600 = vadd.f32 %v586, %v596
        %s601 = sld [smem:[#allocation3 + $0x1a]]
        %v602 = vstv %s601
        %v603 = vmul.f32 %v602, %v580
        %v604 = vmul.f32 %v602, %v581
        %607 = vrot.lane.b32.xlu0 %v603, 126
        %v608 = vpop.permute.xlu0 %607
        %609 = vrot.lane.b32.xlu0 %v604, 126
        %v610 = vpop.permute.xlu0 %609
        %v613 = vadd.f32 %v599, %v608
        %v614 = vadd.f32 %v600, %v610
        %s615 = sld [smem:[#allocation3 + $0x1b]]
        %s616 = scalar_lea.vmem %s274, 72
        %v617 = vld [vmem:[%s616] sm:$0xff]
        %v618 = vld [vmem:[%s616 + $0x8] sm:$0xff]
        %v619 = vstv %s615
        %v620 = vmul.f32 %v619, %v617
        %v621 = vmul.f32 %v619, %v618
        %v622 = vadd.f32 %v613, %v620
        %v623 = vadd.f32 %v614, %v621
        %s624 = sld [smem:[#allocation3 + $0x1c]]
        %v625 = vstv %s624
        %v626 = vmul.f32 %v625, %v617
        %v627 = vmul.f32 %v625, %v618
        %630 = vrot.lane.b32.xlu0 %v626, 127
        %v631 = vpop.permute.xlu0 %630
        %632 = vrot.lane.b32.xlu0 %v627, 127
        %v633 = vpop.permute.xlu0 %632
        %v636 = vadd.f32 %v622, %v631
        %v637 = vadd.f32 %v623, %v633
        %s638 = sld [smem:[#allocation3 + $0x1d]]
        %v639 = vstv %s638
        %v640 = vmul.f32 %v639, %v617
        %v641 = vmul.f32 %v639, %v618
        %644 = vrot.lane.b32.xlu0 %v640, 126
        %v645 = vpop.permute.xlu0 %644
        %646 = vrot.lane.b32.xlu0 %v641, 126
        %v647 = vpop.permute.xlu0 %646
        %v650 = vadd.f32 %v636, %v645
        %v651 = vadd.f32 %v637, %v647
        %s652 = sld [smem:[#allocation3 + $0x1e]]
        %v653 = vld [vmem:[%s616 + $0x1] sm:$0xff]
        %v654 = vld [vmem:[%s616 + $0x9] sm:$0xff]
        %v655 = vstv %s652
        %v656 = vmul.f32 %v655, %v653
        %v657 = vmul.f32 %v655, %v654
        %v658 = vadd.f32 %v650, %v656
        %v659 = vadd.f32 %v651, %v657
        %s660 = sld [smem:[#allocation3 + $0x1f]]
        %v661 = vstv %s660
        %v662 = vmul.f32 %v661, %v653
        %v663 = vmul.f32 %v661, %v654
        %666 = vrot.lane.b32.xlu0 %v662, 127
        %v667 = vpop.permute.xlu0 %666
        %668 = vrot.lane.b32.xlu0 %v663, 127
        %v669 = vpop.permute.xlu0 %668
        %v672 = vadd.f32 %v658, %v667
        %v673 = vadd.f32 %v659, %v669
        %s674 = sld [smem:[#allocation3 + $0x20]]
        %v675 = vstv %s674
        %v676 = vmul.f32 %v675, %v653
        %v677 = vmul.f32 %v675, %v654
        %680 = vrot.lane.b32.xlu0 %v676, 126
        %v681 = vpop.permute.xlu0 %680
        %682 = vrot.lane.b32.xlu0 %v677, 126
        %v683 = vpop.permute.xlu0 %682
        %v686 = vadd.f32 %v672, %v681
        %v687 = vadd.f32 %v673, %v683
        %s688 = sld [smem:[#allocation3 + $0x21]]
        %v689 = vld [vmem:[%s616 + $0x2] sm:$0xff]
        %v690 = vld [vmem:[%s616 + $0xa] sm:$0xff]
        %v691 = vstv %s688
        %v692 = vmul.f32 %v691, %v689
        %v693 = vmul.f32 %v691, %v690
        %v694 = vadd.f32 %v686, %v692
        %v695 = vadd.f32 %v687, %v693
        %s696 = sld [smem:[#allocation3 + $0x22]]
        %v697 = vstv %s696
        %v698 = vmul.f32 %v697, %v689
        %v699 = vmul.f32 %v697, %v690
        %702 = vrot.lane.b32.xlu0 %v698, 127
        %v703 = vpop.permute.xlu0 %702
        %704 = vrot.lane.b32.xlu0 %v699, 127
        %v705 = vpop.permute.xlu0 %704
        %v708 = vadd.f32 %v694, %v703
        %v709 = vadd.f32 %v695, %v705
        %s710 = sld [smem:[#allocation3 + $0x23]]
        %v711 = vstv %s710
        %v712 = vmul.f32 %v711, %v689
        %v713 = vmul.f32 %v711, %v690
        %716 = vrot.lane.b32.xlu0 %v712, 126
        %v717 = vpop.permute.xlu0 %716
        %718 = vrot.lane.b32.xlu0 %v713, 126
        %v719 = vpop.permute.xlu0 %718
        %v722 = vadd.f32 %v708, %v717
        %v723 = vadd.f32 %v709, %v719
        %s724 = sld [smem:[#allocation6]]
        %v725 = vstv %s724
        %v726 = vadd.f32 %v722, %v725
        %v727 = vadd.f32 %v723, %v725
        %v728 = vmax.f32 %v726, 0.0
        %v729 = vmax.f32 %v727, 0.0
        %732 = vrot.lane.b32.xlu0 %v728, 1
        %v733 = vpop.permute.xlu0 %732
        %734 = vrot.lane.b32.xlu0 %v729, 1
        %v735 = vpop.permute.xlu0 %734
        %vm738 = vcmask 138248
        %739 = vst.msk [vmem:[#allocation2 + $0x1] sm:$0xff] %vm738, %v733
        %740 = vst.msk [vmem:[#allocation2 + $0x9] sm:$0xff] %vm738, %v735
        %s741 = sld [smem:[#allocation3 + $0x24]]
        %v742 = vld [vmem:[%s274] sm:$0xff]
        %v743 = vld [vmem:[%s274 + $0x8] sm:$0xff]
        %v744 = vstv %s741
        %v745 = vmul.f32 %v744, %v742
        %v746 = vmul.f32 %v744, %v743
        %v747 = vadd.f32 %v745, 0.0
        %v748 = vadd.f32 %v746, 0.0
        %s749 = sld [smem:[#allocation3 + $0x25]]
        %v750 = vstv %s749
        %v751 = vmul.f32 %v750, %v742
        %v752 = vmul.f32 %v750, %v743
        %755 = vrot.lane.b32.xlu0 %v751, 127
        %v756 = vpop.permute.xlu0 %755
        %757 = vrot.lane.b32.xlu0 %v752, 127
        %v758 = vpop.permute.xlu0 %757
        %v761 = vadd.f32 %v747, %v756
        %v762 = vadd.f32 %v748, %v758
        %s763 = sld [smem:[#allocation3 + $0x26]]
        %v764 = vstv %s763
        %v765 = vmul.f32 %v764, %v742
        %v766 = vmul.f32 %v764, %v743
        %769 = vrot.lane.b32.xlu0 %v765, 126
        %v770 = vpop.permute.xlu0 %769
        %771 = vrot.lane.b32.xlu0 %v766, 126
        %v772 = vpop.permute.xlu0 %771
        %v775 = vadd.f32 %v761, %v770
        %v776 = vadd.f32 %v762, %v772
        %s777 = sld [smem:[#allocation3 + $0x27]]
        %v778 = vld [vmem:[%s274 + $0x1] sm:$0xff]
        %v779 = vld [vmem:[%s274 + $0x9] sm:$0xff]
        %v780 = vstv %s777
        %v781 = vmul.f32 %v780, %v778
        %v782 = vmul.f32 %v780, %v779
        %v783 = vadd.f32 %v775, %v781
        %v784 = vadd.f32 %v776, %v782
        %s785 = sld [smem:[#allocation3 + $0x28]]
        %v786 = vstv %s785
        %v787 = vmul.f32 %v786, %v778
        %v788 = vmul.f32 %v786, %v779
        %791 = vrot.lane.b32.xlu0 %v787, 127
        %v792 = vpop.permute.xlu0 %791
        %793 = vrot.lane.b32.xlu0 %v788, 127
        %v794 = vpop.permute.xlu0 %793
        %v797 = vadd.f32 %v783, %v792
        %v798 = vadd.f32 %v784, %v794
        %s799 = sld [smem:[#allocation3 + $0x29]]
        %v800 = vstv %s799
        %v801 = vmul.f32 %v800, %v778
        %v802 = vmul.f32 %v800, %v779
        %805 = vrot.lane.b32.xlu0 %v801, 126
        %v806 = vpop.permute.xlu0 %805
        %807 = vrot.lane.b32.xlu0 %v802, 126
        %v808 = vpop.permute.xlu0 %807
        %v811 = vadd.f32 %v797, %v806
        %v812 = vadd.f32 %v798, %v808
        %s813 = sld [smem:[#allocation3 + $0x2a]]
        %v814 = vld [vmem:[%s274 + $0x2] sm:$0xff]
        %v815 = vld [vmem:[%s274 + $0xa] sm:$0xff]
        %v816 = vstv %s813
        %v817 = vmul.f32 %v816, %v814
        %v818 = vmul.f32 %v816, %v815
        %v819 = vadd.f32 %v811, %v817
        %v820 = vadd.f32 %v812, %v818
        %s821 = sld [smem:[#allocation3 + $0x2b]]
        %v822 = vstv %s821
        %v823 = vmul.f32 %v822, %v814
        %v824 = vmul.f32 %v822, %v815
        %827 = vrot.lane.b32.xlu0 %v823, 127
        %v828 = vpop.permute.xlu0 %827
        %829 = vrot.lane.b32.xlu0 %v824, 127
        %v830 = vpop.permute.xlu0 %829
        %v833 = vadd.f32 %v819, %v828
        %v834 = vadd.f32 %v820, %v830
        %s835 = sld [smem:[#allocation3 + $0x2c]]
        %v836 = vstv %s835
        %v837 = vmul.f32 %v836, %v814
        %v838 = vmul.f32 %v836, %v815
        %841 = vrot.lane.b32.xlu0 %v837, 126
        %v842 = vpop.permute.xlu0 %841
        %843 = vrot.lane.b32.xlu0 %v838, 126
        %v844 = vpop.permute.xlu0 %843
        %v847 = vadd.f32 %v833, %v842
        %v848 = vadd.f32 %v834, %v844
        %s849 = sld [smem:[#allocation3 + $0x2d]]
        %v850 = vld [vmem:[%s398] sm:$0xff]
        %v851 = vld [vmem:[%s398 + $0x8] sm:$0xff]
        %v852 = vstv %s849
        %v853 = vmul.f32 %v852, %v850
        %v854 = vmul.f32 %v852, %v851
        %v855 = vadd.f32 %v847, %v853
        %v856 = vadd.f32 %v848, %v854
        %s857 = sld [smem:[#allocation3 + $0x2e]]
        %v858 = vstv %s857
        %v859 = vmul.f32 %v858, %v850
        %v860 = vmul.f32 %v858, %v851
        %863 = vrot.lane.b32.xlu0 %v859, 127
        %v864 = vpop.permute.xlu0 %863
        %865 = vrot.lane.b32.xlu0 %v860, 127
        %v866 = vpop.permute.xlu0 %865
        %v869 = vadd.f32 %v855, %v864
        %v870 = vadd.f32 %v856, %v866
        %s871 = sld [smem:[#allocation3 + $0x2f]]
        %v872 = vstv %s871
        %v873 = vmul.f32 %v872, %v850
        %v874 = vmul.f32 %v872, %v851
        %877 = vrot.lane.b32.xlu0 %v873, 126
        %v878 = vpop.permute.xlu0 %877
        %879 = vrot.lane.b32.xlu0 %v874, 126
        %v880 = vpop.permute.xlu0 %879
        %v883 = vadd.f32 %v869, %v878
        %v884 = vadd.f32 %v870, %v880
        %s885 = sld [smem:[#allocation3 + $0x30]]
        %v886 = vld [vmem:[%s398 + $0x1] sm:$0xff]
        %v887 = vld [vmem:[%s398 + $0x9] sm:$0xff]
        %v888 = vstv %s885
        %v889 = vmul.f32 %v888, %v886
        %v890 = vmul.f32 %v888, %v887
        %v891 = vadd.f32 %v883, %v889
        %v892 = vadd.f32 %v884, %v890
        %s893 = sld [smem:[#allocation3 + $0x31]]
        %v894 = vstv %s893
        %v895 = vmul.f32 %v894, %v886
        %v896 = vmul.f32 %v894, %v887
        %899 = vrot.lane.b32.xlu0 %v895, 127
        %v900 = vpop.permute.xlu0 %899
        %901 = vrot.lane.b32.xlu0 %v896, 127
        %v902 = vpop.permute.xlu0 %901
        %v905 = vadd.f32 %v891, %v900
        %v906 = vadd.f32 %v892, %v902
        %s907 = sld [smem:[#allocation3 + $0x32]]
        %v908 = vstv %s907
        %v909 = vmul.f32 %v908, %v886
        %v910 = vmul.f32 %v908, %v887
        %913 = vrot.lane.b32.xlu0 %v909, 126
        %v914 = vpop.permute.xlu0 %913
        %915 = vrot.lane.b32.xlu0 %v910, 126
        %v916 = vpop.permute.xlu0 %915
        %v919 = vadd.f32 %v905, %v914
        %v920 = vadd.f32 %v906, %v916
        %s921 = sld [smem:[#allocation3 + $0x33]]
        %v922 = vld [vmem:[%s398 + $0x2] sm:$0xff]
        %v923 = vld [vmem:[%s398 + $0xa] sm:$0xff]
        %v924 = vstv %s921
        %v925 = vmul.f32 %v924, %v922
        %v926 = vmul.f32 %v924, %v923
        %v927 = vadd.f32 %v919, %v925
        %v928 = vadd.f32 %v920, %v926
        %s929 = sld [smem:[#allocation3 + $0x34]]
        %v930 = vstv %s929
        %v931 = vmul.f32 %v930, %v922
        %v932 = vmul.f32 %v930, %v923
        %935 = vrot.lane.b32.xlu0 %v931, 127
        %v936 = vpop.permute.xlu0 %935
        %937 = vrot.lane.b32.xlu0 %v932, 127
        %v938 = vpop.permute.xlu0 %937
        %v941 = vadd.f32 %v927, %v936
        %v942 = vadd.f32 %v928, %v938
        %s943 = sld [smem:[#allocation3 + $0x35]]
        %v944 = vstv %s943
        %v945 = vmul.f32 %v944, %v922
        %v946 = vmul.f32 %v944, %v923
        %949 = vrot.lane.b32.xlu0 %v945, 126
        %v950 = vpop.permute.xlu0 %949
        %951 = vrot.lane.b32.xlu0 %v946, 126
        %v952 = vpop.permute.xlu0 %951
        %v955 = vadd.f32 %v941, %v950
        %v956 = vadd.f32 %v942, %v952
        %s957 = sld [smem:[#allocation3 + $0x36]]
        %v958 = vld [vmem:[%s507] sm:$0xff]
        %v959 = vld [vmem:[%s507 + $0x8] sm:$0xff]
        %v960 = vstv %s957
        %v961 = vmul.f32 %v960, %v958
        %v962 = vmul.f32 %v960, %v959
        %v963 = vadd.f32 %v955, %v961
        %v964 = vadd.f32 %v956, %v962
        %s965 = sld [smem:[#allocation3 + $0x37]]
        %v966 = vstv %s965
        %v967 = vmul.f32 %v966, %v958
        %v968 = vmul.f32 %v966, %v959
        %971 = vrot.lane.b32.xlu0 %v967, 127
        %v972 = vpop.permute.xlu0 %971
        %973 = vrot.lane.b32.xlu0 %v968, 127
        %v974 = vpop.permute.xlu0 %973
        %v977 = vadd.f32 %v963, %v972
        %v978 = vadd.f32 %v964, %v974
        %s979 = sld [smem:[#allocation3 + $0x38]]
        %v980 = vstv %s979
        %v981 = vmul.f32 %v980, %v958
        %v982 = vmul.f32 %v980, %v959
        %985 = vrot.lane.b32.xlu0 %v981, 126
        %v986 = vpop.permute.xlu0 %985
        %987 = vrot.lane.b32.xlu0 %v982, 126
        %v988 = vpop.permute.xlu0 %987
        %v991 = vadd.f32 %v977, %v986
        %v992 = vadd.f32 %v978, %v988
        %s993 = sld [smem:[#allocation3 + $0x39]]
        %v994 = vld [vmem:[%s507 + $0x1] sm:$0xff]
        %v995 = vld [vmem:[%s507 + $0x9] sm:$0xff]
        %v996 = vstv %s993
        %v997 = vmul.f32 %v996, %v994
        %v998 = vmul.f32 %v996, %v995
        %v999 = vadd.f32 %v991, %v997
        %v1000 = vadd.f32 %v992, %v998
        %s1001 = sld [smem:[#allocation3 + $0x3a]]
        %v1002 = vstv %s1001
        %v1003 = vmul.f32 %v1002, %v994
        %v1004 = vmul.f32 %v1002, %v995
        %1007 = vrot.lane.b32.xlu0 %v1003, 127
        %v1008 = vpop.permute.xlu0 %1007
        %1009 = vrot.lane.b32.xlu0 %v1004, 127
        %v1010 = vpop.permute.xlu0 %1009
        %v1013 = vadd.f32 %v999, %v1008
        %v1014 = vadd.f32 %v1000, %v1010
        %s1015 = sld [smem:[#allocation3 + $0x3b]]
        %v1016 = vstv %s1015
        %v1017 = vmul.f32 %v1016, %v994
        %v1018 = vmul.f32 %v1016, %v995
        %1021 = vrot.lane.b32.xlu0 %v1017, 126
        %v1022 = vpop.permute.xlu0 %1021
        %1023 = vrot.lane.b32.xlu0 %v1018, 126
        %v1024 = vpop.permute.xlu0 %1023
        %v1027 = vadd.f32 %v1013, %v1022
        %v1028 = vadd.f32 %v1014, %v1024
        %s1029 = sld [smem:[#allocation3 + $0x3c]]
        %v1030 = vld [vmem:[%s507 + $0x2] sm:$0xff]
        %v1031 = vld [vmem:[%s507 + $0xa] sm:$0xff]
        %v1032 = vstv %s1029
        %v1033 = vmul.f32 %v1032, %v1030
        %v1034 = vmul.f32 %v1032, %v1031
        %v1035 = vadd.f32 %v1027, %v1033
        %v1036 = vadd.f32 %v1028, %v1034
        %s1037 = sld [smem:[#allocation3 + $0x3d]]
        %v1038 = vstv %s1037
        %v1039 = vmul.f32 %v1038, %v1030
        %v1040 = vmul.f32 %v1038, %v1031
        %1043 = vrot.lane.b32.xlu0 %v1039, 127
        %v1044 = vpop.permute.xlu0 %1043
        %1045 = vrot.lane.b32.xlu0 %v1040, 127
        %v1046 = vpop.permute.xlu0 %1045
        %v1049 = vadd.f32 %v1035, %v1044
        %v1050 = vadd.f32 %v1036, %v1046
        %s1051 = sld [smem:[#allocation3 + $0x3e]]
        %v1052 = vstv %s1051
        %v1053 = vmul.f32 %v1052, %v1030
        %v1054 = vmul.f32 %v1052, %v1031
        %1057 = vrot.lane.b32.xlu0 %v1053, 126
        %v1058 = vpop.permute.xlu0 %1057
        %1059 = vrot.lane.b32.xlu0 %v1054, 126
        %v1060 = vpop.permute.xlu0 %1059
        %v1063 = vadd.f32 %v1049, %v1058
        %v1064 = vadd.f32 %v1050, %v1060
        %s1065 = sld [smem:[#allocation3 + $0x3f]]
        %v1066 = vld [vmem:[%s616] sm:$0xff]
        %v1067 = vld [vmem:[%s616 + $0x8] sm:$0xff]
        %v1068 = vstv %s1065
        %v1069 = vmul.f32 %v1068, %v1066
        %v1070 = vmul.f32 %v1068, %v1067
        %v1071 = vadd.f32 %v1063, %v1069
        %v1072 = vadd.f32 %v1064, %v1070
        %s1073 = sld [smem:[#allocation3 + $0x40]]
        %v1074 = vstv %s1073
        %v1075 = vmul.f32 %v1074, %v1066
        %v1076 = vmul.f32 %v1074, %v1067
        %1079 = vrot.lane.b32.xlu0 %v1075, 127
        %v1080 = vpop.permute.xlu0 %1079
        %1081 = vrot.lane.b32.xlu0 %v1076, 127
        %v1082 = vpop.permute.xlu0 %1081
        %v1085 = vadd.f32 %v1071, %v1080
        %v1086 = vadd.f32 %v1072, %v1082
        %s1087 = sld [smem:[#allocation3 + $0x41]]
        %v1088 = vstv %s1087
        %v1089 = vmul.f32 %v1088, %v1066
        %v1090 = vmul.f32 %v1088, %v1067
        %1093 = vrot.lane.b32.xlu0 %v1089, 126
        %v1094 = vpop.permute.xlu0 %1093
        %1095 = vrot.lane.b32.xlu0 %v1090, 126
        %v1096 = vpop.permute.xlu0 %1095
        %v1099 = vadd.f32 %v1085, %v1094
        %v1100 = vadd.f32 %v1086, %v1096
        %s1101 = sld [smem:[#allocation3 + $0x42]]
        %v1102 = vld [vmem:[%s616 + $0x1] sm:$0xff]
        %v1103 = vld [vmem:[%s616 + $0x9] sm:$0xff]
        %v1104 = vstv %s1101
        %v1105 = vmul.f32 %v1104, %v1102
        %v1106 = vmul.f32 %v1104, %v1103
        %v1107 = vadd.f32 %v1099, %v1105
        %v1108 = vadd.f32 %v1100, %v1106
        %s1109 = sld [smem:[#allocation3 + $0x43]]
        %v1110 = vstv %s1109
        %v1111 = vmul.f32 %v1110, %v1102
        %v1112 = vmul.f32 %v1110, %v1103
        %1115 = vrot.lane.b32.xlu0 %v1111, 127
        %v1116 = vpop.permute.xlu0 %1115
        %1117 = vrot.lane.b32.xlu0 %v1112, 127
        %v1118 = vpop.permute.xlu0 %1117
        %v1121 = vadd.f32 %v1107, %v1116
        %v1122 = vadd.f32 %v1108, %v1118
        %s1123 = sld [smem:[#allocation3 + $0x44]]
        %v1124 = vstv %s1123
        %v1125 = vmul.f32 %v1124, %v1102
        %v1126 = vmul.f32 %v1124, %v1103
        %1129 = vrot.lane.b32.xlu0 %v1125, 126
        %v1130 = vpop.permute.xlu0 %1129
        %1131 = vrot.lane.b32.xlu0 %v1126, 126
        %v1132 = vpop.permute.xlu0 %1131
        %v1135 = vadd.f32 %v1121, %v1130
        %v1136 = vadd.f32 %v1122, %v1132
        %s1137 = sld [smem:[#allocation3 + $0x45]]
        %v1138 = vld [vmem:[%s616 + $0x2] sm:$0xff]
        %v1139 = vld [vmem:[%s616 + $0xa] sm:$0xff]
        %v1140 = vstv %s1137
        %v1141 = vmul.f32 %v1140, %v1138
        %v1142 = vmul.f32 %v1140, %v1139
        %v1143 = vadd.f32 %v1135, %v1141
        %v1144 = vadd.f32 %v1136, %v1142
        %s1145 = sld [smem:[#allocation3 + $0x46]]
        %v1146 = vstv %s1145
        %v1147 = vmul.f32 %v1146, %v1138
        %v1148 = vmul.f32 %v1146, %v1139
        %1151 = vrot.lane.b32.xlu0 %v1147, 127
        %v1152 = vpop.permute.xlu0 %1151
        %1153 = vrot.lane.b32.xlu0 %v1148, 127
        %v1154 = vpop.permute.xlu0 %1153
        %v1157 = vadd.f32 %v1143, %v1152
        %v1158 = vadd.f32 %v1144, %v1154
        %s1159 = sld [smem:[#allocation3 + $0x47]]
        %v1160 = vstv %s1159
        %v1161 = vmul.f32 %v1160, %v1138
        %v1162 = vmul.f32 %v1160, %v1139
        %1165 = vrot.lane.b32.xlu0 %v1161, 126
        %v1166 = vpop.permute.xlu0 %1165
        %1167 = vrot.lane.b32.xlu0 %v1162, 126
        %v1168 = vpop.permute.xlu0 %1167
        %v1171 = vadd.f32 %v1157, %v1166
        %v1172 = vadd.f32 %v1158, %v1168
        %s1173 = sld [smem:[#allocation6 + $0x1]]
        %v1174 = vstv %s1173
        %v1175 = vadd.f32 %v1171, %v1174
        %v1176 = vadd.f32 %v1172, %v1174
        %v1177 = vmax.f32 %v1175, 0.0
        %v1178 = vmax.f32 %v1176, 0.0
        %1181 = vrot.lane.b32.xlu0 %v1177, 1
        %v1182 = vpop.permute.xlu0 %1181
        %1183 = vrot.lane.b32.xlu0 %v1178, 1
        %v1184 = vpop.permute.xlu0 %1183
        %s1187 = scalar_lea.vmem [#allocation2], 24
        %1188 = vst.msk [vmem:[%s1187 + $0x1] sm:$0xff] %vm738, %v1182
        %1189 = vst.msk [vmem:[%s1187 + $0x9] sm:$0xff] %vm738, %v1184
        %s1190 = sld [smem:[#allocation3 + $0x48]]
        %v1191 = vld [vmem:[%s274] sm:$0xff]
        %v1192 = vld [vmem:[%s274 + $0x8] sm:$0xff]
        %v1193 = vstv %s1190
        %v1194 = vmul.f32 %v1193, %v1191
        %v1195 = vmul.f32 %v1193, %v1192
        %v1196 = vadd.f32 %v1194, 0.0
        %v1197 = vadd.f32 %v1195, 0.0
        %s1198 = sld [smem:[#allocation3 + $0x49]]
        %v1199 = vstv %s1198
        %v1200 = vmul.f32 %v1199, %v1191
        %v1201 = vmul.f32 %v1199, %v1192
        %1204 = vrot.lane.b32.xlu0 %v1200, 127
        %v1205 = vpop.permute.xlu0 %1204
        %1206 = vrot.lane.b32.xlu0 %v1201, 127
        %v1207 = vpop.permute.xlu0 %1206
        %v1210 = vadd.f32 %v1196, %v1205
        %v1211 = vadd.f32 %v1197, %v1207
        %s1212 = sld [smem:[#allocation3 + $0x4a]]
        %v1213 = vstv %s1212
        %v1214 = vmul.f32 %v1213, %v1191
        %v1215 = vmul.f32 %v1213, %v1192
        %1218 = vrot.lane.b32.xlu0 %v1214, 126
        %v1219 = vpop.permute.xlu0 %1218
        %1220 = vrot.lane.b32.xlu0 %v1215, 126
        %v1221 = vpop.permute.xlu0 %1220
        %v1224 = vadd.f32 %v1210, %v1219
        %v1225 = vadd.f32 %v1211, %v1221
        %s1226 = sld [smem:[#allocation3 + $0x4b]]
        %v1227 = vld [vmem:[%s274 + $0x1] sm:$0xff]
        %v1228 = vld [vmem:[%s274 + $0x9] sm:$0xff]
        %v1229 = vstv %s1226
        %v1230 = vmul.f32 %v1229, %v1227
        %v1231 = vmul.f32 %v1229, %v1228
        %v1232 = vadd.f32 %v1224, %v1230
        %v1233 = vadd.f32 %v1225, %v1231
        %s1234 = sld [smem:[#allocation3 + $0x4c]]
        %v1235 = vstv %s1234
        %v1236 = vmul.f32 %v1235, %v1227
        %v1237 = vmul.f32 %v1235, %v1228
        %1240 = vrot.lane.b32.xlu0 %v1236, 127
        %v1241 = vpop.permute.xlu0 %1240
        %1242 = vrot.lane.b32.xlu0 %v1237, 127
        %v1243 = vpop.permute.xlu0 %1242
        %v1246 = vadd.f32 %v1232, %v1241
        %v1247 = vadd.f32 %v1233, %v1243
        %s1248 = sld [smem:[#allocation3 + $0x4d]]
        %v1249 = vstv %s1248
        %v1250 = vmul.f32 %v1249, %v1227
        %v1251 = vmul.f32 %v1249, %v1228
        %1254 = vrot.lane.b32.xlu0 %v1250, 126
        %v1255 = vpop.permute.xlu0 %1254
        %1256 = vrot.lane.b32.xlu0 %v1251, 126
        %v1257 = vpop.permute.xlu0 %1256
        %v1260 = vadd.f32 %v1246, %v1255
        %v1261 = vadd.f32 %v1247, %v1257
        %s1262 = sld [smem:[#allocation3 + $0x4e]]
        %v1263 = vld [vmem:[%s274 + $0x2] sm:$0xff]
        %v1264 = vld [vmem:[%s274 + $0xa] sm:$0xff]
        %v1265 = vstv %s1262
        %v1266 = vmul.f32 %v1265, %v1263
        %v1267 = vmul.f32 %v1265, %v1264
        %v1268 = vadd.f32 %v1260, %v1266
        %v1269 = vadd.f32 %v1261, %v1267
        %s1270 = sld [smem:[#allocation3 + $0x4f]]
        %v1271 = vstv %s1270
        %v1272 = vmul.f32 %v1271, %v1263
        %v1273 = vmul.f32 %v1271, %v1264
        %1276 = vrot.lane.b32.xlu0 %v1272, 127
        %v1277 = vpop.permute.xlu0 %1276
        %1278 = vrot.lane.b32.xlu0 %v1273, 127
        %v1279 = vpop.permute.xlu0 %1278
        %v1282 = vadd.f32 %v1268, %v1277
        %v1283 = vadd.f32 %v1269, %v1279
        %s1284 = sld [smem:[#allocation3 + $0x50]]
        %v1285 = vstv %s1284
        %v1286 = vmul.f32 %v1285, %v1263
        %v1287 = vmul.f32 %v1285, %v1264
        %1290 = vrot.lane.b32.xlu0 %v1286, 126
        %v1291 = vpop.permute.xlu0 %1290
        %1292 = vrot.lane.b32.xlu0 %v1287, 126
        %v1293 = vpop.permute.xlu0 %1292
        %v1296 = vadd.f32 %v1282, %v1291
        %v1297 = vadd.f32 %v1283, %v1293
        %s1298 = sld [smem:[#allocation3 + $0x51]]
        %v1299 = vld [vmem:[%s398] sm:$0xff]
        %v1300 = vld [vmem:[%s398 + $0x8] sm:$0xff]
        %v1301 = vstv %s1298
        %v1302 = vmul.f32 %v1301, %v1299
        %v1303 = vmul.f32 %v1301, %v1300
        %v1304 = vadd.f32 %v1296, %v1302
        %v1305 = vadd.f32 %v1297, %v1303
        %s1306 = sld [smem:[#allocation3 + $0x52]]
        %v1307 = vstv %s1306
        %v1308 = vmul.f32 %v1307, %v1299
        %v1309 = vmul.f32 %v1307, %v1300
        %1312 = vrot.lane.b32.xlu0 %v1308, 127
        %v1313 = vpop.permute.xlu0 %1312
        %1314 = vrot.lane.b32.xlu0 %v1309, 127
        %v1315 = vpop.permute.xlu0 %1314
        %v1318 = vadd.f32 %v1304, %v1313
        %v1319 = vadd.f32 %v1305, %v1315
        %s1320 = sld [smem:[#allocation3 + $0x53]]
        %v1321 = vstv %s1320
        %v1322 = vmul.f32 %v1321, %v1299
        %v1323 = vmul.f32 %v1321, %v1300
        %1326 = vrot.lane.b32.xlu0 %v1322, 126
        %v1327 = vpop.permute.xlu0 %1326
        %1328 = vrot.lane.b32.xlu0 %v1323, 126
        %v1329 = vpop.permute.xlu0 %1328
        %v1332 = vadd.f32 %v1318, %v1327
        %v1333 = vadd.f32 %v1319, %v1329
        %s1334 = sld [smem:[#allocation3 + $0x54]]
        %v1335 = vld [vmem:[%s398 + $0x1] sm:$0xff]
        %v1336 = vld [vmem:[%s398 + $0x9] sm:$0xff]
        %v1337 = vstv %s1334
        %v1338 = vmul.f32 %v1337, %v1335
        %v1339 = vmul.f32 %v1337, %v1336
        %v1340 = vadd.f32 %v1332, %v1338
        %v1341 = vadd.f32 %v1333, %v1339
        %s1342 = sld [smem:[#allocation3 + $0x55]]
        %v1343 = vstv %s1342
        %v1344 = vmul.f32 %v1343, %v1335
        %v1345 = vmul.f32 %v1343, %v1336
        %1348 = vrot.lane.b32.xlu0 %v1344, 127
        %v1349 = vpop.permute.xlu0 %1348
        %1350 = vrot.lane.b32.xlu0 %v1345, 127
        %v1351 = vpop.permute.xlu0 %1350
        %v1354 = vadd.f32 %v1340, %v1349
        %v1355 = vadd.f32 %v1341, %v1351
        %s1356 = sld [smem:[#allocation3 + $0x56]]
        %v1357 = vstv %s1356
        %v1358 = vmul.f32 %v1357, %v1335
        %v1359 = vmul.f32 %v1357, %v1336
        %1362 = vrot.lane.b32.xlu0 %v1358, 126
        %v1363 = vpop.permute.xlu0 %1362
        %1364 = vrot.lane.b32.xlu0 %v1359, 126
        %v1365 = vpop.permute.xlu0 %1364
        %v1368 = vadd.f32 %v1354, %v1363
        %v1369 = vadd.f32 %v1355, %v1365
        %s1370 = sld [smem:[#allocation3 + $0x57]]
        %v1371 = vld [vmem:[%s398 + $0x2] sm:$0xff]
        %v1372 = vld [vmem:[%s398 + $0xa] sm:$0xff]
        %v1373 = vstv %s1370
        %v1374 = vmul.f32 %v1373, %v1371
        %v1375 = vmul.f32 %v1373, %v1372
        %v1376 = vadd.f32 %v1368, %v1374
        %v1377 = vadd.f32 %v1369, %v1375
        %s1378 = sld [smem:[#allocation3 + $0x58]]
        %v1379 = vstv %s1378
        %v1380 = vmul.f32 %v1379, %v1371
        %v1381 = vmul.f32 %v1379, %v1372
        %1384 = vrot.lane.b32.xlu0 %v1380, 127
        %v1385 = vpop.permute.xlu0 %1384
        %1386 = vrot.lane.b32.xlu0 %v1381, 127
        %v1387 = vpop.permute.xlu0 %1386
        %v1390 = vadd.f32 %v1376, %v1385
        %v1391 = vadd.f32 %v1377, %v1387
        %s1392 = sld [smem:[#allocation3 + $0x59]]
        %v1393 = vstv %s1392
        %v1394 = vmul.f32 %v1393, %v1371
        %v1395 = vmul.f32 %v1393, %v1372
        %1398 = vrot.lane.b32.xlu0 %v1394, 126
        %v1399 = vpop.permute.xlu0 %1398
        %1400 = vrot.lane.b32.xlu0 %v1395, 126
        %v1401 = vpop.permute.xlu0 %1400
        %v1404 = vadd.f32 %v1390, %v1399
        %v1405 = vadd.f32 %v1391, %v1401
        %s1406 = sld [smem:[#allocation3 + $0x5a]]
        %v1407 = vld [vmem:[%s507] sm:$0xff]
        %v1408 = vld [vmem:[%s507 + $0x8] sm:$0xff]
        %v1409 = vstv %s1406
        %v1410 = vmul.f32 %v1409, %v1407
        %v1411 = vmul.f32 %v1409, %v1408
        %v1412 = vadd.f32 %v1404, %v1410
        %v1413 = vadd.f32 %v1405, %v1411
        %s1414 = sld [smem:[#allocation3 + $0x5b]]
        %v1415 = vstv %s1414
        %v1416 = vmul.f32 %v1415, %v1407
        %v1417 = vmul.f32 %v1415, %v1408
        %1420 = vrot.lane.b32.xlu0 %v1416, 127
        %v1421 = vpop.permute.xlu0 %1420
        %1422 = vrot.lane.b32.xlu0 %v1417, 127
        %v1423 = vpop.permute.xlu0 %1422
        %v1426 = vadd.f32 %v1412, %v1421
        %v1427 = vadd.f32 %v1413, %v1423
        %s1428 = sld [smem:[#allocation3 + $0x5c]]
        %v1429 = vstv %s1428
        %v1430 = vmul.f32 %v1429, %v1407
        %v1431 = vmul.f32 %v1429, %v1408
        %1434 = vrot.lane.b32.xlu0 %v1430, 126
        %v1435 = vpop.permute.xlu0 %1434
        %1436 = vrot.lane.b32.xlu0 %v1431, 126
        %v1437 = vpop.permute.xlu0 %1436
        %v1440 = vadd.f32 %v1426, %v1435
        %v1441 = vadd.f32 %v1427, %v1437
        %s1442 = sld [smem:[#allocation3 + $0x5d]]
        %v1443 = vld [vmem:[%s507 + $0x1] sm:$0xff]
        %v1444 = vld [vmem:[%s507 + $0x9] sm:$0xff]
        %v1445 = vstv %s1442
        %v1446 = vmul.f32 %v1445, %v1443
        %v1447 = vmul.f32 %v1445, %v1444
        %v1448 = vadd.f32 %v1440, %v1446
        %v1449 = vadd.f32 %v1441, %v1447
        %s1450 = sld [smem:[#allocation3 + $0x5e]]
        %v1451 = vstv %s1450
        %v1452 = vmul.f32 %v1451, %v1443
        %v1453 = vmul.f32 %v1451, %v1444
        %1456 = vrot.lane.b32.xlu0 %v1452, 127
        %v1457 = vpop.permute.xlu0 %1456
        %1458 = vrot.lane.b32.xlu0 %v1453, 127
        %v1459 = vpop.permute.xlu0 %1458
        %v1462 = vadd.f32 %v1448, %v1457
        %v1463 = vadd.f32 %v1449, %v1459
        %s1464 = sld [smem:[#allocation3 + $0x5f]]
        %v1465 = vstv %s1464
        %v1466 = vmul.f32 %v1465, %v1443
        %v1467 = vmul.f32 %v1465, %v1444
        %1470 = vrot.lane.b32.xlu0 %v1466, 126
        %v1471 = vpop.permute.xlu0 %1470
        %1472 = vrot.lane.b32.xlu0 %v1467, 126
        %v1473 = vpop.permute.xlu0 %1472
        %v1476 = vadd.f32 %v1462, %v1471
        %v1477 = vadd.f32 %v1463, %v1473
        %s1478 = sld [smem:[#allocation3 + $0x60]]
        %v1479 = vld [vmem:[%s507 + $0x2] sm:$0xff]
        %v1480 = vld [vmem:[%s507 + $0xa] sm:$0xff]
        %v1481 = vstv %s1478
        %v1482 = vmul.f32 %v1481, %v1479
        %v1483 = vmul.f32 %v1481, %v1480
        %v1484 = vadd.f32 %v1476, %v1482
        %v1485 = vadd.f32 %v1477, %v1483
        %s1486 = sld [smem:[#allocation3 + $0x61]]
        %v1487 = vstv %s1486
        %v1488 = vmul.f32 %v1487, %v1479
        %v1489 = vmul.f32 %v1487, %v1480
        %1492 = vrot.lane.b32.xlu0 %v1488, 127
        %v1493 = vpop.permute.xlu0 %1492
        %1494 = vrot.lane.b32.xlu0 %v1489, 127
        %v1495 = vpop.permute.xlu0 %1494
        %v1498 = vadd.f32 %v1484, %v1493
        %v1499 = vadd.f32 %v1485, %v1495
        %s1500 = sld [smem:[#allocation3 + $0x62]]
        %v1501 = vstv %s1500
        %v1502 = vmul.f32 %v1501, %v1479
        %v1503 = vmul.f32 %v1501, %v1480
        %1506 = vrot.lane.b32.xlu0 %v1502, 126
        %v1507 = vpop.permute.xlu0 %1506
        %1508 = vrot.lane.b32.xlu0 %v1503, 126
        %v1509 = vpop.permute.xlu0 %1508
        %v1512 = vadd.f32 %v1498, %v1507
        %v1513 = vadd.f32 %v1499, %v1509
        %s1514 = sld [smem:[#allocation3 + $0x63]]
        %v1515 = vld [vmem:[%s616] sm:$0xff]
        %v1516 = vld [vmem:[%s616 + $0x8] sm:$0xff]
        %v1517 = vstv %s1514
        %v1518 = vmul.f32 %v1517, %v1515
        %v1519 = vmul.f32 %v1517, %v1516
        %v1520 = vadd.f32 %v1512, %v1518
        %v1521 = vadd.f32 %v1513, %v1519
        %s1522 = sld [smem:[#allocation3 + $0x64]]
        %v1523 = vstv %s1522
        %v1524 = vmul.f32 %v1523, %v1515
        %v1525 = vmul.f32 %v1523, %v1516
        %1528 = vrot.lane.b32.xlu0 %v1524, 127
        %v1529 = vpop.permute.xlu0 %1528
        %1530 = vrot.lane.b32.xlu0 %v1525, 127
        %v1531 = vpop.permute.xlu0 %1530
        %v1534 = vadd.f32 %v1520, %v1529
        %v1535 = vadd.f32 %v1521, %v1531
        %s1536 = sld [smem:[#allocation3 + $0x65]]
        %v1537 = vstv %s1536
        %v1538 = vmul.f32 %v1537, %v1515
        %v1539 = vmul.f32 %v1537, %v1516
        %1542 = vrot.lane.b32.xlu0 %v1538, 126
        %v1543 = vpop.permute.xlu0 %1542
        %1544 = vrot.lane.b32.xlu0 %v1539, 126
        %v1545 = vpop.permute.xlu0 %1544
        %v1548 = vadd.f32 %v1534, %v1543
        %v1549 = vadd.f32 %v1535, %v1545
        %s1550 = sld [smem:[#allocation3 + $0x66]]
        %v1551 = vld [vmem:[%s616 + $0x1] sm:$0xff]
        %v1552 = vld [vmem:[%s616 + $0x9] sm:$0xff]
        %v1553 = vstv %s1550
        %v1554 = vmul.f32 %v1553, %v1551
        %v1555 = vmul.f32 %v1553, %v1552
        %v1556 = vadd.f32 %v1548, %v1554
        %v1557 = vadd.f32 %v1549, %v1555
        %s1558 = sld [smem:[#allocation3 + $0x67]]
        %v1559 = vstv %s1558
        %v1560 = vmul.f32 %v1559, %v1551
        %v1561 = vmul.f32 %v1559, %v1552
        %1564 = vrot.lane.b32.xlu0 %v1560, 127
        %v1565 = vpop.permute.xlu0 %1564
        %1566 = vrot.lane.b32.xlu0 %v1561, 127
        %v1567 = vpop.permute.xlu0 %1566
        %v1570 = vadd.f32 %v1556, %v1565
        %v1571 = vadd.f32 %v1557, %v1567
        %s1572 = sld [smem:[#allocation3 + $0x68]]
        %v1573 = vstv %s1572
        %v1574 = vmul.f32 %v1573, %v1551
        %v1575 = vmul.f32 %v1573, %v1552
        %1578 = vrot.lane.b32.xlu0 %v1574, 126
        %v1579 = vpop.permute.xlu0 %1578
        %1580 = vrot.lane.b32.xlu0 %v1575, 126
        %v1581 = vpop.permute.xlu0 %1580
        %v1584 = vadd.f32 %v1570, %v1579
        %v1585 = vadd.f32 %v1571, %v1581
        %s1586 = sld [smem:[#allocation3 + $0x69]]
        %v1587 = vld [vmem:[%s616 + $0x2] sm:$0xff]
        %v1588 = vld [vmem:[%s616 + $0xa] sm:$0xff]
        %v1589 = vstv %s1586
        %v1590 = vmul.f32 %v1589, %v1587
        %v1591 = vmul.f32 %v1589, %v1588
        %v1592 = vadd.f32 %v1584, %v1590
        %v1593 = vadd.f32 %v1585, %v1591
        %s1594 = sld [smem:[#allocation3 + $0x6a]]
        %v1595 = vstv %s1594
        %v1596 = vmul.f32 %v1595, %v1587
        %v1597 = vmul.f32 %v1595, %v1588
        %1600 = vrot.lane.b32.xlu0 %v1596, 127
        %v1601 = vpop.permute.xlu0 %1600
        %1602 = vrot.lane.b32.xlu0 %v1597, 127
        %v1603 = vpop.permute.xlu0 %1602
        %v1606 = vadd.f32 %v1592, %v1601
        %v1607 = vadd.f32 %v1593, %v1603
        %s1608 = sld [smem:[#allocation3 + $0x6b]]
        %v1609 = vstv %s1608
        %v1610 = vmul.f32 %v1609, %v1587
        %v1611 = vmul.f32 %v1609, %v1588
        %1614 = vrot.lane.b32.xlu0 %v1610, 126
        %v1615 = vpop.permute.xlu0 %1614
        %1616 = vrot.lane.b32.xlu0 %v1611, 126
        %v1617 = vpop.permute.xlu0 %1616
        %v1620 = vadd.f32 %v1606, %v1615
        %v1621 = vadd.f32 %v1607, %v1617
        %s1622 = sld [smem:[#allocation6 + $0x2]]
        %v1623 = vstv %s1622
        %v1624 = vadd.f32 %v1620, %v1623
        %v1625 = vadd.f32 %v1621, %v1623
        %v1626 = vmax.f32 %v1624, 0.0
        %v1627 = vmax.f32 %v1625, 0.0
        %1630 = vrot.lane.b32.xlu0 %v1626, 1
        %v1631 = vpop.permute.xlu0 %1630
        %1632 = vrot.lane.b32.xlu0 %v1627, 1
        %v1633 = vpop.permute.xlu0 %1632
        %s1636 = scalar_lea.vmem [#allocation2], 48
        %1637 = vst.msk [vmem:[%s1636 + $0x1] sm:$0xff] %vm738, %v1631
        %1638 = vst.msk [vmem:[%s1636 + $0x9] sm:$0xff] %vm738, %v1633
        %s1639 = sld [smem:[#allocation3 + $0x6c]]
        %v1640 = vld [vmem:[%s274] sm:$0xff]
        %v1641 = vld [vmem:[%s274 + $0x8] sm:$0xff]
        %v1642 = vstv %s1639
        %v1643 = vmul.f32 %v1642, %v1640
        %v1644 = vmul.f32 %v1642, %v1641
        %v1645 = vadd.f32 %v1643, 0.0
        %v1646 = vadd.f32 %v1644, 0.0
        %s1647 = sld [smem:[#allocation3 + $0x6d]]
        %v1648 = vstv %s1647
        %v1649 = vmul.f32 %v1648, %v1640
        %v1650 = vmul.f32 %v1648, %v1641
        %1653 = vrot.lane.b32.xlu0 %v1649, 127
        %v1654 = vpop.permute.xlu0 %1653
        %1655 = vrot.lane.b32.xlu0 %v1650, 127
        %v1656 = vpop.permute.xlu0 %1655
        %v1659 = vadd.f32 %v1645, %v1654
        %v1660 = vadd.f32 %v1646, %v1656
        %s1661 = sld [smem:[#allocation3 + $0x6e]]
        %v1662 = vstv %s1661
        %v1663 = vmul.f32 %v1662, %v1640
        %v1664 = vmul.f32 %v1662, %v1641
        %1667 = vrot.lane.b32.xlu0 %v1663, 126
        %v1668 = vpop.permute.xlu0 %1667
        %1669 = vrot.lane.b32.xlu0 %v1664, 126
        %v1670 = vpop.permute.xlu0 %1669
        %v1673 = vadd.f32 %v1659, %v1668
        %v1674 = vadd.f32 %v1660, %v1670
        %s1675 = sld [smem:[#allocation3 + $0x6f]]
        %v1676 = vld [vmem:[%s274 + $0x1] sm:$0xff]
        %v1677 = vld [vmem:[%s274 + $0x9] sm:$0xff]
        %v1678 = vstv %s1675
        %v1679 = vmul.f32 %v1678, %v1676
        %v1680 = vmul.f32 %v1678, %v1677
        %v1681 = vadd.f32 %v1673, %v1679
        %v1682 = vadd.f32 %v1674, %v1680
        %s1683 = sld [smem:[#allocation3 + $0x70]]
        %v1684 = vstv %s1683
        %v1685 = vmul.f32 %v1684, %v1676
        %v1686 = vmul.f32 %v1684, %v1677
        %1689 = vrot.lane.b32.xlu0 %v1685, 127
        %v1690 = vpop.permute.xlu0 %1689
        %1691 = vrot.lane.b32.xlu0 %v1686, 127
        %v1692 = vpop.permute.xlu0 %1691
        %v1695 = vadd.f32 %v1681, %v1690
        %v1696 = vadd.f32 %v1682, %v1692
        %s1697 = sld [smem:[#allocation3 + $0x71]]
        %v1698 = vstv %s1697
        %v1699 = vmul.f32 %v1698, %v1676
        %v1700 = vmul.f32 %v1698, %v1677
        %1703 = vrot.lane.b32.xlu0 %v1699, 126
        %v1704 = vpop.permute.xlu0 %1703
        %1705 = vrot.lane.b32.xlu0 %v1700, 126
        %v1706 = vpop.permute.xlu0 %1705
        %v1709 = vadd.f32 %v1695, %v1704
        %v1710 = vadd.f32 %v1696, %v1706
        %s1711 = sld [smem:[#allocation3 + $0x72]]
        %v1712 = vld [vmem:[%s274 + $0x2] sm:$0xff]
        %v1713 = vld [vmem:[%s274 + $0xa] sm:$0xff]
        %v1714 = vstv %s1711
        %v1715 = vmul.f32 %v1714, %v1712
        %v1716 = vmul.f32 %v1714, %v1713
        %v1717 = vadd.f32 %v1709, %v1715
        %v1718 = vadd.f32 %v1710, %v1716
        %s1719 = sld [smem:[#allocation3 + $0x73]]
        %v1720 = vstv %s1719
        %v1721 = vmul.f32 %v1720, %v1712
        %v1722 = vmul.f32 %v1720, %v1713
        %1725 = vrot.lane.b32.xlu0 %v1721, 127
        %v1726 = vpop.permute.xlu0 %1725
        %1727 = vrot.lane.b32.xlu0 %v1722, 127
        %v1728 = vpop.permute.xlu0 %1727
        %v1731 = vadd.f32 %v1717, %v1726
        %v1732 = vadd.f32 %v1718, %v1728
        %s1733 = sld [smem:[#allocation3 + $0x74]]
        %v1734 = vstv %s1733
        %v1735 = vmul.f32 %v1734, %v1712
        %v1736 = vmul.f32 %v1734, %v1713
        %1739 = vrot.lane.b32.xlu0 %v1735, 126
        %v1740 = vpop.permute.xlu0 %1739
        %1741 = vrot.lane.b32.xlu0 %v1736, 126
        %v1742 = vpop.permute.xlu0 %1741
        %v1745 = vadd.f32 %v1731, %v1740
        %v1746 = vadd.f32 %v1732, %v1742
        %s1747 = sld [smem:[#allocation3 + $0x75]]
        %v1748 = vld [vmem:[%s398] sm:$0xff]
        %v1749 = vld [vmem:[%s398 + $0x8] sm:$0xff]
        %v1750 = vstv %s1747
        %v1751 = vmul.f32 %v1750, %v1748
        %v1752 = vmul.f32 %v1750, %v1749
        %v1753 = vadd.f32 %v1745, %v1751
        %v1754 = vadd.f32 %v1746, %v1752
        %s1755 = sld [smem:[#allocation3 + $0x76]]
        %v1756 = vstv %s1755
        %v1757 = vmul.f32 %v1756, %v1748
        %v1758 = vmul.f32 %v1756, %v1749
        %1761 = vrot.lane.b32.xlu0 %v1757, 127
        %v1762 = vpop.permute.xlu0 %1761
        %1763 = vrot.lane.b32.xlu0 %v1758, 127
        %v1764 = vpop.permute.xlu0 %1763
        %v1767 = vadd.f32 %v1753, %v1762
        %v1768 = vadd.f32 %v1754, %v1764
        %s1769 = sld [smem:[#allocation3 + $0x77]]
        %v1770 = vstv %s1769
        %v1771 = vmul.f32 %v1770, %v1748
        %v1772 = vmul.f32 %v1770, %v1749
        %1775 = vrot.lane.b32.xlu0 %v1771, 126
        %v1776 = vpop.permute.xlu0 %1775
        %1777 = vrot.lane.b32.xlu0 %v1772, 126
        %v1778 = vpop.permute.xlu0 %1777
        %v1781 = vadd.f32 %v1767, %v1776
        %v1782 = vadd.f32 %v1768, %v1778
        %s1783 = sld [smem:[#allocation3 + $0x78]]
        %v1784 = vld [vmem:[%s398 + $0x1] sm:$0xff]
        %v1785 = vld [vmem:[%s398 + $0x9] sm:$0xff]
        %v1786 = vstv %s1783
        %v1787 = vmul.f32 %v1786, %v1784
        %v1788 = vmul.f32 %v1786, %v1785
        %v1789 = vadd.f32 %v1781, %v1787
        %v1790 = vadd.f32 %v1782, %v1788
        %s1791 = sld [smem:[#allocation3 + $0x79]]
        %v1792 = vstv %s1791
        %v1793 = vmul.f32 %v1792, %v1784
        %v1794 = vmul.f32 %v1792, %v1785
        %1797 = vrot.lane.b32.xlu0 %v1793, 127
        %v1798 = vpop.permute.xlu0 %1797
        %1799 = vrot.lane.b32.xlu0 %v1794, 127
        %v1800 = vpop.permute.xlu0 %1799
        %v1803 = vadd.f32 %v1789, %v1798
        %v1804 = vadd.f32 %v1790, %v1800
        %s1805 = sld [smem:[#allocation3 + $0x7a]]
        %v1806 = vstv %s1805
        %v1807 = vmul.f32 %v1806, %v1784
        %v1808 = vmul.f32 %v1806, %v1785
        %1811 = vrot.lane.b32.xlu0 %v1807, 126
        %v1812 = vpop.permute.xlu0 %1811
        %1813 = vrot.lane.b32.xlu0 %v1808, 126
        %v1814 = vpop.permute.xlu0 %1813
        %v1817 = vadd.f32 %v1803, %v1812
        %v1818 = vadd.f32 %v1804, %v1814
        %s1819 = sld [smem:[#allocation3 + $0x7b]]
        %v1820 = vld [vmem:[%s398 + $0x2] sm:$0xff]
        %v1821 = vld [vmem:[%s398 + $0xa] sm:$0xff]
        %v1822 = vstv %s1819
        %v1823 = vmul.f32 %v1822, %v1820
        %v1824 = vmul.f32 %v1822, %v1821
        %v1825 = vadd.f32 %v1817, %v1823
        %v1826 = vadd.f32 %v1818, %v1824
        %s1827 = sld [smem:[#allocation3 + $0x7c]]
        %v1828 = vstv %s1827
        %v1829 = vmul.f32 %v1828, %v1820
        %v1830 = vmul.f32 %v1828, %v1821
        %1833 = vrot.lane.b32.xlu0 %v1829, 127
        %v1834 = vpop.permute.xlu0 %1833
        %1835 = vrot.lane.b32.xlu0 %v1830, 127
        %v1836 = vpop.permute.xlu0 %1835
        %v1839 = vadd.f32 %v1825, %v1834
        %v1840 = vadd.f32 %v1826, %v1836
        %s1841 = sld [smem:[#allocation3 + $0x7d]]
        %v1842 = vstv %s1841
        %v1843 = vmul.f32 %v1842, %v1820
        %v1844 = vmul.f32 %v1842, %v1821
        %1847 = vrot.lane.b32.xlu0 %v1843, 126
        %v1848 = vpop.permute.xlu0 %1847
        %1849 = vrot.lane.b32.xlu0 %v1844, 126
        %v1850 = vpop.permute.xlu0 %1849
        %v1853 = vadd.f32 %v1839, %v1848
        %v1854 = vadd.f32 %v1840, %v1850
        %s1855 = sld [smem:[#allocation3 + $0x7e]]
        %v1856 = vld [vmem:[%s507] sm:$0xff]
        %v1857 = vld [vmem:[%s507 + $0x8] sm:$0xff]
        %v1858 = vstv %s1855
        %v1859 = vmul.f32 %v1858, %v1856
        %v1860 = vmul.f32 %v1858, %v1857
        %v1861 = vadd.f32 %v1853, %v1859
        %v1862 = vadd.f32 %v1854, %v1860
        %s1863 = sld [smem:[#allocation3 + $0x7f]]
        %v1864 = vstv %s1863
        %v1865 = vmul.f32 %v1864, %v1856
        %v1866 = vmul.f32 %v1864, %v1857
        %1869 = vrot.lane.b32.xlu0 %v1865, 127
        %v1870 = vpop.permute.xlu0 %1869
        %1871 = vrot.lane.b32.xlu0 %v1866, 127
        %v1872 = vpop.permute.xlu0 %1871
        %v1875 = vadd.f32 %v1861, %v1870
        %v1876 = vadd.f32 %v1862, %v1872
        %s1877 = sld [smem:[#allocation3 + $0x80]]
        %v1878 = vstv %s1877
        %v1879 = vmul.f32 %v1878, %v1856
        %v1880 = vmul.f32 %v1878, %v1857
        %1883 = vrot.lane.b32.xlu0 %v1879, 126
        %v1884 = vpop.permute.xlu0 %1883
        %1885 = vrot.lane.b32.xlu0 %v1880, 126
        %v1886 = vpop.permute.xlu0 %1885
        %v1889 = vadd.f32 %v1875, %v1884
        %v1890 = vadd.f32 %v1876, %v1886
        %s1891 = sld [smem:[#allocation3 + $0x81]]
        %v1892 = vld [vmem:[%s507 + $0x1] sm:$0xff]
        %v1893 = vld [vmem:[%s507 + $0x9] sm:$0xff]
        %v1894 = vstv %s1891
        %v1895 = vmul.f32 %v1894, %v1892
        %v1896 = vmul.f32 %v1894, %v1893
        %v1897 = vadd.f32 %v1889, %v1895
        %v1898 = vadd.f32 %v1890, %v1896
        %s1899 = sld [smem:[#allocation3 + $0x82]]
        %v1900 = vstv %s1899
        %v1901 = vmul.f32 %v1900, %v1892
        %v1902 = vmul.f32 %v1900, %v1893
        %1905 = vrot.lane.b32.xlu0 %v1901, 127
        %v1906 = vpop.permute.xlu0 %1905
        %1907 = vrot.lane.b32.xlu0 %v1902, 127
        %v1908 = vpop.permute.xlu0 %1907
        %v1911 = vadd.f32 %v1897, %v1906
        %v1912 = vadd.f32 %v1898, %v1908
        %s1913 = sld [smem:[#allocation3 + $0x83]]
        %v1914 = vstv %s1913
        %v1915 = vmul.f32 %v1914, %v1892
        %v1916 = vmul.f32 %v1914, %v1893
        %1919 = vrot.lane.b32.xlu0 %v1915, 126
        %v1920 = vpop.permute.xlu0 %1919
        %1921 = vrot.lane.b32.xlu0 %v1916, 126
        %v1922 = vpop.permute.xlu0 %1921
        %v1925 = vadd.f32 %v1911, %v1920
        %v1926 = vadd.f32 %v1912, %v1922
        %s1927 = sld [smem:[#allocation3 + $0x84]]
        %v1928 = vld [vmem:[%s507 + $0x2] sm:$0xff]
        %v1929 = vld [vmem:[%s507 + $0xa] sm:$0xff]
        %v1930 = vstv %s1927
        %v1931 = vmul.f32 %v1930, %v1928
        %v1932 = vmul.f32 %v1930, %v1929
        %v1933 = vadd.f32 %v1925, %v1931
        %v1934 = vadd.f32 %v1926, %v1932
        %s1935 = sld [smem:[#allocation3 + $0x85]]
        %v1936 = vstv %s1935
        %v1937 = vmul.f32 %v1936, %v1928
        %v1938 = vmul.f32 %v1936, %v1929
        %1941 = vrot.lane.b32.xlu0 %v1937, 127
        %v1942 = vpop.permute.xlu0 %1941
        %1943 = vrot.lane.b32.xlu0 %v1938, 127
        %v1944 = vpop.permute.xlu0 %1943
        %v1947 = vadd.f32 %v1933, %v1942
        %v1948 = vadd.f32 %v1934, %v1944
        %s1949 = sld [smem:[#allocation3 + $0x86]]
        %v1950 = vstv %s1949
        %v1951 = vmul.f32 %v1950, %v1928
        %v1952 = vmul.f32 %v1950, %v1929
        %1955 = vrot.lane.b32.xlu0 %v1951, 126
        %v1956 = vpop.permute.xlu0 %1955
        %1957 = vrot.lane.b32.xlu0 %v1952, 126
        %v1958 = vpop.permute.xlu0 %1957
        %v1961 = vadd.f32 %v1947, %v1956
        %v1962 = vadd.f32 %v1948, %v1958
        %s1963 = sld [smem:[#allocation3 + $0x87]]
        %v1964 = vld [vmem:[%s616] sm:$0xff]
        %v1965 = vld [vmem:[%s616 + $0x8] sm:$0xff]
        %v1966 = vstv %s1963
        %v1967 = vmul.f32 %v1966, %v1964
        %v1968 = vmul.f32 %v1966, %v1965
        %v1969 = vadd.f32 %v1961, %v1967
        %v1970 = vadd.f32 %v1962, %v1968
        %s1971 = sld [smem:[#allocation3 + $0x88]]
        %v1972 = vstv %s1971
        %v1973 = vmul.f32 %v1972, %v1964
        %v1974 = vmul.f32 %v1972, %v1965
        %1977 = vrot.lane.b32.xlu0 %v1973, 127
        %v1978 = vpop.permute.xlu0 %1977
        %1979 = vrot.lane.b32.xlu0 %v1974, 127
        %v1980 = vpop.permute.xlu0 %1979
        %v1983 = vadd.f32 %v1969, %v1978
        %v1984 = vadd.f32 %v1970, %v1980
        %s1985 = sld [smem:[#allocation3 + $0x89]]
        %v1986 = vstv %s1985
        %v1987 = vmul.f32 %v1986, %v1964
        %v1988 = vmul.f32 %v1986, %v1965
        %1991 = vrot.lane.b32.xlu0 %v1987, 126
        %v1992 = vpop.permute.xlu0 %1991
        %1993 = vrot.lane.b32.xlu0 %v1988, 126
        %v1994 = vpop.permute.xlu0 %1993
        %v1997 = vadd.f32 %v1983, %v1992
        %v1998 = vadd.f32 %v1984, %v1994
        %s1999 = sld [smem:[#allocation3 + $0x8a]]
        %v2000 = vld [vmem:[%s616 + $0x1] sm:$0xff]
        %v2001 = vld [vmem:[%s616 + $0x9] sm:$0xff]
        %v2002 = vstv %s1999
        %v2003 = vmul.f32 %v2002, %v2000
        %v2004 = vmul.f32 %v2002, %v2001
        %v2005 = vadd.f32 %v1997, %v2003
        %v2006 = vadd.f32 %v1998, %v2004
        %s2007 = sld [smem:[#allocation3 + $0x8b]]
        %v2008 = vstv %s2007
        %v2009 = vmul.f32 %v2008, %v2000
        %v2010 = vmul.f32 %v2008, %v2001
        %2013 = vrot.lane.b32.xlu0 %v2009, 127
        %v2014 = vpop.permute.xlu0 %2013
        %2015 = vrot.lane.b32.xlu0 %v2010, 127
        %v2016 = vpop.permute.xlu0 %2015
        %v2019 = vadd.f32 %v2005, %v2014
        %v2020 = vadd.f32 %v2006, %v2016
        %s2021 = sld [smem:[#allocation3 + $0x8c]]
        %v2022 = vstv %s2021
        %v2023 = vmul.f32 %v2022, %v2000
        %v2024 = vmul.f32 %v2022, %v2001
        %2027 = vrot.lane.b32.xlu0 %v2023, 126
        %v2028 = vpop.permute.xlu0 %2027
        %2029 = vrot.lane.b32.xlu0 %v2024, 126
        %v2030 = vpop.permute.xlu0 %2029
        %v2033 = vadd.f32 %v2019, %v2028
        %v2034 = vadd.f32 %v2020, %v2030
        %s2035 = sld [smem:[#allocation3 + $0x8d]]
        %v2036 = vld [vmem:[%s616 + $0x2] sm:$0xff]
        %v2037 = vld [vmem:[%s616 + $0xa] sm:$0xff]
        %v2038 = vstv %s2035
        %v2039 = vmul.f32 %v2038, %v2036
        %v2040 = vmul.f32 %v2038, %v2037
        %v2041 = vadd.f32 %v2033, %v2039
        %v2042 = vadd.f32 %v2034, %v2040
        %s2043 = sld [smem:[#allocation3 + $0x8e]]
        %v2044 = vstv %s2043
        %v2045 = vmul.f32 %v2044, %v2036
        %v2046 = vmul.f32 %v2044, %v2037
        %2049 = vrot.lane.b32.xlu0 %v2045, 127
        %v2050 = vpop.permute.xlu0 %2049
        %2051 = vrot.lane.b32.xlu0 %v2046, 127
        %v2052 = vpop.permute.xlu0 %2051
        %v2055 = vadd.f32 %v2041, %v2050
        %v2056 = vadd.f32 %v2042, %v2052
        %s2057 = sld [smem:[#allocation3 + $0x8f]]
        %v2058 = vstv %s2057
        %v2059 = vmul.f32 %v2058, %v2036
        %v2060 = vmul.f32 %v2058, %v2037
        %2063 = vrot.lane.b32.xlu0 %v2059, 126
        %v2064 = vpop.permute.xlu0 %2063
        %2065 = vrot.lane.b32.xlu0 %v2060, 126
        %v2066 = vpop.permute.xlu0 %2065
        %v2069 = vadd.f32 %v2055, %v2064
        %v2070 = vadd.f32 %v2056, %v2066
        %s2071 = sld [smem:[#allocation6 + $0x3]]
        %v2072 = vstv %s2071
        %v2073 = vadd.f32 %v2069, %v2072
        %v2074 = vadd.f32 %v2070, %v2072
        %v2075 = vmax.f32 %v2073, 0.0
        %v2076 = vmax.f32 %v2074, 0.0
        %2079 = vrot.lane.b32.xlu0 %v2075, 1
        %v2080 = vpop.permute.xlu0 %2079
        %2081 = vrot.lane.b32.xlu0 %v2076, 1
        %v2082 = vpop.permute.xlu0 %2081
        %s2085 = scalar_lea.vmem [#allocation2], 72
        %2086 = vst.msk [vmem:[%s2085 + $0x1] sm:$0xff] %vm738, %v2080
        %2087 = vst.msk [vmem:[%s2085 + $0x9] sm:$0xff] %vm738, %v2082
        %s2088 = sld [smem:[#allocation8]]
        %v2089 = vld [vmem:[#allocation2] sm:$0xff]
        %v2090 = vld [vmem:[#allocation2 + $0x8] sm:$0xff]
        %v2091 = vstv %s2088
        %v2092 = vmul.f32 %v2091, %v2089
        %v2093 = vmul.f32 %v2091, %v2090
        %v2094 = vadd.f32 %v2092, 0.0
        %v2095 = vadd.f32 %v2093, 0.0
        %s2096 = sld [smem:[#allocation8 + $0x1]]
        %v2097 = vstv %s2096
        %v2098 = vmul.f32 %v2097, %v2089
        %v2099 = vmul.f32 %v2097, %v2090
        %2102 = vrot.lane.b32.xlu0 %v2098, 127
        %v2103 = vpop.permute.xlu0 %2102
        %2104 = vrot.lane.b32.xlu0 %v2099, 127
        %v2105 = vpop.permute.xlu0 %2104
        %v2108 = vadd.f32 %v2094, %v2103
        %v2109 = vadd.f32 %v2095, %v2105
        %s2110 = sld [smem:[#allocation8 + $0x2]]
        %v2111 = vstv %s2110
        %v2112 = vmul.f32 %v2111, %v2089
        %v2113 = vmul.f32 %v2111, %v2090
        %2116 = vrot.lane.b32.xlu0 %v2112, 126
        %v2117 = vpop.permute.xlu0 %2116
        %2118 = vrot.lane.b32.xlu0 %v2113, 126
        %v2119 = vpop.permute.xlu0 %2118
        %v2122 = vadd.f32 %v2108, %v2117
        %v2123 = vadd.f32 %v2109, %v2119
        %s2124 = sld [smem:[#allocation8 + $0x3]]
        %v2125 = vld [vmem:[#allocation2 + $0x1] sm:$0xff]
        %v2126 = vld [vmem:[#allocation2 + $0x9] sm:$0xff]
        %v2127 = vstv %s2124
        %v2128 = vmul.f32 %v2127, %v2125
        %v2129 = vmul.f32 %v2127, %v2126
        %v2130 = vadd.f32 %v2122, %v2128
        %v2131 = vadd.f32 %v2123, %v2129
        %s2132 = sld [smem:[#allocation8 + $0x4]]
        %v2133 = vstv %s2132
        %v2134 = vmul.f32 %v2133, %v2125
        %v2135 = vmul.f32 %v2133, %v2126
        %2138 = vrot.lane.b32.xlu0 %v2134, 127
        %v2139 = vpop.permute.xlu0 %2138
        %2140 = vrot.lane.b32.xlu0 %v2135, 127
        %v2141 = vpop.permute.xlu0 %2140
        %v2144 = vadd.f32 %v2130, %v2139
        %v2145 = vadd.f32 %v2131, %v2141
        %s2146 = sld [smem:[#allocation8 + $0x5]]
        %v2147 = vstv %s2146
        %v2148 = vmul.f32 %v2147, %v2125
        %v2149 = vmul.f32 %v2147, %v2126
        %2152 = vrot.lane.b32.xlu0 %v2148, 126
        %v2153 = vpop.permute.xlu0 %2152
        %2154 = vrot.lane.b32.xlu0 %v2149, 126
        %v2155 = vpop.permute.xlu0 %2154
        %v2158 = vadd.f32 %v2144, %v2153
        %v2159 = vadd.f32 %v2145, %v2155
        %s2160 = sld [smem:[#allocation8 + $0x6]]
        %v2161 = vld [vmem:[#allocation2 + $0x2] sm:$0xff]
        %v2162 = vld [vmem:[#allocation2 + $0xa] sm:$0xff]
        %v2163 = vstv %s2160
        %v2164 = vmul.f32 %v2163, %v2161
        %v2165 = vmul.f32 %v2163, %v2162
        %v2166 = vadd.f32 %v2158, %v2164
        %v2167 = vadd.f32 %v2159, %v2165
        %s2168 = sld [smem:[#allocation8 + $0x7]]
        %v2169 = vstv %s2168
        %v2170 = vmul.f32 %v2169, %v2161
        %v2171 = vmul.f32 %v2169, %v2162
        %2174 = vrot.lane.b32.xlu0 %v2170, 127
        %v2175 = vpop.permute.xlu0 %2174
        %2176 = vrot.lane.b32.xlu0 %v2171, 127
        %v2177 = vpop.permute.xlu0 %2176
        %v2180 = vadd.f32 %v2166, %v2175
        %v2181 = vadd.f32 %v2167, %v2177
        %s2182 = sld [smem:[#allocation8 + $0x8]]
        %v2183 = vstv %s2182
        %v2184 = vmul.f32 %v2183, %v2161
        %v2185 = vmul.f32 %v2183, %v2162
        %2188 = vrot.lane.b32.xlu0 %v2184, 126
        %v2189 = vpop.permute.xlu0 %2188
        %2190 = vrot.lane.b32.xlu0 %v2185, 126
        %v2191 = vpop.permute.xlu0 %2190
        %v2194 = vadd.f32 %v2180, %v2189
        %v2195 = vadd.f32 %v2181, %v2191
        %s2196 = sld [smem:[#allocation8 + $0x9]]
        %v2197 = vld [vmem:[%s1187] sm:$0xff]
        %v2198 = vld [vmem:[%s1187 + $0x8] sm:$0xff]
        %v2199 = vstv %s2196
        %v2200 = vmul.f32 %v2199, %v2197
        %v2201 = vmul.f32 %v2199, %v2198
        %v2202 = vadd.f32 %v2194, %v2200
        %v2203 = vadd.f32 %v2195, %v2201
        %s2204 = sld [smem:[#allocation8 + $0xa]]
        %v2205 = vstv %s2204
        %v2206 = vmul.f32 %v2205, %v2197
        %v2207 = vmul.f32 %v2205, %v2198
        %2210 = vrot.lane.b32.xlu0 %v2206, 127
        %v2211 = vpop.permute.xlu0 %2210
        %2212 = vrot.lane.b32.xlu0 %v2207, 127
        %v2213 = vpop.permute.xlu0 %2212
        %v2216 = vadd.f32 %v2202, %v2211
        %v2217 = vadd.f32 %v2203, %v2213
        %s2218 = sld [smem:[#allocation8 + $0xb]]
        %v2219 = vstv %s2218
        %v2220 = vmul.f32 %v2219, %v2197
        %v2221 = vmul.f32 %v2219, %v2198
        %2224 = vrot.lane.b32.xlu0 %v2220, 126
        %v2225 = vpop.permute.xlu0 %2224
        %2226 = vrot.lane.b32.xlu0 %v2221, 126
        %v2227 = vpop.permute.xlu0 %2226
        %v2230 = vadd.f32 %v2216, %v2225
        %v2231 = vadd.f32 %v2217, %v2227
        %s2232 = sld [smem:[#allocation8 + $0xc]]
        %v2233 = vld [vmem:[%s1187 + $0x1] sm:$0xff]
        %v2234 = vld [vmem:[%s1187 + $0x9] sm:$0xff]
        %v2235 = vstv %s2232
        %v2236 = vmul.f32 %v2235, %v2233
        %v2237 = vmul.f32 %v2235, %v2234
        %v2238 = vadd.f32 %v2230, %v2236
        %v2239 = vadd.f32 %v2231, %v2237
        %s2240 = sld [smem:[#allocation8 + $0xd]]
        %v2241 = vstv %s2240
        %v2242 = vmul.f32 %v2241, %v2233
        %v2243 = vmul.f32 %v2241, %v2234
        %2246 = vrot.lane.b32.xlu0 %v2242, 127
        %v2247 = vpop.permute.xlu0 %2246
        %2248 = vrot.lane.b32.xlu0 %v2243, 127
        %v2249 = vpop.permute.xlu0 %2248
        %v2252 = vadd.f32 %v2238, %v2247
        %v2253 = vadd.f32 %v2239, %v2249
        %s2254 = sld [smem:[#allocation8 + $0xe]]
        %v2255 = vstv %s2254
        %v2256 = vmul.f32 %v2255, %v2233
        %v2257 = vmul.f32 %v2255, %v2234
        %2260 = vrot.lane.b32.xlu0 %v2256, 126
        %v2261 = vpop.permute.xlu0 %2260
        %2262 = vrot.lane.b32.xlu0 %v2257, 126
        %v2263 = vpop.permute.xlu0 %2262
        %v2266 = vadd.f32 %v2252, %v2261
        %v2267 = vadd.f32 %v2253, %v2263
        %s2268 = sld [smem:[#allocation8 + $0xf]]
        %v2269 = vld [vmem:[%s1187 + $0x2] sm:$0xff]
        %v2270 = vld [vmem:[%s1187 + $0xa] sm:$0xff]
        %v2271 = vstv %s2268
        %v2272 = vmul.f32 %v2271, %v2269
        %v2273 = vmul.f32 %v2271, %v2270
        %v2274 = vadd.f32 %v2266, %v2272
        %v2275 = vadd.f32 %v2267, %v2273
        %s2276 = sld [smem:[#allocation8 + $0x10]]
        %v2277 = vstv %s2276
        %v2278 = vmul.f32 %v2277, %v2269
        %v2279 = vmul.f32 %v2277, %v2270
        %2282 = vrot.lane.b32.xlu0 %v2278, 127
        %v2283 = vpop.permute.xlu0 %2282
        %2284 = vrot.lane.b32.xlu0 %v2279, 127
        %v2285 = vpop.permute.xlu0 %2284
        %v2288 = vadd.f32 %v2274, %v2283
        %v2289 = vadd.f32 %v2275, %v2285
        %s2290 = sld [smem:[#allocation8 + $0x11]]
        %v2291 = vstv %s2290
        %v2292 = vmul.f32 %v2291, %v2269
        %v2293 = vmul.f32 %v2291, %v2270
        %2296 = vrot.lane.b32.xlu0 %v2292, 126
        %v2297 = vpop.permute.xlu0 %2296
        %2298 = vrot.lane.b32.xlu0 %v2293, 126
        %v2299 = vpop.permute.xlu0 %2298
        %v2302 = vadd.f32 %v2288, %v2297
        %v2303 = vadd.f32 %v2289, %v2299
        %s2304 = sld [smem:[#allocation8 + $0x12]]
        %v2305 = vld [vmem:[%s1636] sm:$0xff]
        %v2306 = vld [vmem:[%s1636 + $0x8] sm:$0xff]
        %v2307 = vstv %s2304
        %v2308 = vmul.f32 %v2307, %v2305
        %v2309 = vmul.f32 %v2307, %v2306
        %v2310 = vadd.f32 %v2302, %v2308
        %v2311 = vadd.f32 %v2303, %v2309
        %s2312 = sld [smem:[#allocation8 + $0x13]]
        %v2313 = vstv %s2312
        %v2314 = vmul.f32 %v2313, %v2305
        %v2315 = vmul.f32 %v2313, %v2306
        %2318 = vrot.lane.b32.xlu0 %v2314, 127
        %v2319 = vpop.permute.xlu0 %2318
        %2320 = vrot.lane.b32.xlu0 %v2315, 127
        %v2321 = vpop.permute.xlu0 %2320
        %v2324 = vadd.f32 %v2310, %v2319
        %v2325 = vadd.f32 %v2311, %v2321
        %s2326 = sld [smem:[#allocation8 + $0x14]]
        %v2327 = vstv %s2326
        %v2328 = vmul.f32 %v2327, %v2305
        %v2329 = vmul.f32 %v2327, %v2306
        %2332 = vrot.lane.b32.xlu0 %v2328, 126
        %v2333 = vpop.permute.xlu0 %2332
        %2334 = vrot.lane.b32.xlu0 %v2329, 126
        %v2335 = vpop.permute.xlu0 %2334
        %v2338 = vadd.f32 %v2324, %v2333
        %v2339 = vadd.f32 %v2325, %v2335
        %s2340 = sld [smem:[#allocation8 + $0x15]]
        %v2341 = vld [vmem:[%s1636 + $0x1] sm:$0xff]
        %v2342 = vld [vmem:[%s1636 + $0x9] sm:$0xff]
        %v2343 = vstv %s2340
        %v2344 = vmul.f32 %v2343, %v2341
        %v2345 = vmul.f32 %v2343, %v2342
        %v2346 = vadd.f32 %v2338, %v2344
        %v2347 = vadd.f32 %v2339, %v2345
        %s2348 = sld [smem:[#allocation8 + $0x16]]
        %v2349 = vstv %s2348
        %v2350 = vmul.f32 %v2349, %v2341
        %v2351 = vmul.f32 %v2349, %v2342
        %2354 = vrot.lane.b32.xlu0 %v2350, 127
        %v2355 = vpop.permute.xlu0 %2354
        %2356 = vrot.lane.b32.xlu0 %v2351, 127
        %v2357 = vpop.permute.xlu0 %2356
        %v2360 = vadd.f32 %v2346, %v2355
        %v2361 = vadd.f32 %v2347, %v2357
        %s2362 = sld [smem:[#allocation8 + $0x17]]
        %v2363 = vstv %s2362
        %v2364 = vmul.f32 %v2363, %v2341
        %v2365 = vmul.f32 %v2363, %v2342
        %2368 = vrot.lane.b32.xlu0 %v2364, 126
        %v2369 = vpop.permute.xlu0 %2368
        %2370 = vrot.lane.b32.xlu0 %v2365, 126
        %v2371 = vpop.permute.xlu0 %2370
        %v2374 = vadd.f32 %v2360, %v2369
        %v2375 = vadd.f32 %v2361, %v2371
        %s2376 = sld [smem:[#allocation8 + $0x18]]
        %v2377 = vld [vmem:[%s1636 + $0x2] sm:$0xff]
        %v2378 = vld [vmem:[%s1636 + $0xa] sm:$0xff]
        %v2379 = vstv %s2376
        %v2380 = vmul.f32 %v2379, %v2377
        %v2381 = vmul.f32 %v2379, %v2378
        %v2382 = vadd.f32 %v2374, %v2380
        %v2383 = vadd.f32 %v2375, %v2381
        %s2384 = sld [smem:[#allocation8 + $0x19]]
        %v2385 = vstv %s2384
        %v2386 = vmul.f32 %v2385, %v2377
        %v2387 = vmul.f32 %v2385, %v2378
        %2390 = vrot.lane.b32.xlu0 %v2386, 127
        %v2391 = vpop.permute.xlu0 %2390
        %2392 = vrot.lane.b32.xlu0 %v2387, 127
        %v2393 = vpop.permute.xlu0 %2392
        %v2396 = vadd.f32 %v2382, %v2391
        %v2397 = vadd.f32 %v2383, %v2393
        %s2398 = sld [smem:[#allocation8 + $0x1a]]
        %v2399 = vstv %s2398
        %v2400 = vmul.f32 %v2399, %v2377
        %v2401 = vmul.f32 %v2399, %v2378
        %2404 = vrot.lane.b32.xlu0 %v2400, 126
        %v2405 = vpop.permute.xlu0 %2404
        %2406 = vrot.lane.b32.xlu0 %v2401, 126
        %v2407 = vpop.permute.xlu0 %2406
        %v2410 = vadd.f32 %v2396, %v2405
        %v2411 = vadd.f32 %v2397, %v2407
        %s2412 = sld [smem:[#allocation8 + $0x1b]]
        %v2413 = vld [vmem:[%s2085] sm:$0xff]
        %v2414 = vld [vmem:[%s2085 + $0x8] sm:$0xff]
        %v2415 = vstv %s2412
        %v2416 = vmul.f32 %v2415, %v2413
        %v2417 = vmul.f32 %v2415, %v2414
        %v2418 = vadd.f32 %v2410, %v2416
        %v2419 = vadd.f32 %v2411, %v2417
        %s2420 = sld [smem:[#allocation8 + $0x1c]]
        %v2421 = vstv %s2420
        %v2422 = vmul.f32 %v2421, %v2413
        %v2423 = vmul.f32 %v2421, %v2414
        %2426 = vrot.lane.b32.xlu0 %v2422, 127
        %v2427 = vpop.permute.xlu0 %2426
        %2428 = vrot.lane.b32.xlu0 %v2423, 127
        %v2429 = vpop.permute.xlu0 %2428
        %v2432 = vadd.f32 %v2418, %v2427
        %v2433 = vadd.f32 %v2419, %v2429
        %s2434 = sld [smem:[#allocation8 + $0x1d]]
        %v2435 = vstv %s2434
        %v2436 = vmul.f32 %v2435, %v2413
        %v2437 = vmul.f32 %v2435, %v2414
        %2440 = vrot.lane.b32.xlu0 %v2436, 126
        %v2441 = vpop.permute.xlu0 %2440
        %2442 = vrot.lane.b32.xlu0 %v2437, 126
        %v2443 = vpop.permute.xlu0 %2442
        %v2446 = vadd.f32 %v2432, %v2441
        %v2447 = vadd.f32 %v2433, %v2443
        %s2448 = sld [smem:[#allocation8 + $0x1e]]
        %v2449 = vld [vmem:[%s2085 + $0x1] sm:$0xff]
        %v2450 = vld [vmem:[%s2085 + $0x9] sm:$0xff]
        %v2451 = vstv %s2448
        %v2452 = vmul.f32 %v2451, %v2449
        %v2453 = vmul.f32 %v2451, %v2450
        %v2454 = vadd.f32 %v2446, %v2452
        %v2455 = vadd.f32 %v2447, %v2453
        %s2456 = sld [smem:[#allocation8 + $0x1f]]
        %v2457 = vstv %s2456
        %v2458 = vmul.f32 %v2457, %v2449
        %v2459 = vmul.f32 %v2457, %v2450
        %2462 = vrot.lane.b32.xlu0 %v2458, 127
        %v2463 = vpop.permute.xlu0 %2462
        %2464 = vrot.lane.b32.xlu0 %v2459, 127
        %v2465 = vpop.permute.xlu0 %2464
        %v2468 = vadd.f32 %v2454, %v2463
        %v2469 = vadd.f32 %v2455, %v2465
        %s2470 = sld [smem:[#allocation8 + $0x20]]
        %v2471 = vstv %s2470
        %v2472 = vmul.f32 %v2471, %v2449
        %v2473 = vmul.f32 %v2471, %v2450
        %2476 = vrot.lane.b32.xlu0 %v2472, 126
        %v2477 = vpop.permute.xlu0 %2476
        %2478 = vrot.lane.b32.xlu0 %v2473, 126
        %v2479 = vpop.permute.xlu0 %2478
        %v2482 = vadd.f32 %v2468, %v2477
        %v2483 = vadd.f32 %v2469, %v2479
        %s2484 = sld [smem:[#allocation8 + $0x21]]
        %v2485 = vld [vmem:[%s2085 + $0x2] sm:$0xff]
        %v2486 = vld [vmem:[%s2085 + $0xa] sm:$0xff]
        %v2487 = vstv %s2484
        %v2488 = vmul.f32 %v2487, %v2485
        %v2489 = vmul.f32 %v2487, %v2486
        %v2490 = vadd.f32 %v2482, %v2488
        %v2491 = vadd.f32 %v2483, %v2489
        %s2492 = sld [smem:[#allocation8 + $0x22]]
        %v2493 = vstv %s2492
        %v2494 = vmul.f32 %v2493, %v2485
        %v2495 = vmul.f32 %v2493, %v2486
        %2498 = vrot.lane.b32.xlu0 %v2494, 127
        %v2499 = vpop.permute.xlu0 %2498
        %2500 = vrot.lane.b32.xlu0 %v2495, 127
        %v2501 = vpop.permute.xlu0 %2500
        %v2504 = vadd.f32 %v2490, %v2499
        %v2505 = vadd.f32 %v2491, %v2501
        %s2506 = sld [smem:[#allocation8 + $0x23]]
        %v2507 = vstv %s2506
        %v2508 = vmul.f32 %v2507, %v2485
        %v2509 = vmul.f32 %v2507, %v2486
        %2512 = vrot.lane.b32.xlu0 %v2508, 126
        %v2513 = vpop.permute.xlu0 %2512
        %2514 = vrot.lane.b32.xlu0 %v2509, 126
        %v2515 = vpop.permute.xlu0 %2514
        %v2518 = vadd.f32 %v2504, %v2513
        %v2519 = vadd.f32 %v2505, %v2515
        %s2520 = sld [smem:[#allocation9]]
        %v2521 = vstv %s2520
        %v2522 = vadd.f32 %v2518, %v2521
        %v2523 = vadd.f32 %v2519, %v2521
        %v2524 = vmax.f32 %v2522, 0.0
        %v2525 = vmax.f32 %v2523, 0.0
        %v2526 = vld [vmem:[%s274 + $0x1] sm:$0xff]
        %v2527 = vld [vmem:[%s274 + $0x9] sm:$0xff]
        %2530 = vrot.lane.b32.xlu0 %v2526, 127
        %v2531 = vpop.permute.xlu0 %2530
        %2532 = vrot.lane.b32.xlu0 %v2527, 127
        %v2533 = vpop.permute.xlu0 %2532
        %v2536 = vadd.f32 %v2524, %v2531
        %v2537 = vadd.f32 %v2525, %v2533
        %vm2538 = vcmask 130048
        %2539 = vst.msk [vmem:[%s269] sm:$0xff] %vm2538, %v2536
        %2540 = vst.msk [vmem:[%s269 + $0x8] sm:$0xff] %vm2538, %v2537
        %s2541 = sld [smem:[#allocation8 + $0x24]]
        %v2542 = vld [vmem:[#allocation2] sm:$0xff]
        %v2543 = vld [vmem:[#allocation2 + $0x8] sm:$0xff]
        %v2544 = vstv %s2541
        %v2545 = vmul.f32 %v2544, %v2542
        %v2546 = vmul.f32 %v2544, %v2543
        %v2547 = vadd.f32 %v2545, 0.0
        %v2548 = vadd.f32 %v2546, 0.0
        %s2549 = sld [smem:[#allocation8 + $0x25]]
        %v2550 = vstv %s2549
        %v2551 = vmul.f32 %v2550, %v2542
        %v2552 = vmul.f32 %v2550, %v2543
        %2555 = vrot.lane.b32.xlu0 %v2551, 127
        %v2556 = vpop.permute.xlu0 %2555
        %2557 = vrot.lane.b32.xlu0 %v2552, 127
        %v2558 = vpop.permute.xlu0 %2557
        %v2561 = vadd.f32 %v2547, %v2556
        %v2562 = vadd.f32 %v2548, %v2558
        %s2563 = sld [smem:[#allocation8 + $0x26]]
        %v2564 = vstv %s2563
        %v2565 = vmul.f32 %v2564, %v2542
        %v2566 = vmul.f32 %v2564, %v2543
        %2569 = vrot.lane.b32.xlu0 %v2565, 126
        %v2570 = vpop.permute.xlu0 %2569
        %2571 = vrot.lane.b32.xlu0 %v2566, 126
        %v2572 = vpop.permute.xlu0 %2571
        %v2575 = vadd.f32 %v2561, %v2570
        %v2576 = vadd.f32 %v2562, %v2572
        %s2577 = sld [smem:[#allocation8 + $0x27]]
        %v2578 = vld [vmem:[#allocation2 + $0x1] sm:$0xff]
        %v2579 = vld [vmem:[#allocation2 + $0x9] sm:$0xff]
        %v2580 = vstv %s2577
        %v2581 = vmul.f32 %v2580, %v2578
        %v2582 = vmul.f32 %v2580, %v2579
        %v2583 = vadd.f32 %v2575, %v2581
        %v2584 = vadd.f32 %v2576, %v2582
        %s2585 = sld [smem:[#allocation8 + $0x28]]
        %v2586 = vstv %s2585
        %v2587 = vmul.f32 %v2586, %v2578
        %v2588 = vmul.f32 %v2586, %v2579
        %2591 = vrot.lane.b32.xlu0 %v2587, 127
        %v2592 = vpop.permute.xlu0 %2591
        %2593 = vrot.lane.b32.xlu0 %v2588, 127
        %v2594 = vpop.permute.xlu0 %2593
        %v2597 = vadd.f32 %v2583, %v2592
        %v2598 = vadd.f32 %v2584, %v2594
        %s2599 = sld [smem:[#allocation8 + $0x29]]
        %v2600 = vstv %s2599
        %v2601 = vmul.f32 %v2600, %v2578
        %v2602 = vmul.f32 %v2600, %v2579
        %2605 = vrot.lane.b32.xlu0 %v2601, 126
        %v2606 = vpop.permute.xlu0 %2605
        %2607 = vrot.lane.b32.xlu0 %v2602, 126
        %v2608 = vpop.permute.xlu0 %2607
        %v2611 = vadd.f32 %v2597, %v2606
        %v2612 = vadd.f32 %v2598, %v2608
        %s2613 = sld [smem:[#allocation8 + $0x2a]]
        %v2614 = vld [vmem:[#allocation2 + $0x2] sm:$0xff]
        %v2615 = vld [vmem:[#allocation2 + $0xa] sm:$0xff]
        %v2616 = vstv %s2613
        %v2617 = vmul.f32 %v2616, %v2614
        %v2618 = vmul.f32 %v2616, %v2615
        %v2619 = vadd.f32 %v2611, %v2617
        %v2620 = vadd.f32 %v2612, %v2618
        %s2621 = sld [smem:[#allocation8 + $0x2b]]
        %v2622 = vstv %s2621
        %v2623 = vmul.f32 %v2622, %v2614
        %v2624 = vmul.f32 %v2622, %v2615
        %2627 = vrot.lane.b32.xlu0 %v2623, 127
        %v2628 = vpop.permute.xlu0 %2627
        %2629 = vrot.lane.b32.xlu0 %v2624, 127
        %v2630 = vpop.permute.xlu0 %2629
        %v2633 = vadd.f32 %v2619, %v2628
        %v2634 = vadd.f32 %v2620, %v2630
        %s2635 = sld [smem:[#allocation8 + $0x2c]]
        %v2636 = vstv %s2635
        %v2637 = vmul.f32 %v2636, %v2614
        %v2638 = vmul.f32 %v2636, %v2615
        %2641 = vrot.lane.b32.xlu0 %v2637, 126
        %v2642 = vpop.permute.xlu0 %2641
        %2643 = vrot.lane.b32.xlu0 %v2638, 126
        %v2644 = vpop.permute.xlu0 %2643
        %v2647 = vadd.f32 %v2633, %v2642
        %v2648 = vadd.f32 %v2634, %v2644
        %s2649 = sld [smem:[#allocation8 + $0x2d]]
        %v2650 = vld [vmem:[%s1187] sm:$0xff]
        %v2651 = vld [vmem:[%s1187 + $0x8] sm:$0xff]
        %v2652 = vstv %s2649
        %v2653 = vmul.f32 %v2652, %v2650
        %v2654 = vmul.f32 %v2652, %v2651
        %v2655 = vadd.f32 %v2647, %v2653
        %v2656 = vadd.f32 %v2648, %v2654
        %s2657 = sld [smem:[#allocation8 + $0x2e]]
        %v2658 = vstv %s2657
        %v2659 = vmul.f32 %v2658, %v2650
        %v2660 = vmul.f32 %v2658, %v2651
        %2663 = vrot.lane.b32.xlu0 %v2659, 127
        %v2664 = vpop.permute.xlu0 %2663
        %2665 = vrot.lane.b32.xlu0 %v2660, 127
        %v2666 = vpop.permute.xlu0 %2665
        %v2669 = vadd.f32 %v2655, %v2664
        %v2670 = vadd.f32 %v2656, %v2666
        %s2671 = sld [smem:[#allocation8 + $0x2f]]
        %v2672 = vstv %s2671
        %v2673 = vmul.f32 %v2672, %v2650
        %v2674 = vmul.f32 %v2672, %v2651
        %2677 = vrot.lane.b32.xlu0 %v2673, 126
        %v2678 = vpop.permute.xlu0 %2677
        %2679 = vrot.lane.b32.xlu0 %v2674, 126
        %v2680 = vpop.permute.xlu0 %2679
        %v2683 = vadd.f32 %v2669, %v2678
        %v2684 = vadd.f32 %v2670, %v2680
        %s2685 = sld [smem:[#allocation8 + $0x30]]
        %v2686 = vld [vmem:[%s1187 + $0x1] sm:$0xff]
        %v2687 = vld [vmem:[%s1187 + $0x9] sm:$0xff]
        %v2688 = vstv %s2685
        %v2689 = vmul.f32 %v2688, %v2686
        %v2690 = vmul.f32 %v2688, %v2687
        %v2691 = vadd.f32 %v2683, %v2689
        %v2692 = vadd.f32 %v2684, %v2690
        %s2693 = sld [smem:[#allocation8 + $0x31]]
        %v2694 = vstv %s2693
        %v2695 = vmul.f32 %v2694, %v2686
        %v2696 = vmul.f32 %v2694, %v2687
        %2699 = vrot.lane.b32.xlu0 %v2695, 127
        %v2700 = vpop.permute.xlu0 %2699
        %2701 = vrot.lane.b32.xlu0 %v2696, 127
        %v2702 = vpop.permute.xlu0 %2701
        %v2705 = vadd.f32 %v2691, %v2700
        %v2706 = vadd.f32 %v2692, %v2702
        %s2707 = sld [smem:[#allocation8 + $0x32]]
        %v2708 = vstv %s2707
        %v2709 = vmul.f32 %v2708, %v2686
        %v2710 = vmul.f32 %v2708, %v2687
        %2713 = vrot.lane.b32.xlu0 %v2709, 126
        %v2714 = vpop.permute.xlu0 %2713
        %2715 = vrot.lane.b32.xlu0 %v2710, 126
        %v2716 = vpop.permute.xlu0 %2715
        %v2719 = vadd.f32 %v2705, %v2714
        %v2720 = vadd.f32 %v2706, %v2716
        %s2721 = sld [smem:[#allocation8 + $0x33]]
        %v2722 = vld [vmem:[%s1187 + $0x2] sm:$0xff]
        %v2723 = vld [vmem:[%s1187 + $0xa] sm:$0xff]
        %v2724 = vstv %s2721
        %v2725 = vmul.f32 %v2724, %v2722
        %v2726 = vmul.f32 %v2724, %v2723
        %v2727 = vadd.f32 %v2719, %v2725
        %v2728 = vadd.f32 %v2720, %v2726
        %s2729 = sld [smem:[#allocation8 + $0x34]]
        %v2730 = vstv %s2729
        %v2731 = vmul.f32 %v2730, %v2722
        %v2732 = vmul.f32 %v2730, %v2723
        %2735 = vrot.lane.b32.xlu0 %v2731, 127
        %v2736 = vpop.permute.xlu0 %2735
        %2737 = vrot.lane.b32.xlu0 %v2732, 127
        %v2738 = vpop.permute.xlu0 %2737
        %v2741 = vadd.f32 %v2727, %v2736
        %v2742 = vadd.f32 %v2728, %v2738
        %s2743 = sld [smem:[#allocation8 + $0x35]]
        %v2744 = vstv %s2743
        %v2745 = vmul.f32 %v2744, %v2722
        %v2746 = vmul.f32 %v2744, %v2723
        %2749 = vrot.lane.b32.xlu0 %v2745, 126
        %v2750 = vpop.permute.xlu0 %2749
        %2751 = vrot.lane.b32.xlu0 %v2746, 126
        %v2752 = vpop.permute.xlu0 %2751
        %v2755 = vadd.f32 %v2741, %v2750
        %v2756 = vadd.f32 %v2742, %v2752
        %s2757 = sld [smem:[#allocation8 + $0x36]]
        %v2758 = vld [vmem:[%s1636] sm:$0xff]
        %v2759 = vld [vmem:[%s1636 + $0x8] sm:$0xff]
        %v2760 = vstv %s2757
        %v2761 = vmul.f32 %v2760, %v2758
        %v2762 = vmul.f32 %v2760, %v2759
        %v2763 = vadd.f32 %v2755, %v2761
        %v2764 = vadd.f32 %v2756, %v2762
        %s2765 = sld [smem:[#allocation8 + $0x37]]
        %v2766 = vstv %s2765
        %v2767 = vmul.f32 %v2766, %v2758
        %v2768 = vmul.f32 %v2766, %v2759
        %2771 = vrot.lane.b32.xlu0 %v2767, 127
        %v2772 = vpop.permute.xlu0 %2771
        %2773 = vrot.lane.b32.xlu0 %v2768, 127
        %v2774 = vpop.permute.xlu0 %2773
        %v2777 = vadd.f32 %v2763, %v2772
        %v2778 = vadd.f32 %v2764, %v2774
        %s2779 = sld [smem:[#allocation8 + $0x38]]
        %v2780 = vstv %s2779
        %v2781 = vmul.f32 %v2780, %v2758
        %v2782 = vmul.f32 %v2780, %v2759
        %2785 = vrot.lane.b32.xlu0 %v2781, 126
        %v2786 = vpop.permute.xlu0 %2785
        %2787 = vrot.lane.b32.xlu0 %v2782, 126
        %v2788 = vpop.permute.xlu0 %2787
        %v2791 = vadd.f32 %v2777, %v2786
        %v2792 = vadd.f32 %v2778, %v2788
        %s2793 = sld [smem:[#allocation8 + $0x39]]
        %v2794 = vld [vmem:[%s1636 + $0x1] sm:$0xff]
        %v2795 = vld [vmem:[%s1636 + $0x9] sm:$0xff]
        %v2796 = vstv %s2793
        %v2797 = vmul.f32 %v2796, %v2794
        %v2798 = vmul.f32 %v2796, %v2795
        %v2799 = vadd.f32 %v2791, %v2797
        %v2800 = vadd.f32 %v2792, %v2798
        %s2801 = sld [smem:[#allocation8 + $0x3a]]
        %v2802 = vstv %s2801
        %v2803 = vmul.f32 %v2802, %v2794
        %v2804 = vmul.f32 %v2802, %v2795
        %2807 = vrot.lane.b32.xlu0 %v2803, 127
        %v2808 = vpop.permute.xlu0 %2807
        %2809 = vrot.lane.b32.xlu0 %v2804, 127
        %v2810 = vpop.permute.xlu0 %2809
        %v2813 = vadd.f32 %v2799, %v2808
        %v2814 = vadd.f32 %v2800, %v2810
        %s2815 = sld [smem:[#allocation8 + $0x3b]]
        %v2816 = vstv %s2815
        %v2817 = vmul.f32 %v2816, %v2794
        %v2818 = vmul.f32 %v2816, %v2795
        %2821 = vrot.lane.b32.xlu0 %v2817, 126
        %v2822 = vpop.permute.xlu0 %2821
        %2823 = vrot.lane.b32.xlu0 %v2818, 126
        %v2824 = vpop.permute.xlu0 %2823
        %v2827 = vadd.f32 %v2813, %v2822
        %v2828 = vadd.f32 %v2814, %v2824
        %s2829 = sld [smem:[#allocation8 + $0x3c]]
        %v2830 = vld [vmem:[%s1636 + $0x2] sm:$0xff]
        %v2831 = vld [vmem:[%s1636 + $0xa] sm:$0xff]
        %v2832 = vstv %s2829
        %v2833 = vmul.f32 %v2832, %v2830
        %v2834 = vmul.f32 %v2832, %v2831
        %v2835 = vadd.f32 %v2827, %v2833
        %v2836 = vadd.f32 %v2828, %v2834
        %s2837 = sld [smem:[#allocation8 + $0x3d]]
        %v2838 = vstv %s2837
        %v2839 = vmul.f32 %v2838, %v2830
        %v2840 = vmul.f32 %v2838, %v2831
        %2843 = vrot.lane.b32.xlu0 %v2839, 127
        %v2844 = vpop.permute.xlu0 %2843
        %2845 = vrot.lane.b32.xlu0 %v2840, 127
        %v2846 = vpop.permute.xlu0 %2845
        %v2849 = vadd.f32 %v2835, %v2844
        %v2850 = vadd.f32 %v2836, %v2846
        %s2851 = sld [smem:[#allocation8 + $0x3e]]
        %v2852 = vstv %s2851
        %v2853 = vmul.f32 %v2852, %v2830
        %v2854 = vmul.f32 %v2852, %v2831
        %2857 = vrot.lane.b32.xlu0 %v2853, 126
        %v2858 = vpop.permute.xlu0 %2857
        %2859 = vrot.lane.b32.xlu0 %v2854, 126
        %v2860 = vpop.permute.xlu0 %2859
        %v2863 = vadd.f32 %v2849, %v2858
        %v2864 = vadd.f32 %v2850, %v2860
        %s2865 = sld [smem:[#allocation8 + $0x3f]]
        %v2866 = vld [vmem:[%s2085] sm:$0xff]
        %v2867 = vld [vmem:[%s2085 + $0x8] sm:$0xff]
        %v2868 = vstv %s2865
        %v2869 = vmul.f32 %v2868, %v2866
        %v2870 = vmul.f32 %v2868, %v2867
        %v2871 = vadd.f32 %v2863, %v2869
        %v2872 = vadd.f32 %v2864, %v2870
        %s2873 = sld [smem:[#allocation8 + $0x40]]
        %v2874 = vstv %s2873
        %v2875 = vmul.f32 %v2874, %v2866
        %v2876 = vmul.f32 %v2874, %v2867
        %2879 = vrot.lane.b32.xlu0 %v2875, 127
        %v2880 = vpop.permute.xlu0 %2879
        %2881 = vrot.lane.b32.xlu0 %v2876, 127
        %v2882 = vpop.permute.xlu0 %2881
        %v2885 = vadd.f32 %v2871, %v2880
        %v2886 = vadd.f32 %v2872, %v2882
        %s2887 = sld [smem:[#allocation8 + $0x41]]
        %v2888 = vstv %s2887
        %v2889 = vmul.f32 %v2888, %v2866
        %v2890 = vmul.f32 %v2888, %v2867
        %2893 = vrot.lane.b32.xlu0 %v2889, 126
        %v2894 = vpop.permute.xlu0 %2893
        %2895 = vrot.lane.b32.xlu0 %v2890, 126
        %v2896 = vpop.permute.xlu0 %2895
        %v2899 = vadd.f32 %v2885, %v2894
        %v2900 = vadd.f32 %v2886, %v2896
        %s2901 = sld [smem:[#allocation8 + $0x42]]
        %v2902 = vld [vmem:[%s2085 + $0x1] sm:$0xff]
        %v2903 = vld [vmem:[%s2085 + $0x9] sm:$0xff]
        %v2904 = vstv %s2901
        %v2905 = vmul.f32 %v2904, %v2902
        %v2906 = vmul.f32 %v2904, %v2903
        %v2907 = vadd.f32 %v2899, %v2905
        %v2908 = vadd.f32 %v2900, %v2906
        %s2909 = sld [smem:[#allocation8 + $0x43]]
        %v2910 = vstv %s2909
        %v2911 = vmul.f32 %v2910, %v2902
        %v2912 = vmul.f32 %v2910, %v2903
        %2915 = vrot.lane.b32.xlu0 %v2911, 127
        %v2916 = vpop.permute.xlu0 %2915
        %2917 = vrot.lane.b32.xlu0 %v2912, 127
        %v2918 = vpop.permute.xlu0 %2917
        %v2921 = vadd.f32 %v2907, %v2916
        %v2922 = vadd.f32 %v2908, %v2918
        %s2923 = sld [smem:[#allocation8 + $0x44]]
        %v2924 = vstv %s2923
        %v2925 = vmul.f32 %v2924, %v2902
        %v2926 = vmul.f32 %v2924, %v2903
        %2929 = vrot.lane.b32.xlu0 %v2925, 126
        %v2930 = vpop.permute.xlu0 %2929
        %2931 = vrot.lane.b32.xlu0 %v2926, 126
        %v2932 = vpop.permute.xlu0 %2931
        %v2935 = vadd.f32 %v2921, %v2930
        %v2936 = vadd.f32 %v2922, %v2932
        %s2937 = sld [smem:[#allocation8 + $0x45]]
        %v2938 = vld [vmem:[%s2085 + $0x2] sm:$0xff]
        %v2939 = vld [vmem:[%s2085 + $0xa] sm:$0xff]
        %v2940 = vstv %s2937
        %v2941 = vmul.f32 %v2940, %v2938
        %v2942 = vmul.f32 %v2940, %v2939
        %v2943 = vadd.f32 %v2935, %v2941
        %v2944 = vadd.f32 %v2936, %v2942
        %s2945 = sld [smem:[#allocation8 + $0x46]]
        %v2946 = vstv %s2945
        %v2947 = vmul.f32 %v2946, %v2938
        %v2948 = vmul.f32 %v2946, %v2939
        %2951 = vrot.lane.b32.xlu0 %v2947, 127
        %v2952 = vpop.permute.xlu0 %2951
        %2953 = vrot.lane.b32.xlu0 %v2948, 127
        %v2954 = vpop.permute.xlu0 %2953
        %v2957 = vadd.f32 %v2943, %v2952
        %v2958 = vadd.f32 %v2944, %v2954
        %s2959 = sld [smem:[#allocation8 + $0x47]]
        %v2960 = vstv %s2959
        %v2961 = vmul.f32 %v2960, %v2938
        %v2962 = vmul.f32 %v2960, %v2939
        %2965 = vrot.lane.b32.xlu0 %v2961, 126
        %v2966 = vpop.permute.xlu0 %2965
        %2967 = vrot.lane.b32.xlu0 %v2962, 126
        %v2968 = vpop.permute.xlu0 %2967
        %v2971 = vadd.f32 %v2957, %v2966
        %v2972 = vadd.f32 %v2958, %v2968
        %s2973 = sld [smem:[#allocation9 + $0x1]]
        %v2974 = vstv %s2973
        %v2975 = vadd.f32 %v2971, %v2974
        %v2976 = vadd.f32 %v2972, %v2974
        %v2977 = vmax.f32 %v2975, 0.0
        %v2978 = vmax.f32 %v2976, 0.0
        %v2979 = vld [vmem:[%s398 + $0x1] sm:$0xff]
        %v2980 = vld [vmem:[%s398 + $0x9] sm:$0xff]
        %2983 = vrot.lane.b32.xlu0 %v2979, 127
        %v2984 = vpop.permute.xlu0 %2983
        %2985 = vrot.lane.b32.xlu0 %v2980, 127
        %v2986 = vpop.permute.xlu0 %2985
        %v2989 = vadd.f32 %v2977, %v2984
        %v2990 = vadd.f32 %v2978, %v2986
        %s2991 = scalar_lea.vmem %s269, 16 [#allocation11]
        %2992 = vst.msk [vmem:[%s2991] sm:$0xff] %vm2538, %v2989
        %2993 = vst.msk [vmem:[%s2991 + $0x8] sm:$0xff] %vm2538, %v2990
        %s2994 = sld [smem:[#allocation8 + $0x48]]
        %v2995 = vld [vmem:[#allocation2] sm:$0xff]
        %v2996 = vld [vmem:[#allocation2 + $0x8] sm:$0xff]
        %v2997 = vstv %s2994
        %v2998 = vmul.f32 %v2997, %v2995
        %v2999 = vmul.f32 %v2997, %v2996
        %v3000 = vadd.f32 %v2998, 0.0
        %v3001 = vadd.f32 %v2999, 0.0
        %s3002 = sld [smem:[#allocation8 + $0x49]]
        %v3003 = vstv %s3002
        %v3004 = vmul.f32 %v3003, %v2995
        %v3005 = vmul.f32 %v3003, %v2996
        %3008 = vrot.lane.b32.xlu0 %v3004, 127
        %v3009 = vpop.permute.xlu0 %3008
        %3010 = vrot.lane.b32.xlu0 %v3005, 127
        %v3011 = vpop.permute.xlu0 %3010
        %v3014 = vadd.f32 %v3000, %v3009
        %v3015 = vadd.f32 %v3001, %v3011
        %s3016 = sld [smem:[#allocation8 + $0x4a]]
        %v3017 = vstv %s3016
        %v3018 = vmul.f32 %v3017, %v2995
        %v3019 = vmul.f32 %v3017, %v2996
        %3022 = vrot.lane.b32.xlu0 %v3018, 126
        %v3023 = vpop.permute.xlu0 %3022
        %3024 = vrot.lane.b32.xlu0 %v3019, 126
        %v3025 = vpop.permute.xlu0 %3024
        %v3028 = vadd.f32 %v3014, %v3023
        %v3029 = vadd.f32 %v3015, %v3025
        %s3030 = sld [smem:[#allocation8 + $0x4b]]
        %v3031 = vld [vmem:[#allocation2 + $0x1] sm:$0xff]
        %v3032 = vld [vmem:[#allocation2 + $0x9] sm:$0xff]
        %v3033 = vstv %s3030
        %v3034 = vmul.f32 %v3033, %v3031
        %v3035 = vmul.f32 %v3033, %v3032
        %v3036 = vadd.f32 %v3028, %v3034
        %v3037 = vadd.f32 %v3029, %v3035
        %s3038 = sld [smem:[#allocation8 + $0x4c]]
        %v3039 = vstv %s3038
        %v3040 = vmul.f32 %v3039, %v3031
        %v3041 = vmul.f32 %v3039, %v3032
        %3044 = vrot.lane.b32.xlu0 %v3040, 127
        %v3045 = vpop.permute.xlu0 %3044
        %3046 = vrot.lane.b32.xlu0 %v3041, 127
        %v3047 = vpop.permute.xlu0 %3046
        %v3050 = vadd.f32 %v3036, %v3045
        %v3051 = vadd.f32 %v3037, %v3047
        %s3052 = sld [smem:[#allocation8 + $0x4d]]
        %v3053 = vstv %s3052
        %v3054 = vmul.f32 %v3053, %v3031
        %v3055 = vmul.f32 %v3053, %v3032
        %3058 = vrot.lane.b32.xlu0 %v3054, 126
        %v3059 = vpop.permute.xlu0 %3058
        %3060 = vrot.lane.b32.xlu0 %v3055, 126
        %v3061 = vpop.permute.xlu0 %3060
        %v3064 = vadd.f32 %v3050, %v3059
        %v3065 = vadd.f32 %v3051, %v3061
        %s3066 = sld [smem:[#allocation8 + $0x4e]]
        %v3067 = vld [vmem:[#allocation2 + $0x2] sm:$0xff]
        %v3068 = vld [vmem:[#allocation2 + $0xa] sm:$0xff]
        %v3069 = vstv %s3066
        %v3070 = vmul.f32 %v3069, %v3067
        %v3071 = vmul.f32 %v3069, %v3068
        %v3072 = vadd.f32 %v3064, %v3070
        %v3073 = vadd.f32 %v3065, %v3071
        %s3074 = sld [smem:[#allocation8 + $0x4f]]
        %v3075 = vstv %s3074
        %v3076 = vmul.f32 %v3075, %v3067
        %v3077 = vmul.f32 %v3075, %v3068
        %3080 = vrot.lane.b32.xlu0 %v3076, 127
        %v3081 = vpop.permute.xlu0 %3080
        %3082 = vrot.lane.b32.xlu0 %v3077, 127
        %v3083 = vpop.permute.xlu0 %3082
        %v3086 = vadd.f32 %v3072, %v3081
        %v3087 = vadd.f32 %v3073, %v3083
        %s3088 = sld [smem:[#allocation8 + $0x50]]
        %v3089 = vstv %s3088
        %v3090 = vmul.f32 %v3089, %v3067
        %v3091 = vmul.f32 %v3089, %v3068
        %3094 = vrot.lane.b32.xlu0 %v3090, 126
        %v3095 = vpop.permute.xlu0 %3094
        %3096 = vrot.lane.b32.xlu0 %v3091, 126
        %v3097 = vpop.permute.xlu0 %3096
        %v3100 = vadd.f32 %v3086, %v3095
        %v3101 = vadd.f32 %v3087, %v3097
        %s3102 = sld [smem:[#allocation8 + $0x51]]
        %v3103 = vld [vmem:[%s1187] sm:$0xff]
        %v3104 = vld [vmem:[%s1187 + $0x8] sm:$0xff]
        %v3105 = vstv %s3102
        %v3106 = vmul.f32 %v3105, %v3103
        %v3107 = vmul.f32 %v3105, %v3104
        %v3108 = vadd.f32 %v3100, %v3106
        %v3109 = vadd.f32 %v3101, %v3107
        %s3110 = sld [smem:[#allocation8 + $0x52]]
        %v3111 = vstv %s3110
        %v3112 = vmul.f32 %v3111, %v3103
        %v3113 = vmul.f32 %v3111, %v3104
        %3116 = vrot.lane.b32.xlu0 %v3112, 127
        %v3117 = vpop.permute.xlu0 %3116
        %3118 = vrot.lane.b32.xlu0 %v3113, 127
        %v3119 = vpop.permute.xlu0 %3118
        %v3122 = vadd.f32 %v3108, %v3117
        %v3123 = vadd.f32 %v3109, %v3119
        %s3124 = sld [smem:[#allocation8 + $0x53]]
        %v3125 = vstv %s3124
        %v3126 = vmul.f32 %v3125, %v3103
        %v3127 = vmul.f32 %v3125, %v3104
        %3130 = vrot.lane.b32.xlu0 %v3126, 126
        %v3131 = vpop.permute.xlu0 %3130
        %3132 = vrot.lane.b32.xlu0 %v3127, 126
        %v3133 = vpop.permute.xlu0 %3132
        %v3136 = vadd.f32 %v3122, %v3131
        %v3137 = vadd.f32 %v3123, %v3133
        %s3138 = sld [smem:[#allocation8 + $0x54]]
        %v3139 = vld [vmem:[%s1187 + $0x1] sm:$0xff]
        %v3140 = vld [vmem:[%s1187 + $0x9] sm:$0xff]
        %v3141 = vstv %s3138
        %v3142 = vmul.f32 %v3141, %v3139
        %v3143 = vmul.f32 %v3141, %v3140
        %v3144 = vadd.f32 %v3136, %v3142
        %v3145 = vadd.f32 %v3137, %v3143
        %s3146 = sld [smem:[#allocation8 + $0x55]]
        %v3147 = vstv %s3146
        %v3148 = vmul.f32 %v3147, %v3139
        %v3149 = vmul.f32 %v3147, %v3140
        %3152 = vrot.lane.b32.xlu0 %v3148, 127
        %v3153 = vpop.permute.xlu0 %3152
        %3154 = vrot.lane.b32.xlu0 %v3149, 127
        %v3155 = vpop.permute.xlu0 %3154
        %v3158 = vadd.f32 %v3144, %v3153
        %v3159 = vadd.f32 %v3145, %v3155
        %s3160 = sld [smem:[#allocation8 + $0x56]]
        %v3161 = vstv %s3160
        %v3162 = vmul.f32 %v3161, %v3139
        %v3163 = vmul.f32 %v3161, %v3140
        %3166 = vrot.lane.b32.xlu0 %v3162, 126
        %v3167 = vpop.permute.xlu0 %3166
        %3168 = vrot.lane.b32.xlu0 %v3163, 126
        %v3169 = vpop.permute.xlu0 %3168
        %v3172 = vadd.f32 %v3158, %v3167
        %v3173 = vadd.f32 %v3159, %v3169
        %s3174 = sld [smem:[#allocation8 + $0x57]]
        %v3175 = vld [vmem:[%s1187 + $0x2] sm:$0xff]
        %v3176 = vld [vmem:[%s1187 + $0xa] sm:$0xff]
        %v3177 = vstv %s3174
        %v3178 = vmul.f32 %v3177, %v3175
        %v3179 = vmul.f32 %v3177, %v3176
        %v3180 = vadd.f32 %v3172, %v3178
        %v3181 = vadd.f32 %v3173, %v3179
        %s3182 = sld [smem:[#allocation8 + $0x58]]
        %v3183 = vstv %s3182
        %v3184 = vmul.f32 %v3183, %v3175
        %v3185 = vmul.f32 %v3183, %v3176
        %3188 = vrot.lane.b32.xlu0 %v3184, 127
        %v3189 = vpop.permute.xlu0 %3188
        %3190 = vrot.lane.b32.xlu0 %v3185, 127
        %v3191 = vpop.permute.xlu0 %3190
        %v3194 = vadd.f32 %v3180, %v3189
        %v3195 = vadd.f32 %v3181, %v3191
        %s3196 = sld [smem:[#allocation8 + $0x59]]
        %v3197 = vstv %s3196
        %v3198 = vmul.f32 %v3197, %v3175
        %v3199 = vmul.f32 %v3197, %v3176
        %3202 = vrot.lane.b32.xlu0 %v3198, 126
        %v3203 = vpop.permute.xlu0 %3202
        %3204 = vrot.lane.b32.xlu0 %v3199, 126
        %v3205 = vpop.permute.xlu0 %3204
        %v3208 = vadd.f32 %v3194, %v3203
        %v3209 = vadd.f32 %v3195, %v3205
        %s3210 = sld [smem:[#allocation8 + $0x5a]]
        %v3211 = vld [vmem:[%s1636] sm:$0xff]
        %v3212 = vld [vmem:[%s1636 + $0x8] sm:$0xff]
        %v3213 = vstv %s3210
        %v3214 = vmul.f32 %v3213, %v3211
        %v3215 = vmul.f32 %v3213, %v3212
        %v3216 = vadd.f32 %v3208, %v3214
        %v3217 = vadd.f32 %v3209, %v3215
        %s3218 = sld [smem:[#allocation8 + $0x5b]]
        %v3219 = vstv %s3218
        %v3220 = vmul.f32 %v3219, %v3211
        %v3221 = vmul.f32 %v3219, %v3212
        %3224 = vrot.lane.b32.xlu0 %v3220, 127
        %v3225 = vpop.permute.xlu0 %3224
        %3226 = vrot.lane.b32.xlu0 %v3221, 127
        %v3227 = vpop.permute.xlu0 %3226
        %v3230 = vadd.f32 %v3216, %v3225
        %v3231 = vadd.f32 %v3217, %v3227
        %s3232 = sld [smem:[#allocation8 + $0x5c]]
        %v3233 = vstv %s3232
        %v3234 = vmul.f32 %v3233, %v3211
        %v3235 = vmul.f32 %v3233, %v3212
        %3238 = vrot.lane.b32.xlu0 %v3234, 126
        %v3239 = vpop.permute.xlu0 %3238
        %3240 = vrot.lane.b32.xlu0 %v3235, 126
        %v3241 = vpop.permute.xlu0 %3240
        %v3244 = vadd.f32 %v3230, %v3239
        %v3245 = vadd.f32 %v3231, %v3241
        %s3246 = sld [smem:[#allocation8 + $0x5d]]
        %v3247 = vld [vmem:[%s1636 + $0x1] sm:$0xff]
        %v3248 = vld [vmem:[%s1636 + $0x9] sm:$0xff]
        %v3249 = vstv %s3246
        %v3250 = vmul.f32 %v3249, %v3247
        %v3251 = vmul.f32 %v3249, %v3248
        %v3252 = vadd.f32 %v3244, %v3250
        %v3253 = vadd.f32 %v3245, %v3251
        %s3254 = sld [smem:[#allocation8 + $0x5e]]
        %v3255 = vstv %s3254
        %v3256 = vmul.f32 %v3255, %v3247
        %v3257 = vmul.f32 %v3255, %v3248
        %3260 = vrot.lane.b32.xlu0 %v3256, 127
        %v3261 = vpop.permute.xlu0 %3260
        %3262 = vrot.lane.b32.xlu0 %v3257, 127
        %v3263 = vpop.permute.xlu0 %3262
        %v3266 = vadd.f32 %v3252, %v3261
        %v3267 = vadd.f32 %v3253, %v3263
        %s3268 = sld [smem:[#allocation8 + $0x5f]]
        %v3269 = vstv %s3268
        %v3270 = vmul.f32 %v3269, %v3247
        %v3271 = vmul.f32 %v3269, %v3248
        %3274 = vrot.lane.b32.xlu0 %v3270, 126
        %v3275 = vpop.permute.xlu0 %3274
        %3276 = vrot.lane.b32.xlu0 %v3271, 126
        %v3277 = vpop.permute.xlu0 %3276
        %v3280 = vadd.f32 %v3266, %v3275
        %v3281 = vadd.f32 %v3267, %v3277
        %s3282 = sld [smem:[#allocation8 + $0x60]]
        %v3283 = vld [vmem:[%s1636 + $0x2] sm:$0xff]
        %v3284 = vld [vmem:[%s1636 + $0xa] sm:$0xff]
        %v3285 = vstv %s3282
        %v3286 = vmul.f32 %v3285, %v3283
        %v3287 = vmul.f32 %v3285, %v3284
        %v3288 = vadd.f32 %v3280, %v3286
        %v3289 = vadd.f32 %v3281, %v3287
        %s3290 = sld [smem:[#allocation8 + $0x61]]
        %v3291 = vstv %s3290
        %v3292 = vmul.f32 %v3291, %v3283
        %v3293 = vmul.f32 %v3291, %v3284
        %3296 = vrot.lane.b32.xlu0 %v3292, 127
        %v3297 = vpop.permute.xlu0 %3296
        %3298 = vrot.lane.b32.xlu0 %v3293, 127
        %v3299 = vpop.permute.xlu0 %3298
        %v3302 = vadd.f32 %v3288, %v3297
        %v3303 = vadd.f32 %v3289, %v3299
        %s3304 = sld [smem:[#allocation8 + $0x62]]
        %v3305 = vstv %s3304
        %v3306 = vmul.f32 %v3305, %v3283
        %v3307 = vmul.f32 %v3305, %v3284
        %3310 = vrot.lane.b32.xlu0 %v3306, 126
        %v3311 = vpop.permute.xlu0 %3310
        %3312 = vrot.lane.b32.xlu0 %v3307, 126
        %v3313 = vpop.permute.xlu0 %3312
        %v3316 = vadd.f32 %v3302, %v3311
        %v3317 = vadd.f32 %v3303, %v3313
        %s3318 = sld [smem:[#allocation8 + $0x63]]
        %v3319 = vld [vmem:[%s2085] sm:$0xff]
        %v3320 = vld [vmem:[%s2085 + $0x8] sm:$0xff]
        %v3321 = vstv %s3318
        %v3322 = vmul.f32 %v3321, %v3319
        %v3323 = vmul.f32 %v3321, %v3320
        %v3324 = vadd.f32 %v3316, %v3322
        %v3325 = vadd.f32 %v3317, %v3323
        %s3326 = sld [smem:[#allocation8 + $0x64]]
        %v3327 = vstv %s3326
        %v3328 = vmul.f32 %v3327, %v3319
        %v3329 = vmul.f32 %v3327, %v3320
        %3332 = vrot.lane.b32.xlu0 %v3328, 127
        %v3333 = vpop.permute.xlu0 %3332
        %3334 = vrot.lane.b32.xlu0 %v3329, 127
        %v3335 = vpop.permute.xlu0 %3334
        %v3338 = vadd.f32 %v3324, %v3333
        %v3339 = vadd.f32 %v3325, %v3335
        %s3340 = sld [smem:[#allocation8 + $0x65]]
        %v3341 = vstv %s3340
        %v3342 = vmul.f32 %v3341, %v3319
        %v3343 = vmul.f32 %v3341, %v3320
        %3346 = vrot.lane.b32.xlu0 %v3342, 126
        %v3347 = vpop.permute.xlu0 %3346
        %3348 = vrot.lane.b32.xlu0 %v3343, 126
        %v3349 = vpop.permute.xlu0 %3348
        %v3352 = vadd.f32 %v3338, %v3347
        %v3353 = vadd.f32 %v3339, %v3349
        %s3354 = sld [smem:[#allocation8 + $0x66]]
        %v3355 = vld [vmem:[%s2085 + $0x1] sm:$0xff]
        %v3356 = vld [vmem:[%s2085 + $0x9] sm:$0xff]
        %v3357 = vstv %s3354
        %v3358 = vmul.f32 %v3357, %v3355
        %v3359 = vmul.f32 %v3357, %v3356
        %v3360 = vadd.f32 %v3352, %v3358
        %v3361 = vadd.f32 %v3353, %v3359
        %s3362 = sld [smem:[#allocation8 + $0x67]]
        %v3363 = vstv %s3362
        %v3364 = vmul.f32 %v3363, %v3355
        %v3365 = vmul.f32 %v3363, %v3356
        %3368 = vrot.lane.b32.xlu0 %v3364, 127
        %v3369 = vpop.permute.xlu0 %3368
        %3370 = vrot.lane.b32.xlu0 %v3365, 127
        %v3371 = vpop.permute.xlu0 %3370
        %v3374 = vadd.f32 %v3360, %v3369
        %v3375 = vadd.f32 %v3361, %v3371
        %s3376 = sld [smem:[#allocation8 + $0x68]]
        %v3377 = vstv %s3376
        %v3378 = vmul.f32 %v3377, %v3355
        %v3379 = vmul.f32 %v3377, %v3356
        %3382 = vrot.lane.b32.xlu0 %v3378, 126
        %v3383 = vpop.permute.xlu0 %3382
        %3384 = vrot.lane.b32.xlu0 %v3379, 126
        %v3385 = vpop.permute.xlu0 %3384
        %v3388 = vadd.f32 %v3374, %v3383
        %v3389 = vadd.f32 %v3375, %v3385
        %s3390 = sld [smem:[#allocation8 + $0x69]]
        %v3391 = vld [vmem:[%s2085 + $0x2] sm:$0xff]
        %v3392 = vld [vmem:[%s2085 + $0xa] sm:$0xff]
        %v3393 = vstv %s3390
        %v3394 = vmul.f32 %v3393, %v3391
        %v3395 = vmul.f32 %v3393, %v3392
        %v3396 = vadd.f32 %v3388, %v3394
        %v3397 = vadd.f32 %v3389, %v3395
        %s3398 = sld [smem:[#allocation8 + $0x6a]]
        %v3399 = vstv %s3398
        %v3400 = vmul.f32 %v3399, %v3391
        %v3401 = vmul.f32 %v3399, %v3392
        %3404 = vrot.lane.b32.xlu0 %v3400, 127
        %v3405 = vpop.permute.xlu0 %3404
        %3406 = vrot.lane.b32.xlu0 %v3401, 127
        %v3407 = vpop.permute.xlu0 %3406
        %v3410 = vadd.f32 %v3396, %v3405
        %v3411 = vadd.f32 %v3397, %v3407
        %s3412 = sld [smem:[#allocation8 + $0x6b]]
        %v3413 = vstv %s3412
        %v3414 = vmul.f32 %v3413, %v3391
        %v3415 = vmul.f32 %v3413, %v3392
        %3418 = vrot.lane.b32.xlu0 %v3414, 126
        %v3419 = vpop.permute.xlu0 %3418
        %3420 = vrot.lane.b32.xlu0 %v3415, 126
        %v3421 = vpop.permute.xlu0 %3420
        %v3424 = vadd.f32 %v3410, %v3419
        %v3425 = vadd.f32 %v3411, %v3421
        %s3426 = sld [smem:[#allocation9 + $0x2]]
        %v3427 = vstv %s3426
        %v3428 = vadd.f32 %v3424, %v3427
        %v3429 = vadd.f32 %v3425, %v3427
        %v3430 = vmax.f32 %v3428, 0.0
        %v3431 = vmax.f32 %v3429, 0.0
        %v3432 = vld [vmem:[%s507 + $0x1] sm:$0xff]
        %v3433 = vld [vmem:[%s507 + $0x9] sm:$0xff]
        %3436 = vrot.lane.b32.xlu0 %v3432, 127
        %v3437 = vpop.permute.xlu0 %3436
        %3438 = vrot.lane.b32.xlu0 %v3433, 127
        %v3439 = vpop.permute.xlu0 %3438
        %v3442 = vadd.f32 %v3430, %v3437
        %v3443 = vadd.f32 %v3431, %v3439
        %s3444 = scalar_lea.vmem %s269, 32 [#allocation11]
        %3445 = vst.msk [vmem:[%s3444] sm:$0xff] %vm2538, %v3442
        %3446 = vst.msk [vmem:[%s3444 + $0x8] sm:$0xff] %vm2538, %v3443
        %s3447 = sld [smem:[#allocation8 + $0x6c]]
        %v3448 = vld [vmem:[#allocation2] sm:$0xff]
        %v3449 = vld [vmem:[#allocation2 + $0x8] sm:$0xff]
        %v3450 = vstv %s3447
        %v3451 = vmul.f32 %v3450, %v3448
        %v3452 = vmul.f32 %v3450, %v3449
        %v3453 = vadd.f32 %v3451, 0.0
        %v3454 = vadd.f32 %v3452, 0.0
        %s3455 = sld [smem:[#allocation8 + $0x6d]]
        %v3456 = vstv %s3455
        %v3457 = vmul.f32 %v3456, %v3448
        %v3458 = vmul.f32 %v3456, %v3449
        %3461 = vrot.lane.b32.xlu0 %v3457, 127
        %v3462 = vpop.permute.xlu0 %3461
        %3463 = vrot.lane.b32.xlu0 %v3458, 127
        %v3464 = vpop.permute.xlu0 %3463
        %v3467 = vadd.f32 %v3453, %v3462
        %v3468 = vadd.f32 %v3454, %v3464
        %s3469 = sld [smem:[#allocation8 + $0x6e]]
        %v3470 = vstv %s3469
        %v3471 = vmul.f32 %v3470, %v3448
        %v3472 = vmul.f32 %v3470, %v3449
        %3475 = vrot.lane.b32.xlu0 %v3471, 126
        %v3476 = vpop.permute.xlu0 %3475
        %3477 = vrot.lane.b32.xlu0 %v3472, 126
        %v3478 = vpop.permute.xlu0 %3477
        %v3481 = vadd.f32 %v3467, %v3476
        %v3482 = vadd.f32 %v3468, %v3478
        %s3483 = sld [smem:[#allocation8 + $0x6f]]
        %v3484 = vld [vmem:[#allocation2 + $0x1] sm:$0xff]
        %v3485 = vld [vmem:[#allocation2 + $0x9] sm:$0xff]
        %v3486 = vstv %s3483
        %v3487 = vmul.f32 %v3486, %v3484
        %v3488 = vmul.f32 %v3486, %v3485
        %v3489 = vadd.f32 %v3481, %v3487
        %v3490 = vadd.f32 %v3482, %v3488
        %s3491 = sld [smem:[#allocation8 + $0x70]]
        %v3492 = vstv %s3491
        %v3493 = vmul.f32 %v3492, %v3484
        %v3494 = vmul.f32 %v3492, %v3485
        %3497 = vrot.lane.b32.xlu0 %v3493, 127
        %v3498 = vpop.permute.xlu0 %3497
        %3499 = vrot.lane.b32.xlu0 %v3494, 127
        %v3500 = vpop.permute.xlu0 %3499
        %v3503 = vadd.f32 %v3489, %v3498
        %v3504 = vadd.f32 %v3490, %v3500
        %s3505 = sld [smem:[#allocation8 + $0x71]]
        %v3506 = vstv %s3505
        %v3507 = vmul.f32 %v3506, %v3484
        %v3508 = vmul.f32 %v3506, %v3485
        %3511 = vrot.lane.b32.xlu0 %v3507, 126
        %v3512 = vpop.permute.xlu0 %3511
        %3513 = vrot.lane.b32.xlu0 %v3508, 126
        %v3514 = vpop.permute.xlu0 %3513
        %v3517 = vadd.f32 %v3503, %v3512
        %v3518 = vadd.f32 %v3504, %v3514
        %s3519 = sld [smem:[#allocation8 + $0x72]]
        %v3520 = vld [vmem:[#allocation2 + $0x2] sm:$0xff]
        %v3521 = vld [vmem:[#allocation2 + $0xa] sm:$0xff]
        %v3522 = vstv %s3519
        %v3523 = vmul.f32 %v3522, %v3520
        %v3524 = vmul.f32 %v3522, %v3521
        %v3525 = vadd.f32 %v3517, %v3523
        %v3526 = vadd.f32 %v3518, %v3524
        %s3527 = sld [smem:[#allocation8 + $0x73]]
        %v3528 = vstv %s3527
        %v3529 = vmul.f32 %v3528, %v3520
        %v3530 = vmul.f32 %v3528, %v3521
        %3533 = vrot.lane.b32.xlu0 %v3529, 127
        %v3534 = vpop.permute.xlu0 %3533
        %3535 = vrot.lane.b32.xlu0 %v3530, 127
        %v3536 = vpop.permute.xlu0 %3535
        %v3539 = vadd.f32 %v3525, %v3534
        %v3540 = vadd.f32 %v3526, %v3536
        %s3541 = sld [smem:[#allocation8 + $0x74]]
        %v3542 = vstv %s3541
        %v3543 = vmul.f32 %v3542, %v3520
        %v3544 = vmul.f32 %v3542, %v3521
        %3547 = vrot.lane.b32.xlu0 %v3543, 126
        %v3548 = vpop.permute.xlu0 %3547
        %3549 = vrot.lane.b32.xlu0 %v3544, 126
        %v3550 = vpop.permute.xlu0 %3549
        %v3553 = vadd.f32 %v3539, %v3548
        %v3554 = vadd.f32 %v3540, %v3550
        %s3555 = sld [smem:[#allocation8 + $0x75]]
        %v3556 = vld [vmem:[%s1187] sm:$0xff]
        %v3557 = vld [vmem:[%s1187 + $0x8] sm:$0xff]
        %v3558 = vstv %s3555
        %v3559 = vmul.f32 %v3558, %v3556
        %v3560 = vmul.f32 %v3558, %v3557
        %v3561 = vadd.f32 %v3553, %v3559
        %v3562 = vadd.f32 %v3554, %v3560
        %s3563 = sld [smem:[#allocation8 + $0x76]]
        %v3564 = vstv %s3563
        %v3565 = vmul.f32 %v3564, %v3556
        %v3566 = vmul.f32 %v3564, %v3557
        %3569 = vrot.lane.b32.xlu0 %v3565, 127
        %v3570 = vpop.permute.xlu0 %3569
        %3571 = vrot.lane.b32.xlu0 %v3566, 127
        %v3572 = vpop.permute.xlu0 %3571
        %v3575 = vadd.f32 %v3561, %v3570
        %v3576 = vadd.f32 %v3562, %v3572
        %s3577 = sld [smem:[#allocation8 + $0x77]]
        %v3578 = vstv %s3577
        %v3579 = vmul.f32 %v3578, %v3556
        %v3580 = vmul.f32 %v3578, %v3557
        %3583 = vrot.lane.b32.xlu0 %v3579, 126
        %v3584 = vpop.permute.xlu0 %3583
        %3585 = vrot.lane.b32.xlu0 %v3580, 126
        %v3586 = vpop.permute.xlu0 %3585
        %v3589 = vadd.f32 %v3575, %v3584
        %v3590 = vadd.f32 %v3576, %v3586
        %s3591 = sld [smem:[#allocation8 + $0x78]]
        %v3592 = vld [vmem:[%s1187 + $0x1] sm:$0xff]
        %v3593 = vld [vmem:[%s1187 + $0x9] sm:$0xff]
        %v3594 = vstv %s3591
        %v3595 = vmul.f32 %v3594, %v3592
        %v3596 = vmul.f32 %v3594, %v3593
        %v3597 = vadd.f32 %v3589, %v3595
        %v3598 = vadd.f32 %v3590, %v3596
        %s3599 = sld [smem:[#allocation8 + $0x79]]
        %v3600 = vstv %s3599
        %v3601 = vmul.f32 %v3600, %v3592
        %v3602 = vmul.f32 %v3600, %v3593
        %3605 = vrot.lane.b32.xlu0 %v3601, 127
        %v3606 = vpop.permute.xlu0 %3605
        %3607 = vrot.lane.b32.xlu0 %v3602, 127
        %v3608 = vpop.permute.xlu0 %3607
        %v3611 = vadd.f32 %v3597, %v3606
        %v3612 = vadd.f32 %v3598, %v3608
        %s3613 = sld [smem:[#allocation8 + $0x7a]]
        %v3614 = vstv %s3613
        %v3615 = vmul.f32 %v3614, %v3592
        %v3616 = vmul.f32 %v3614, %v3593
        %3619 = vrot.lane.b32.xlu0 %v3615, 126
        %v3620 = vpop.permute.xlu0 %3619
        %3621 = vrot.lane.b32.xlu0 %v3616, 126
        %v3622 = vpop.permute.xlu0 %3621
        %v3625 = vadd.f32 %v3611, %v3620
        %v3626 = vadd.f32 %v3612, %v3622
        %s3627 = sld [smem:[#allocation8 + $0x7b]]
        %v3628 = vld [vmem:[%s1187 + $0x2] sm:$0xff]
        %v3629 = vld [vmem:[%s1187 + $0xa] sm:$0xff]
        %v3630 = vstv %s3627
        %v3631 = vmul.f32 %v3630, %v3628
        %v3632 = vmul.f32 %v3630, %v3629
        %v3633 = vadd.f32 %v3625, %v3631
        %v3634 = vadd.f32 %v3626, %v3632
        %s3635 = sld [smem:[#allocation8 + $0x7c]]
        %v3636 = vstv %s3635
        %v3637 = vmul.f32 %v3636, %v3628
        %v3638 = vmul.f32 %v3636, %v3629
        %3641 = vrot.lane.b32.xlu0 %v3637, 127
        %v3642 = vpop.permute.xlu0 %3641
        %3643 = vrot.lane.b32.xlu0 %v3638, 127
        %v3644 = vpop.permute.xlu0 %3643
        %v3647 = vadd.f32 %v3633, %v3642
        %v3648 = vadd.f32 %v3634, %v3644
        %s3649 = sld [smem:[#allocation8 + $0x7d]]
        %v3650 = vstv %s3649
        %v3651 = vmul.f32 %v3650, %v3628
        %v3652 = vmul.f32 %v3650, %v3629
        %3655 = vrot.lane.b32.xlu0 %v3651, 126
        %v3656 = vpop.permute.xlu0 %3655
        %3657 = vrot.lane.b32.xlu0 %v3652, 126
        %v3658 = vpop.permute.xlu0 %3657
        %v3661 = vadd.f32 %v3647, %v3656
        %v3662 = vadd.f32 %v3648, %v3658
        %s3663 = sld [smem:[#allocation8 + $0x7e]]
        %v3664 = vld [vmem:[%s1636] sm:$0xff]
        %v3665 = vld [vmem:[%s1636 + $0x8] sm:$0xff]
        %v3666 = vstv %s3663
        %v3667 = vmul.f32 %v3666, %v3664
        %v3668 = vmul.f32 %v3666, %v3665
        %v3669 = vadd.f32 %v3661, %v3667
        %v3670 = vadd.f32 %v3662, %v3668
        %s3671 = sld [smem:[#allocation8 + $0x7f]]
        %v3672 = vstv %s3671
        %v3673 = vmul.f32 %v3672, %v3664
        %v3674 = vmul.f32 %v3672, %v3665
        %3677 = vrot.lane.b32.xlu0 %v3673, 127
        %v3678 = vpop.permute.xlu0 %3677
        %3679 = vrot.lane.b32.xlu0 %v3674, 127
        %v3680 = vpop.permute.xlu0 %3679
        %v3683 = vadd.f32 %v3669, %v3678
        %v3684 = vadd.f32 %v3670, %v3680
        %s3685 = sld [smem:[#allocation8 + $0x80]]
        %v3686 = vstv %s3685
        %v3687 = vmul.f32 %v3686, %v3664
        %v3688 = vmul.f32 %v3686, %v3665
        %3691 = vrot.lane.b32.xlu0 %v3687, 126
        %v3692 = vpop.permute.xlu0 %3691
        %3693 = vrot.lane.b32.xlu0 %v3688, 126
        %v3694 = vpop.permute.xlu0 %3693
        %v3697 = vadd.f32 %v3683, %v3692
        %v3698 = vadd.f32 %v3684, %v3694
        %s3699 = sld [smem:[#allocation8 + $0x81]]
        %v3700 = vld [vmem:[%s1636 + $0x1] sm:$0xff]
        %v3701 = vld [vmem:[%s1636 + $0x9] sm:$0xff]
        %v3702 = vstv %s3699
        %v3703 = vmul.f32 %v3702, %v3700
        %v3704 = vmul.f32 %v3702, %v3701
        %v3705 = vadd.f32 %v3697, %v3703
        %v3706 = vadd.f32 %v3698, %v3704
        %s3707 = sld [smem:[#allocation8 + $0x82]]
        %v3708 = vstv %s3707
        %v3709 = vmul.f32 %v3708, %v3700
        %v3710 = vmul.f32 %v3708, %v3701
        %3713 = vrot.lane.b32.xlu0 %v3709, 127
        %v3714 = vpop.permute.xlu0 %3713
        %3715 = vrot.lane.b32.xlu0 %v3710, 127
        %v3716 = vpop.permute.xlu0 %3715
        %v3719 = vadd.f32 %v3705, %v3714
        %v3720 = vadd.f32 %v3706, %v3716
        %s3721 = sld [smem:[#allocation8 + $0x83]]
        %v3722 = vstv %s3721
        %v3723 = vmul.f32 %v3722, %v3700
        %v3724 = vmul.f32 %v3722, %v3701
        %3727 = vrot.lane.b32.xlu0 %v3723, 126
        %v3728 = vpop.permute.xlu0 %3727
        %3729 = vrot.lane.b32.xlu0 %v3724, 126
        %v3730 = vpop.permute.xlu0 %3729
        %v3733 = vadd.f32 %v3719, %v3728
        %v3734 = vadd.f32 %v3720, %v3730
        %s3735 = sld [smem:[#allocation8 + $0x84]]
        %v3736 = vld [vmem:[%s1636 + $0x2] sm:$0xff]
        %v3737 = vld [vmem:[%s1636 + $0xa] sm:$0xff]
        %v3738 = vstv %s3735
        %v3739 = vmul.f32 %v3738, %v3736
        %v3740 = vmul.f32 %v3738, %v3737
        %v3741 = vadd.f32 %v3733, %v3739
        %v3742 = vadd.f32 %v3734, %v3740
        %s3743 = sld [smem:[#allocation8 + $0x85]]
        %v3744 = vstv %s3743
        %v3745 = vmul.f32 %v3744, %v3736
        %v3746 = vmul.f32 %v3744, %v3737
        %3749 = vrot.lane.b32.xlu0 %v3745, 127
        %v3750 = vpop.permute.xlu0 %3749
        %3751 = vrot.lane.b32.xlu0 %v3746, 127
        %v3752 = vpop.permute.xlu0 %3751
        %v3755 = vadd.f32 %v3741, %v3750
        %v3756 = vadd.f32 %v3742, %v3752
        %s3757 = sld [smem:[#allocation8 + $0x86]]
        %v3758 = vstv %s3757
        %v3759 = vmul.f32 %v3758, %v3736
        %v3760 = vmul.f32 %v3758, %v3737
        %3763 = vrot.lane.b32.xlu0 %v3759, 126
        %v3764 = vpop.permute.xlu0 %3763
        %3765 = vrot.lane.b32.xlu0 %v3760, 126
        %v3766 = vpop.permute.xlu0 %3765
        %v3769 = vadd.f32 %v3755, %v3764
        %v3770 = vadd.f32 %v3756, %v3766
        %s3771 = sld [smem:[#allocation8 + $0x87]]
        %v3772 = vld [vmem:[%s2085] sm:$0xff]
        %v3773 = vld [vmem:[%s2085 + $0x8] sm:$0xff]
        %v3774 = vstv %s3771
        %v3775 = vmul.f32 %v3774, %v3772
        %v3776 = vmul.f32 %v3774, %v3773
        %v3777 = vadd.f32 %v3769, %v3775
        %v3778 = vadd.f32 %v3770, %v3776
        %s3779 = sld [smem:[#allocation8 + $0x88]]
        %v3780 = vstv %s3779
        %v3781 = vmul.f32 %v3780, %v3772
        %v3782 = vmul.f32 %v3780, %v3773
        %3785 = vrot.lane.b32.xlu0 %v3781, 127
        %v3786 = vpop.permute.xlu0 %3785
        %3787 = vrot.lane.b32.xlu0 %v3782, 127
        %v3788 = vpop.permute.xlu0 %3787
        %v3791 = vadd.f32 %v3777, %v3786
        %v3792 = vadd.f32 %v3778, %v3788
        %s3793 = sld [smem:[#allocation8 + $0x89]]
        %v3794 = vstv %s3793
        %v3795 = vmul.f32 %v3794, %v3772
        %v3796 = vmul.f32 %v3794, %v3773
        %3799 = vrot.lane.b32.xlu0 %v3795, 126
        %v3800 = vpop.permute.xlu0 %3799
        %3801 = vrot.lane.b32.xlu0 %v3796, 126
        %v3802 = vpop.permute.xlu0 %3801
        %v3805 = vadd.f32 %v3791, %v3800
        %v3806 = vadd.f32 %v3792, %v3802
        %s3807 = sld [smem:[#allocation8 + $0x8a]]
        %v3808 = vld [vmem:[%s2085 + $0x1] sm:$0xff]
        %v3809 = vld [vmem:[%s2085 + $0x9] sm:$0xff]
        %v3810 = vstv %s3807
        %v3811 = vmul.f32 %v3810, %v3808
        %v3812 = vmul.f32 %v3810, %v3809
        %v3813 = vadd.f32 %v3805, %v3811
        %v3814 = vadd.f32 %v3806, %v3812
        %s3815 = sld [smem:[#allocation8 + $0x8b]]
        %v3816 = vstv %s3815
        %v3817 = vmul.f32 %v3816, %v3808
        %v3818 = vmul.f32 %v3816, %v3809
        %3821 = vrot.lane.b32.xlu0 %v3817, 127
        %v3822 = vpop.permute.xlu0 %3821
        %3823 = vrot.lane.b32.xlu0 %v3818, 127
        %v3824 = vpop.permute.xlu0 %3823
        %v3827 = vadd.f32 %v3813, %v3822
        %v3828 = vadd.f32 %v3814, %v3824
        %s3829 = sld [smem:[#allocation8 + $0x8c]]
        %v3830 = vstv %s3829
        %v3831 = vmul.f32 %v3830, %v3808
        %v3832 = vmul.f32 %v3830, %v3809
        %3835 = vrot.lane.b32.xlu0 %v3831, 126
        %v3836 = vpop.permute.xlu0 %3835
        %3837 = vrot.lane.b32.xlu0 %v3832, 126
        %v3838 = vpop.permute.xlu0 %3837
        %v3841 = vadd.f32 %v3827, %v3836
        %v3842 = vadd.f32 %v3828, %v3838
        %s3843 = sld [smem:[#allocation8 + $0x8d]]
        %v3844 = vld [vmem:[%s2085 + $0x2] sm:$0xff]
        %v3845 = vld [vmem:[%s2085 + $0xa] sm:$0xff]
        %v3846 = vstv %s3843
        %v3847 = vmul.f32 %v3846, %v3844
        %v3848 = vmul.f32 %v3846, %v3845
        %v3849 = vadd.f32 %v3841, %v3847
        %v3850 = vadd.f32 %v3842, %v3848
        %s3851 = sld [smem:[#allocation8 + $0x8e]]
        %v3852 = vstv %s3851
        %v3853 = vmul.f32 %v3852, %v3844
        %v3854 = vmul.f32 %v3852, %v3845
        %3857 = vrot.lane.b32.xlu0 %v3853, 127
        %v3858 = vpop.permute.xlu0 %3857
        %3859 = vrot.lane.b32.xlu0 %v3854, 127
        %v3860 = vpop.permute.xlu0 %3859
        %v3863 = vadd.f32 %v3849, %v3858
        %v3864 = vadd.f32 %v3850, %v3860
        %s3865 = sld [smem:[#allocation8 + $0x8f]]
        %v3866 = vstv %s3865
        %v3867 = vmul.f32 %v3866, %v3844
        %v3868 = vmul.f32 %v3866, %v3845
        %3871 = vrot.lane.b32.xlu0 %v3867, 126
        %v3872 = vpop.permute.xlu0 %3871
        %3873 = vrot.lane.b32.xlu0 %v3868, 126
        %v3874 = vpop.permute.xlu0 %3873
        %v3877 = vadd.f32 %v3863, %v3872
        %v3878 = vadd.f32 %v3864, %v3874
        %s3879 = sld [smem:[#allocation9 + $0x3]]
        %v3880 = vstv %s3879
        %v3881 = vadd.f32 %v3877, %v3880
        %v3882 = vadd.f32 %v3878, %v3880
        %v3883 = vmax.f32 %v3881, 0.0
        %v3884 = vmax.f32 %v3882, 0.0
        %v3885 = vld [vmem:[%s616 + $0x1] sm:$0xff]
        %v3886 = vld [vmem:[%s616 + $0x9] sm:$0xff]
        %3889 = vrot.lane.b32.xlu0 %v3885, 127
        %v3890 = vpop.permute.xlu0 %3889
        %3891 = vrot.lane.b32.xlu0 %v3886, 127
        %v3892 = vpop.permute.xlu0 %3891
        %v3895 = vadd.f32 %v3883, %v3890
        %v3896 = vadd.f32 %v3884, %v3892
        %s3897 = scalar_lea.vmem %s269, 48 [#allocation11]
        %3898 = vst.msk [vmem:[%s3897] sm:$0xff] %vm2538, %v3895
        %3899 = vst.msk [vmem:[%s3897 + $0x8] sm:$0xff] %vm2538, %v3896
        %s3900 = sand.u32 %s140, 1
        %s3901 = scalar_lea.sflag [#allocation4], %s3900
        %s3902 = sand.u32 %s140, 1
        %s3903 = smul.addr %s3902, 64
        %s3904 = scalar_lea.vmem [#allocation11], %s3903
        // Predicated region
        $region57: #{tpu_custom_call.1} parent=39 // pred_check
          %p3905 = pneg %p150
        $region58: #{tpu_custom_call.1} parent=39 // pred_check_branch
          %3907 = sbr.rel (%p3905) target = $region60
        $region59: #{tpu_custom_call.1} parent=39 // pred_region
          %s3909 = ssub.s32 1024, 1024
          %3910 = vsyncadd %s3901, %s3909
          %s3911 = smul.addr %s22, 8
          %s3912 = smul.addr %s3911, 128
          %s3913 = scalar_lea.hbm %s5, %s3912
          %s3914 = sshll.u32 %s3904, 4
          %s3915 = int_to_ptr.vmem [resolvable:$true] %s3914
          %3920 = dma.vmem_to_hbm [thread:$0]  %s3915, 1024, %s3913, %s3901, 128, 128, 8
        $region60: #{tpu_custom_call.1} parent=39 // pred_fallthru
          _
      $region40: #{tpu_custom_call.1} parent=5 // pred_fallthru
        _
      %p3921 = scmp.le.s32.totalorder 2, %s17
      // Predicated region
      $region61: #{tpu_custom_call.1} parent=5 // pred_check
        %p3922 = pneg %p3921
      $region62: #{tpu_custom_call.1} parent=5 // pred_check_branch
        %3924 = sbr.rel (%p3922) target = $region64
      $region63: #{tpu_custom_call.1} parent=5 // pred_region
        %s3925 = ssub.s32 %s17, 2
        // Predicated region
        $region65: #{tpu_custom_call.1} parent=63 // pred_check
          %p3926 = pneg %p156
        $region66: #{tpu_custom_call.1} parent=63 // pred_check_branch
          %3928 = sbr.rel (%p3926) target = $region68
        $region67: #{tpu_custom_call.1} parent=63 // pred_region
          %s3929 = sand.u32 %s141, 1
          %s3930 = scalar_lea.sflag [#allocation4], %s3929
          %s3931 = sand.u32 %s141, 1
          %s3932 = smul.addr %s3931, 64
          %s3933 = scalar_lea.vmem [#allocation11], %s3932
          %3934 = dma.done %s3930, 1024
        $region68: #{tpu_custom_call.1} parent=63 // pred_fallthru
          _
      $region64: #{tpu_custom_call.1} parent=5 // pred_fallthru
        _
    $region6: #{tpu_custom_call.1} parent=1 // loop_footer
      %s21 = sadd.s32 1, %s17
    $region7: #{tpu_custom_call.1} parent=1 // loop_footer_branch
      %16 = sbr.rel target = $region3
    $region8: #{tpu_custom_call.1} parent=1 // loop_exit
      _
    %3935 = vsyncpa [#allocation4], 1
    %s3936 = scalar_lea.sflag [#allocation4], 1
    %3937 = vsyncpa %s3936, 1
    %3938 = vsyncpa [#allocation5], 1
    %s3939 = scalar_lea.sflag [#allocation5], 1
    %3940 = vsyncpa %s3939, 1
    %3941 = vsyncpa [#allocation7], 1
    %3942 = vsyncpa [#allocation10], 1

</llo_original>
